<compile_context>
chip_gen: v7x
topology: tpu7x:2x2x1
jax: 0.10.0
libtpu: 0.0.40
codegen_flags: <defaults>
</compile_context>

<pallas_src>
import jax
import jax.numpy as jnp
from jax import lax
from jax.experimental import pallas as pl
from jax.experimental.pallas import tpu as pltpu

EPS = 1e-5
LANES = 128


def _double_conv_kernel(x_ref, w1_ref, b1_ref, g1_ref, be1_ref,
                        w2_ref, b2_ref, g2_ref, be2_ref,
                        out_ref, h1_ref):
    # x_ref  : (N, H+2, W+2, Ci) f32   spatially zero-padded, channel-padded NHWC
    # w1_ref : (9*Ci, Co) bf16         3x3 taps flattened in (ky, kx, cin) order
    # w2_ref : (9*Co, Co) bf16
    # b/g/be : (1, Co) f32             conv bias, BN gamma, BN beta (channel-padded)
    # out_ref: (N, H, W, Co) f32       lane-dense (Co is a multiple of 128)
    # h1_ref : (N, H+2, W+2, Co) f32   scratch: padded intermediate activation
    N, Hp, Wp, Ci = x_ref.shape
    H, W = Hp - 2, Wp - 2
    Co = out_ref.shape[-1]
    P = N * H * W
    inv_p = 1.0 / P
    mxu_dtype = w1_ref.dtype

    def im2col(src_ref, C):
        # (N, H+2, W+2, C) -> (P, 9*C); tap order (ky, kx, c) matches weights.
        taps = [src_ref[:, dy:dy + H, dx:dx + W, :]
                for dy in range(3) for dx in range(3)]
        return jnp.concatenate(taps, axis=-1).reshape(P, 9 * C)

    def bn_relu(acc, g, be):
        # One-pass batch stats (biased variance), PyTorch training-mode forward.
        mean = jnp.sum(acc, axis=0, keepdims=True) * inv_p
        var = jnp.sum(acc * acc, axis=0, keepdims=True) * inv_p - mean * mean
        scale = lax.rsqrt(var + EPS) * g
        return jnp.maximum((acc - mean) * scale + be, 0.0)

    # ---- conv1: single fused MXU matmul, K = 9*Ci ----
    p1 = im2col(x_ref, Ci).astype(mxu_dtype)
    acc1 = jnp.dot(p1, w1_ref[...], preferred_element_type=jnp.float32)
    y1 = bn_relu(acc1 + b1_ref[...], g1_ref[...], be1_ref[...])     # (P, Co) f32

    # ---- stage padded intermediate: zero only the 1-pixel border ----
    zrow = jnp.zeros((N, 1, Wp, Co), jnp.float32)
    h1_ref[:, 0:1, :, :] = zrow
    h1_ref[:, H + 1:H + 2, :, :] = zrow
    zcol = jnp.zeros((N, Hp, 1, Co), jnp.float32)
    h1_ref[:, :, 0:1, :] = zcol
    h1_ref[:, :, W + 1:W + 2, :] = zcol
    h1_ref[:, 1:H + 1, 1:W + 1, :] = y1.reshape(N, H, W, Co)

    # ---- conv2: single fused MXU matmul, K = 9*Co ----
    p2 = im2col(h1_ref, Co).astype(mxu_dtype)
    acc2 = jnp.dot(p2, w2_ref[...], preferred_element_type=jnp.float32)
    y2 = bn_relu(acc2 + b2_ref[...], g2_ref[...], be2_ref[...])
    out_ref[...] = y2.reshape(N, H, W, Co)


def _round_up(v, m):
    return (v + m - 1) // m * m


def double_conv(x_nchw, params, mxu_dtype=jnp.bfloat16):
    """DoubleConv forward pass.  Input/output are NCHW (PyTorch layout)."""
    N, Cin, H, W = x_nchw.shape
    Cout = params["w1"].shape[0]
    Ci = _round_up(Cin, LANES)     # lane-dense input channels
    Co = _round_up(Cout, LANES)    # lane-dense output channels

    # NCHW -> NHWC; fuse the spatial (padding=1) and channel (lane) pads.
    # TODO(synk): a surrounding model should stay NHWC end-to-end so these two
    # full-tensor transposes disappear from the HBM budget.
    x = jnp.transpose(x_nchw, (0, 2, 3, 1)).astype(jnp.float32)
    x = jnp.pad(x, ((0, 0), (1, 1), (1, 1), (0, Ci - Cin)))

    def conv_weight(w, cin, cin_p):
        # OIHW -> (ky, kx, cin_p, Co) -> (9*cin_p, Co), matching im2col order.
        w = jnp.transpose(w, (2, 3, 1, 0))
        w = jnp.pad(w, ((0, 0), (0, 0), (0, cin_p - cin), (0, Co - Cout)))
        return w.reshape(9 * cin_p, Co).astype(mxu_dtype)

    def vec(v):
        return jnp.pad(v.astype(jnp.float32), (0, Co - Cout)).reshape(1, Co)

    vmem = pl.BlockSpec(memory_space=pltpu.MemorySpace.VMEM)
    out = pl.pallas_call(
        _double_conv_kernel,
        out_shape=jax.ShapeDtypeStruct((N, H, W, Co), jnp.float32),
        in_specs=[vmem] * 9,
        out_specs=vmem,
        scratch_shapes=[pltpu.VMEM((N, H + 2, W + 2, Co), jnp.float32)],
        compiler_params=pltpu.CompilerParams(
            vmem_limit_bytes=32 * 1024 * 1024),
    )(x, conv_weight(params["w1"], Cin, Ci), vec(params["b1"]),
      vec(params["g1"]), vec(params["be1"]),
      conv_weight(params["w2"], Cout, Co), vec(params["b2"]),
      vec(params["g2"]), vec(params["be2"]))

    # drop the channel padding, back to NCHW
    return jnp.transpose(out[..., :Cout], (0, 3, 1, 2))


def double_conv_ref(x, p, mxu_dtype=None):
    """Pure-JAX reference with PyTorch training-mode BN semantics (NCHW).

    If `mxu_dtype` is given, conv inputs/weights are quantized to that dtype
    (then convolved with f32 accumulation), mirroring the kernel's MXU feed.
    """
    if mxu_dtype is None:
        cast = lambda a: a
    else:
        cast = lambda a: a.astype(mxu_dtype).astype(jnp.float32)

    def conv(x, w, b):
        y = lax.conv_general_dilated(
            cast(x), cast(w), (1, 1), ((1, 1), (1, 1)),
            dimension_numbers=("NCHW", "OIHW", "NCHW"),
            precision=lax.Precision.HIGHEST)
        return y + b[None, :, None, None]

    def bn(x, g, be):
        mean = jnp.mean(x, axis=(0, 2, 3), keepdims=True)
        var = jnp.mean((x - mean) ** 2, axis=(0, 2, 3), keepdims=True)
        return (x - mean) * lax.rsqrt(var + EPS) * g[None, :, None, None] \
            + be[None, :, None, None]

    y = jnp.maximum(bn(conv(x, p["w1"], p["b1"]), p["g1"], p["be1"]), 0.0)
    y = jnp.maximum(bn(conv(y, p["w2"], p["b2"]), p["g2"], p["be2"]), 0.0)
    return y


if __name__ == "__main__":
    N, Cin, Cout, H, W = 2, 4, 8, 16, 16

    key = jax.random.PRNGKey(0)
    ks = jax.random.split(key, 9)
    params = {
        "w1":  0.1 * jax.random.normal(ks[0], (Cout, Cin, 3, 3), jnp.float32),
        "b1":  0.1 * jax.random.normal(ks[1], (Cout,), jnp.float32),
        "g1":  1.0 + 0.1 * jax.random.normal(ks[2], (Cout,), jnp.float32),
        "be1": 0.1 * jax.random.normal(ks[3], (Cout,), jnp.float32),
        "w2":  0.1 * jax.random.normal(ks[4], (Cout, Cout, 3, 3), jnp.float32),
        "b2":  0.1 * jax.random.normal(ks[5], (Cout,), jnp.float32),
        "g2":  1.0 + 0.1 * jax.random.normal(ks[6], (Cout,), jnp.float32),
        "be2": 0.1 * jax.random.normal(ks[7], (Cout,), jnp.float32),
    }
    x = jax.random.normal(ks[8], (N, Cin, H, W), jnp.float32)

    out = jax.block_until_ready(double_conv(x, params))
    assert out.shape == (N, Cout, H, W), out.shape

    # Check vs. a reference that applies the same bf16 quantization of the conv
    # operands (tolerance covers bf16 rounding-boundary flips of the
    # intermediate activation between the two implementations).
    ref_q = jax.block_until_ready(
        double_conv_ref(x, params, mxu_dtype=jnp.bfloat16))
    assert jnp.allclose(out, ref_q, atol=5e-2, rtol=5e-2), \
        float(jnp.max(jnp.abs(out - ref_q)))

    # Sanity check vs. the exact f32 (PyTorch-semantics) reference; the bf16
    # MXU feed keeps the deviation well inside this tolerance.
    ref_f = jax.block_until_ready(double_conv_ref(x, params))
    assert jnp.allclose(out, ref_f, atol=1.5e-1, rtol=1.5e-1), \
        float(jnp.max(jnp.abs(out - ref_f)))

    print("KERNEL_OK")
</pallas_src>

<mosaic_0001>
module attributes {stable_mosaic.version = 11 : i64} {
  func.func @_double_conv_kernel(%arg0: memref<2x18x18x128xf32, #tpu.memory_space<vmem>>, %arg1: memref<1152x128xbf16, #tpu.memory_space<vmem>>, %arg2: memref<1x128xf32, #tpu.memory_space<vmem>>, %arg3: memref<1x128xf32, #tpu.memory_space<vmem>>, %arg4: memref<1x128xf32, #tpu.memory_space<vmem>>, %arg5: memref<1152x128xbf16, #tpu.memory_space<vmem>>, %arg6: memref<1x128xf32, #tpu.memory_space<vmem>>, %arg7: memref<1x128xf32, #tpu.memory_space<vmem>>, %arg8: memref<1x128xf32, #tpu.memory_space<vmem>>, %arg9: memref<2x16x16x128xf32, #tpu.memory_space<vmem>>, %arg10: memref<2x18x18x128xf32, #tpu.memory_space<vmem>>) attributes {dimension_semantics = [], scalar_prefetch = 0 : i64, scratch_operands = 1 : i64, tpu.core_type = #tpu.core_type<tc>} {
    %c0 = arith.constant 0 : index
    %c0_0 = arith.constant 0 : index
    %c0_1 = arith.constant 0 : index
    %c0_2 = arith.constant 0 : index
    %0 = vector.load %arg0[%c0, %c0_0, %c0_1, %c0_2] : memref<2x18x18x128xf32, #tpu.memory_space<vmem>>, vector<2x16x16x128xf32>
    %c0_3 = arith.constant 0 : index
    %c0_4 = arith.constant 0 : index
    %c1 = arith.constant 1 : index
    %c0_5 = arith.constant 0 : index
    %1 = vector.load %arg0[%c0_3, %c0_4, %c1, %c0_5] : memref<2x18x18x128xf32, #tpu.memory_space<vmem>>, vector<2x16x16x128xf32>
    %c0_6 = arith.constant 0 : index
    %c0_7 = arith.constant 0 : index
    %c2 = arith.constant 2 : index
    %c0_8 = arith.constant 0 : index
    %2 = vector.load %arg0[%c0_6, %c0_7, %c2, %c0_8] : memref<2x18x18x128xf32, #tpu.memory_space<vmem>>, vector<2x16x16x128xf32>
    %c0_9 = arith.constant 0 : index
    %c1_10 = arith.constant 1 : index
    %c0_11 = arith.constant 0 : index
    %c0_12 = arith.constant 0 : index
    %3 = vector.load %arg0[%c0_9, %c1_10, %c0_11, %c0_12] : memref<2x18x18x128xf32, #tpu.memory_space<vmem>>, vector<2x16x16x128xf32>
    %c0_13 = arith.constant 0 : index
    %c1_14 = arith.constant 1 : index
    %c1_15 = arith.constant 1 : index
    %c0_16 = arith.constant 0 : index
    %4 = vector.load %arg0[%c0_13, %c1_14, %c1_15, %c0_16] : memref<2x18x18x128xf32, #tpu.memory_space<vmem>>, vector<2x16x16x128xf32>
    %c0_17 = arith.constant 0 : index
    %c1_18 = arith.constant 1 : index
    %c2_19 = arith.constant 2 : index
    %c0_20 = arith.constant 0 : index
    %5 = vector.load %arg0[%c0_17, %c1_18, %c2_19, %c0_20] : memref<2x18x18x128xf32, #tpu.memory_space<vmem>>, vector<2x16x16x128xf32>
    %c0_21 = arith.constant 0 : index
    %c2_22 = arith.constant 2 : index
    %c0_23 = arith.constant 0 : index
    %c0_24 = arith.constant 0 : index
    %6 = vector.load %arg0[%c0_21, %c2_22, %c0_23, %c0_24] : memref<2x18x18x128xf32, #tpu.memory_space<vmem>>, vector<2x16x16x128xf32>
    %c0_25 = arith.constant 0 : index
    %c2_26 = arith.constant 2 : index
    %c1_27 = arith.constant 1 : index
    %c0_28 = arith.constant 0 : index
    %7 = vector.load %arg0[%c0_25, %c2_26, %c1_27, %c0_28] : memref<2x18x18x128xf32, #tpu.memory_space<vmem>>, vector<2x16x16x128xf32>
    %c0_29 = arith.constant 0 : index
    %c2_30 = arith.constant 2 : index
    %c2_31 = arith.constant 2 : index
    %c0_32 = arith.constant 0 : index
    %8 = vector.load %arg0[%c0_29, %c2_30, %c2_31, %c0_32] : memref<2x18x18x128xf32, #tpu.memory_space<vmem>>, vector<2x16x16x128xf32>
    %9 = tpu.concatenate %0, %1, %2, %3, %4, %5, %6, %7, %8 in 3 : vector<2x16x16x128xf32>, vector<2x16x16x128xf32>, vector<2x16x16x128xf32>, vector<2x16x16x128xf32>, vector<2x16x16x128xf32>, vector<2x16x16x128xf32>, vector<2x16x16x128xf32>, vector<2x16x16x128xf32>, vector<2x16x16x128xf32> -> vector<2x16x16x1152xf32>
    %10 = vector.shape_cast %9 : vector<2x16x16x1152xf32> to vector<512x1152xf32>
    %11 = arith.truncf %10 : vector<512x1152xf32> to vector<512x1152xbf16>
    %c0_33 = arith.constant 0 : index
    %c0_34 = arith.constant 0 : index
    %12 = vector.load %arg1[%c0_33, %c0_34] : memref<1152x128xbf16, #tpu.memory_space<vmem>>, vector<1152x128xbf16>
    %cst = arith.constant dense<0.000000e+00> : vector<512x128xf32>
    %13 = tpu.matmul %11, %12, %cst {dimension_numbers = #tpu.dot_dimension_numbers<[1], [0], [0], [1], [0, 0, 1, 1], [], []>} : vector<512x1152xbf16>, vector<1152x128xbf16>, vector<512x128xf32> -> vector<512x128xf32>
    %c0_35 = arith.constant 0 : index
    %c0_36 = arith.constant 0 : index
    %14 = vector.load %arg2[%c0_35, %c0_36] : memref<1x128xf32, #tpu.memory_space<vmem>>, vector<1x128xf32>
    %15 = vector.broadcast %14 : vector<1x128xf32> to vector<512x128xf32>
    %16 = arith.addf %13, %15 : vector<512x128xf32>
    %c0_37 = arith.constant 0 : index
    %c0_38 = arith.constant 0 : index
    %17 = vector.load %arg3[%c0_37, %c0_38] : memref<1x128xf32, #tpu.memory_space<vmem>>, vector<1x128xf32>
    %c0_39 = arith.constant 0 : index
    %c0_40 = arith.constant 0 : index
    %18 = vector.load %arg4[%c0_39, %c0_40] : memref<1x128xf32, #tpu.memory_space<vmem>>, vector<1x128xf32>
    %cst_41 = arith.constant dense<0.000000e+00> : vector<128xf32>
    %19 = vector.multi_reduction <add>, %16, %cst_41 [0] : vector<512x128xf32> to vector<128xf32>
    %20 = vector.shape_cast %19 : vector<128xf32> to vector<1x128xf32>
    %cst_42 = arith.constant 0.001953125 : f32
    %21 = vector.broadcast %cst_42 : f32 to vector<1x128xf32>
    %22 = arith.mulf %20, %21 : vector<1x128xf32>
    %23 = arith.mulf %16, %16 : vector<512x128xf32>
    %cst_43 = arith.constant dense<0.000000e+00> : vector<128xf32>
    %24 = vector.multi_reduction <add>, %23, %cst_43 [0] : vector<512x128xf32> to vector<128xf32>
    %25 = vector.shape_cast %24 : vector<128xf32> to vector<1x128xf32>
    %cst_44 = arith.constant 0.001953125 : f32
    %26 = vector.broadcast %cst_44 : f32 to vector<1x128xf32>
    %27 = arith.mulf %25, %26 : vector<1x128xf32>
    %28 = arith.mulf %22, %22 : vector<1x128xf32>
    %29 = arith.subf %27, %28 : vector<1x128xf32>
    %cst_45 = arith.constant 9.99999974E-6 : f32
    %30 = vector.broadcast %cst_45 : f32 to vector<1x128xf32>
    %31 = arith.addf %29, %30 : vector<1x128xf32>
    %32 = math.rsqrt %31 : vector<1x128xf32>
    %33 = arith.mulf %32, %17 : vector<1x128xf32>
    %34 = vector.broadcast %22 : vector<1x128xf32> to vector<512x128xf32>
    %35 = arith.subf %16, %34 : vector<512x128xf32>
    %36 = vector.broadcast %33 : vector<1x128xf32> to vector<512x128xf32>
    %37 = arith.mulf %35, %36 : vector<512x128xf32>
    %38 = vector.broadcast %18 : vector<1x128xf32> to vector<512x128xf32>
    %39 = arith.addf %37, %38 : vector<512x128xf32>
    %cst_46 = arith.constant 0.000000e+00 : f32
    %40 = vector.broadcast %cst_46 : f32 to vector<512x128xf32>
    %41 = arith.maximumf %39, %40 : vector<512x128xf32>
    %cst_47 = arith.constant 0.000000e+00 : f32
    %42 = vector.broadcast %cst_47 : f32 to vector<2x1x18x128xf32>
    %c0_48 = arith.constant 0 : index
    %c0_49 = arith.constant 0 : index
    %c0_50 = arith.constant 0 : index
    %c0_51 = arith.constant 0 : index
    %43 = vector.load %arg10[%c0_48, %c0_49, %c0_50, %c0_51] : memref<2x18x18x128xf32, #tpu.memory_space<vmem>>, vector<2x1x18x128xf32>
    tpu.vector_store %arg10[%c0_48, %c0_49, %c0_50, %c0_51], %42 {strides = array<i32>} : memref<2x18x18x128xf32, #tpu.memory_space<vmem>>, vector<2x1x18x128xf32>,
    %c0_52 = arith.constant 0 : index
    %c17 = arith.constant 17 : index
    %c0_53 = arith.constant 0 : index
    %c0_54 = arith.constant 0 : index
    %44 = vector.load %arg10[%c0_52, %c17, %c0_53, %c0_54] : memref<2x18x18x128xf32, #tpu.memory_space<vmem>>, vector<2x1x18x128xf32>
    tpu.vector_store %arg10[%c0_52, %c17, %c0_53, %c0_54], %42 {strides = array<i32>} : memref<2x18x18x128xf32, #tpu.memory_space<vmem>>, vector<2x1x18x128xf32>,
    %cst_55 = arith.constant 0.000000e+00 : f32
    %45 = vector.broadcast %cst_55 : f32 to vector<2x18x1x128xf32>
    %c0_56 = arith.constant 0 : index
    %c0_57 = arith.constant 0 : index
    %c0_58 = arith.constant 0 : index
    %c0_59 = arith.constant 0 : index
    %46 = vector.load %arg10[%c0_56, %c0_57, %c0_58, %c0_59] : memref<2x18x18x128xf32, #tpu.memory_space<vmem>>, vector<2x18x1x128xf32>
    tpu.vector_store %arg10[%c0_56, %c0_57, %c0_58, %c0_59], %45 {strides = array<i32>} : memref<2x18x18x128xf32, #tpu.memory_space<vmem>>, vector<2x18x1x128xf32>,
    %c0_60 = arith.constant 0 : index
    %c0_61 = arith.constant 0 : index
    %c17_62 = arith.constant 17 : index
    %c0_63 = arith.constant 0 : index
    %47 = vector.load %arg10[%c0_60, %c0_61, %c17_62, %c0_63] : memref<2x18x18x128xf32, #tpu.memory_space<vmem>>, vector<2x18x1x128xf32>
    tpu.vector_store %arg10[%c0_60, %c0_61, %c17_62, %c0_63], %45 {strides = array<i32>} : memref<2x18x18x128xf32, #tpu.memory_space<vmem>>, vector<2x18x1x128xf32>,
    %48 = vector.shape_cast %41 : vector<512x128xf32> to vector<2x16x16x128xf32>
    %c0_64 = arith.constant 0 : index
    %c1_65 = arith.constant 1 : index
    %c1_66 = arith.constant 1 : index
    %c0_67 = arith.constant 0 : index
    %49 = vector.load %arg10[%c0_64, %c1_65, %c1_66, %c0_67] : memref<2x18x18x128xf32, #tpu.memory_space<vmem>>, vector<2x16x16x128xf32>
    tpu.vector_store %arg10[%c0_64, %c1_65, %c1_66, %c0_67], %48 {strides = array<i32>} : memref<2x18x18x128xf32, #tpu.memory_space<vmem>>, vector<2x16x16x128xf32>,
    %c0_68 = arith.constant 0 : index
    %c0_69 = arith.constant 0 : index
    %c0_70 = arith.constant 0 : index
    %c0_71 = arith.constant 0 : index
    %50 = vector.load %arg10[%c0_68, %c0_69, %c0_70, %c0_71] : memref<2x18x18x128xf32, #tpu.memory_space<vmem>>, vector<2x16x16x128xf32>
    %c0_72 = arith.constant 0 : index
    %c0_73 = arith.constant 0 : index
    %c1_74 = arith.constant 1 : index
    %c0_75 = arith.constant 0 : index
    %51 = vector.load %arg10[%c0_72, %c0_73, %c1_74, %c0_75] : memref<2x18x18x128xf32, #tpu.memory_space<vmem>>, vector<2x16x16x128xf32>
    %c0_76 = arith.constant 0 : index
    %c0_77 = arith.constant 0 : index
    %c2_78 = arith.constant 2 : index
    %c0_79 = arith.constant 0 : index
    %52 = vector.load %arg10[%c0_76, %c0_77, %c2_78, %c0_79] : memref<2x18x18x128xf32, #tpu.memory_space<vmem>>, vector<2x16x16x128xf32>
    %c0_80 = arith.constant 0 : index
    %c1_81 = arith.constant 1 : index
    %c0_82 = arith.constant 0 : index
    %c0_83 = arith.constant 0 : index
    %53 = vector.load %arg10[%c0_80, %c1_81, %c0_82, %c0_83] : memref<2x18x18x128xf32, #tpu.memory_space<vmem>>, vector<2x16x16x128xf32>
    %c0_84 = arith.constant 0 : index
    %c1_85 = arith.constant 1 : index
    %c1_86 = arith.constant 1 : index
    %c0_87 = arith.constant 0 : index
    %54 = vector.load %arg10[%c0_84, %c1_85, %c1_86, %c0_87] : memref<2x18x18x128xf32, #tpu.memory_space<vmem>>, vector<2x16x16x128xf32>
    %c0_88 = arith.constant 0 : index
    %c1_89 = arith.constant 1 : index
    %c2_90 = arith.constant 2 : index
    %c0_91 = arith.constant 0 : index
    %55 = vector.load %arg10[%c0_88, %c1_89, %c2_90, %c0_91] : memref<2x18x18x128xf32, #tpu.memory_space<vmem>>, vector<2x16x16x128xf32>
    %c0_92 = arith.constant 0 : index
    %c2_93 = arith.constant 2 : index
    %c0_94 = arith.constant 0 : index
    %c0_95 = arith.constant 0 : index
    %56 = vector.load %arg10[%c0_92, %c2_93, %c0_94, %c0_95] : memref<2x18x18x128xf32, #tpu.memory_space<vmem>>, vector<2x16x16x128xf32>
    %c0_96 = arith.constant 0 : index
    %c2_97 = arith.constant 2 : index
    %c1_98 = arith.constant 1 : index
    %c0_99 = arith.constant 0 : index
    %57 = vector.load %arg10[%c0_96, %c2_97, %c1_98, %c0_99] : memref<2x18x18x128xf32, #tpu.memory_space<vmem>>, vector<2x16x16x128xf32>
    %c0_100 = arith.constant 0 : index
    %c2_101 = arith.constant 2 : index
    %c2_102 = arith.constant 2 : index
    %c0_103 = arith.constant 0 : index
    %58 = vector.load %arg10[%c0_100, %c2_101, %c2_102, %c0_103] : memref<2x18x18x128xf32, #tpu.memory_space<vmem>>, vector<2x16x16x128xf32>
    %59 = tpu.concatenate %50, %51, %52, %53, %54, %55, %56, %57, %58 in 3 : vector<2x16x16x128xf32>, vector<2x16x16x128xf32>, vector<2x16x16x128xf32>, vector<2x16x16x128xf32>, vector<2x16x16x128xf32>, vector<2x16x16x128xf32>, vector<2x16x16x128xf32>, vector<2x16x16x128xf32>, vector<2x16x16x128xf32> -> vector<2x16x16x1152xf32>
    %60 = vector.shape_cast %59 : vector<2x16x16x1152xf32> to vector<512x1152xf32>
    %61 = arith.truncf %60 : vector<512x1152xf32> to vector<512x1152xbf16>
    %c0_104 = arith.constant 0 : index
    %c0_105 = arith.constant 0 : index
    %62 = vector.load %arg5[%c0_104, %c0_105] : memref<1152x128xbf16, #tpu.memory_space<vmem>>, vector<1152x128xbf16>
    %cst_106 = arith.constant dense<0.000000e+00> : vector<512x128xf32>
    %63 = tpu.matmul %61, %62, %cst_106 {dimension_numbers = #tpu.dot_dimension_numbers<[1], [0], [0], [1], [0, 0, 1, 1], [], []>} : vector<512x1152xbf16>, vector<1152x128xbf16>, vector<512x128xf32> -> vector<512x128xf32>
    %c0_107 = arith.constant 0 : index
    %c0_108 = arith.constant 0 : index
    %64 = vector.load %arg6[%c0_107, %c0_108] : memref<1x128xf32, #tpu.memory_space<vmem>>, vector<1x128xf32>
    %65 = vector.broadcast %64 : vector<1x128xf32> to vector<512x128xf32>
    %66 = arith.addf %63, %65 : vector<512x128xf32>
    %c0_109 = arith.constant 0 : index
    %c0_110 = arith.constant 0 : index
    %67 = vector.load %arg7[%c0_109, %c0_110] : memref<1x128xf32, #tpu.memory_space<vmem>>, vector<1x128xf32>
    %c0_111 = arith.constant 0 : index
    %c0_112 = arith.constant 0 : index
    %68 = vector.load %arg8[%c0_111, %c0_112] : memref<1x128xf32, #tpu.memory_space<vmem>>, vector<1x128xf32>
    %cst_113 = arith.constant dense<0.000000e+00> : vector<128xf32>
    %69 = vector.multi_reduction <add>, %66, %cst_113 [0] : vector<512x128xf32> to vector<128xf32>
    %70 = vector.shape_cast %69 : vector<128xf32> to vector<1x128xf32>
    %cst_114 = arith.constant 0.001953125 : f32
    %71 = vector.broadcast %cst_114 : f32 to vector<1x128xf32>
    %72 = arith.mulf %70, %71 : vector<1x128xf32>
    %73 = arith.mulf %66, %66 : vector<512x128xf32>
    %cst_115 = arith.constant dense<0.000000e+00> : vector<128xf32>
    %74 = vector.multi_reduction <add>, %73, %cst_115 [0] : vector<512x128xf32> to vector<128xf32>
    %75 = vector.shape_cast %74 : vector<128xf32> to vector<1x128xf32>
    %cst_116 = arith.constant 0.001953125 : f32
    %76 = vector.broadcast %cst_116 : f32 to vector<1x128xf32>
    %77 = arith.mulf %75, %76 : vector<1x128xf32>
    %78 = arith.mulf %72, %72 : vector<1x128xf32>
    %79 = arith.subf %77, %78 : vector<1x128xf32>
    %cst_117 = arith.constant 9.99999974E-6 : f32
    %80 = vector.broadcast %cst_117 : f32 to vector<1x128xf32>
    %81 = arith.addf %79, %80 : vector<1x128xf32>
    %82 = math.rsqrt %81 : vector<1x128xf32>
    %83 = arith.mulf %82, %67 : vector<1x128xf32>
    %84 = vector.broadcast %72 : vector<1x128xf32> to vector<512x128xf32>
    %85 = arith.subf %66, %84 : vector<512x128xf32>
    %86 = vector.broadcast %83 : vector<1x128xf32> to vector<512x128xf32>
    %87 = arith.mulf %85, %86 : vector<512x128xf32>
    %88 = vector.broadcast %68 : vector<1x128xf32> to vector<512x128xf32>
    %89 = arith.addf %87, %88 : vector<512x128xf32>
    %cst_118 = arith.constant 0.000000e+00 : f32
    %90 = vector.broadcast %cst_118 : f32 to vector<512x128xf32>
    %91 = arith.maximumf %89, %90 : vector<512x128xf32>
    %92 = vector.shape_cast %91 : vector<512x128xf32> to vector<2x16x16x128xf32>
    %c0_119 = arith.constant 0 : index
    %c0_120 = arith.constant 0 : index
    %c0_121 = arith.constant 0 : index
    %c0_122 = arith.constant 0 : index
    %93 = vector.load %arg9[%c0_119, %c0_120, %c0_121, %c0_122] : memref<2x16x16x128xf32, #tpu.memory_space<vmem>>, vector<2x16x16x128xf32>
    tpu.vector_store %arg9[%c0_119, %c0_120, %c0_121, %c0_122], %92 {strides = array<i32>} : memref<2x16x16x128xf32, #tpu.memory_space<vmem>>, vector<2x16x16x128xf32>,
    return
  }
}

</mosaic_0001>

<llo_original>
// kernel: tpu_custom_call.1
$region0: #{tpu_custom_call.1}
  #allocation0 [shape = 'u32[]', space=smem, size = 0x4, offset = 0x4, fixed_abs, tag = 'smem constant byte address 0x4 - core index']
  #allocation1 [shape = 'u32[144,128]{1,0:T(1,128)}', space=vmem, size = 0x12000, scoped, tag = 'internal scratch']
  #allocation2 [shape = 'f32[2,18,18,128]{3,2,1,0:T(8,128)}', space=vmem, size = 0x6c000, scoped, tag = 'scratch operand']
  %s0 = inlined_call_operand.vmem [shape: f32[2,18,18,128], index: 0, kind: input, shape index: {}]
  %s1 = inlined_call_operand.vmem [shape: bf16[1152,128], index: 1, kind: input, shape index: {}]
  %s2 = inlined_call_operand.vmem [shape: f32[1,128], index: 2, kind: input, shape index: {}]
  %s3 = inlined_call_operand.vmem [shape: f32[1,128], index: 3, kind: input, shape index: {}]
  %s4 = inlined_call_operand.vmem [shape: f32[1,128], index: 4, kind: input, shape index: {}]
  %s5 = inlined_call_operand.vmem [shape: bf16[1152,128], index: 5, kind: input, shape index: {}]
  %s6 = inlined_call_operand.vmem [shape: f32[1,128], index: 6, kind: input, shape index: {}]
  %s7 = inlined_call_operand.vmem [shape: f32[1,128], index: 7, kind: input, shape index: {}]
  %s8 = inlined_call_operand.vmem [shape: f32[1,128], index: 8, kind: input, shape index: {}]
  %s9 = inlined_call_operand.hbm [shape: f32[2,16,16,128], index: 9, kind: output, shape index: {}]
  %s10 = sld [smem:[#allocation0]]
  $region46: #{tpu_custom_call.1} parent=0
    _
  %s12 = ssub.s32 1, %s10
  %s13 = scalar_select 0, %s12, %s10
  $region1: #{tpu_custom_call.1} parent=0
    #allocation3 [shape = 'u8[262144]{0}', space=vmem, size = 0x40000, scoped, tag = 'output window, operand 0, single buffered']
    #allocation4 [shape = 's32[1]{0}', space=sflag, size = 0x4, scoped, tag = 'scoped memory for tpu_custom_call.1']
    %14 = vsyncpa [#allocation4], 0
    // Predicated region
    $region2: #{tpu_custom_call.1} parent=1 // pred_check
      _
    $region3: #{tpu_custom_call.1} parent=1 // pred_check_branch
      %16 = sbr.rel (0) target = $region5
    $region4: #{tpu_custom_call.1} parent=1 // pred_region
      _
    $region5: #{tpu_custom_call.1} parent=1 // pred_fallthru
      _
    // Predicated region
    $region6: #{tpu_custom_call.1} parent=1 // pred_check
      _
    $region7: #{tpu_custom_call.1} parent=1 // pred_check_branch
      %18 = sbr.rel (0) target = $region9
    $region8: #{tpu_custom_call.1} parent=1 // pred_region
      _
    $region9: #{tpu_custom_call.1} parent=1 // pred_fallthru
      _
    // Predicated region
    $region10: #{tpu_custom_call.1} parent=1 // pred_check
      _
    $region11: #{tpu_custom_call.1} parent=1 // pred_check_branch
      %20 = sbr.rel (0) target = $region13
    $region12: #{tpu_custom_call.1} parent=1 // pred_region
      _
    $region13: #{tpu_custom_call.1} parent=1 // pred_fallthru
      _
    // Predicated region
    $region14: #{tpu_custom_call.1} parent=1 // pred_check
      _
    $region15: #{tpu_custom_call.1} parent=1 // pred_check_branch
      %22 = sbr.rel (0) target = $region17
    $region16: #{tpu_custom_call.1} parent=1 // pred_region
      _
    $region17: #{tpu_custom_call.1} parent=1 // pred_fallthru
      _
    // Predicated region
    $region18: #{tpu_custom_call.1} parent=1 // pred_check
      _
    $region19: #{tpu_custom_call.1} parent=1 // pred_check_branch
      %24 = sbr.rel (0) target = $region21
    $region20: #{tpu_custom_call.1} parent=1 // pred_region
      _
    $region21: #{tpu_custom_call.1} parent=1 // pred_fallthru
      _
    // Predicated region
    $region22: #{tpu_custom_call.1} parent=1 // pred_check
      _
    $region23: #{tpu_custom_call.1} parent=1 // pred_check_branch
      %26 = sbr.rel (0) target = $region25
    $region24: #{tpu_custom_call.1} parent=1 // pred_region
      _
    $region25: #{tpu_custom_call.1} parent=1 // pred_fallthru
      _
    // Predicated region
    $region26: #{tpu_custom_call.1} parent=1 // pred_check
      _
    $region27: #{tpu_custom_call.1} parent=1 // pred_check_branch
      %28 = sbr.rel (0) target = $region29
    $region28: #{tpu_custom_call.1} parent=1 // pred_region
      _
    $region29: #{tpu_custom_call.1} parent=1 // pred_fallthru
      _
    // Predicated region
    $region30: #{tpu_custom_call.1} parent=1 // pred_check
      _
    $region31: #{tpu_custom_call.1} parent=1 // pred_check_branch
      %30 = sbr.rel (0) target = $region33
    $region32: #{tpu_custom_call.1} parent=1 // pred_region
      _
    $region33: #{tpu_custom_call.1} parent=1 // pred_fallthru
      _
    // Predicated region
    $region34: #{tpu_custom_call.1} parent=1 // pred_check
      _
    $region35: #{tpu_custom_call.1} parent=1 // pred_check_branch
      %32 = sbr.rel (0) target = $region37
    $region36: #{tpu_custom_call.1} parent=1 // pred_region
      _
    $region37: #{tpu_custom_call.1} parent=1 // pred_fallthru
      _
    %v34 = vld [vmem:[%s0] sm:$0xff]
    %v35 = vld [vmem:[%s0 + $0x8] sm:$0xff]
    %v36 = vld [vmem:[%s0 + $0x18] sm:$0xff]
    %v37 = vld [vmem:[%s0 + $0x20] sm:$0xff]
    %v38 = vld [vmem:[%s0 + $0x30] sm:$0xff]
    %v39 = vld [vmem:[%s0 + $0x38] sm:$0xff]
    %v40 = vld [vmem:[%s0 + $0x48] sm:$0xff]
    %v41 = vld [vmem:[%s0 + $0x50] sm:$0xff]
    %v42 = vld [vmem:[%s0 + $0x60] sm:$0xff]
    %v43 = vld [vmem:[%s0 + $0x68] sm:$0xff]
    %v44 = vld [vmem:[%s0 + $0x78] sm:$0xff]
    %v45 = vld [vmem:[%s0 + $0x80] sm:$0xff]
    %v46 = vld [vmem:[%s0 + $0x90] sm:$0xff]
    %v47 = vld [vmem:[%s0 + $0x98] sm:$0xff]
    %v48 = vld [vmem:[%s0 + $0xa8] sm:$0xff]
    %v49 = vld [vmem:[%s0 + $0xb0] sm:$0xff]
    %v50 = vld [vmem:[%s0 + $0xc0] sm:$0xff]
    %v51 = vld [vmem:[%s0 + $0xc8] sm:$0xff]
    %v52 = vld [vmem:[%s0 + $0xd8] sm:$0xff]
    %v53 = vld [vmem:[%s0 + $0xe0] sm:$0xff]
    %v54 = vld [vmem:[%s0 + $0xf0] sm:$0xff]
    %v55 = vld [vmem:[%s0 + $0xf8] sm:$0xff]
    %v56 = vld [vmem:[%s0 + $0x108] sm:$0xff]
    %v57 = vld [vmem:[%s0 + $0x110] sm:$0xff]
    %v58 = vld [vmem:[%s0 + $0x120] sm:$0xff]
    %v59 = vld [vmem:[%s0 + $0x128] sm:$0xff]
    %v60 = vld [vmem:[%s0 + $0x138] sm:$0xff]
    %v61 = vld [vmem:[%s0 + $0x140] sm:$0xff]
    %v62 = vld [vmem:[%s0 + $0x150] sm:$0xff]
    %v63 = vld [vmem:[%s0 + $0x158] sm:$0xff]
    %v64 = vld [vmem:[%s0 + $0x168] sm:$0xff]
    %v65 = vld [vmem:[%s0 + $0x170] sm:$0xff]
    %v66 = vld [vmem:[%s0 + $0x1b0] sm:$0xff]
    %v67 = vld [vmem:[%s0 + $0x1b8] sm:$0xff]
    %v68 = vld [vmem:[%s0 + $0x1c8] sm:$0xff]
    %v69 = vld [vmem:[%s0 + $0x1d0] sm:$0xff]
    %v70 = vld [vmem:[%s0 + $0x1e0] sm:$0xff]
    %v71 = vld [vmem:[%s0 + $0x1e8] sm:$0xff]
    %v72 = vld [vmem:[%s0 + $0x1f8] sm:$0xff]
    %v73 = vld [vmem:[%s0 + $0x200] sm:$0xff]
    %v74 = vld [vmem:[%s0 + $0x210] sm:$0xff]
    %v75 = vld [vmem:[%s0 + $0x218] sm:$0xff]
    %v76 = vld [vmem:[%s0 + $0x228] sm:$0xff]
    %v77 = vld [vmem:[%s0 + $0x230] sm:$0xff]
    %v78 = vld [vmem:[%s0 + $0x240] sm:$0xff]
    %v79 = vld [vmem:[%s0 + $0x248] sm:$0xff]
    %v80 = vld [vmem:[%s0 + $0x258] sm:$0xff]
    %v81 = vld [vmem:[%s0 + $0x260] sm:$0xff]
    %v82 = vld [vmem:[%s0 + $0x270] sm:$0xff]
    %v83 = vld [vmem:[%s0 + $0x278] sm:$0xff]
    %v84 = vld [vmem:[%s0 + $0x288] sm:$0xff]
    %v85 = vld [vmem:[%s0 + $0x290] sm:$0xff]
    %v86 = vld [vmem:[%s0 + $0x2a0] sm:$0xff]
    %v87 = vld [vmem:[%s0 + $0x2a8] sm:$0xff]
    %v88 = vld [vmem:[%s0 + $0x2b8] sm:$0xff]
    %v89 = vld [vmem:[%s0 + $0x2c0] sm:$0xff]
    %v90 = vld [vmem:[%s0 + $0x2d0] sm:$0xff]
    %v91 = vld [vmem:[%s0 + $0x2d8] sm:$0xff]
    %v92 = vld [vmem:[%s0 + $0x2e8] sm:$0xff]
    %v93 = vld [vmem:[%s0 + $0x2f0] sm:$0xff]
    %v94 = vld [vmem:[%s0 + $0x300] sm:$0xff]
    %v95 = vld [vmem:[%s0 + $0x308] sm:$0xff]
    %v96 = vld [vmem:[%s0 + $0x318] sm:$0xff]
    %v97 = vld [vmem:[%s0 + $0x320] sm:$0xff]
    %v98 = vld [vmem:[%s0 + $0x1] sm:$0xff]
    %v99 = vld [vmem:[%s0 + $0x9] sm:$0xff]
    %v100 = vld [vmem:[%s0 + $0x19] sm:$0xff]
    %v101 = vld [vmem:[%s0 + $0x21] sm:$0xff]
    %v102 = vld [vmem:[%s0 + $0x31] sm:$0xff]
    %v103 = vld [vmem:[%s0 + $0x39] sm:$0xff]
    %v104 = vld [vmem:[%s0 + $0x49] sm:$0xff]
    %v105 = vld [vmem:[%s0 + $0x51] sm:$0xff]
    %v106 = vld [vmem:[%s0 + $0x61] sm:$0xff]
    %v107 = vld [vmem:[%s0 + $0x69] sm:$0xff]
    %v108 = vld [vmem:[%s0 + $0x79] sm:$0xff]
    %v109 = vld [vmem:[%s0 + $0x81] sm:$0xff]
    %v110 = vld [vmem:[%s0 + $0x91] sm:$0xff]
    %v111 = vld [vmem:[%s0 + $0x99] sm:$0xff]
    %v112 = vld [vmem:[%s0 + $0xa9] sm:$0xff]
    %v113 = vld [vmem:[%s0 + $0xb1] sm:$0xff]
    %v114 = vld [vmem:[%s0 + $0xc1] sm:$0xff]
    %v115 = vld [vmem:[%s0 + $0xc9] sm:$0xff]
    %v116 = vld [vmem:[%s0 + $0xd9] sm:$0xff]
    %v117 = vld [vmem:[%s0 + $0xe1] sm:$0xff]
    %v118 = vld [vmem:[%s0 + $0xf1] sm:$0xff]
    %v119 = vld [vmem:[%s0 + $0xf9] sm:$0xff]
    %v120 = vld [vmem:[%s0 + $0x109] sm:$0xff]
    %v121 = vld [vmem:[%s0 + $0x111] sm:$0xff]
    %v122 = vld [vmem:[%s0 + $0x121] sm:$0xff]
    %v123 = vld [vmem:[%s0 + $0x129] sm:$0xff]
    %v124 = vld [vmem:[%s0 + $0x139] sm:$0xff]
    %v125 = vld [vmem:[%s0 + $0x141] sm:$0xff]
    %v126 = vld [vmem:[%s0 + $0x151] sm:$0xff]
    %v127 = vld [vmem:[%s0 + $0x159] sm:$0xff]
    %v128 = vld [vmem:[%s0 + $0x169] sm:$0xff]
    %v129 = vld [vmem:[%s0 + $0x171] sm:$0xff]
    %v130 = vld [vmem:[%s0 + $0x1b1] sm:$0xff]
    %v131 = vld [vmem:[%s0 + $0x1b9] sm:$0xff]
    %v132 = vld [vmem:[%s0 + $0x1c9] sm:$0xff]
    %v133 = vld [vmem:[%s0 + $0x1d1] sm:$0xff]
    %v134 = vld [vmem:[%s0 + $0x1e1] sm:$0xff]
    %v135 = vld [vmem:[%s0 + $0x1e9] sm:$0xff]
    %v136 = vld [vmem:[%s0 + $0x1f9] sm:$0xff]
    %v137 = vld [vmem:[%s0 + $0x201] sm:$0xff]
    %v138 = vld [vmem:[%s0 + $0x211] sm:$0xff]
    %v139 = vld [vmem:[%s0 + $0x219] sm:$0xff]
    %v140 = vld [vmem:[%s0 + $0x229] sm:$0xff]
    %v141 = vld [vmem:[%s0 + $0x231] sm:$0xff]
    %v142 = vld [vmem:[%s0 + $0x241] sm:$0xff]
    %v143 = vld [vmem:[%s0 + $0x249] sm:$0xff]
    %v144 = vld [vmem:[%s0 + $0x259] sm:$0xff]
    %v145 = vld [vmem:[%s0 + $0x261] sm:$0xff]
    %v146 = vld [vmem:[%s0 + $0x271] sm:$0xff]
    %v147 = vld [vmem:[%s0 + $0x279] sm:$0xff]
    %v148 = vld [vmem:[%s0 + $0x289] sm:$0xff]
    %v149 = vld [vmem:[%s0 + $0x291] sm:$0xff]
    %v150 = vld [vmem:[%s0 + $0x2a1] sm:$0xff]
    %v151 = vld [vmem:[%s0 + $0x2a9] sm:$0xff]
    %v152 = vld [vmem:[%s0 + $0x2b9] sm:$0xff]
    %v153 = vld [vmem:[%s0 + $0x2c1] sm:$0xff]
    %v154 = vld [vmem:[%s0 + $0x2d1] sm:$0xff]
    %v155 = vld [vmem:[%s0 + $0x2d9] sm:$0xff]
    %v156 = vld [vmem:[%s0 + $0x2e9] sm:$0xff]
    %v157 = vld [vmem:[%s0 + $0x2f1] sm:$0xff]
    %v158 = vld [vmem:[%s0 + $0x301] sm:$0xff]
    %v159 = vld [vmem:[%s0 + $0x309] sm:$0xff]
    %v160 = vld [vmem:[%s0 + $0x319] sm:$0xff]
    %v161 = vld [vmem:[%s0 + $0x321] sm:$0xff]
    %v162 = vld [vmem:[%s0 + $0x2] sm:$0xff]
    %v163 = vld [vmem:[%s0 + $0xa] sm:$0xff]
    %v164 = vld [vmem:[%s0 + $0x1a] sm:$0xff]
    %v165 = vld [vmem:[%s0 + $0x22] sm:$0xff]
    %v166 = vld [vmem:[%s0 + $0x32] sm:$0xff]
    %v167 = vld [vmem:[%s0 + $0x3a] sm:$0xff]
    %v168 = vld [vmem:[%s0 + $0x4a] sm:$0xff]
    %v169 = vld [vmem:[%s0 + $0x52] sm:$0xff]
    %v170 = vld [vmem:[%s0 + $0x62] sm:$0xff]
    %v171 = vld [vmem:[%s0 + $0x6a] sm:$0xff]
    %v172 = vld [vmem:[%s0 + $0x7a] sm:$0xff]
    %v173 = vld [vmem:[%s0 + $0x82] sm:$0xff]
    %v174 = vld [vmem:[%s0 + $0x92] sm:$0xff]
    %v175 = vld [vmem:[%s0 + $0x9a] sm:$0xff]
    %v176 = vld [vmem:[%s0 + $0xaa] sm:$0xff]
    %v177 = vld [vmem:[%s0 + $0xb2] sm:$0xff]
    %v178 = vld [vmem:[%s0 + $0xc2] sm:$0xff]
    %v179 = vld [vmem:[%s0 + $0xca] sm:$0xff]
    %v180 = vld [vmem:[%s0 + $0xda] sm:$0xff]
    %v181 = vld [vmem:[%s0 + $0xe2] sm:$0xff]
    %v182 = vld [vmem:[%s0 + $0xf2] sm:$0xff]
    %v183 = vld [vmem:[%s0 + $0xfa] sm:$0xff]
    %v184 = vld [vmem:[%s0 + $0x10a] sm:$0xff]
    %v185 = vld [vmem:[%s0 + $0x112] sm:$0xff]
    %v186 = vld [vmem:[%s0 + $0x122] sm:$0xff]
    %v187 = vld [vmem:[%s0 + $0x12a] sm:$0xff]
    %v188 = vld [vmem:[%s0 + $0x13a] sm:$0xff]
    %v189 = vld [vmem:[%s0 + $0x142] sm:$0xff]
    %v190 = vld [vmem:[%s0 + $0x152] sm:$0xff]
    %v191 = vld [vmem:[%s0 + $0x15a] sm:$0xff]
    %v192 = vld [vmem:[%s0 + $0x16a] sm:$0xff]
    %v193 = vld [vmem:[%s0 + $0x172] sm:$0xff]
    %v194 = vld [vmem:[%s0 + $0x1b2] sm:$0xff]
    %v195 = vld [vmem:[%s0 + $0x1ba] sm:$0xff]
    %v196 = vld [vmem:[%s0 + $0x1ca] sm:$0xff]
    %v197 = vld [vmem:[%s0 + $0x1d2] sm:$0xff]
    %v198 = vld [vmem:[%s0 + $0x1e2] sm:$0xff]
    %v199 = vld [vmem:[%s0 + $0x1ea] sm:$0xff]
    %v200 = vld [vmem:[%s0 + $0x1fa] sm:$0xff]
    %v201 = vld [vmem:[%s0 + $0x202] sm:$0xff]
    %v202 = vld [vmem:[%s0 + $0x212] sm:$0xff]
    %v203 = vld [vmem:[%s0 + $0x21a] sm:$0xff]
    %v204 = vld [vmem:[%s0 + $0x22a] sm:$0xff]
    %v205 = vld [vmem:[%s0 + $0x232] sm:$0xff]
    %v206 = vld [vmem:[%s0 + $0x242] sm:$0xff]
    %v207 = vld [vmem:[%s0 + $0x24a] sm:$0xff]
    %v208 = vld [vmem:[%s0 + $0x25a] sm:$0xff]
    %v209 = vld [vmem:[%s0 + $0x262] sm:$0xff]
    %v210 = vld [vmem:[%s0 + $0x272] sm:$0xff]
    %v211 = vld [vmem:[%s0 + $0x27a] sm:$0xff]
    %v212 = vld [vmem:[%s0 + $0x28a] sm:$0xff]
    %v213 = vld [vmem:[%s0 + $0x292] sm:$0xff]
    %v214 = vld [vmem:[%s0 + $0x2a2] sm:$0xff]
    %v215 = vld [vmem:[%s0 + $0x2aa] sm:$0xff]
    %v216 = vld [vmem:[%s0 + $0x2ba] sm:$0xff]
    %v217 = vld [vmem:[%s0 + $0x2c2] sm:$0xff]
    %v218 = vld [vmem:[%s0 + $0x2d2] sm:$0xff]
    %v219 = vld [vmem:[%s0 + $0x2da] sm:$0xff]
    %v220 = vld [vmem:[%s0 + $0x2ea] sm:$0xff]
    %v221 = vld [vmem:[%s0 + $0x2f2] sm:$0xff]
    %v222 = vld [vmem:[%s0 + $0x302] sm:$0xff]
    %v223 = vld [vmem:[%s0 + $0x30a] sm:$0xff]
    %v224 = vld [vmem:[%s0 + $0x31a] sm:$0xff]
    %v225 = vld [vmem:[%s0 + $0x322] sm:$0xff]
    %s226 = scalar_lea.vmem %s0, 24
    %v227 = vld [vmem:[%s226] sm:$0xff]
    %v228 = vld [vmem:[%s226 + $0x8] sm:$0xff]
    %v229 = vld [vmem:[%s226 + $0x18] sm:$0xff]
    %v230 = vld [vmem:[%s226 + $0x20] sm:$0xff]
    %v231 = vld [vmem:[%s226 + $0x30] sm:$0xff]
    %v232 = vld [vmem:[%s226 + $0x38] sm:$0xff]
    %v233 = vld [vmem:[%s226 + $0x48] sm:$0xff]
    %v234 = vld [vmem:[%s226 + $0x50] sm:$0xff]
    %v235 = vld [vmem:[%s226 + $0x60] sm:$0xff]
    %v236 = vld [vmem:[%s226 + $0x68] sm:$0xff]
    %v237 = vld [vmem:[%s226 + $0x78] sm:$0xff]
    %v238 = vld [vmem:[%s226 + $0x80] sm:$0xff]
    %v239 = vld [vmem:[%s226 + $0x90] sm:$0xff]
    %v240 = vld [vmem:[%s226 + $0x98] sm:$0xff]
    %v241 = vld [vmem:[%s226 + $0xa8] sm:$0xff]
    %v242 = vld [vmem:[%s226 + $0xb0] sm:$0xff]
    %v243 = vld [vmem:[%s226 + $0xc0] sm:$0xff]
    %v244 = vld [vmem:[%s226 + $0xc8] sm:$0xff]
    %v245 = vld [vmem:[%s226 + $0xd8] sm:$0xff]
    %v246 = vld [vmem:[%s226 + $0xe0] sm:$0xff]
    %v247 = vld [vmem:[%s226 + $0xf0] sm:$0xff]
    %v248 = vld [vmem:[%s226 + $0xf8] sm:$0xff]
    %v249 = vld [vmem:[%s226 + $0x108] sm:$0xff]
    %v250 = vld [vmem:[%s226 + $0x110] sm:$0xff]
    %v251 = vld [vmem:[%s226 + $0x120] sm:$0xff]
    %v252 = vld [vmem:[%s226 + $0x128] sm:$0xff]
    %v253 = vld [vmem:[%s226 + $0x138] sm:$0xff]
    %v254 = vld [vmem:[%s226 + $0x140] sm:$0xff]
    %v255 = vld [vmem:[%s226 + $0x150] sm:$0xff]
    %v256 = vld [vmem:[%s226 + $0x158] sm:$0xff]
    %v257 = vld [vmem:[%s226 + $0x168] sm:$0xff]
    %v258 = vld [vmem:[%s226 + $0x170] sm:$0xff]
    %v259 = vld [vmem:[%s226 + $0x1b0] sm:$0xff]
    %v260 = vld [vmem:[%s226 + $0x1b8] sm:$0xff]
    %v261 = vld [vmem:[%s226 + $0x1c8] sm:$0xff]
    %v262 = vld [vmem:[%s226 + $0x1d0] sm:$0xff]
    %v263 = vld [vmem:[%s226 + $0x1e0] sm:$0xff]
    %v264 = vld [vmem:[%s226 + $0x1e8] sm:$0xff]
    %v265 = vld [vmem:[%s226 + $0x1f8] sm:$0xff]
    %v266 = vld [vmem:[%s226 + $0x200] sm:$0xff]
    %v267 = vld [vmem:[%s226 + $0x210] sm:$0xff]
    %v268 = vld [vmem:[%s226 + $0x218] sm:$0xff]
    %v269 = vld [vmem:[%s226 + $0x228] sm:$0xff]
    %v270 = vld [vmem:[%s226 + $0x230] sm:$0xff]
    %v271 = vld [vmem:[%s226 + $0x240] sm:$0xff]
    %v272 = vld [vmem:[%s226 + $0x248] sm:$0xff]
    %v273 = vld [vmem:[%s226 + $0x258] sm:$0xff]
    %v274 = vld [vmem:[%s226 + $0x260] sm:$0xff]
    %v275 = vld [vmem:[%s226 + $0x270] sm:$0xff]
    %v276 = vld [vmem:[%s226 + $0x278] sm:$0xff]
    %v277 = vld [vmem:[%s226 + $0x288] sm:$0xff]
    %v278 = vld [vmem:[%s226 + $0x290] sm:$0xff]
    %v279 = vld [vmem:[%s226 + $0x2a0] sm:$0xff]
    %v280 = vld [vmem:[%s226 + $0x2a8] sm:$0xff]
    %v281 = vld [vmem:[%s226 + $0x2b8] sm:$0xff]
    %v282 = vld [vmem:[%s226 + $0x2c0] sm:$0xff]
    %v283 = vld [vmem:[%s226 + $0x2d0] sm:$0xff]
    %v284 = vld [vmem:[%s226 + $0x2d8] sm:$0xff]
    %v285 = vld [vmem:[%s226 + $0x2e8] sm:$0xff]
    %v286 = vld [vmem:[%s226 + $0x2f0] sm:$0xff]
    %v287 = vld [vmem:[%s226 + $0x300] sm:$0xff]
    %v288 = vld [vmem:[%s226 + $0x308] sm:$0xff]
    %v289 = vld [vmem:[%s226 + $0x318] sm:$0xff]
    %v290 = vld [vmem:[%s226 + $0x320] sm:$0xff]
    %v291 = vld [vmem:[%s226 + $0x1] sm:$0xff]
    %v292 = vld [vmem:[%s226 + $0x9] sm:$0xff]
    %v293 = vld [vmem:[%s226 + $0x19] sm:$0xff]
    %v294 = vld [vmem:[%s226 + $0x21] sm:$0xff]
    %v295 = vld [vmem:[%s226 + $0x31] sm:$0xff]
    %v296 = vld [vmem:[%s226 + $0x39] sm:$0xff]
    %v297 = vld [vmem:[%s226 + $0x49] sm:$0xff]
    %v298 = vld [vmem:[%s226 + $0x51] sm:$0xff]
    %v299 = vld [vmem:[%s226 + $0x61] sm:$0xff]
    %v300 = vld [vmem:[%s226 + $0x69] sm:$0xff]
    %v301 = vld [vmem:[%s226 + $0x79] sm:$0xff]
    %v302 = vld [vmem:[%s226 + $0x81] sm:$0xff]
    %v303 = vld [vmem:[%s226 + $0x91] sm:$0xff]
    %v304 = vld [vmem:[%s226 + $0x99] sm:$0xff]
    %v305 = vld [vmem:[%s226 + $0xa9] sm:$0xff]
    %v306 = vld [vmem:[%s226 + $0xb1] sm:$0xff]
    %v307 = vld [vmem:[%s226 + $0xc1] sm:$0xff]
    %v308 = vld [vmem:[%s226 + $0xc9] sm:$0xff]
    %v309 = vld [vmem:[%s226 + $0xd9] sm:$0xff]
    %v310 = vld [vmem:[%s226 + $0xe1] sm:$0xff]
    %v311 = vld [vmem:[%s226 + $0xf1] sm:$0xff]
    %v312 = vld [vmem:[%s226 + $0xf9] sm:$0xff]
    %v313 = vld [vmem:[%s226 + $0x109] sm:$0xff]
    %v314 = vld [vmem:[%s226 + $0x111] sm:$0xff]
    %v315 = vld [vmem:[%s226 + $0x121] sm:$0xff]
    %v316 = vld [vmem:[%s226 + $0x129] sm:$0xff]
    %v317 = vld [vmem:[%s226 + $0x139] sm:$0xff]
    %v318 = vld [vmem:[%s226 + $0x141] sm:$0xff]
    %v319 = vld [vmem:[%s226 + $0x151] sm:$0xff]
    %v320 = vld [vmem:[%s226 + $0x159] sm:$0xff]
    %v321 = vld [vmem:[%s226 + $0x169] sm:$0xff]
    %v322 = vld [vmem:[%s226 + $0x171] sm:$0xff]
    %v323 = vld [vmem:[%s226 + $0x1b1] sm:$0xff]
    %v324 = vld [vmem:[%s226 + $0x1b9] sm:$0xff]
    %v325 = vld [vmem:[%s226 + $0x1c9] sm:$0xff]
    %v326 = vld [vmem:[%s226 + $0x1d1] sm:$0xff]
    %v327 = vld [vmem:[%s226 + $0x1e1] sm:$0xff]
    %v328 = vld [vmem:[%s226 + $0x1e9] sm:$0xff]
    %v329 = vld [vmem:[%s226 + $0x1f9] sm:$0xff]
    %v330 = vld [vmem:[%s226 + $0x201] sm:$0xff]
    %v331 = vld [vmem:[%s226 + $0x211] sm:$0xff]
    %v332 = vld [vmem:[%s226 + $0x219] sm:$0xff]
    %v333 = vld [vmem:[%s226 + $0x229] sm:$0xff]
    %v334 = vld [vmem:[%s226 + $0x231] sm:$0xff]
    %v335 = vld [vmem:[%s226 + $0x241] sm:$0xff]
    %v336 = vld [vmem:[%s226 + $0x249] sm:$0xff]
    %v337 = vld [vmem:[%s226 + $0x259] sm:$0xff]
    %v338 = vld [vmem:[%s226 + $0x261] sm:$0xff]
    %v339 = vld [vmem:[%s226 + $0x271] sm:$0xff]
    %v340 = vld [vmem:[%s226 + $0x279] sm:$0xff]
    %v341 = vld [vmem:[%s226 + $0x289] sm:$0xff]
    %v342 = vld [vmem:[%s226 + $0x291] sm:$0xff]
    %v343 = vld [vmem:[%s226 + $0x2a1] sm:$0xff]
    %v344 = vld [vmem:[%s226 + $0x2a9] sm:$0xff]
    %v345 = vld [vmem:[%s226 + $0x2b9] sm:$0xff]
    %v346 = vld [vmem:[%s226 + $0x2c1] sm:$0xff]
    %v347 = vld [vmem:[%s226 + $0x2d1] sm:$0xff]
    %v348 = vld [vmem:[%s226 + $0x2d9] sm:$0xff]
    %v349 = vld [vmem:[%s226 + $0x2e9] sm:$0xff]
    %v350 = vld [vmem:[%s226 + $0x2f1] sm:$0xff]
    %v351 = vld [vmem:[%s226 + $0x301] sm:$0xff]
    %v352 = vld [vmem:[%s226 + $0x309] sm:$0xff]
    %v353 = vld [vmem:[%s226 + $0x319] sm:$0xff]
    %v354 = vld [vmem:[%s226 + $0x321] sm:$0xff]
    %v355 = vld [vmem:[%s226 + $0x2] sm:$0xff]
    %v356 = vld [vmem:[%s226 + $0xa] sm:$0xff]
    %v357 = vld [vmem:[%s226 + $0x1a] sm:$0xff]
    %v358 = vld [vmem:[%s226 + $0x22] sm:$0xff]
    %v359 = vld [vmem:[%s226 + $0x32] sm:$0xff]
    %v360 = vld [vmem:[%s226 + $0x3a] sm:$0xff]
    %v361 = vld [vmem:[%s226 + $0x4a] sm:$0xff]
    %v362 = vld [vmem:[%s226 + $0x52] sm:$0xff]
    %v363 = vld [vmem:[%s226 + $0x62] sm:$0xff]
    %v364 = vld [vmem:[%s226 + $0x6a] sm:$0xff]
    %v365 = vld [vmem:[%s226 + $0x7a] sm:$0xff]
    %v366 = vld [vmem:[%s226 + $0x82] sm:$0xff]
    %v367 = vld [vmem:[%s226 + $0x92] sm:$0xff]
    %v368 = vld [vmem:[%s226 + $0x9a] sm:$0xff]
    %v369 = vld [vmem:[%s226 + $0xaa] sm:$0xff]
    %v370 = vld [vmem:[%s226 + $0xb2] sm:$0xff]
    %v371 = vld [vmem:[%s226 + $0xc2] sm:$0xff]
    %v372 = vld [vmem:[%s226 + $0xca] sm:$0xff]
    %v373 = vld [vmem:[%s226 + $0xda] sm:$0xff]
    %v374 = vld [vmem:[%s226 + $0xe2] sm:$0xff]
    %v375 = vld [vmem:[%s226 + $0xf2] sm:$0xff]
    %v376 = vld [vmem:[%s226 + $0xfa] sm:$0xff]
    %v377 = vld [vmem:[%s226 + $0x10a] sm:$0xff]
    %v378 = vld [vmem:[%s226 + $0x112] sm:$0xff]
    %v379 = vld [vmem:[%s226 + $0x122] sm:$0xff]
    %v380 = vld [vmem:[%s226 + $0x12a] sm:$0xff]
    %v381 = vld [vmem:[%s226 + $0x13a] sm:$0xff]
    %v382 = vld [vmem:[%s226 + $0x142] sm:$0xff]
    %v383 = vld [vmem:[%s226 + $0x152] sm:$0xff]
    %v384 = vld [vmem:[%s226 + $0x15a] sm:$0xff]
    %v385 = vld [vmem:[%s226 + $0x16a] sm:$0xff]
    %v386 = vld [vmem:[%s226 + $0x172] sm:$0xff]
    %v387 = vld [vmem:[%s226 + $0x1b2] sm:$0xff]
    %v388 = vld [vmem:[%s226 + $0x1ba] sm:$0xff]
    %v389 = vld [vmem:[%s226 + $0x1ca] sm:$0xff]
    %v390 = vld [vmem:[%s226 + $0x1d2] sm:$0xff]
    %v391 = vld [vmem:[%s226 + $0x1e2] sm:$0xff]
    %v392 = vld [vmem:[%s226 + $0x1ea] sm:$0xff]
    %v393 = vld [vmem:[%s226 + $0x1fa] sm:$0xff]
    %v394 = vld [vmem:[%s226 + $0x202] sm:$0xff]
    %v395 = vld [vmem:[%s226 + $0x212] sm:$0xff]
    %v396 = vld [vmem:[%s226 + $0x21a] sm:$0xff]
    %v397 = vld [vmem:[%s226 + $0x22a] sm:$0xff]
    %v398 = vld [vmem:[%s226 + $0x232] sm:$0xff]
    %v399 = vld [vmem:[%s226 + $0x242] sm:$0xff]
    %v400 = vld [vmem:[%s226 + $0x24a] sm:$0xff]
    %v401 = vld [vmem:[%s226 + $0x25a] sm:$0xff]
    %v402 = vld [vmem:[%s226 + $0x262] sm:$0xff]
    %v403 = vld [vmem:[%s226 + $0x272] sm:$0xff]
    %v404 = vld [vmem:[%s226 + $0x27a] sm:$0xff]
    %v405 = vld [vmem:[%s226 + $0x28a] sm:$0xff]
    %v406 = vld [vmem:[%s226 + $0x292] sm:$0xff]
    %v407 = vld [vmem:[%s226 + $0x2a2] sm:$0xff]
    %v408 = vld [vmem:[%s226 + $0x2aa] sm:$0xff]
    %v409 = vld [vmem:[%s226 + $0x2ba] sm:$0xff]
    %v410 = vld [vmem:[%s226 + $0x2c2] sm:$0xff]
    %v411 = vld [vmem:[%s226 + $0x2d2] sm:$0xff]
    %v412 = vld [vmem:[%s226 + $0x2da] sm:$0xff]
    %v413 = vld [vmem:[%s226 + $0x2ea] sm:$0xff]
    %v414 = vld [vmem:[%s226 + $0x2f2] sm:$0xff]
    %v415 = vld [vmem:[%s226 + $0x302] sm:$0xff]
    %v416 = vld [vmem:[%s226 + $0x30a] sm:$0xff]
    %v417 = vld [vmem:[%s226 + $0x31a] sm:$0xff]
    %v418 = vld [vmem:[%s226 + $0x322] sm:$0xff]
    %s419 = scalar_lea.vmem %s0, 48
    %v420 = vld [vmem:[%s419] sm:$0xff]
    %v421 = vld [vmem:[%s419 + $0x8] sm:$0xff]
    %v422 = vld [vmem:[%s419 + $0x18] sm:$0xff]
    %v423 = vld [vmem:[%s419 + $0x20] sm:$0xff]
    %v424 = vld [vmem:[%s419 + $0x30] sm:$0xff]
    %v425 = vld [vmem:[%s419 + $0x38] sm:$0xff]
    %v426 = vld [vmem:[%s419 + $0x48] sm:$0xff]
    %v427 = vld [vmem:[%s419 + $0x50] sm:$0xff]
    %v428 = vld [vmem:[%s419 + $0x60] sm:$0xff]
    %v429 = vld [vmem:[%s419 + $0x68] sm:$0xff]
    %v430 = vld [vmem:[%s419 + $0x78] sm:$0xff]
    %v431 = vld [vmem:[%s419 + $0x80] sm:$0xff]
    %v432 = vld [vmem:[%s419 + $0x90] sm:$0xff]
    %v433 = vld [vmem:[%s419 + $0x98] sm:$0xff]
    %v434 = vld [vmem:[%s419 + $0xa8] sm:$0xff]
    %v435 = vld [vmem:[%s419 + $0xb0] sm:$0xff]
    %v436 = vld [vmem:[%s419 + $0xc0] sm:$0xff]
    %v437 = vld [vmem:[%s419 + $0xc8] sm:$0xff]
    %v438 = vld [vmem:[%s419 + $0xd8] sm:$0xff]
    %v439 = vld [vmem:[%s419 + $0xe0] sm:$0xff]
    %v440 = vld [vmem:[%s419 + $0xf0] sm:$0xff]
    %v441 = vld [vmem:[%s419 + $0xf8] sm:$0xff]
    %v442 = vld [vmem:[%s419 + $0x108] sm:$0xff]
    %v443 = vld [vmem:[%s419 + $0x110] sm:$0xff]
    %v444 = vld [vmem:[%s419 + $0x120] sm:$0xff]
    %v445 = vld [vmem:[%s419 + $0x128] sm:$0xff]
    %v446 = vld [vmem:[%s419 + $0x138] sm:$0xff]
    %v447 = vld [vmem:[%s419 + $0x140] sm:$0xff]
    %v448 = vld [vmem:[%s419 + $0x150] sm:$0xff]
    %v449 = vld [vmem:[%s419 + $0x158] sm:$0xff]
    %v450 = vld [vmem:[%s419 + $0x168] sm:$0xff]
    %v451 = vld [vmem:[%s419 + $0x170] sm:$0xff]
    %v452 = vld [vmem:[%s419 + $0x1b0] sm:$0xff]
    %v453 = vld [vmem:[%s419 + $0x1b8] sm:$0xff]
    %v454 = vld [vmem:[%s419 + $0x1c8] sm:$0xff]
    %v455 = vld [vmem:[%s419 + $0x1d0] sm:$0xff]
    %v456 = vld [vmem:[%s419 + $0x1e0] sm:$0xff]
    %v457 = vld [vmem:[%s419 + $0x1e8] sm:$0xff]
    %v458 = vld [vmem:[%s419 + $0x1f8] sm:$0xff]
    %v459 = vld [vmem:[%s419 + $0x200] sm:$0xff]
    %v460 = vld [vmem:[%s419 + $0x210] sm:$0xff]
    %v461 = vld [vmem:[%s419 + $0x218] sm:$0xff]
    %v462 = vld [vmem:[%s419 + $0x228] sm:$0xff]
    %v463 = vld [vmem:[%s419 + $0x230] sm:$0xff]
    %v464 = vld [vmem:[%s419 + $0x240] sm:$0xff]
    %v465 = vld [vmem:[%s419 + $0x248] sm:$0xff]
    %v466 = vld [vmem:[%s419 + $0x258] sm:$0xff]
    %v467 = vld [vmem:[%s419 + $0x260] sm:$0xff]
    %v468 = vld [vmem:[%s419 + $0x270] sm:$0xff]
    %v469 = vld [vmem:[%s419 + $0x278] sm:$0xff]
    %v470 = vld [vmem:[%s419 + $0x288] sm:$0xff]
    %v471 = vld [vmem:[%s419 + $0x290] sm:$0xff]
    %v472 = vld [vmem:[%s419 + $0x2a0] sm:$0xff]
    %v473 = vld [vmem:[%s419 + $0x2a8] sm:$0xff]
    %v474 = vld [vmem:[%s419 + $0x2b8] sm:$0xff]
    %v475 = vld [vmem:[%s419 + $0x2c0] sm:$0xff]
    %v476 = vld [vmem:[%s419 + $0x2d0] sm:$0xff]
    %v477 = vld [vmem:[%s419 + $0x2d8] sm:$0xff]
    %v478 = vld [vmem:[%s419 + $0x2e8] sm:$0xff]
    %v479 = vld [vmem:[%s419 + $0x2f0] sm:$0xff]
    %v480 = vld [vmem:[%s419 + $0x300] sm:$0xff]
    %v481 = vld [vmem:[%s419 + $0x308] sm:$0xff]
    %v482 = vld [vmem:[%s419 + $0x318] sm:$0xff]
    %v483 = vld [vmem:[%s419 + $0x320] sm:$0xff]
    %v484 = vld [vmem:[%s419 + $0x1] sm:$0xff]
    %v485 = vld [vmem:[%s419 + $0x9] sm:$0xff]
    %v486 = vld [vmem:[%s419 + $0x19] sm:$0xff]
    %v487 = vld [vmem:[%s419 + $0x21] sm:$0xff]
    %v488 = vld [vmem:[%s419 + $0x31] sm:$0xff]
    %v489 = vld [vmem:[%s419 + $0x39] sm:$0xff]
    %v490 = vld [vmem:[%s419 + $0x49] sm:$0xff]
    %v491 = vld [vmem:[%s419 + $0x51] sm:$0xff]
    %v492 = vld [vmem:[%s419 + $0x61] sm:$0xff]
    %v493 = vld [vmem:[%s419 + $0x69] sm:$0xff]
    %v494 = vld [vmem:[%s419 + $0x79] sm:$0xff]
    %v495 = vld [vmem:[%s419 + $0x81] sm:$0xff]
    %v496 = vld [vmem:[%s419 + $0x91] sm:$0xff]
    %v497 = vld [vmem:[%s419 + $0x99] sm:$0xff]
    %v498 = vld [vmem:[%s419 + $0xa9] sm:$0xff]
    %v499 = vld [vmem:[%s419 + $0xb1] sm:$0xff]
    %v500 = vld [vmem:[%s419 + $0xc1] sm:$0xff]
    %v501 = vld [vmem:[%s419 + $0xc9] sm:$0xff]
    %v502 = vld [vmem:[%s419 + $0xd9] sm:$0xff]
    %v503 = vld [vmem:[%s419 + $0xe1] sm:$0xff]
    %v504 = vld [vmem:[%s419 + $0xf1] sm:$0xff]
    %v505 = vld [vmem:[%s419 + $0xf9] sm:$0xff]
    %v506 = vld [vmem:[%s419 + $0x109] sm:$0xff]
    %v507 = vld [vmem:[%s419 + $0x111] sm:$0xff]
    %v508 = vld [vmem:[%s419 + $0x121] sm:$0xff]
    %v509 = vld [vmem:[%s419 + $0x129] sm:$0xff]
    %v510 = vld [vmem:[%s419 + $0x139] sm:$0xff]
    %v511 = vld [vmem:[%s419 + $0x141] sm:$0xff]
    %v512 = vld [vmem:[%s419 + $0x151] sm:$0xff]
    %v513 = vld [vmem:[%s419 + $0x159] sm:$0xff]
    %v514 = vld [vmem:[%s419 + $0x169] sm:$0xff]
    %v515 = vld [vmem:[%s419 + $0x171] sm:$0xff]
    %v516 = vld [vmem:[%s419 + $0x1b1] sm:$0xff]
    %v517 = vld [vmem:[%s419 + $0x1b9] sm:$0xff]
    %v518 = vld [vmem:[%s419 + $0x1c9] sm:$0xff]
    %v519 = vld [vmem:[%s419 + $0x1d1] sm:$0xff]
    %v520 = vld [vmem:[%s419 + $0x1e1] sm:$0xff]
    %v521 = vld [vmem:[%s419 + $0x1e9] sm:$0xff]
    %v522 = vld [vmem:[%s419 + $0x1f9] sm:$0xff]
    %v523 = vld [vmem:[%s419 + $0x201] sm:$0xff]
    %v524 = vld [vmem:[%s419 + $0x211] sm:$0xff]
    %v525 = vld [vmem:[%s419 + $0x219] sm:$0xff]
    %v526 = vld [vmem:[%s419 + $0x229] sm:$0xff]
    %v527 = vld [vmem:[%s419 + $0x231] sm:$0xff]
    %v528 = vld [vmem:[%s419 + $0x241] sm:$0xff]
    %v529 = vld [vmem:[%s419 + $0x249] sm:$0xff]
    %v530 = vld [vmem:[%s419 + $0x259] sm:$0xff]
    %v531 = vld [vmem:[%s419 + $0x261] sm:$0xff]
    %v532 = vld [vmem:[%s419 + $0x271] sm:$0xff]
    %v533 = vld [vmem:[%s419 + $0x279] sm:$0xff]
    %v534 = vld [vmem:[%s419 + $0x289] sm:$0xff]
    %v535 = vld [vmem:[%s419 + $0x291] sm:$0xff]
    %v536 = vld [vmem:[%s419 + $0x2a1] sm:$0xff]
    %v537 = vld [vmem:[%s419 + $0x2a9] sm:$0xff]
    %v538 = vld [vmem:[%s419 + $0x2b9] sm:$0xff]
    %v539 = vld [vmem:[%s419 + $0x2c1] sm:$0xff]
    %v540 = vld [vmem:[%s419 + $0x2d1] sm:$0xff]
    %v541 = vld [vmem:[%s419 + $0x2d9] sm:$0xff]
    %v542 = vld [vmem:[%s419 + $0x2e9] sm:$0xff]
    %v543 = vld [vmem:[%s419 + $0x2f1] sm:$0xff]
    %v544 = vld [vmem:[%s419 + $0x301] sm:$0xff]
    %v545 = vld [vmem:[%s419 + $0x309] sm:$0xff]
    %v546 = vld [vmem:[%s419 + $0x319] sm:$0xff]
    %v547 = vld [vmem:[%s419 + $0x321] sm:$0xff]
    %v548 = vld [vmem:[%s419 + $0x2] sm:$0xff]
    %v549 = vld [vmem:[%s419 + $0xa] sm:$0xff]
    %v550 = vld [vmem:[%s419 + $0x1a] sm:$0xff]
    %v551 = vld [vmem:[%s419 + $0x22] sm:$0xff]
    %v552 = vld [vmem:[%s419 + $0x32] sm:$0xff]
    %v553 = vld [vmem:[%s419 + $0x3a] sm:$0xff]
    %v554 = vld [vmem:[%s419 + $0x4a] sm:$0xff]
    %v555 = vld [vmem:[%s419 + $0x52] sm:$0xff]
    %v556 = vld [vmem:[%s419 + $0x62] sm:$0xff]
    %v557 = vld [vmem:[%s419 + $0x6a] sm:$0xff]
    %v558 = vld [vmem:[%s419 + $0x7a] sm:$0xff]
    %v559 = vld [vmem:[%s419 + $0x82] sm:$0xff]
    %v560 = vld [vmem:[%s419 + $0x92] sm:$0xff]
    %v561 = vld [vmem:[%s419 + $0x9a] sm:$0xff]
    %v562 = vld [vmem:[%s419 + $0xaa] sm:$0xff]
    %v563 = vld [vmem:[%s419 + $0xb2] sm:$0xff]
    %v564 = vld [vmem:[%s419 + $0xc2] sm:$0xff]
    %v565 = vld [vmem:[%s419 + $0xca] sm:$0xff]
    %v566 = vld [vmem:[%s419 + $0xda] sm:$0xff]
    %v567 = vld [vmem:[%s419 + $0xe2] sm:$0xff]
    %v568 = vld [vmem:[%s419 + $0xf2] sm:$0xff]
    %v569 = vld [vmem:[%s419 + $0xfa] sm:$0xff]
    %v570 = vld [vmem:[%s419 + $0x10a] sm:$0xff]
    %v571 = vld [vmem:[%s419 + $0x112] sm:$0xff]
    %v572 = vld [vmem:[%s419 + $0x122] sm:$0xff]
    %v573 = vld [vmem:[%s419 + $0x12a] sm:$0xff]
    %v574 = vld [vmem:[%s419 + $0x13a] sm:$0xff]
    %v575 = vld [vmem:[%s419 + $0x142] sm:$0xff]
    %v576 = vld [vmem:[%s419 + $0x152] sm:$0xff]
    %v577 = vld [vmem:[%s419 + $0x15a] sm:$0xff]
    %v578 = vld [vmem:[%s419 + $0x16a] sm:$0xff]
    %v579 = vld [vmem:[%s419 + $0x172] sm:$0xff]
    %v580 = vld [vmem:[%s419 + $0x1b2] sm:$0xff]
    %v581 = vld [vmem:[%s419 + $0x1ba] sm:$0xff]
    %v582 = vld [vmem:[%s419 + $0x1ca] sm:$0xff]
    %v583 = vld [vmem:[%s419 + $0x1d2] sm:$0xff]
    %v584 = vld [vmem:[%s419 + $0x1e2] sm:$0xff]
    %v585 = vld [vmem:[%s419 + $0x1ea] sm:$0xff]
    %v586 = vld [vmem:[%s419 + $0x1fa] sm:$0xff]
    %v587 = vld [vmem:[%s419 + $0x202] sm:$0xff]
    %v588 = vld [vmem:[%s419 + $0x212] sm:$0xff]
    %v589 = vld [vmem:[%s419 + $0x21a] sm:$0xff]
    %v590 = vld [vmem:[%s419 + $0x22a] sm:$0xff]
    %v591 = vld [vmem:[%s419 + $0x232] sm:$0xff]
    %v592 = vld [vmem:[%s419 + $0x242] sm:$0xff]
    %v593 = vld [vmem:[%s419 + $0x24a] sm:$0xff]
    %v594 = vld [vmem:[%s419 + $0x25a] sm:$0xff]
    %v595 = vld [vmem:[%s419 + $0x262] sm:$0xff]
    %v596 = vld [vmem:[%s419 + $0x272] sm:$0xff]
    %v597 = vld [vmem:[%s419 + $0x27a] sm:$0xff]
    %v598 = vld [vmem:[%s419 + $0x28a] sm:$0xff]
    %v599 = vld [vmem:[%s419 + $0x292] sm:$0xff]
    %v600 = vld [vmem:[%s419 + $0x2a2] sm:$0xff]
    %v601 = vld [vmem:[%s419 + $0x2aa] sm:$0xff]
    %v602 = vld [vmem:[%s419 + $0x2ba] sm:$0xff]
    %v603 = vld [vmem:[%s419 + $0x2c2] sm:$0xff]
    %v604 = vld [vmem:[%s419 + $0x2d2] sm:$0xff]
    %v605 = vld [vmem:[%s419 + $0x2da] sm:$0xff]
    %v606 = vld [vmem:[%s419 + $0x2ea] sm:$0xff]
    %v607 = vld [vmem:[%s419 + $0x2f2] sm:$0xff]
    %v608 = vld [vmem:[%s419 + $0x302] sm:$0xff]
    %v609 = vld [vmem:[%s419 + $0x30a] sm:$0xff]
    %v610 = vld [vmem:[%s419 + $0x31a] sm:$0xff]
    %v611 = vld [vmem:[%s419 + $0x322] sm:$0xff]
    %v612 = vpack.c.bf16 %v35, %v34
    %v613 = vpack.c.bf16 %v99, %v98
    %v614 = vpack.c.bf16 %v163, %v162
    %v615 = vpack.c.bf16 %v228, %v227
    %v616 = vpack.c.bf16 %v292, %v291
    %v617 = vpack.c.bf16 %v356, %v355
    %v618 = vpack.c.bf16 %v421, %v420
    %v619 = vpack.c.bf16 %v485, %v484
    %v620 = vpack.c.bf16 %v549, %v548
    %v621 = vpack.c.bf16 %v37, %v36
    %v622 = vpack.c.bf16 %v101, %v100
    %v623 = vpack.c.bf16 %v165, %v164
    %v624 = vpack.c.bf16 %v230, %v229
    %v625 = vpack.c.bf16 %v294, %v293
    %v626 = vpack.c.bf16 %v358, %v357
    %v627 = vpack.c.bf16 %v423, %v422
    %v628 = vpack.c.bf16 %v487, %v486
    %v629 = vpack.c.bf16 %v551, %v550
    %v630 = vpack.c.bf16 %v39, %v38
    %v631 = vpack.c.bf16 %v103, %v102
    %v632 = vpack.c.bf16 %v167, %v166
    %v633 = vpack.c.bf16 %v232, %v231
    %v634 = vpack.c.bf16 %v296, %v295
    %v635 = vpack.c.bf16 %v360, %v359
    %v636 = vpack.c.bf16 %v425, %v424
    %v637 = vpack.c.bf16 %v489, %v488
    %v638 = vpack.c.bf16 %v553, %v552
    %v639 = vpack.c.bf16 %v41, %v40
    %v640 = vpack.c.bf16 %v105, %v104
    %v641 = vpack.c.bf16 %v169, %v168
    %v642 = vpack.c.bf16 %v234, %v233
    %v643 = vpack.c.bf16 %v298, %v297
    %v644 = vpack.c.bf16 %v362, %v361
    %v645 = vpack.c.bf16 %v427, %v426
    %v646 = vpack.c.bf16 %v491, %v490
    %v647 = vpack.c.bf16 %v555, %v554
    %v648 = vpack.c.bf16 %v43, %v42
    %v649 = vpack.c.bf16 %v107, %v106
    %v650 = vpack.c.bf16 %v171, %v170
    %v651 = vpack.c.bf16 %v236, %v235
    %v652 = vpack.c.bf16 %v300, %v299
    %v653 = vpack.c.bf16 %v364, %v363
    %v654 = vpack.c.bf16 %v429, %v428
    %v655 = vpack.c.bf16 %v493, %v492
    %v656 = vpack.c.bf16 %v557, %v556
    %v657 = vpack.c.bf16 %v45, %v44
    %v658 = vpack.c.bf16 %v109, %v108
    %v659 = vpack.c.bf16 %v173, %v172
    %v660 = vpack.c.bf16 %v238, %v237
    %v661 = vpack.c.bf16 %v302, %v301
    %v662 = vpack.c.bf16 %v366, %v365
    %v663 = vpack.c.bf16 %v431, %v430
    %v664 = vpack.c.bf16 %v495, %v494
    %v665 = vpack.c.bf16 %v559, %v558
    %v666 = vpack.c.bf16 %v47, %v46
    %v667 = vpack.c.bf16 %v111, %v110
    %v668 = vpack.c.bf16 %v175, %v174
    %v669 = vpack.c.bf16 %v240, %v239
    %v670 = vpack.c.bf16 %v304, %v303
    %v671 = vpack.c.bf16 %v368, %v367
    %v672 = vpack.c.bf16 %v433, %v432
    %v673 = vpack.c.bf16 %v497, %v496
    %v674 = vpack.c.bf16 %v561, %v560
    %v675 = vpack.c.bf16 %v49, %v48
    %v676 = vpack.c.bf16 %v113, %v112
    %v677 = vpack.c.bf16 %v177, %v176
    %v678 = vpack.c.bf16 %v242, %v241
    %v679 = vpack.c.bf16 %v306, %v305
    %v680 = vpack.c.bf16 %v370, %v369
    %v681 = vpack.c.bf16 %v435, %v434
    %v682 = vpack.c.bf16 %v499, %v498
    %v683 = vpack.c.bf16 %v563, %v562
    %v684 = vpack.c.bf16 %v51, %v50
    %v685 = vpack.c.bf16 %v115, %v114
    %v686 = vpack.c.bf16 %v179, %v178
    %v687 = vpack.c.bf16 %v244, %v243
    %v688 = vpack.c.bf16 %v308, %v307
    %v689 = vpack.c.bf16 %v372, %v371
    %v690 = vpack.c.bf16 %v437, %v436
    %v691 = vpack.c.bf16 %v501, %v500
    %v692 = vpack.c.bf16 %v565, %v564
    %v693 = vpack.c.bf16 %v53, %v52
    %v694 = vpack.c.bf16 %v117, %v116
    %v695 = vpack.c.bf16 %v181, %v180
    %v696 = vpack.c.bf16 %v246, %v245
    %v697 = vpack.c.bf16 %v310, %v309
    %v698 = vpack.c.bf16 %v374, %v373
    %v699 = vpack.c.bf16 %v439, %v438
    %v700 = vpack.c.bf16 %v503, %v502
    %v701 = vpack.c.bf16 %v567, %v566
    %v702 = vpack.c.bf16 %v55, %v54
    %v703 = vpack.c.bf16 %v119, %v118
    %v704 = vpack.c.bf16 %v183, %v182
    %v705 = vpack.c.bf16 %v248, %v247
    %v706 = vpack.c.bf16 %v312, %v311
    %v707 = vpack.c.bf16 %v376, %v375
    %v708 = vpack.c.bf16 %v441, %v440
    %v709 = vpack.c.bf16 %v505, %v504
    %v710 = vpack.c.bf16 %v569, %v568
    %v711 = vpack.c.bf16 %v57, %v56
    %v712 = vpack.c.bf16 %v121, %v120
    %v713 = vpack.c.bf16 %v185, %v184
    %v714 = vpack.c.bf16 %v250, %v249
    %v715 = vpack.c.bf16 %v314, %v313
    %v716 = vpack.c.bf16 %v378, %v377
    %v717 = vpack.c.bf16 %v443, %v442
    %v718 = vpack.c.bf16 %v507, %v506
    %v719 = vpack.c.bf16 %v571, %v570
    %v720 = vpack.c.bf16 %v59, %v58
    %v721 = vpack.c.bf16 %v123, %v122
    %v722 = vpack.c.bf16 %v187, %v186
    %v723 = vpack.c.bf16 %v252, %v251
    %v724 = vpack.c.bf16 %v316, %v315
    %v725 = vpack.c.bf16 %v380, %v379
    %v726 = vpack.c.bf16 %v445, %v444
    %v727 = vpack.c.bf16 %v509, %v508
    %v728 = vpack.c.bf16 %v573, %v572
    %v729 = vpack.c.bf16 %v61, %v60
    %v730 = vpack.c.bf16 %v125, %v124
    %v731 = vpack.c.bf16 %v189, %v188
    %v732 = vpack.c.bf16 %v254, %v253
    %v733 = vpack.c.bf16 %v318, %v317
    %v734 = vpack.c.bf16 %v382, %v381
    %v735 = vpack.c.bf16 %v447, %v446
    %v736 = vpack.c.bf16 %v511, %v510
    %v737 = vpack.c.bf16 %v575, %v574
    %v738 = vpack.c.bf16 %v63, %v62
    %v739 = vpack.c.bf16 %v127, %v126
    %v740 = vpack.c.bf16 %v191, %v190
    %v741 = vpack.c.bf16 %v256, %v255
    %v742 = vpack.c.bf16 %v320, %v319
    %v743 = vpack.c.bf16 %v384, %v383
    %v744 = vpack.c.bf16 %v449, %v448
    %v745 = vpack.c.bf16 %v513, %v512
    %v746 = vpack.c.bf16 %v577, %v576
    %v747 = vpack.c.bf16 %v65, %v64
    %v748 = vpack.c.bf16 %v129, %v128
    %v749 = vpack.c.bf16 %v193, %v192
    %v750 = vpack.c.bf16 %v258, %v257
    %v751 = vpack.c.bf16 %v322, %v321
    %v752 = vpack.c.bf16 %v386, %v385
    %v753 = vpack.c.bf16 %v451, %v450
    %v754 = vpack.c.bf16 %v515, %v514
    %v755 = vpack.c.bf16 %v579, %v578
    %v756 = vpack.c.bf16 %v67, %v66
    %v757 = vpack.c.bf16 %v131, %v130
    %v758 = vpack.c.bf16 %v195, %v194
    %v759 = vpack.c.bf16 %v260, %v259
    %v760 = vpack.c.bf16 %v324, %v323
    %v761 = vpack.c.bf16 %v388, %v387
    %v762 = vpack.c.bf16 %v453, %v452
    %v763 = vpack.c.bf16 %v517, %v516
    %v764 = vpack.c.bf16 %v581, %v580
    %v765 = vpack.c.bf16 %v69, %v68
    %v766 = vpack.c.bf16 %v133, %v132
    %v767 = vpack.c.bf16 %v197, %v196
    %v768 = vpack.c.bf16 %v262, %v261
    %v769 = vpack.c.bf16 %v326, %v325
    %v770 = vpack.c.bf16 %v390, %v389
    %v771 = vpack.c.bf16 %v455, %v454
    %v772 = vpack.c.bf16 %v519, %v518
    %v773 = vpack.c.bf16 %v583, %v582
    %v774 = vpack.c.bf16 %v71, %v70
    %v775 = vpack.c.bf16 %v135, %v134
    %v776 = vpack.c.bf16 %v199, %v198
    %v777 = vpack.c.bf16 %v264, %v263
    %v778 = vpack.c.bf16 %v328, %v327
    %v779 = vpack.c.bf16 %v392, %v391
    %v780 = vpack.c.bf16 %v457, %v456
    %v781 = vpack.c.bf16 %v521, %v520
    %v782 = vpack.c.bf16 %v585, %v584
    %v783 = vpack.c.bf16 %v73, %v72
    %v784 = vpack.c.bf16 %v137, %v136
    %v785 = vpack.c.bf16 %v201, %v200
    %v786 = vpack.c.bf16 %v266, %v265
    %v787 = vpack.c.bf16 %v330, %v329
    %v788 = vpack.c.bf16 %v394, %v393
    %v789 = vpack.c.bf16 %v459, %v458
    %v790 = vpack.c.bf16 %v523, %v522
    %v791 = vpack.c.bf16 %v587, %v586
    %v792 = vpack.c.bf16 %v75, %v74
    %v793 = vpack.c.bf16 %v139, %v138
    %v794 = vpack.c.bf16 %v203, %v202
    %v795 = vpack.c.bf16 %v268, %v267
    %v796 = vpack.c.bf16 %v332, %v331
    %v797 = vpack.c.bf16 %v396, %v395
    %v798 = vpack.c.bf16 %v461, %v460
    %v799 = vpack.c.bf16 %v525, %v524
    %v800 = vpack.c.bf16 %v589, %v588
    %v801 = vpack.c.bf16 %v77, %v76
    %v802 = vpack.c.bf16 %v141, %v140
    %v803 = vpack.c.bf16 %v205, %v204
    %v804 = vpack.c.bf16 %v270, %v269
    %v805 = vpack.c.bf16 %v334, %v333
    %v806 = vpack.c.bf16 %v398, %v397
    %v807 = vpack.c.bf16 %v463, %v462
    %v808 = vpack.c.bf16 %v527, %v526
    %v809 = vpack.c.bf16 %v591, %v590
    %v810 = vpack.c.bf16 %v79, %v78
    %v811 = vpack.c.bf16 %v143, %v142
    %v812 = vpack.c.bf16 %v207, %v206
    %v813 = vpack.c.bf16 %v272, %v271
    %v814 = vpack.c.bf16 %v336, %v335
    %v815 = vpack.c.bf16 %v400, %v399
    %v816 = vpack.c.bf16 %v465, %v464
    %v817 = vpack.c.bf16 %v529, %v528
    %v818 = vpack.c.bf16 %v593, %v592
    %v819 = vpack.c.bf16 %v81, %v80
    %v820 = vpack.c.bf16 %v145, %v144
    %v821 = vpack.c.bf16 %v209, %v208
    %v822 = vpack.c.bf16 %v274, %v273
    %v823 = vpack.c.bf16 %v338, %v337
    %v824 = vpack.c.bf16 %v402, %v401
    %v825 = vpack.c.bf16 %v467, %v466
    %v826 = vpack.c.bf16 %v531, %v530
    %v827 = vpack.c.bf16 %v595, %v594
    %v828 = vpack.c.bf16 %v83, %v82
    %v829 = vpack.c.bf16 %v147, %v146
    %v830 = vpack.c.bf16 %v211, %v210
    %v831 = vpack.c.bf16 %v276, %v275
    %v832 = vpack.c.bf16 %v340, %v339
    %v833 = vpack.c.bf16 %v404, %v403
    %v834 = vpack.c.bf16 %v469, %v468
    %v835 = vpack.c.bf16 %v533, %v532
    %v836 = vpack.c.bf16 %v597, %v596
    %v837 = vpack.c.bf16 %v85, %v84
    %v838 = vpack.c.bf16 %v149, %v148
    %v839 = vpack.c.bf16 %v213, %v212
    %v840 = vpack.c.bf16 %v278, %v277
    %v841 = vpack.c.bf16 %v342, %v341
    %v842 = vpack.c.bf16 %v406, %v405
    %v843 = vpack.c.bf16 %v471, %v470
    %v844 = vpack.c.bf16 %v535, %v534
    %v845 = vpack.c.bf16 %v599, %v598
    %v846 = vpack.c.bf16 %v87, %v86
    %v847 = vpack.c.bf16 %v151, %v150
    %v848 = vpack.c.bf16 %v215, %v214
    %v849 = vpack.c.bf16 %v280, %v279
    %v850 = vpack.c.bf16 %v344, %v343
    %v851 = vpack.c.bf16 %v408, %v407
    %v852 = vpack.c.bf16 %v473, %v472
    %v853 = vpack.c.bf16 %v537, %v536
    %v854 = vpack.c.bf16 %v601, %v600
    %v855 = vpack.c.bf16 %v89, %v88
    %v856 = vpack.c.bf16 %v153, %v152
    %v857 = vpack.c.bf16 %v217, %v216
    %v858 = vpack.c.bf16 %v282, %v281
    %v859 = vpack.c.bf16 %v346, %v345
    %v860 = vpack.c.bf16 %v410, %v409
    %v861 = vpack.c.bf16 %v475, %v474
    %v862 = vpack.c.bf16 %v539, %v538
    %v863 = vpack.c.bf16 %v603, %v602
    %v864 = vpack.c.bf16 %v91, %v90
    %v865 = vpack.c.bf16 %v155, %v154
    %v866 = vpack.c.bf16 %v219, %v218
    %v867 = vpack.c.bf16 %v284, %v283
    %v868 = vpack.c.bf16 %v348, %v347
    %v869 = vpack.c.bf16 %v412, %v411
    %v870 = vpack.c.bf16 %v477, %v476
    %v871 = vpack.c.bf16 %v541, %v540
    %v872 = vpack.c.bf16 %v605, %v604
    %v873 = vpack.c.bf16 %v93, %v92
    %v874 = vpack.c.bf16 %v157, %v156
    %v875 = vpack.c.bf16 %v221, %v220
    %v876 = vpack.c.bf16 %v286, %v285
    %v877 = vpack.c.bf16 %v350, %v349
    %v878 = vpack.c.bf16 %v414, %v413
    %v879 = vpack.c.bf16 %v479, %v478
    %v880 = vpack.c.bf16 %v543, %v542
    %v881 = vpack.c.bf16 %v607, %v606
    %v882 = vpack.c.bf16 %v95, %v94
    %v883 = vpack.c.bf16 %v159, %v158
    %v884 = vpack.c.bf16 %v223, %v222
    %v885 = vpack.c.bf16 %v288, %v287
    %v886 = vpack.c.bf16 %v352, %v351
    %v887 = vpack.c.bf16 %v416, %v415
    %v888 = vpack.c.bf16 %v481, %v480
    %v889 = vpack.c.bf16 %v545, %v544
    %v890 = vpack.c.bf16 %v609, %v608
    %v891 = vpack.c.bf16 %v97, %v96
    %v892 = vpack.c.bf16 %v161, %v160
    %v893 = vpack.c.bf16 %v225, %v224
    %v894 = vpack.c.bf16 %v290, %v289
    %v895 = vpack.c.bf16 %v354, %v353
    %v896 = vpack.c.bf16 %v418, %v417
    %v897 = vpack.c.bf16 %v483, %v482
    %v898 = vpack.c.bf16 %v547, %v546
    %v899 = vpack.c.bf16 %v611, %v610
    %v900 = vld [vmem:[%s1] sm:$0xf]
    %v901 = vld [vmem:[%s1 + $0x4] sm:$0xf]
    %v902 = vld [vmem:[%s1 + $0x8] sm:$0xf]
    %v903 = vld [vmem:[%s1 + $0xc] sm:$0xf]
    %v904 = vld [vmem:[%s1 + $0x10] sm:$0xf]
    %v905 = vld [vmem:[%s1 + $0x14] sm:$0xf]
    %v906 = vld [vmem:[%s1 + $0x18] sm:$0xf]
    %v907 = vld [vmem:[%s1 + $0x1c] sm:$0xf]
    %v908 = vld [vmem:[%s1 + $0x20] sm:$0xf]
    %v909 = vld [vmem:[%s1 + $0x24] sm:$0xf]
    %v910 = vld [vmem:[%s1 + $0x28] sm:$0xf]
    %v911 = vld [vmem:[%s1 + $0x2c] sm:$0xf]
    %v912 = vld [vmem:[%s1 + $0x30] sm:$0xf]
    %v913 = vld [vmem:[%s1 + $0x34] sm:$0xf]
    %v914 = vld [vmem:[%s1 + $0x38] sm:$0xf]
    %v915 = vld [vmem:[%s1 + $0x3c] sm:$0xf]
    %v916 = vld [vmem:[%s1 + $0x40] sm:$0xf]
    %v917 = vld [vmem:[%s1 + $0x44] sm:$0xf]
    %v918 = vld [vmem:[%s1 + $0x48] sm:$0xf]
    %v919 = vld [vmem:[%s1 + $0x4c] sm:$0xf]
    %v920 = vld [vmem:[%s1 + $0x50] sm:$0xf]
    %v921 = vld [vmem:[%s1 + $0x54] sm:$0xf]
    %v922 = vld [vmem:[%s1 + $0x58] sm:$0xf]
    %v923 = vld [vmem:[%s1 + $0x5c] sm:$0xf]
    %v924 = vld [vmem:[%s1 + $0x60] sm:$0xf]
    %v925 = vld [vmem:[%s1 + $0x64] sm:$0xf]
    %v926 = vld [vmem:[%s1 + $0x68] sm:$0xf]
    %v927 = vld [vmem:[%s1 + $0x6c] sm:$0xf]
    %v928 = vld [vmem:[%s1 + $0x70] sm:$0xf]
    %v929 = vld [vmem:[%s1 + $0x74] sm:$0xf]
    %v930 = vld [vmem:[%s1 + $0x78] sm:$0xf]
    %v931 = vld [vmem:[%s1 + $0x7c] sm:$0xf]
    %v932 = vld [vmem:[%s1 + $0x80] sm:$0xf]
    %v933 = vld [vmem:[%s1 + $0x84] sm:$0xf]
    %v934 = vld [vmem:[%s1 + $0x88] sm:$0xf]
    %v935 = vld [vmem:[%s1 + $0x8c] sm:$0xf]
    %v936 = vld [vmem:[%s1 + $0x90] sm:$0xf]
    %v937 = vld [vmem:[%s1 + $0x94] sm:$0xf]
    %v938 = vld [vmem:[%s1 + $0x98] sm:$0xf]
    %v939 = vld [vmem:[%s1 + $0x9c] sm:$0xf]
    %v940 = vld [vmem:[%s1 + $0xa0] sm:$0xf]
    %v941 = vld [vmem:[%s1 + $0xa4] sm:$0xf]
    %v942 = vld [vmem:[%s1 + $0xa8] sm:$0xf]
    %v943 = vld [vmem:[%s1 + $0xac] sm:$0xf]
    %v944 = vld [vmem:[%s1 + $0xb0] sm:$0xf]
    %v945 = vld [vmem:[%s1 + $0xb4] sm:$0xf]
    %v946 = vld [vmem:[%s1 + $0xb8] sm:$0xf]
    %v947 = vld [vmem:[%s1 + $0xbc] sm:$0xf]
    %v948 = vld [vmem:[%s1 + $0xc0] sm:$0xf]
    %v949 = vld [vmem:[%s1 + $0xc4] sm:$0xf]
    %v950 = vld [vmem:[%s1 + $0xc8] sm:$0xf]
    %v951 = vld [vmem:[%s1 + $0xcc] sm:$0xf]
    %v952 = vld [vmem:[%s1 + $0xd0] sm:$0xf]
    %v953 = vld [vmem:[%s1 + $0xd4] sm:$0xf]
    %v954 = vld [vmem:[%s1 + $0xd8] sm:$0xf]
    %v955 = vld [vmem:[%s1 + $0xdc] sm:$0xf]
    %v956 = vld [vmem:[%s1 + $0xe0] sm:$0xf]
    %v957 = vld [vmem:[%s1 + $0xe4] sm:$0xf]
    %v958 = vld [vmem:[%s1 + $0xe8] sm:$0xf]
    %v959 = vld [vmem:[%s1 + $0xec] sm:$0xf]
    %v960 = vld [vmem:[%s1 + $0xf0] sm:$0xf]
    %v961 = vld [vmem:[%s1 + $0xf4] sm:$0xf]
    %v962 = vld [vmem:[%s1 + $0xf8] sm:$0xf]
    %v963 = vld [vmem:[%s1 + $0xfc] sm:$0xf]
    %v964 = vld [vmem:[%s1 + $0x100] sm:$0xf]
    %v965 = vld [vmem:[%s1 + $0x104] sm:$0xf]
    %v966 = vld [vmem:[%s1 + $0x108] sm:$0xf]
    %v967 = vld [vmem:[%s1 + $0x10c] sm:$0xf]
    %v968 = vld [vmem:[%s1 + $0x110] sm:$0xf]
    %v969 = vld [vmem:[%s1 + $0x114] sm:$0xf]
    %v970 = vld [vmem:[%s1 + $0x118] sm:$0xf]
    %v971 = vld [vmem:[%s1 + $0x11c] sm:$0xf]
    %v972 = vld [vmem:[%s1 + $0x120] sm:$0xf]
    %v973 = vld [vmem:[%s1 + $0x124] sm:$0xf]
    %v974 = vld [vmem:[%s1 + $0x128] sm:$0xf]
    %v975 = vld [vmem:[%s1 + $0x12c] sm:$0xf]
    %v976 = vld [vmem:[%s1 + $0x130] sm:$0xf]
    %v977 = vld [vmem:[%s1 + $0x134] sm:$0xf]
    %v978 = vld [vmem:[%s1 + $0x138] sm:$0xf]
    %v979 = vld [vmem:[%s1 + $0x13c] sm:$0xf]
    %v980 = vld [vmem:[%s1 + $0x140] sm:$0xf]
    %v981 = vld [vmem:[%s1 + $0x144] sm:$0xf]
    %v982 = vld [vmem:[%s1 + $0x148] sm:$0xf]
    %v983 = vld [vmem:[%s1 + $0x14c] sm:$0xf]
    %v984 = vld [vmem:[%s1 + $0x150] sm:$0xf]
    %v985 = vld [vmem:[%s1 + $0x154] sm:$0xf]
    %v986 = vld [vmem:[%s1 + $0x158] sm:$0xf]
    %v987 = vld [vmem:[%s1 + $0x15c] sm:$0xf]
    %v988 = vld [vmem:[%s1 + $0x160] sm:$0xf]
    %v989 = vld [vmem:[%s1 + $0x164] sm:$0xf]
    %v990 = vld [vmem:[%s1 + $0x168] sm:$0xf]
    %v991 = vld [vmem:[%s1 + $0x16c] sm:$0xf]
    %v992 = vld [vmem:[%s1 + $0x170] sm:$0xf]
    %v993 = vld [vmem:[%s1 + $0x174] sm:$0xf]
    %v994 = vld [vmem:[%s1 + $0x178] sm:$0xf]
    %v995 = vld [vmem:[%s1 + $0x17c] sm:$0xf]
    %v996 = vld [vmem:[%s1 + $0x180] sm:$0xf]
    %v997 = vld [vmem:[%s1 + $0x184] sm:$0xf]
    %v998 = vld [vmem:[%s1 + $0x188] sm:$0xf]
    %v999 = vld [vmem:[%s1 + $0x18c] sm:$0xf]
    %v1000 = vld [vmem:[%s1 + $0x190] sm:$0xf]
    %v1001 = vld [vmem:[%s1 + $0x194] sm:$0xf]
    %v1002 = vld [vmem:[%s1 + $0x198] sm:$0xf]
    %v1003 = vld [vmem:[%s1 + $0x19c] sm:$0xf]
    %v1004 = vld [vmem:[%s1 + $0x1a0] sm:$0xf]
    %v1005 = vld [vmem:[%s1 + $0x1a4] sm:$0xf]
    %v1006 = vld [vmem:[%s1 + $0x1a8] sm:$0xf]
    %v1007 = vld [vmem:[%s1 + $0x1ac] sm:$0xf]
    %v1008 = vld [vmem:[%s1 + $0x1b0] sm:$0xf]
    %v1009 = vld [vmem:[%s1 + $0x1b4] sm:$0xf]
    %v1010 = vld [vmem:[%s1 + $0x1b8] sm:$0xf]
    %v1011 = vld [vmem:[%s1 + $0x1bc] sm:$0xf]
    %v1012 = vld [vmem:[%s1 + $0x1c0] sm:$0xf]
    %v1013 = vld [vmem:[%s1 + $0x1c4] sm:$0xf]
    %v1014 = vld [vmem:[%s1 + $0x1c8] sm:$0xf]
    %v1015 = vld [vmem:[%s1 + $0x1cc] sm:$0xf]
    %v1016 = vld [vmem:[%s1 + $0x1d0] sm:$0xf]
    %v1017 = vld [vmem:[%s1 + $0x1d4] sm:$0xf]
    %v1018 = vld [vmem:[%s1 + $0x1d8] sm:$0xf]
    %v1019 = vld [vmem:[%s1 + $0x1dc] sm:$0xf]
    %v1020 = vld [vmem:[%s1 + $0x1e0] sm:$0xf]
    %v1021 = vld [vmem:[%s1 + $0x1e4] sm:$0xf]
    %v1022 = vld [vmem:[%s1 + $0x1e8] sm:$0xf]
    %v1023 = vld [vmem:[%s1 + $0x1ec] sm:$0xf]
    %v1024 = vld [vmem:[%s1 + $0x1f0] sm:$0xf]
    %v1025 = vld [vmem:[%s1 + $0x1f4] sm:$0xf]
    %v1026 = vld [vmem:[%s1 + $0x1f8] sm:$0xf]
    %v1027 = vld [vmem:[%s1 + $0x1fc] sm:$0xf]
    %v1028 = vld [vmem:[%s1 + $0x200] sm:$0xf]
    %v1029 = vld [vmem:[%s1 + $0x204] sm:$0xf]
    %v1030 = vld [vmem:[%s1 + $0x208] sm:$0xf]
    %v1031 = vld [vmem:[%s1 + $0x20c] sm:$0xf]
    %v1032 = vld [vmem:[%s1 + $0x210] sm:$0xf]
    %v1033 = vld [vmem:[%s1 + $0x214] sm:$0xf]
    %v1034 = vld [vmem:[%s1 + $0x218] sm:$0xf]
    %v1035 = vld [vmem:[%s1 + $0x21c] sm:$0xf]
    %v1036 = vld [vmem:[%s1 + $0x220] sm:$0xf]
    %v1037 = vld [vmem:[%s1 + $0x224] sm:$0xf]
    %v1038 = vld [vmem:[%s1 + $0x228] sm:$0xf]
    %v1039 = vld [vmem:[%s1 + $0x22c] sm:$0xf]
    %v1040 = vld [vmem:[%s1 + $0x230] sm:$0xf]
    %v1041 = vld [vmem:[%s1 + $0x234] sm:$0xf]
    %v1042 = vld [vmem:[%s1 + $0x238] sm:$0xf]
    %v1043 = vld [vmem:[%s1 + $0x23c] sm:$0xf]
    %v1044 = vld [vmem:[%s2] sm:$0x1]
    %v1046 = vlaneseq
    %v1047 = vshrl.u32 %v1046, 7
    %v1048 = vsub.s32 0, %v1047
    %v1049 = vrot.slane %v1044, %v1048
    %v1195 = vunpack.c.l.b16 %v900
    %v1196 = vunpack.c.l.b16 %v901
    %v1197 = vunpack.c.l.b16 %v902
    %v1198 = vunpack.c.l.b16 %v903
    %v1199 = vunpack.c.l.b16 %v904
    %v1200 = vunpack.c.l.b16 %v905
    %v1201 = vunpack.c.l.b16 %v906
    %v1202 = vunpack.c.l.b16 %v907
    %v1203 = vunpack.c.l.b16 %v908
    %v1204 = vunpack.c.l.b16 %v909
    %v1205 = vunpack.c.l.b16 %v910
    %v1206 = vunpack.c.l.b16 %v911
    %v1207 = vunpack.c.l.b16 %v912
    %v1208 = vunpack.c.l.b16 %v913
    %v1209 = vunpack.c.l.b16 %v914
    %v1210 = vunpack.c.l.b16 %v915
    %v1211 = vunpack.c.l.b16 %v916
    %v1212 = vunpack.c.l.b16 %v917
    %v1213 = vunpack.c.l.b16 %v918
    %v1214 = vunpack.c.l.b16 %v919
    %v1215 = vunpack.c.l.b16 %v920
    %v1216 = vunpack.c.l.b16 %v921
    %v1217 = vunpack.c.l.b16 %v922
    %v1218 = vunpack.c.l.b16 %v923
    %v1219 = vunpack.c.l.b16 %v924
    %v1220 = vunpack.c.l.b16 %v925
    %v1221 = vunpack.c.l.b16 %v926
    %v1222 = vunpack.c.l.b16 %v927
    %v1223 = vunpack.c.l.b16 %v928
    %v1224 = vunpack.c.l.b16 %v929
    %v1225 = vunpack.c.l.b16 %v930
    %v1226 = vunpack.c.l.b16 %v931
    %v1227 = vunpack.c.l.b16 %v932
    %v1228 = vunpack.c.l.b16 %v933
    %v1229 = vunpack.c.l.b16 %v934
    %v1230 = vunpack.c.l.b16 %v935
    %v1231 = vunpack.c.l.b16 %v936
    %v1232 = vunpack.c.l.b16 %v937
    %v1233 = vunpack.c.l.b16 %v938
    %v1234 = vunpack.c.l.b16 %v939
    %v1235 = vunpack.c.l.b16 %v940
    %v1236 = vunpack.c.l.b16 %v941
    %v1237 = vunpack.c.l.b16 %v942
    %v1238 = vunpack.c.l.b16 %v943
    %v1239 = vunpack.c.l.b16 %v944
    %v1240 = vunpack.c.l.b16 %v945
    %v1241 = vunpack.c.l.b16 %v946
    %v1242 = vunpack.c.l.b16 %v947
    %v1243 = vunpack.c.l.b16 %v948
    %v1244 = vunpack.c.l.b16 %v949
    %v1245 = vunpack.c.l.b16 %v950
    %v1246 = vunpack.c.l.b16 %v951
    %v1247 = vunpack.c.l.b16 %v952
    %v1248 = vunpack.c.l.b16 %v953
    %v1249 = vunpack.c.l.b16 %v954
    %v1250 = vunpack.c.l.b16 %v955
    %v1251 = vunpack.c.l.b16 %v956
    %v1252 = vunpack.c.l.b16 %v957
    %v1253 = vunpack.c.l.b16 %v958
    %v1254 = vunpack.c.l.b16 %v959
    %v1255 = vunpack.c.l.b16 %v960
    %v1256 = vunpack.c.l.b16 %v961
    %v1257 = vunpack.c.l.b16 %v962
    %v1258 = vunpack.c.l.b16 %v963
    %v1259 = vunpack.c.l.b16 %v964
    %v1260 = vunpack.c.l.b16 %v965
    %v1261 = vunpack.c.l.b16 %v966
    %v1262 = vunpack.c.l.b16 %v967
    %v1263 = vunpack.c.l.b16 %v968
    %v1264 = vunpack.c.l.b16 %v969
    %v1265 = vunpack.c.l.b16 %v970
    %v1266 = vunpack.c.l.b16 %v971
    %v1267 = vunpack.c.l.b16 %v972
    %v1268 = vunpack.c.l.b16 %v973
    %v1269 = vunpack.c.l.b16 %v974
    %v1270 = vunpack.c.l.b16 %v975
    %v1271 = vunpack.c.l.b16 %v976
    %v1272 = vunpack.c.l.b16 %v977
    %v1273 = vunpack.c.l.b16 %v978
    %v1274 = vunpack.c.l.b16 %v979
    %v1275 = vunpack.c.l.b16 %v980
    %v1276 = vunpack.c.l.b16 %v981
    %v1277 = vunpack.c.l.b16 %v982
    %v1278 = vunpack.c.l.b16 %v983
    %v1279 = vunpack.c.l.b16 %v984
    %v1280 = vunpack.c.l.b16 %v985
    %v1281 = vunpack.c.l.b16 %v986
    %v1282 = vunpack.c.l.b16 %v987
    %v1283 = vunpack.c.l.b16 %v988
    %v1284 = vunpack.c.l.b16 %v989
    %v1285 = vunpack.c.l.b16 %v990
    %v1286 = vunpack.c.l.b16 %v991
    %v1287 = vunpack.c.l.b16 %v992
    %v1288 = vunpack.c.l.b16 %v993
    %v1289 = vunpack.c.l.b16 %v994
    %v1290 = vunpack.c.l.b16 %v995
    %v1291 = vunpack.c.l.b16 %v996
    %v1292 = vunpack.c.l.b16 %v997
    %v1293 = vunpack.c.l.b16 %v998
    %v1294 = vunpack.c.l.b16 %v999
    %v1295 = vunpack.c.l.b16 %v1000
    %v1296 = vunpack.c.l.b16 %v1001
    %v1297 = vunpack.c.l.b16 %v1002
    %v1298 = vunpack.c.l.b16 %v1003
    %v1299 = vunpack.c.l.b16 %v1004
    %v1300 = vunpack.c.l.b16 %v1005
    %v1301 = vunpack.c.l.b16 %v1006
    %v1302 = vunpack.c.l.b16 %v1007
    %v1303 = vunpack.c.l.b16 %v1008
    %v1304 = vunpack.c.l.b16 %v1009
    %v1305 = vunpack.c.l.b16 %v1010
    %v1306 = vunpack.c.l.b16 %v1011
    %v1307 = vunpack.c.l.b16 %v1012
    %v1308 = vunpack.c.l.b16 %v1013
    %v1309 = vunpack.c.l.b16 %v1014
    %v1310 = vunpack.c.l.b16 %v1015
    %v1311 = vunpack.c.l.b16 %v1016
    %v1312 = vunpack.c.l.b16 %v1017
    %v1313 = vunpack.c.l.b16 %v1018
    %v1314 = vunpack.c.l.b16 %v1019
    %v1315 = vunpack.c.l.b16 %v1020
    %v1316 = vunpack.c.l.b16 %v1021
    %v1317 = vunpack.c.l.b16 %v1022
    %v1318 = vunpack.c.l.b16 %v1023
    %v1319 = vunpack.c.l.b16 %v1024
    %v1320 = vunpack.c.l.b16 %v1025
    %v1321 = vunpack.c.l.b16 %v1026
    %v1322 = vunpack.c.l.b16 %v1027
    %v1323 = vunpack.c.l.b16 %v1028
    %v1324 = vunpack.c.l.b16 %v1029
    %v1325 = vunpack.c.l.b16 %v1030
    %v1326 = vunpack.c.l.b16 %v1031
    %v1327 = vunpack.c.l.b16 %v1032
    %v1328 = vunpack.c.l.b16 %v1033
    %v1329 = vunpack.c.l.b16 %v1034
    %v1330 = vunpack.c.l.b16 %v1035
    %v1331 = vunpack.c.l.b16 %v1036
    %v1332 = vunpack.c.l.b16 %v1037
    %v1333 = vunpack.c.l.b16 %v1038
    %v1334 = vunpack.c.l.b16 %v1039
    %v1335 = vunpack.c.l.b16 %v1040
    %v1336 = vunpack.c.l.b16 %v1041
    %v1337 = vunpack.c.l.b16 %v1042
    %v1338 = vunpack.c.l.b16 %v1043
    %v1339 = vpack.c.b16 %v1196, %v1195
    %v1340 = vpack.c.b16 %v1198, %v1197
    %v1341 = vpack.c.b16 %v1200, %v1199
    %v1342 = vpack.c.b16 %v1202, %v1201
    %v1343 = vpack.c.b16 %v1204, %v1203
    %v1344 = vpack.c.b16 %v1206, %v1205
    %v1345 = vpack.c.b16 %v1208, %v1207
    %v1346 = vpack.c.b16 %v1210, %v1209
    %v1347 = vpack.c.b16 %v1212, %v1211
    %v1348 = vpack.c.b16 %v1214, %v1213
    %v1349 = vpack.c.b16 %v1216, %v1215
    %v1350 = vpack.c.b16 %v1218, %v1217
    %v1351 = vpack.c.b16 %v1220, %v1219
    %v1352 = vpack.c.b16 %v1222, %v1221
    %v1353 = vpack.c.b16 %v1224, %v1223
    %v1354 = vpack.c.b16 %v1226, %v1225
    %v1355 = vpack.c.b16 %v1228, %v1227
    %v1356 = vpack.c.b16 %v1230, %v1229
    %v1357 = vpack.c.b16 %v1232, %v1231
    %v1358 = vpack.c.b16 %v1234, %v1233
    %v1359 = vpack.c.b16 %v1236, %v1235
    %v1360 = vpack.c.b16 %v1238, %v1237
    %v1361 = vpack.c.b16 %v1240, %v1239
    %v1362 = vpack.c.b16 %v1242, %v1241
    %v1363 = vpack.c.b16 %v1244, %v1243
    %v1364 = vpack.c.b16 %v1246, %v1245
    %v1365 = vpack.c.b16 %v1248, %v1247
    %v1366 = vpack.c.b16 %v1250, %v1249
    %v1367 = vpack.c.b16 %v1252, %v1251
    %v1368 = vpack.c.b16 %v1254, %v1253
    %v1369 = vpack.c.b16 %v1256, %v1255
    %v1370 = vpack.c.b16 %v1258, %v1257
    %v1371 = vpack.c.b16 %v1260, %v1259
    %v1372 = vpack.c.b16 %v1262, %v1261
    %v1373 = vpack.c.b16 %v1264, %v1263
    %v1374 = vpack.c.b16 %v1266, %v1265
    %v1375 = vpack.c.b16 %v1268, %v1267
    %v1376 = vpack.c.b16 %v1270, %v1269
    %v1377 = vpack.c.b16 %v1272, %v1271
    %v1378 = vpack.c.b16 %v1274, %v1273
    %v1379 = vpack.c.b16 %v1276, %v1275
    %v1380 = vpack.c.b16 %v1278, %v1277
    %v1381 = vpack.c.b16 %v1280, %v1279
    %v1382 = vpack.c.b16 %v1282, %v1281
    %v1383 = vpack.c.b16 %v1284, %v1283
    %v1384 = vpack.c.b16 %v1286, %v1285
    %v1385 = vpack.c.b16 %v1288, %v1287
    %v1386 = vpack.c.b16 %v1290, %v1289
    %v1387 = vpack.c.b16 %v1292, %v1291
    %v1388 = vpack.c.b16 %v1294, %v1293
    %v1389 = vpack.c.b16 %v1296, %v1295
    %v1390 = vpack.c.b16 %v1298, %v1297
    %v1391 = vpack.c.b16 %v1300, %v1299
    %v1392 = vpack.c.b16 %v1302, %v1301
    %v1393 = vpack.c.b16 %v1304, %v1303
    %v1394 = vpack.c.b16 %v1306, %v1305
    %v1395 = vpack.c.b16 %v1308, %v1307
    %v1396 = vpack.c.b16 %v1310, %v1309
    %v1397 = vpack.c.b16 %v1312, %v1311
    %v1398 = vpack.c.b16 %v1314, %v1313
    %v1399 = vpack.c.b16 %v1316, %v1315
    %v1400 = vpack.c.b16 %v1318, %v1317
    %v1401 = vpack.c.b16 %v1320, %v1319
    %v1402 = vpack.c.b16 %v1322, %v1321
    %v1403 = vpack.c.b16 %v1324, %v1323
    %v1404 = vpack.c.b16 %v1326, %v1325
    %v1405 = vpack.c.b16 %v1328, %v1327
    %v1406 = vpack.c.b16 %v1330, %v1329
    %v1407 = vpack.c.b16 %v1332, %v1331
    %v1408 = vpack.c.b16 %v1334, %v1333
    %v1409 = vpack.c.b16 %v1336, %v1335
    %v1410 = vpack.c.b16 %v1338, %v1337
    %1483 = vmatprep.subr.bf16.mxu0 0
    %1484 = vmatpush1.bf16.msra.mxu0 %v1339
    %1485 = vmatprep.subr.bf16.mxu0 0
    %1486 = vmatpush1.bf16.msra.mxu0 %v1340
    %1487 = vmatprep.subr.bf16.mxu0 0
    %1488 = vmatpush1.bf16.msra.mxu0 %v1341
    %1489 = vmatprep.subr.bf16.mxu0 0
    %1490 = vmatpush1.bf16.msra.mxu0 %v1342
    %1491 = vmatprep.subr.bf16.mxu0 0
    %1492 = vmatpush1.bf16.msra.mxu0 %v1343
    %1493 = vmatprep.subr.bf16.mxu0 0
    %1494 = vmatpush1.bf16.msra.mxu0 %v1344
    %1495 = vmatprep.subr.bf16.mxu0 0
    %1496 = vmatpush1.bf16.msra.mxu0 %v1345
    %1497 = vmatprep.subr.bf16.mxu0 0
    %1498 = vmatpush1.bf16.msra.mxu0 %v1346
    %1499 = vmatprep.subr.bf16.mxu0 0
    %1500 = vmatpush1.bf16.msra.mxu0 %v1347
    %1501 = vmatprep.subr.bf16.mxu0 0
    %1502 = vmatpush1.bf16.msra.mxu0 %v1348
    %1503 = vmatprep.subr.bf16.mxu0 0
    %1504 = vmatpush1.bf16.msra.mxu0 %v1349
    %1505 = vmatprep.subr.bf16.mxu0 0
    %1506 = vmatpush1.bf16.msra.mxu0 %v1350
    %1507 = vmatprep.subr.bf16.mxu0 0
    %1508 = vmatpush1.bf16.msra.mxu0 %v1351
    %1509 = vmatprep.subr.bf16.mxu0 0
    %1510 = vmatpush1.bf16.msra.mxu0 %v1352
    %1511 = vmatprep.subr.bf16.mxu0 0
    %1512 = vmatpush1.bf16.msra.mxu0 %v1353
    %1513 = vmatprep.subr.bf16.mxu0 0
    %1514 = vmatpush1.bf16.msra.mxu0 %v1354
    %1515 = vmatprep.mubr.bf16.mxu0 %v613
    %1516 = vmatmul.mubr.bf16.gmra.mrb[0].mxu0 %v612
    %v1517 = vpop.f32.mrb[0].mxu0
    %v1518 = vadd.f32 %v1049, %v1517
    %v1519 = vpop.f32.mrb[0].mxu0
    %v1520 = vpop.f32.mrb[0].mxu0
    %v1521 = vadd.f32 %v1049, %v1520
    %v1522 = vpop.f32.mrb[0].mxu0
    %1523 = vmatprep.mubr.bf16.mxu0 %v622
    %1524 = vmatmul.mubr.bf16.gmra.mrb[0].mxu0 %v621
    %v1525 = vpop.f32.mrb[0].mxu0
    %v1526 = vadd.f32 %v1049, %v1525
    %v1527 = vpop.f32.mrb[0].mxu0
    %v1528 = vpop.f32.mrb[0].mxu0
    %v1529 = vadd.f32 %v1049, %v1528
    %v1530 = vpop.f32.mrb[0].mxu0
    %1531 = vmatprep.mubr.bf16.mxu0 %v631
    %1532 = vmatmul.mubr.bf16.gmra.mrb[0].mxu0 %v630
    %v1533 = vpop.f32.mrb[0].mxu0
    %v1534 = vadd.f32 %v1049, %v1533
    %v1535 = vpop.f32.mrb[0].mxu0
    %v1536 = vpop.f32.mrb[0].mxu0
    %v1537 = vadd.f32 %v1049, %v1536
    %v1538 = vpop.f32.mrb[0].mxu0
    %1539 = vmatprep.mubr.bf16.mxu0 %v640
    %1540 = vmatmul.mubr.bf16.gmra.mrb[0].mxu0 %v639
    %v1541 = vpop.f32.mrb[0].mxu0
    %v1542 = vadd.f32 %v1049, %v1541
    %v1543 = vpop.f32.mrb[0].mxu0
    %v1544 = vpop.f32.mrb[0].mxu0
    %v1545 = vadd.f32 %v1049, %v1544
    %v1546 = vpop.f32.mrb[0].mxu0
    %1547 = vmatprep.mubr.bf16.mxu0 %v649
    %1548 = vmatmul.mubr.bf16.gmra.mrb[0].mxu0 %v648
    %v1549 = vpop.f32.mrb[0].mxu0
    %v1550 = vadd.f32 %v1049, %v1549
    %v1551 = vpop.f32.mrb[0].mxu0
    %v1552 = vpop.f32.mrb[0].mxu0
    %v1553 = vadd.f32 %v1049, %v1552
    %v1554 = vpop.f32.mrb[0].mxu0
    %1555 = vmatprep.mubr.bf16.mxu0 %v658
    %1556 = vmatmul.mubr.bf16.gmra.mrb[0].mxu0 %v657
    %v1557 = vpop.f32.mrb[0].mxu0
    %v1558 = vadd.f32 %v1049, %v1557
    %v1559 = vpop.f32.mrb[0].mxu0
    %v1560 = vpop.f32.mrb[0].mxu0
    %v1561 = vadd.f32 %v1049, %v1560
    %v1562 = vpop.f32.mrb[0].mxu0
    %1563 = vmatprep.mubr.bf16.mxu0 %v667
    %1564 = vmatmul.mubr.bf16.gmra.mrb[0].mxu0 %v666
    %v1565 = vpop.f32.mrb[0].mxu0
    %v1566 = vadd.f32 %v1049, %v1565
    %v1567 = vpop.f32.mrb[0].mxu0
    %v1568 = vpop.f32.mrb[0].mxu0
    %v1569 = vadd.f32 %v1049, %v1568
    %v1570 = vpop.f32.mrb[0].mxu0
    %1571 = vmatprep.mubr.bf16.mxu0 %v676
    %1572 = vmatmul.mubr.bf16.gmra.mrb[0].mxu0 %v675
    %v1573 = vpop.f32.mrb[0].mxu0
    %v1574 = vadd.f32 %v1049, %v1573
    %v1575 = vpop.f32.mrb[0].mxu0
    %v1576 = vpop.f32.mrb[0].mxu0
    %v1577 = vadd.f32 %v1049, %v1576
    %v1578 = vpop.f32.mrb[0].mxu0
    %1579 = vmatprep.mubr.bf16.mxu0 %v685
    %1580 = vmatmul.mubr.bf16.gmra.mrb[0].mxu0 %v684
    %v1581 = vpop.f32.mrb[0].mxu0
    %v1582 = vadd.f32 %v1049, %v1581
    %v1583 = vpop.f32.mrb[0].mxu0
    %v1584 = vpop.f32.mrb[0].mxu0
    %v1585 = vadd.f32 %v1049, %v1584
    %v1586 = vpop.f32.mrb[0].mxu0
    %1587 = vmatprep.mubr.bf16.mxu0 %v694
    %1588 = vmatmul.mubr.bf16.gmra.mrb[0].mxu0 %v693
    %v1589 = vpop.f32.mrb[0].mxu0
    %v1590 = vadd.f32 %v1049, %v1589
    %v1591 = vpop.f32.mrb[0].mxu0
    %v1592 = vpop.f32.mrb[0].mxu0
    %v1593 = vadd.f32 %v1049, %v1592
    %v1594 = vpop.f32.mrb[0].mxu0
    %1595 = vmatprep.mubr.bf16.mxu0 %v703
    %1596 = vmatmul.mubr.bf16.gmra.mrb[0].mxu0 %v702
    %v1597 = vpop.f32.mrb[0].mxu0
    %v1598 = vadd.f32 %v1049, %v1597
    %v1599 = vpop.f32.mrb[0].mxu0
    %v1600 = vpop.f32.mrb[0].mxu0
    %v1601 = vadd.f32 %v1049, %v1600
    %v1602 = vpop.f32.mrb[0].mxu0
    %1603 = vmatprep.mubr.bf16.mxu0 %v712
    %1604 = vmatmul.mubr.bf16.gmra.mrb[0].mxu0 %v711
    %v1605 = vpop.f32.mrb[0].mxu0
    %v1606 = vadd.f32 %v1049, %v1605
    %v1607 = vpop.f32.mrb[0].mxu0
    %v1608 = vpop.f32.mrb[0].mxu0
    %v1609 = vadd.f32 %v1049, %v1608
    %v1610 = vpop.f32.mrb[0].mxu0
    %1611 = vmatprep.mubr.bf16.mxu0 %v721
    %1612 = vmatmul.mubr.bf16.gmra.mrb[0].mxu0 %v720
    %v1613 = vpop.f32.mrb[0].mxu0
    %v1614 = vadd.f32 %v1049, %v1613
    %v1615 = vpop.f32.mrb[0].mxu0
    %v1616 = vpop.f32.mrb[0].mxu0
    %v1617 = vadd.f32 %v1049, %v1616
    %v1618 = vpop.f32.mrb[0].mxu0
    %1619 = vmatprep.mubr.bf16.mxu0 %v730
    %1620 = vmatmul.mubr.bf16.gmra.mrb[0].mxu0 %v729
    %v1621 = vpop.f32.mrb[0].mxu0
    %v1622 = vadd.f32 %v1049, %v1621
    %v1623 = vpop.f32.mrb[0].mxu0
    %v1624 = vpop.f32.mrb[0].mxu0
    %v1625 = vadd.f32 %v1049, %v1624
    %v1626 = vpop.f32.mrb[0].mxu0
    %1627 = vmatprep.mubr.bf16.mxu0 %v739
    %1628 = vmatmul.mubr.bf16.gmra.mrb[0].mxu0 %v738
    %v1629 = vpop.f32.mrb[0].mxu0
    %v1630 = vadd.f32 %v1049, %v1629
    %v1631 = vpop.f32.mrb[0].mxu0
    %v1632 = vpop.f32.mrb[0].mxu0
    %v1633 = vadd.f32 %v1049, %v1632
    %v1634 = vpop.f32.mrb[0].mxu0
    %1635 = vmatprep.mubr.bf16.mxu0 %v748
    %1636 = vmatmul.mubr.bf16.gmra.mrb[0].mxu0 %v747
    %v1637 = vpop.f32.mrb[0].mxu0
    %v1638 = vadd.f32 %v1049, %v1637
    %v1639 = vpop.f32.mrb[0].mxu0
    %v1640 = vpop.f32.mrb[0].mxu0
    %v1641 = vadd.f32 %v1049, %v1640
    %v1642 = vpop.f32.mrb[0].mxu0
    %1643 = vmatprep.mubr.bf16.mxu0 %v757
    %1644 = vmatmul.mubr.bf16.gmra.mrb[0].mxu0 %v756
    %v1645 = vpop.f32.mrb[0].mxu0
    %v1646 = vadd.f32 %v1049, %v1645
    %v1647 = vpop.f32.mrb[0].mxu0
    %v1648 = vpop.f32.mrb[0].mxu0
    %v1649 = vadd.f32 %v1049, %v1648
    %v1650 = vpop.f32.mrb[0].mxu0
    %1651 = vmatprep.mubr.bf16.mxu0 %v766
    %1652 = vmatmul.mubr.bf16.gmra.mrb[0].mxu0 %v765
    %v1653 = vpop.f32.mrb[0].mxu0
    %v1654 = vadd.f32 %v1049, %v1653
    %v1655 = vpop.f32.mrb[0].mxu0
    %v1656 = vpop.f32.mrb[0].mxu0
    %v1657 = vadd.f32 %v1049, %v1656
    %v1658 = vpop.f32.mrb[0].mxu0
    %1659 = vmatprep.mubr.bf16.mxu0 %v775
    %1660 = vmatmul.mubr.bf16.gmra.mrb[0].mxu0 %v774
    %v1661 = vpop.f32.mrb[0].mxu0
    %v1662 = vadd.f32 %v1049, %v1661
    %v1663 = vpop.f32.mrb[0].mxu0
    %v1664 = vpop.f32.mrb[0].mxu0
    %v1665 = vadd.f32 %v1049, %v1664
    %v1666 = vpop.f32.mrb[0].mxu0
    %1667 = vmatprep.mubr.bf16.mxu0 %v784
    %1668 = vmatmul.mubr.bf16.gmra.mrb[0].mxu0 %v783
    %v1669 = vpop.f32.mrb[0].mxu0
    %v1670 = vadd.f32 %v1049, %v1669
    %v1671 = vpop.f32.mrb[0].mxu0
    %v1672 = vpop.f32.mrb[0].mxu0
    %v1673 = vadd.f32 %v1049, %v1672
    %v1674 = vpop.f32.mrb[0].mxu0
    %1675 = vmatprep.mubr.bf16.mxu0 %v793
    %1676 = vmatmul.mubr.bf16.gmra.mrb[0].mxu0 %v792
    %v1677 = vpop.f32.mrb[0].mxu0
    %v1678 = vadd.f32 %v1049, %v1677
    %v1679 = vpop.f32.mrb[0].mxu0
    %v1680 = vpop.f32.mrb[0].mxu0
    %v1681 = vadd.f32 %v1049, %v1680
    %v1682 = vpop.f32.mrb[0].mxu0
    %1683 = vmatprep.mubr.bf16.mxu0 %v802
    %1684 = vmatmul.mubr.bf16.gmra.mrb[0].mxu0 %v801
    %v1685 = vpop.f32.mrb[0].mxu0
    %v1686 = vadd.f32 %v1049, %v1685
    %v1687 = vpop.f32.mrb[0].mxu0
    %v1688 = vpop.f32.mrb[0].mxu0
    %v1689 = vadd.f32 %v1049, %v1688
    %v1690 = vpop.f32.mrb[0].mxu0
    %1691 = vmatprep.mubr.bf16.mxu0 %v811
    %1692 = vmatmul.mubr.bf16.gmra.mrb[0].mxu0 %v810
    %v1693 = vpop.f32.mrb[0].mxu0
    %v1694 = vadd.f32 %v1049, %v1693
    %v1695 = vpop.f32.mrb[0].mxu0
    %v1696 = vpop.f32.mrb[0].mxu0
    %v1697 = vadd.f32 %v1049, %v1696
    %v1698 = vpop.f32.mrb[0].mxu0
    %1699 = vmatprep.mubr.bf16.mxu0 %v820
    %1700 = vmatmul.mubr.bf16.gmra.mrb[0].mxu0 %v819
    %v1701 = vpop.f32.mrb[0].mxu0
    %v1702 = vadd.f32 %v1049, %v1701
    %v1703 = vpop.f32.mrb[0].mxu0
    %v1704 = vpop.f32.mrb[0].mxu0
    %v1705 = vadd.f32 %v1049, %v1704
    %v1706 = vpop.f32.mrb[0].mxu0
    %1707 = vmatprep.mubr.bf16.mxu0 %v829
    %1708 = vmatmul.mubr.bf16.gmra.mrb[0].mxu0 %v828
    %v1709 = vpop.f32.mrb[0].mxu0
    %v1710 = vadd.f32 %v1049, %v1709
    %v1711 = vpop.f32.mrb[0].mxu0
    %v1712 = vpop.f32.mrb[0].mxu0
    %v1713 = vadd.f32 %v1049, %v1712
    %v1714 = vpop.f32.mrb[0].mxu0
    %1715 = vmatprep.mubr.bf16.mxu0 %v838
    %1716 = vmatmul.mubr.bf16.gmra.mrb[0].mxu0 %v837
    %v1717 = vpop.f32.mrb[0].mxu0
    %v1718 = vadd.f32 %v1049, %v1717
    %v1719 = vpop.f32.mrb[0].mxu0
    %v1720 = vpop.f32.mrb[0].mxu0
    %v1721 = vadd.f32 %v1049, %v1720
    %v1722 = vpop.f32.mrb[0].mxu0
    %1723 = vmatprep.mubr.bf16.mxu0 %v847
    %1724 = vmatmul.mubr.bf16.gmra.mrb[0].mxu0 %v846
    %v1725 = vpop.f32.mrb[0].mxu0
    %v1726 = vadd.f32 %v1049, %v1725
    %v1727 = vpop.f32.mrb[0].mxu0
    %v1728 = vpop.f32.mrb[0].mxu0
    %v1729 = vadd.f32 %v1049, %v1728
    %v1730 = vpop.f32.mrb[0].mxu0
    %1731 = vmatprep.mubr.bf16.mxu0 %v856
    %1732 = vmatmul.mubr.bf16.gmra.mrb[0].mxu0 %v855
    %v1733 = vpop.f32.mrb[0].mxu0
    %v1734 = vadd.f32 %v1049, %v1733
    %v1735 = vpop.f32.mrb[0].mxu0
    %v1736 = vpop.f32.mrb[0].mxu0
    %v1737 = vadd.f32 %v1049, %v1736
    %v1738 = vpop.f32.mrb[0].mxu0
    %1739 = vmatprep.mubr.bf16.mxu0 %v865
    %1740 = vmatmul.mubr.bf16.gmra.mrb[0].mxu0 %v864
    %v1741 = vpop.f32.mrb[0].mxu0
    %v1742 = vadd.f32 %v1049, %v1741
    %v1743 = vpop.f32.mrb[0].mxu0
    %v1744 = vpop.f32.mrb[0].mxu0
    %v1745 = vadd.f32 %v1049, %v1744
    %v1746 = vpop.f32.mrb[0].mxu0
    %1747 = vmatprep.mubr.bf16.mxu0 %v874
    %1748 = vmatmul.mubr.bf16.gmra.mrb[0].mxu0 %v873
    %v1749 = vpop.f32.mrb[0].mxu0
    %v1750 = vadd.f32 %v1049, %v1749
    %v1751 = vpop.f32.mrb[0].mxu0
    %v1752 = vpop.f32.mrb[0].mxu0
    %v1753 = vadd.f32 %v1049, %v1752
    %v1754 = vpop.f32.mrb[0].mxu0
    %1755 = vmatprep.mubr.bf16.mxu0 %v883
    %1756 = vmatmul.mubr.bf16.gmra.mrb[0].mxu0 %v882
    %v1757 = vpop.f32.mrb[0].mxu0
    %v1758 = vadd.f32 %v1049, %v1757
    %v1759 = vpop.f32.mrb[0].mxu0
    %v1760 = vpop.f32.mrb[0].mxu0
    %v1761 = vadd.f32 %v1049, %v1760
    %v1762 = vpop.f32.mrb[0].mxu0
    %1763 = vmatprep.mubr.bf16.mxu0 %v892
    %1764 = vmatmul.mubr.bf16.gmra.mrb[0].mxu0 %v891
    %v1765 = vpop.f32.mrb[0].mxu0
    %v1766 = vadd.f32 %v1049, %v1765
    %v1767 = vpop.f32.mrb[0].mxu0
    %v1768 = vpop.f32.mrb[0].mxu0
    %v1769 = vadd.f32 %v1049, %v1768
    %v1770 = vpop.f32.mrb[0].mxu0
    %1771 = vdwg.mxu0
    %1772 = vmatprep.subr.bf16.mxu0 0
    %1773 = vmatpush1.bf16.msra.mxu0 %v1355
    %1774 = vmatprep.subr.bf16.mxu0 0
    %1775 = vmatpush1.bf16.msra.mxu0 %v1356
    %1776 = vmatprep.subr.bf16.mxu0 0
    %1777 = vmatpush1.bf16.msra.mxu0 %v1357
    %1778 = vmatprep.subr.bf16.mxu0 0
    %1779 = vmatpush1.bf16.msra.mxu0 %v1358
    %1780 = vmatprep.subr.bf16.mxu0 0
    %1781 = vmatpush1.bf16.msra.mxu0 %v1359
    %1782 = vmatprep.subr.bf16.mxu0 0
    %1783 = vmatpush1.bf16.msra.mxu0 %v1360
    %1784 = vmatprep.subr.bf16.mxu0 0
    %1785 = vmatpush1.bf16.msra.mxu0 %v1361
    %1786 = vmatprep.subr.bf16.mxu0 0
    %1787 = vmatpush1.bf16.msra.mxu0 %v1362
    %1788 = vmatprep.subr.bf16.mxu0 0
    %1789 = vmatpush1.bf16.msra.mxu0 %v1363
    %1790 = vmatprep.subr.bf16.mxu0 0
    %1791 = vmatpush1.bf16.msra.mxu0 %v1364
    %1792 = vmatprep.subr.bf16.mxu0 0
    %1793 = vmatpush1.bf16.msra.mxu0 %v1365
    %1794 = vmatprep.subr.bf16.mxu0 0
    %1795 = vmatpush1.bf16.msra.mxu0 %v1366
    %1796 = vmatprep.subr.bf16.mxu0 0
    %1797 = vmatpush1.bf16.msra.mxu0 %v1367
    %1798 = vmatprep.subr.bf16.mxu0 0
    %1799 = vmatpush1.bf16.msra.mxu0 %v1368
    %1800 = vmatprep.subr.bf16.mxu0 0
    %1801 = vmatpush1.bf16.msra.mxu0 %v1369
    %1802 = vmatprep.subr.bf16.mxu0 0
    %1803 = vmatpush1.bf16.msra.mxu0 %v1370
    %1804 = vmatprep.mubr.bf16.mxu0 %v615
    %1805 = vmatmul.mubr.bf16.gmra.mrb[0].mxu0 %v614
    %v1806 = vpop.f32.mrb[0].mxu0
    %v1807 = vadd.f32 %v1518, %v1806
    %v1808 = vpop.f32.mrb[0].mxu0
    %v1809 = vpop.f32.mrb[0].mxu0
    %v1810 = vadd.f32 %v1521, %v1809
    %v1811 = vpop.f32.mrb[0].mxu0
    %1812 = vmatprep.mubr.bf16.mxu0 %v624
    %1813 = vmatmul.mubr.bf16.gmra.mrb[0].mxu0 %v623
    %v1814 = vpop.f32.mrb[0].mxu0
    %v1815 = vadd.f32 %v1526, %v1814
    %v1816 = vpop.f32.mrb[0].mxu0
    %v1817 = vpop.f32.mrb[0].mxu0
    %v1818 = vadd.f32 %v1529, %v1817
    %v1819 = vpop.f32.mrb[0].mxu0
    %1820 = vmatprep.mubr.bf16.mxu0 %v633
    %1821 = vmatmul.mubr.bf16.gmra.mrb[0].mxu0 %v632
    %v1822 = vpop.f32.mrb[0].mxu0
    %v1823 = vadd.f32 %v1534, %v1822
    %v1824 = vpop.f32.mrb[0].mxu0
    %v1825 = vpop.f32.mrb[0].mxu0
    %v1826 = vadd.f32 %v1537, %v1825
    %v1827 = vpop.f32.mrb[0].mxu0
    %1828 = vmatprep.mubr.bf16.mxu0 %v642
    %1829 = vmatmul.mubr.bf16.gmra.mrb[0].mxu0 %v641
    %v1830 = vpop.f32.mrb[0].mxu0
    %v1831 = vadd.f32 %v1542, %v1830
    %v1832 = vpop.f32.mrb[0].mxu0
    %v1833 = vpop.f32.mrb[0].mxu0
    %v1834 = vadd.f32 %v1545, %v1833
    %v1835 = vpop.f32.mrb[0].mxu0
    %1836 = vmatprep.mubr.bf16.mxu0 %v651
    %1837 = vmatmul.mubr.bf16.gmra.mrb[0].mxu0 %v650
    %v1838 = vpop.f32.mrb[0].mxu0
    %v1839 = vadd.f32 %v1550, %v1838
    %v1840 = vpop.f32.mrb[0].mxu0
    %v1841 = vpop.f32.mrb[0].mxu0
    %v1842 = vadd.f32 %v1553, %v1841
    %v1843 = vpop.f32.mrb[0].mxu0
    %1844 = vmatprep.mubr.bf16.mxu0 %v660
    %1845 = vmatmul.mubr.bf16.gmra.mrb[0].mxu0 %v659
    %v1846 = vpop.f32.mrb[0].mxu0
    %v1847 = vadd.f32 %v1558, %v1846
    %v1848 = vpop.f32.mrb[0].mxu0
    %v1849 = vpop.f32.mrb[0].mxu0
    %v1850 = vadd.f32 %v1561, %v1849
    %v1851 = vpop.f32.mrb[0].mxu0
    %1852 = vmatprep.mubr.bf16.mxu0 %v669
    %1853 = vmatmul.mubr.bf16.gmra.mrb[0].mxu0 %v668
    %v1854 = vpop.f32.mrb[0].mxu0
    %v1855 = vadd.f32 %v1566, %v1854
    %v1856 = vpop.f32.mrb[0].mxu0
    %v1857 = vpop.f32.mrb[0].mxu0
    %v1858 = vadd.f32 %v1569, %v1857
    %v1859 = vpop.f32.mrb[0].mxu0
    %1860 = vmatprep.mubr.bf16.mxu0 %v678
    %1861 = vmatmul.mubr.bf16.gmra.mrb[0].mxu0 %v677
    %v1862 = vpop.f32.mrb[0].mxu0
    %v1863 = vadd.f32 %v1574, %v1862
    %v1864 = vpop.f32.mrb[0].mxu0
    %v1865 = vpop.f32.mrb[0].mxu0
    %v1866 = vadd.f32 %v1577, %v1865
    %v1867 = vpop.f32.mrb[0].mxu0
    %1868 = vmatprep.mubr.bf16.mxu0 %v687
    %1869 = vmatmul.mubr.bf16.gmra.mrb[0].mxu0 %v686
    %v1870 = vpop.f32.mrb[0].mxu0
    %v1871 = vadd.f32 %v1582, %v1870
    %v1872 = vpop.f32.mrb[0].mxu0
    %v1873 = vpop.f32.mrb[0].mxu0
    %v1874 = vadd.f32 %v1585, %v1873
    %v1875 = vpop.f32.mrb[0].mxu0
    %1876 = vmatprep.mubr.bf16.mxu0 %v696
    %1877 = vmatmul.mubr.bf16.gmra.mrb[0].mxu0 %v695
    %v1878 = vpop.f32.mrb[0].mxu0
    %v1879 = vadd.f32 %v1590, %v1878
    %v1880 = vpop.f32.mrb[0].mxu0
    %v1881 = vpop.f32.mrb[0].mxu0
    %v1882 = vadd.f32 %v1593, %v1881
    %v1883 = vpop.f32.mrb[0].mxu0
    %1884 = vmatprep.mubr.bf16.mxu0 %v705
    %1885 = vmatmul.mubr.bf16.gmra.mrb[0].mxu0 %v704
    %v1886 = vpop.f32.mrb[0].mxu0
    %v1887 = vadd.f32 %v1598, %v1886
    %v1888 = vpop.f32.mrb[0].mxu0
    %v1889 = vpop.f32.mrb[0].mxu0
    %v1890 = vadd.f32 %v1601, %v1889
    %v1891 = vpop.f32.mrb[0].mxu0
    %1892 = vmatprep.mubr.bf16.mxu0 %v714
    %1893 = vmatmul.mubr.bf16.gmra.mrb[0].mxu0 %v713
    %v1894 = vpop.f32.mrb[0].mxu0
    %v1895 = vadd.f32 %v1606, %v1894
    %v1896 = vpop.f32.mrb[0].mxu0
    %v1897 = vpop.f32.mrb[0].mxu0
    %v1898 = vadd.f32 %v1609, %v1897
    %v1899 = vpop.f32.mrb[0].mxu0
    %1900 = vmatprep.mubr.bf16.mxu0 %v723
    %1901 = vmatmul.mubr.bf16.gmra.mrb[0].mxu0 %v722
    %v1902 = vpop.f32.mrb[0].mxu0
    %v1903 = vadd.f32 %v1614, %v1902
    %v1904 = vpop.f32.mrb[0].mxu0
    %v1905 = vpop.f32.mrb[0].mxu0
    %v1906 = vadd.f32 %v1617, %v1905
    %v1907 = vpop.f32.mrb[0].mxu0
    %1908 = vmatprep.mubr.bf16.mxu0 %v732
    %1909 = vmatmul.mubr.bf16.gmra.mrb[0].mxu0 %v731
    %v1910 = vpop.f32.mrb[0].mxu0
    %v1911 = vadd.f32 %v1622, %v1910
    %v1912 = vpop.f32.mrb[0].mxu0
    %v1913 = vpop.f32.mrb[0].mxu0
    %v1914 = vadd.f32 %v1625, %v1913
    %v1915 = vpop.f32.mrb[0].mxu0
    %1916 = vmatprep.mubr.bf16.mxu0 %v741
    %1917 = vmatmul.mubr.bf16.gmra.mrb[0].mxu0 %v740
    %v1918 = vpop.f32.mrb[0].mxu0
    %v1919 = vadd.f32 %v1630, %v1918
    %v1920 = vpop.f32.mrb[0].mxu0
    %v1921 = vpop.f32.mrb[0].mxu0
    %v1922 = vadd.f32 %v1633, %v1921
    %v1923 = vpop.f32.mrb[0].mxu0
    %1924 = vmatprep.mubr.bf16.mxu0 %v750
    %1925 = vmatmul.mubr.bf16.gmra.mrb[0].mxu0 %v749
    %v1926 = vpop.f32.mrb[0].mxu0
    %v1927 = vadd.f32 %v1638, %v1926
    %v1928 = vpop.f32.mrb[0].mxu0
    %v1929 = vpop.f32.mrb[0].mxu0
    %v1930 = vadd.f32 %v1641, %v1929
    %v1931 = vpop.f32.mrb[0].mxu0
    %1932 = vmatprep.mubr.bf16.mxu0 %v759
    %1933 = vmatmul.mubr.bf16.gmra.mrb[0].mxu0 %v758
    %v1934 = vpop.f32.mrb[0].mxu0
    %v1935 = vadd.f32 %v1646, %v1934
    %v1936 = vpop.f32.mrb[0].mxu0
    %v1937 = vpop.f32.mrb[0].mxu0
    %v1938 = vadd.f32 %v1649, %v1937
    %v1939 = vpop.f32.mrb[0].mxu0
    %1940 = vmatprep.mubr.bf16.mxu0 %v768
    %1941 = vmatmul.mubr.bf16.gmra.mrb[0].mxu0 %v767
    %v1942 = vpop.f32.mrb[0].mxu0
    %v1943 = vadd.f32 %v1654, %v1942
    %v1944 = vpop.f32.mrb[0].mxu0
    %v1945 = vpop.f32.mrb[0].mxu0
    %v1946 = vadd.f32 %v1657, %v1945
    %v1947 = vpop.f32.mrb[0].mxu0
    %1948 = vmatprep.mubr.bf16.mxu0 %v777
    %1949 = vmatmul.mubr.bf16.gmra.mrb[0].mxu0 %v776
    %v1950 = vpop.f32.mrb[0].mxu0
    %v1951 = vadd.f32 %v1662, %v1950
    %v1952 = vpop.f32.mrb[0].mxu0
    %v1953 = vpop.f32.mrb[0].mxu0
    %v1954 = vadd.f32 %v1665, %v1953
    %v1955 = vpop.f32.mrb[0].mxu0
    %1956 = vmatprep.mubr.bf16.mxu0 %v786
    %1957 = vmatmul.mubr.bf16.gmra.mrb[0].mxu0 %v785
    %v1958 = vpop.f32.mrb[0].mxu0
    %v1959 = vadd.f32 %v1670, %v1958
    %v1960 = vpop.f32.mrb[0].mxu0
    %v1961 = vpop.f32.mrb[0].mxu0
    %v1962 = vadd.f32 %v1673, %v1961
    %v1963 = vpop.f32.mrb[0].mxu0
    %1964 = vmatprep.mubr.bf16.mxu0 %v795
    %1965 = vmatmul.mubr.bf16.gmra.mrb[0].mxu0 %v794
    %v1966 = vpop.f32.mrb[0].mxu0
    %v1967 = vadd.f32 %v1678, %v1966
    %v1968 = vpop.f32.mrb[0].mxu0
    %v1969 = vpop.f32.mrb[0].mxu0
    %v1970 = vadd.f32 %v1681, %v1969
    %v1971 = vpop.f32.mrb[0].mxu0
    %1972 = vmatprep.mubr.bf16.mxu0 %v804
    %1973 = vmatmul.mubr.bf16.gmra.mrb[0].mxu0 %v803
    %v1974 = vpop.f32.mrb[0].mxu0
    %v1975 = vadd.f32 %v1686, %v1974
    %v1976 = vpop.f32.mrb[0].mxu0
    %v1977 = vpop.f32.mrb[0].mxu0
    %v1978 = vadd.f32 %v1689, %v1977
    %v1979 = vpop.f32.mrb[0].mxu0
    %1980 = vmatprep.mubr.bf16.mxu0 %v813
    %1981 = vmatmul.mubr.bf16.gmra.mrb[0].mxu0 %v812
    %v1982 = vpop.f32.mrb[0].mxu0
    %v1983 = vadd.f32 %v1694, %v1982
    %v1984 = vpop.f32.mrb[0].mxu0
    %v1985 = vpop.f32.mrb[0].mxu0
    %v1986 = vadd.f32 %v1697, %v1985
    %v1987 = vpop.f32.mrb[0].mxu0
    %1988 = vmatprep.mubr.bf16.mxu0 %v822
    %1989 = vmatmul.mubr.bf16.gmra.mrb[0].mxu0 %v821
    %v1990 = vpop.f32.mrb[0].mxu0
    %v1991 = vadd.f32 %v1702, %v1990
    %v1992 = vpop.f32.mrb[0].mxu0
    %v1993 = vpop.f32.mrb[0].mxu0
    %v1994 = vadd.f32 %v1705, %v1993
    %v1995 = vpop.f32.mrb[0].mxu0
    %1996 = vmatprep.mubr.bf16.mxu0 %v831
    %1997 = vmatmul.mubr.bf16.gmra.mrb[0].mxu0 %v830
    %v1998 = vpop.f32.mrb[0].mxu0
    %v1999 = vadd.f32 %v1710, %v1998
    %v2000 = vpop.f32.mrb[0].mxu0
    %v2001 = vpop.f32.mrb[0].mxu0
    %v2002 = vadd.f32 %v1713, %v2001
    %v2003 = vpop.f32.mrb[0].mxu0
    %2004 = vmatprep.mubr.bf16.mxu0 %v840
    %2005 = vmatmul.mubr.bf16.gmra.mrb[0].mxu0 %v839
    %v2006 = vpop.f32.mrb[0].mxu0
    %v2007 = vadd.f32 %v1718, %v2006
    %v2008 = vpop.f32.mrb[0].mxu0
    %v2009 = vpop.f32.mrb[0].mxu0
    %v2010 = vadd.f32 %v1721, %v2009
    %v2011 = vpop.f32.mrb[0].mxu0
    %2012 = vmatprep.mubr.bf16.mxu0 %v849
    %2013 = vmatmul.mubr.bf16.gmra.mrb[0].mxu0 %v848
    %v2014 = vpop.f32.mrb[0].mxu0
    %v2015 = vadd.f32 %v1726, %v2014
    %v2016 = vpop.f32.mrb[0].mxu0
    %v2017 = vpop.f32.mrb[0].mxu0
    %v2018 = vadd.f32 %v1729, %v2017
    %v2019 = vpop.f32.mrb[0].mxu0
    %2020 = vmatprep.mubr.bf16.mxu0 %v858
    %2021 = vmatmul.mubr.bf16.gmra.mrb[0].mxu0 %v857
    %v2022 = vpop.f32.mrb[0].mxu0
    %v2023 = vadd.f32 %v1734, %v2022
    %v2024 = vpop.f32.mrb[0].mxu0
    %v2025 = vpop.f32.mrb[0].mxu0
    %v2026 = vadd.f32 %v1737, %v2025
    %v2027 = vpop.f32.mrb[0].mxu0
    %2028 = vmatprep.mubr.bf16.mxu0 %v867
    %2029 = vmatmul.mubr.bf16.gmra.mrb[0].mxu0 %v866
    %v2030 = vpop.f32.mrb[0].mxu0
    %v2031 = vadd.f32 %v1742, %v2030
    %v2032 = vpop.f32.mrb[0].mxu0
    %v2033 = vpop.f32.mrb[0].mxu0
    %v2034 = vadd.f32 %v1745, %v2033
    %v2035 = vpop.f32.mrb[0].mxu0
    %2036 = vmatprep.mubr.bf16.mxu0 %v876
    %2037 = vmatmul.mubr.bf16.gmra.mrb[0].mxu0 %v875
    %v2038 = vpop.f32.mrb[0].mxu0
    %v2039 = vadd.f32 %v1750, %v2038
    %v2040 = vpop.f32.mrb[0].mxu0
    %v2041 = vpop.f32.mrb[0].mxu0
    %v2042 = vadd.f32 %v1753, %v2041
    %v2043 = vpop.f32.mrb[0].mxu0
    %2044 = vmatprep.mubr.bf16.mxu0 %v885
    %2045 = vmatmul.mubr.bf16.gmra.mrb[0].mxu0 %v884
    %v2046 = vpop.f32.mrb[0].mxu0
    %v2047 = vadd.f32 %v1758, %v2046
    %v2048 = vpop.f32.mrb[0].mxu0
    %v2049 = vpop.f32.mrb[0].mxu0
    %v2050 = vadd.f32 %v1761, %v2049
    %v2051 = vpop.f32.mrb[0].mxu0
    %2052 = vmatprep.mubr.bf16.mxu0 %v894
    %2053 = vmatmul.mubr.bf16.gmra.mrb[0].mxu0 %v893
    %v2054 = vpop.f32.mrb[0].mxu0
    %v2055 = vadd.f32 %v1766, %v2054
    %v2056 = vpop.f32.mrb[0].mxu0
    %v2057 = vpop.f32.mrb[0].mxu0
    %v2058 = vadd.f32 %v1769, %v2057
    %v2059 = vpop.f32.mrb[0].mxu0
    %2060 = vdwg.mxu0
    %2061 = vmatprep.subr.bf16.mxu0 0
    %2062 = vmatpush1.bf16.msra.mxu0 %v1371
    %2063 = vmatprep.subr.bf16.mxu0 0
    %2064 = vmatpush1.bf16.msra.mxu0 %v1372
    %2065 = vmatprep.subr.bf16.mxu0 0
    %2066 = vmatpush1.bf16.msra.mxu0 %v1373
    %2067 = vmatprep.subr.bf16.mxu0 0
    %2068 = vmatpush1.bf16.msra.mxu0 %v1374
    %2069 = vmatprep.subr.bf16.mxu0 0
    %2070 = vmatpush1.bf16.msra.mxu0 %v1375
    %2071 = vmatprep.subr.bf16.mxu0 0
    %2072 = vmatpush1.bf16.msra.mxu0 %v1376
    %2073 = vmatprep.subr.bf16.mxu0 0
    %2074 = vmatpush1.bf16.msra.mxu0 %v1377
    %2075 = vmatprep.subr.bf16.mxu0 0
    %2076 = vmatpush1.bf16.msra.mxu0 %v1378
    %2077 = vmatprep.subr.bf16.mxu0 0
    %2078 = vmatpush1.bf16.msra.mxu0 %v1379
    %2079 = vmatprep.subr.bf16.mxu0 0
    %2080 = vmatpush1.bf16.msra.mxu0 %v1380
    %2081 = vmatprep.subr.bf16.mxu0 0
    %2082 = vmatpush1.bf16.msra.mxu0 %v1381
    %2083 = vmatprep.subr.bf16.mxu0 0
    %2084 = vmatpush1.bf16.msra.mxu0 %v1382
    %2085 = vmatprep.subr.bf16.mxu0 0
    %2086 = vmatpush1.bf16.msra.mxu0 %v1383
    %2087 = vmatprep.subr.bf16.mxu0 0
    %2088 = vmatpush1.bf16.msra.mxu0 %v1384
    %2089 = vmatprep.subr.bf16.mxu0 0
    %2090 = vmatpush1.bf16.msra.mxu0 %v1385
    %2091 = vmatprep.subr.bf16.mxu0 0
    %2092 = vmatpush1.bf16.msra.mxu0 %v1386
    %2093 = vmatprep.mubr.bf16.mxu0 %v617
    %2094 = vmatmul.mubr.bf16.gmra.mrb[0].mxu0 %v616
    %v2095 = vpop.f32.mrb[0].mxu0
    %v2096 = vadd.f32 %v1807, %v2095
    %v2097 = vpop.f32.mrb[0].mxu0
    %v2098 = vpop.f32.mrb[0].mxu0
    %v2099 = vadd.f32 %v1810, %v2098
    %v2100 = vpop.f32.mrb[0].mxu0
    %2101 = vmatprep.mubr.bf16.mxu0 %v626
    %2102 = vmatmul.mubr.bf16.gmra.mrb[0].mxu0 %v625
    %v2103 = vpop.f32.mrb[0].mxu0
    %v2104 = vadd.f32 %v1815, %v2103
    %v2105 = vpop.f32.mrb[0].mxu0
    %v2106 = vpop.f32.mrb[0].mxu0
    %v2107 = vadd.f32 %v1818, %v2106
    %v2108 = vpop.f32.mrb[0].mxu0
    %2109 = vmatprep.mubr.bf16.mxu0 %v635
    %2110 = vmatmul.mubr.bf16.gmra.mrb[0].mxu0 %v634
    %v2111 = vpop.f32.mrb[0].mxu0
    %v2112 = vadd.f32 %v1823, %v2111
    %v2113 = vpop.f32.mrb[0].mxu0
    %v2114 = vpop.f32.mrb[0].mxu0
    %v2115 = vadd.f32 %v1826, %v2114
    %v2116 = vpop.f32.mrb[0].mxu0
    %2117 = vmatprep.mubr.bf16.mxu0 %v644
    %2118 = vmatmul.mubr.bf16.gmra.mrb[0].mxu0 %v643
    %v2119 = vpop.f32.mrb[0].mxu0
    %v2120 = vadd.f32 %v1831, %v2119
    %v2121 = vpop.f32.mrb[0].mxu0
    %v2122 = vpop.f32.mrb[0].mxu0
    %v2123 = vadd.f32 %v1834, %v2122
    %v2124 = vpop.f32.mrb[0].mxu0
    %2125 = vmatprep.mubr.bf16.mxu0 %v653
    %2126 = vmatmul.mubr.bf16.gmra.mrb[0].mxu0 %v652
    %v2127 = vpop.f32.mrb[0].mxu0
    %v2128 = vadd.f32 %v1839, %v2127
    %v2129 = vpop.f32.mrb[0].mxu0
    %v2130 = vpop.f32.mrb[0].mxu0
    %v2131 = vadd.f32 %v1842, %v2130
    %v2132 = vpop.f32.mrb[0].mxu0
    %2133 = vmatprep.mubr.bf16.mxu0 %v662
    %2134 = vmatmul.mubr.bf16.gmra.mrb[0].mxu0 %v661
    %v2135 = vpop.f32.mrb[0].mxu0
    %v2136 = vadd.f32 %v1847, %v2135
    %v2137 = vpop.f32.mrb[0].mxu0
    %v2138 = vpop.f32.mrb[0].mxu0
    %v2139 = vadd.f32 %v1850, %v2138
    %v2140 = vpop.f32.mrb[0].mxu0
    %2141 = vmatprep.mubr.bf16.mxu0 %v671
    %2142 = vmatmul.mubr.bf16.gmra.mrb[0].mxu0 %v670
    %v2143 = vpop.f32.mrb[0].mxu0
    %v2144 = vadd.f32 %v1855, %v2143
    %v2145 = vpop.f32.mrb[0].mxu0
    %v2146 = vpop.f32.mrb[0].mxu0
    %v2147 = vadd.f32 %v1858, %v2146
    %v2148 = vpop.f32.mrb[0].mxu0
    %2149 = vmatprep.mubr.bf16.mxu0 %v680
    %2150 = vmatmul.mubr.bf16.gmra.mrb[0].mxu0 %v679
    %v2151 = vpop.f32.mrb[0].mxu0
    %v2152 = vadd.f32 %v1863, %v2151
    %v2153 = vpop.f32.mrb[0].mxu0
    %v2154 = vpop.f32.mrb[0].mxu0
    %v2155 = vadd.f32 %v1866, %v2154
    %v2156 = vpop.f32.mrb[0].mxu0
    %2157 = vmatprep.mubr.bf16.mxu0 %v689
    %2158 = vmatmul.mubr.bf16.gmra.mrb[0].mxu0 %v688
    %v2159 = vpop.f32.mrb[0].mxu0
    %v2160 = vadd.f32 %v1871, %v2159
    %v2161 = vpop.f32.mrb[0].mxu0
    %v2162 = vpop.f32.mrb[0].mxu0
    %v2163 = vadd.f32 %v1874, %v2162
    %v2164 = vpop.f32.mrb[0].mxu0
    %2165 = vmatprep.mubr.bf16.mxu0 %v698
    %2166 = vmatmul.mubr.bf16.gmra.mrb[0].mxu0 %v697
    %v2167 = vpop.f32.mrb[0].mxu0
    %v2168 = vadd.f32 %v1879, %v2167
    %v2169 = vpop.f32.mrb[0].mxu0
    %v2170 = vpop.f32.mrb[0].mxu0
    %v2171 = vadd.f32 %v1882, %v2170
    %v2172 = vpop.f32.mrb[0].mxu0
    %2173 = vmatprep.mubr.bf16.mxu0 %v707
    %2174 = vmatmul.mubr.bf16.gmra.mrb[0].mxu0 %v706
    %v2175 = vpop.f32.mrb[0].mxu0
    %v2176 = vadd.f32 %v1887, %v2175
    %v2177 = vpop.f32.mrb[0].mxu0
    %v2178 = vpop.f32.mrb[0].mxu0
    %v2179 = vadd.f32 %v1890, %v2178
    %v2180 = vpop.f32.mrb[0].mxu0
    %2181 = vmatprep.mubr.bf16.mxu0 %v716
    %2182 = vmatmul.mubr.bf16.gmra.mrb[0].mxu0 %v715
    %v2183 = vpop.f32.mrb[0].mxu0
    %v2184 = vadd.f32 %v1895, %v2183
    %v2185 = vpop.f32.mrb[0].mxu0
    %v2186 = vpop.f32.mrb[0].mxu0
    %v2187 = vadd.f32 %v1898, %v2186
    %v2188 = vpop.f32.mrb[0].mxu0
    %2189 = vmatprep.mubr.bf16.mxu0 %v725
    %2190 = vmatmul.mubr.bf16.gmra.mrb[0].mxu0 %v724
    %v2191 = vpop.f32.mrb[0].mxu0
    %v2192 = vadd.f32 %v1903, %v2191
    %v2193 = vpop.f32.mrb[0].mxu0
    %v2194 = vpop.f32.mrb[0].mxu0
    %v2195 = vadd.f32 %v1906, %v2194
    %v2196 = vpop.f32.mrb[0].mxu0
    %2197 = vmatprep.mubr.bf16.mxu0 %v734
    %2198 = vmatmul.mubr.bf16.gmra.mrb[0].mxu0 %v733
    %v2199 = vpop.f32.mrb[0].mxu0
    %v2200 = vadd.f32 %v1911, %v2199
    %v2201 = vpop.f32.mrb[0].mxu0
    %v2202 = vpop.f32.mrb[0].mxu0
    %v2203 = vadd.f32 %v1914, %v2202
    %v2204 = vpop.f32.mrb[0].mxu0
    %2205 = vmatprep.mubr.bf16.mxu0 %v743
    %2206 = vmatmul.mubr.bf16.gmra.mrb[0].mxu0 %v742
    %v2207 = vpop.f32.mrb[0].mxu0
    %v2208 = vadd.f32 %v1919, %v2207
    %v2209 = vpop.f32.mrb[0].mxu0
    %v2210 = vpop.f32.mrb[0].mxu0
    %v2211 = vadd.f32 %v1922, %v2210
    %v2212 = vpop.f32.mrb[0].mxu0
    %2213 = vmatprep.mubr.bf16.mxu0 %v752
    %2214 = vmatmul.mubr.bf16.gmra.mrb[0].mxu0 %v751
    %v2215 = vpop.f32.mrb[0].mxu0
    %v2216 = vadd.f32 %v1927, %v2215
    %v2217 = vpop.f32.mrb[0].mxu0
    %v2218 = vpop.f32.mrb[0].mxu0
    %v2219 = vadd.f32 %v1930, %v2218
    %v2220 = vpop.f32.mrb[0].mxu0
    %2221 = vmatprep.mubr.bf16.mxu0 %v761
    %2222 = vmatmul.mubr.bf16.gmra.mrb[0].mxu0 %v760
    %v2223 = vpop.f32.mrb[0].mxu0
    %v2224 = vadd.f32 %v1935, %v2223
    %v2225 = vpop.f32.mrb[0].mxu0
    %v2226 = vpop.f32.mrb[0].mxu0
    %v2227 = vadd.f32 %v1938, %v2226
    %v2228 = vpop.f32.mrb[0].mxu0
    %2229 = vmatprep.mubr.bf16.mxu0 %v770
    %2230 = vmatmul.mubr.bf16.gmra.mrb[0].mxu0 %v769
    %v2231 = vpop.f32.mrb[0].mxu0
    %v2232 = vadd.f32 %v1943, %v2231
    %v2233 = vpop.f32.mrb[0].mxu0
    %v2234 = vpop.f32.mrb[0].mxu0
    %v2235 = vadd.f32 %v1946, %v2234
    %v2236 = vpop.f32.mrb[0].mxu0
    %2237 = vmatprep.mubr.bf16.mxu0 %v779
    %2238 = vmatmul.mubr.bf16.gmra.mrb[0].mxu0 %v778
    %v2239 = vpop.f32.mrb[0].mxu0
    %v2240 = vadd.f32 %v1951, %v2239
    %v2241 = vpop.f32.mrb[0].mxu0
    %v2242 = vpop.f32.mrb[0].mxu0
    %v2243 = vadd.f32 %v1954, %v2242
    %v2244 = vpop.f32.mrb[0].mxu0
    %2245 = vmatprep.mubr.bf16.mxu0 %v788
    %2246 = vmatmul.mubr.bf16.gmra.mrb[0].mxu0 %v787
    %v2247 = vpop.f32.mrb[0].mxu0
    %v2248 = vadd.f32 %v1959, %v2247
    %v2249 = vpop.f32.mrb[0].mxu0
    %v2250 = vpop.f32.mrb[0].mxu0
    %v2251 = vadd.f32 %v1962, %v2250
    %v2252 = vpop.f32.mrb[0].mxu0
    %2253 = vmatprep.mubr.bf16.mxu0 %v797
    %2254 = vmatmul.mubr.bf16.gmra.mrb[0].mxu0 %v796
    %v2255 = vpop.f32.mrb[0].mxu0
    %v2256 = vadd.f32 %v1967, %v2255
    %v2257 = vpop.f32.mrb[0].mxu0
    %v2258 = vpop.f32.mrb[0].mxu0
    %v2259 = vadd.f32 %v1970, %v2258
    %v2260 = vpop.f32.mrb[0].mxu0
    %2261 = vmatprep.mubr.bf16.mxu0 %v806
    %2262 = vmatmul.mubr.bf16.gmra.mrb[0].mxu0 %v805
    %v2263 = vpop.f32.mrb[0].mxu0
    %v2264 = vadd.f32 %v1975, %v2263
    %v2265 = vpop.f32.mrb[0].mxu0
    %v2266 = vpop.f32.mrb[0].mxu0
    %v2267 = vadd.f32 %v1978, %v2266
    %v2268 = vpop.f32.mrb[0].mxu0
    %2269 = vmatprep.mubr.bf16.mxu0 %v815
    %2270 = vmatmul.mubr.bf16.gmra.mrb[0].mxu0 %v814
    %v2271 = vpop.f32.mrb[0].mxu0
    %v2272 = vadd.f32 %v1983, %v2271
    %v2273 = vpop.f32.mrb[0].mxu0
    %v2274 = vpop.f32.mrb[0].mxu0
    %v2275 = vadd.f32 %v1986, %v2274
    %v2276 = vpop.f32.mrb[0].mxu0
    %2277 = vmatprep.mubr.bf16.mxu0 %v824
    %2278 = vmatmul.mubr.bf16.gmra.mrb[0].mxu0 %v823
    %v2279 = vpop.f32.mrb[0].mxu0
    %v2280 = vadd.f32 %v1991, %v2279
    %v2281 = vpop.f32.mrb[0].mxu0
    %v2282 = vpop.f32.mrb[0].mxu0
    %v2283 = vadd.f32 %v1994, %v2282
    %v2284 = vpop.f32.mrb[0].mxu0
    %2285 = vmatprep.mubr.bf16.mxu0 %v833
    %2286 = vmatmul.mubr.bf16.gmra.mrb[0].mxu0 %v832
    %v2287 = vpop.f32.mrb[0].mxu0
    %v2288 = vadd.f32 %v1999, %v2287
    %v2289 = vpop.f32.mrb[0].mxu0
    %v2290 = vpop.f32.mrb[0].mxu0
    %v2291 = vadd.f32 %v2002, %v2290
    %v2292 = vpop.f32.mrb[0].mxu0
    %2293 = vmatprep.mubr.bf16.mxu0 %v842
    %2294 = vmatmul.mubr.bf16.gmra.mrb[0].mxu0 %v841
    %v2295 = vpop.f32.mrb[0].mxu0
    %v2296 = vadd.f32 %v2007, %v2295
    %v2297 = vpop.f32.mrb[0].mxu0
    %v2298 = vpop.f32.mrb[0].mxu0
    %v2299 = vadd.f32 %v2010, %v2298
    %v2300 = vpop.f32.mrb[0].mxu0
    %2301 = vmatprep.mubr.bf16.mxu0 %v851
    %2302 = vmatmul.mubr.bf16.gmra.mrb[0].mxu0 %v850
    %v2303 = vpop.f32.mrb[0].mxu0
    %v2304 = vadd.f32 %v2015, %v2303
    %v2305 = vpop.f32.mrb[0].mxu0
    %v2306 = vpop.f32.mrb[0].mxu0
    %v2307 = vadd.f32 %v2018, %v2306
    %v2308 = vpop.f32.mrb[0].mxu0
    %2309 = vmatprep.mubr.bf16.mxu0 %v860
    %2310 = vmatmul.mubr.bf16.gmra.mrb[0].mxu0 %v859
    %v2311 = vpop.f32.mrb[0].mxu0
    %v2312 = vadd.f32 %v2023, %v2311
    %v2313 = vpop.f32.mrb[0].mxu0
    %v2314 = vpop.f32.mrb[0].mxu0
    %v2315 = vadd.f32 %v2026, %v2314
    %v2316 = vpop.f32.mrb[0].mxu0
    %2317 = vmatprep.mubr.bf16.mxu0 %v869
    %2318 = vmatmul.mubr.bf16.gmra.mrb[0].mxu0 %v868
    %v2319 = vpop.f32.mrb[0].mxu0
    %v2320 = vadd.f32 %v2031, %v2319
    %v2321 = vpop.f32.mrb[0].mxu0
    %v2322 = vpop.f32.mrb[0].mxu0
    %v2323 = vadd.f32 %v2034, %v2322
    %v2324 = vpop.f32.mrb[0].mxu0
    %2325 = vmatprep.mubr.bf16.mxu0 %v878
    %2326 = vmatmul.mubr.bf16.gmra.mrb[0].mxu0 %v877
    %v2327 = vpop.f32.mrb[0].mxu0
    %v2328 = vadd.f32 %v2039, %v2327
    %v2329 = vpop.f32.mrb[0].mxu0
    %v2330 = vpop.f32.mrb[0].mxu0
    %v2331 = vadd.f32 %v2042, %v2330
    %v2332 = vpop.f32.mrb[0].mxu0
    %2333 = vmatprep.mubr.bf16.mxu0 %v887
    %2334 = vmatmul.mubr.bf16.gmra.mrb[0].mxu0 %v886
    %v2335 = vpop.f32.mrb[0].mxu0
    %v2336 = vadd.f32 %v2047, %v2335
    %v2337 = vpop.f32.mrb[0].mxu0
    %v2338 = vpop.f32.mrb[0].mxu0
    %v2339 = vadd.f32 %v2050, %v2338
    %v2340 = vpop.f32.mrb[0].mxu0
    %2341 = vmatprep.mubr.bf16.mxu0 %v896
    %2342 = vmatmul.mubr.bf16.gmra.mrb[0].mxu0 %v895
    %v2343 = vpop.f32.mrb[0].mxu0
    %v2344 = vadd.f32 %v2055, %v2343
    %v2345 = vpop.f32.mrb[0].mxu0
    %v2346 = vpop.f32.mrb[0].mxu0
    %v2347 = vadd.f32 %v2058, %v2346
    %v2348 = vpop.f32.mrb[0].mxu0
    %2349 = vdwg.mxu0
    %2350 = vmatprep.subr.bf16.mxu0 0
    %2351 = vmatpush1.bf16.msra.mxu0 %v1387
    %2352 = vmatprep.subr.bf16.mxu0 0
    %2353 = vmatpush1.bf16.msra.mxu0 %v1388
    %2354 = vmatprep.subr.bf16.mxu0 0
    %2355 = vmatpush1.bf16.msra.mxu0 %v1389
    %2356 = vmatprep.subr.bf16.mxu0 0
    %2357 = vmatpush1.bf16.msra.mxu0 %v1390
    %2358 = vmatprep.subr.bf16.mxu0 0
    %2359 = vmatpush1.bf16.msra.mxu0 %v1391
    %2360 = vmatprep.subr.bf16.mxu0 0
    %2361 = vmatpush1.bf16.msra.mxu0 %v1392
    %2362 = vmatprep.subr.bf16.mxu0 0
    %2363 = vmatpush1.bf16.msra.mxu0 %v1393
    %2364 = vmatprep.subr.bf16.mxu0 0
    %2365 = vmatpush1.bf16.msra.mxu0 %v1394
    %2366 = vmatprep.subr.bf16.mxu0 0
    %2367 = vmatpush1.bf16.msra.mxu0 %v1395
    %2368 = vmatprep.subr.bf16.mxu0 0
    %2369 = vmatpush1.bf16.msra.mxu0 %v1396
    %2370 = vmatprep.subr.bf16.mxu0 0
    %2371 = vmatpush1.bf16.msra.mxu0 %v1397
    %2372 = vmatprep.subr.bf16.mxu0 0
    %2373 = vmatpush1.bf16.msra.mxu0 %v1398
    %2374 = vmatprep.subr.bf16.mxu0 0
    %2375 = vmatpush1.bf16.msra.mxu0 %v1399
    %2376 = vmatprep.subr.bf16.mxu0 0
    %2377 = vmatpush1.bf16.msra.mxu0 %v1400
    %2378 = vmatprep.subr.bf16.mxu0 0
    %2379 = vmatpush1.bf16.msra.mxu0 %v1401
    %2380 = vmatprep.subr.bf16.mxu0 0
    %2381 = vmatpush1.bf16.msra.mxu0 %v1402
    %2382 = vmatprep.mubr.bf16.mxu0 %v619
    %2383 = vmatmul.mubr.bf16.gmra.mrb[0].mxu0 %v618
    %v2384 = vpop.f32.mrb[0].mxu0
    %v2385 = vadd.f32 %v2096, %v2384
    %v2386 = vpop.f32.mrb[0].mxu0
    %v2387 = vpop.f32.mrb[0].mxu0
    %v2388 = vadd.f32 %v2099, %v2387
    %v2389 = vpop.f32.mrb[0].mxu0
    %2390 = vmatprep.mubr.bf16.mxu0 %v628
    %2391 = vmatmul.mubr.bf16.gmra.mrb[0].mxu0 %v627
    %v2392 = vpop.f32.mrb[0].mxu0
    %v2393 = vadd.f32 %v2104, %v2392
    %v2394 = vpop.f32.mrb[0].mxu0
    %v2395 = vpop.f32.mrb[0].mxu0
    %v2396 = vadd.f32 %v2107, %v2395
    %v2397 = vpop.f32.mrb[0].mxu0
    %2398 = vmatprep.mubr.bf16.mxu0 %v637
    %2399 = vmatmul.mubr.bf16.gmra.mrb[0].mxu0 %v636
    %v2400 = vpop.f32.mrb[0].mxu0
    %v2401 = vadd.f32 %v2112, %v2400
    %v2402 = vpop.f32.mrb[0].mxu0
    %v2403 = vpop.f32.mrb[0].mxu0
    %v2404 = vadd.f32 %v2115, %v2403
    %v2405 = vpop.f32.mrb[0].mxu0
    %2406 = vmatprep.mubr.bf16.mxu0 %v646
    %2407 = vmatmul.mubr.bf16.gmra.mrb[0].mxu0 %v645
    %v2408 = vpop.f32.mrb[0].mxu0
    %v2409 = vadd.f32 %v2120, %v2408
    %v2410 = vpop.f32.mrb[0].mxu0
    %v2411 = vpop.f32.mrb[0].mxu0
    %v2412 = vadd.f32 %v2123, %v2411
    %v2413 = vpop.f32.mrb[0].mxu0
    %2414 = vmatprep.mubr.bf16.mxu0 %v655
    %2415 = vmatmul.mubr.bf16.gmra.mrb[0].mxu0 %v654
    %v2416 = vpop.f32.mrb[0].mxu0
    %v2417 = vadd.f32 %v2128, %v2416
    %v2418 = vpop.f32.mrb[0].mxu0
    %v2419 = vpop.f32.mrb[0].mxu0
    %v2420 = vadd.f32 %v2131, %v2419
    %v2421 = vpop.f32.mrb[0].mxu0
    %2422 = vmatprep.mubr.bf16.mxu0 %v664
    %2423 = vmatmul.mubr.bf16.gmra.mrb[0].mxu0 %v663
    %v2424 = vpop.f32.mrb[0].mxu0
    %v2425 = vadd.f32 %v2136, %v2424
    %v2426 = vpop.f32.mrb[0].mxu0
    %v2427 = vpop.f32.mrb[0].mxu0
    %v2428 = vadd.f32 %v2139, %v2427
    %v2429 = vpop.f32.mrb[0].mxu0
    %2430 = vmatprep.mubr.bf16.mxu0 %v673
    %2431 = vmatmul.mubr.bf16.gmra.mrb[0].mxu0 %v672
    %v2432 = vpop.f32.mrb[0].mxu0
    %v2433 = vadd.f32 %v2144, %v2432
    %v2434 = vpop.f32.mrb[0].mxu0
    %v2435 = vpop.f32.mrb[0].mxu0
    %v2436 = vadd.f32 %v2147, %v2435
    %v2437 = vpop.f32.mrb[0].mxu0
    %2438 = vmatprep.mubr.bf16.mxu0 %v682
    %2439 = vmatmul.mubr.bf16.gmra.mrb[0].mxu0 %v681
    %v2440 = vpop.f32.mrb[0].mxu0
    %v2441 = vadd.f32 %v2152, %v2440
    %v2442 = vpop.f32.mrb[0].mxu0
    %v2443 = vpop.f32.mrb[0].mxu0
    %v2444 = vadd.f32 %v2155, %v2443
    %v2445 = vpop.f32.mrb[0].mxu0
    %2446 = vmatprep.mubr.bf16.mxu0 %v691
    %2447 = vmatmul.mubr.bf16.gmra.mrb[0].mxu0 %v690
    %v2448 = vpop.f32.mrb[0].mxu0
    %v2449 = vadd.f32 %v2160, %v2448
    %v2450 = vpop.f32.mrb[0].mxu0
    %v2451 = vpop.f32.mrb[0].mxu0
    %v2452 = vadd.f32 %v2163, %v2451
    %v2453 = vpop.f32.mrb[0].mxu0
    %2454 = vmatprep.mubr.bf16.mxu0 %v700
    %2455 = vmatmul.mubr.bf16.gmra.mrb[0].mxu0 %v699
    %v2456 = vpop.f32.mrb[0].mxu0
    %v2457 = vadd.f32 %v2168, %v2456
    %v2458 = vpop.f32.mrb[0].mxu0
    %v2459 = vpop.f32.mrb[0].mxu0
    %v2460 = vadd.f32 %v2171, %v2459
    %v2461 = vpop.f32.mrb[0].mxu0
    %2462 = vmatprep.mubr.bf16.mxu0 %v709
    %2463 = vmatmul.mubr.bf16.gmra.mrb[0].mxu0 %v708
    %v2464 = vpop.f32.mrb[0].mxu0
    %v2465 = vadd.f32 %v2176, %v2464
    %v2466 = vpop.f32.mrb[0].mxu0
    %v2467 = vpop.f32.mrb[0].mxu0
    %v2468 = vadd.f32 %v2179, %v2467
    %v2469 = vpop.f32.mrb[0].mxu0
    %2470 = vmatprep.mubr.bf16.mxu0 %v718
    %2471 = vmatmul.mubr.bf16.gmra.mrb[0].mxu0 %v717
    %v2472 = vpop.f32.mrb[0].mxu0
    %v2473 = vadd.f32 %v2184, %v2472
    %v2474 = vpop.f32.mrb[0].mxu0
    %v2475 = vpop.f32.mrb[0].mxu0
    %v2476 = vadd.f32 %v2187, %v2475
    %v2477 = vpop.f32.mrb[0].mxu0
    %2478 = vmatprep.mubr.bf16.mxu0 %v727
    %2479 = vmatmul.mubr.bf16.gmra.mrb[0].mxu0 %v726
    %v2480 = vpop.f32.mrb[0].mxu0
    %v2481 = vadd.f32 %v2192, %v2480
    %v2482 = vpop.f32.mrb[0].mxu0
    %v2483 = vpop.f32.mrb[0].mxu0
    %v2484 = vadd.f32 %v2195, %v2483
    %v2485 = vpop.f32.mrb[0].mxu0
    %2486 = vmatprep.mubr.bf16.mxu0 %v736
    %2487 = vmatmul.mubr.bf16.gmra.mrb[0].mxu0 %v735
    %v2488 = vpop.f32.mrb[0].mxu0
    %v2489 = vadd.f32 %v2200, %v2488
    %v2490 = vpop.f32.mrb[0].mxu0
    %v2491 = vpop.f32.mrb[0].mxu0
    %v2492 = vadd.f32 %v2203, %v2491
    %v2493 = vpop.f32.mrb[0].mxu0
    %2494 = vmatprep.mubr.bf16.mxu0 %v745
    %2495 = vmatmul.mubr.bf16.gmra.mrb[0].mxu0 %v744
    %v2496 = vpop.f32.mrb[0].mxu0
    %v2497 = vadd.f32 %v2208, %v2496
    %v2498 = vpop.f32.mrb[0].mxu0
    %v2499 = vpop.f32.mrb[0].mxu0
    %v2500 = vadd.f32 %v2211, %v2499
    %v2501 = vpop.f32.mrb[0].mxu0
    %2502 = vmatprep.mubr.bf16.mxu0 %v754
    %2503 = vmatmul.mubr.bf16.gmra.mrb[0].mxu0 %v753
    %v2504 = vpop.f32.mrb[0].mxu0
    %v2505 = vadd.f32 %v2216, %v2504
    %v2506 = vpop.f32.mrb[0].mxu0
    %v2507 = vpop.f32.mrb[0].mxu0
    %v2508 = vadd.f32 %v2219, %v2507
    %v2509 = vpop.f32.mrb[0].mxu0
    %2510 = vmatprep.mubr.bf16.mxu0 %v763
    %2511 = vmatmul.mubr.bf16.gmra.mrb[0].mxu0 %v762
    %v2512 = vpop.f32.mrb[0].mxu0
    %v2513 = vadd.f32 %v2224, %v2512
    %v2514 = vpop.f32.mrb[0].mxu0
    %v2515 = vpop.f32.mrb[0].mxu0
    %v2516 = vadd.f32 %v2227, %v2515
    %v2517 = vpop.f32.mrb[0].mxu0
    %2518 = vmatprep.mubr.bf16.mxu0 %v772
    %2519 = vmatmul.mubr.bf16.gmra.mrb[0].mxu0 %v771
    %v2520 = vpop.f32.mrb[0].mxu0
    %v2521 = vadd.f32 %v2232, %v2520
    %v2522 = vpop.f32.mrb[0].mxu0
    %v2523 = vpop.f32.mrb[0].mxu0
    %v2524 = vadd.f32 %v2235, %v2523
    %v2525 = vpop.f32.mrb[0].mxu0
    %2526 = vmatprep.mubr.bf16.mxu0 %v781
    %2527 = vmatmul.mubr.bf16.gmra.mrb[0].mxu0 %v780
    %v2528 = vpop.f32.mrb[0].mxu0
    %v2529 = vadd.f32 %v2240, %v2528
    %v2530 = vpop.f32.mrb[0].mxu0
    %v2531 = vpop.f32.mrb[0].mxu0
    %v2532 = vadd.f32 %v2243, %v2531
    %v2533 = vpop.f32.mrb[0].mxu0
    %2534 = vmatprep.mubr.bf16.mxu0 %v790
    %2535 = vmatmul.mubr.bf16.gmra.mrb[0].mxu0 %v789
    %v2536 = vpop.f32.mrb[0].mxu0
    %v2537 = vadd.f32 %v2248, %v2536
    %v2538 = vpop.f32.mrb[0].mxu0
    %v2539 = vpop.f32.mrb[0].mxu0
    %v2540 = vadd.f32 %v2251, %v2539
    %v2541 = vpop.f32.mrb[0].mxu0
    %2542 = vmatprep.mubr.bf16.mxu0 %v799
    %2543 = vmatmul.mubr.bf16.gmra.mrb[0].mxu0 %v798
    %v2544 = vpop.f32.mrb[0].mxu0
    %v2545 = vadd.f32 %v2256, %v2544
    %v2546 = vpop.f32.mrb[0].mxu0
    %v2547 = vpop.f32.mrb[0].mxu0
    %v2548 = vadd.f32 %v2259, %v2547
    %v2549 = vpop.f32.mrb[0].mxu0
    %2550 = vmatprep.mubr.bf16.mxu0 %v808
    %2551 = vmatmul.mubr.bf16.gmra.mrb[0].mxu0 %v807
    %v2552 = vpop.f32.mrb[0].mxu0
    %v2553 = vadd.f32 %v2264, %v2552
    %v2554 = vpop.f32.mrb[0].mxu0
    %v2555 = vpop.f32.mrb[0].mxu0
    %v2556 = vadd.f32 %v2267, %v2555
    %v2557 = vpop.f32.mrb[0].mxu0
    %2558 = vmatprep.mubr.bf16.mxu0 %v817
    %2559 = vmatmul.mubr.bf16.gmra.mrb[0].mxu0 %v816
    %v2560 = vpop.f32.mrb[0].mxu0
    %v2561 = vadd.f32 %v2272, %v2560
    %v2562 = vpop.f32.mrb[0].mxu0
    %v2563 = vpop.f32.mrb[0].mxu0
    %v2564 = vadd.f32 %v2275, %v2563
    %v2565 = vpop.f32.mrb[0].mxu0
    %2566 = vmatprep.mubr.bf16.mxu0 %v826
    %2567 = vmatmul.mubr.bf16.gmra.mrb[0].mxu0 %v825
    %v2568 = vpop.f32.mrb[0].mxu0
    %v2569 = vadd.f32 %v2280, %v2568
    %v2570 = vpop.f32.mrb[0].mxu0
    %v2571 = vpop.f32.mrb[0].mxu0
    %v2572 = vadd.f32 %v2283, %v2571
    %v2573 = vpop.f32.mrb[0].mxu0
    %2574 = vmatprep.mubr.bf16.mxu0 %v835
    %2575 = vmatmul.mubr.bf16.gmra.mrb[0].mxu0 %v834
    %v2576 = vpop.f32.mrb[0].mxu0
    %v2577 = vadd.f32 %v2288, %v2576
    %v2578 = vpop.f32.mrb[0].mxu0
    %v2579 = vpop.f32.mrb[0].mxu0
    %v2580 = vadd.f32 %v2291, %v2579
    %v2581 = vpop.f32.mrb[0].mxu0
    %2582 = vmatprep.mubr.bf16.mxu0 %v844
    %2583 = vmatmul.mubr.bf16.gmra.mrb[0].mxu0 %v843
    %v2584 = vpop.f32.mrb[0].mxu0
    %v2585 = vadd.f32 %v2296, %v2584
    %v2586 = vpop.f32.mrb[0].mxu0
    %v2587 = vpop.f32.mrb[0].mxu0
    %v2588 = vadd.f32 %v2299, %v2587
    %v2589 = vpop.f32.mrb[0].mxu0
    %2590 = vmatprep.mubr.bf16.mxu0 %v853
    %2591 = vmatmul.mubr.bf16.gmra.mrb[0].mxu0 %v852
    %v2592 = vpop.f32.mrb[0].mxu0
    %v2593 = vadd.f32 %v2304, %v2592
    %v2594 = vpop.f32.mrb[0].mxu0
    %v2595 = vpop.f32.mrb[0].mxu0
    %v2596 = vadd.f32 %v2307, %v2595
    %v2597 = vpop.f32.mrb[0].mxu0
    %2598 = vmatprep.mubr.bf16.mxu0 %v862
    %2599 = vmatmul.mubr.bf16.gmra.mrb[0].mxu0 %v861
    %v2600 = vpop.f32.mrb[0].mxu0
    %v2601 = vadd.f32 %v2312, %v2600
    %v2602 = vpop.f32.mrb[0].mxu0
    %v2603 = vpop.f32.mrb[0].mxu0
    %v2604 = vadd.f32 %v2315, %v2603
    %v2605 = vpop.f32.mrb[0].mxu0
    %2606 = vmatprep.mubr.bf16.mxu0 %v871
    %2607 = vmatmul.mubr.bf16.gmra.mrb[0].mxu0 %v870
    %v2608 = vpop.f32.mrb[0].mxu0
    %v2609 = vadd.f32 %v2320, %v2608
    %v2610 = vpop.f32.mrb[0].mxu0
    %v2611 = vpop.f32.mrb[0].mxu0
    %v2612 = vadd.f32 %v2323, %v2611
    %v2613 = vpop.f32.mrb[0].mxu0
    %2614 = vmatprep.mubr.bf16.mxu0 %v880
    %2615 = vmatmul.mubr.bf16.gmra.mrb[0].mxu0 %v879
    %v2616 = vpop.f32.mrb[0].mxu0
    %v2617 = vadd.f32 %v2328, %v2616
    %v2618 = vpop.f32.mrb[0].mxu0
    %v2619 = vpop.f32.mrb[0].mxu0
    %v2620 = vadd.f32 %v2331, %v2619
    %v2621 = vpop.f32.mrb[0].mxu0
    %2622 = vmatprep.mubr.bf16.mxu0 %v889
    %2623 = vmatmul.mubr.bf16.gmra.mrb[0].mxu0 %v888
    %v2624 = vpop.f32.mrb[0].mxu0
    %v2625 = vadd.f32 %v2336, %v2624
    %v2626 = vpop.f32.mrb[0].mxu0
    %v2627 = vpop.f32.mrb[0].mxu0
    %v2628 = vadd.f32 %v2339, %v2627
    %v2629 = vpop.f32.mrb[0].mxu0
    %2630 = vmatprep.mubr.bf16.mxu0 %v898
    %2631 = vmatmul.mubr.bf16.gmra.mrb[0].mxu0 %v897
    %v2632 = vpop.f32.mrb[0].mxu0
    %v2633 = vadd.f32 %v2344, %v2632
    %v2634 = vpop.f32.mrb[0].mxu0
    %v2635 = vpop.f32.mrb[0].mxu0
    %v2636 = vadd.f32 %v2347, %v2635
    %v2637 = vpop.f32.mrb[0].mxu0
    %2638 = vdwg.mxu0
    %2639 = vmatprep.subr.bf16.mxu0 0
    %2640 = vmatpush1.bf16.msra.mxu0 %v1403
    %2641 = vmatprep.subr.bf16.mxu0 0
    %2642 = vmatpush1.bf16.msra.mxu0 %v1404
    %2643 = vmatprep.subr.bf16.mxu0 0
    %2644 = vmatpush1.bf16.msra.mxu0 %v1405
    %2645 = vmatprep.subr.bf16.mxu0 0
    %2646 = vmatpush1.bf16.msra.mxu0 %v1406
    %2647 = vmatprep.subr.bf16.mxu0 0
    %2648 = vmatpush1.bf16.msra.mxu0 %v1407
    %2649 = vmatprep.subr.bf16.mxu0 0
    %2650 = vmatpush1.bf16.msra.mxu0 %v1408
    %2651 = vmatprep.subr.bf16.mxu0 0
    %2652 = vmatpush1.bf16.msra.mxu0 %v1409
    %2653 = vmatprep.subr.bf16.mxu0 0
    %2654 = vmatpush1.bf16.msra.mxu0 %v1410
    %2655 = vmatprep.subr.bf16.mxu0 0
    %2656 = vmatpush1.bf16.msra.mxu0 0
    %2657 = vmatprep.subr.bf16.mxu0 0
    %2658 = vmatpush1.bf16.msra.mxu0 0
    %2659 = vmatprep.subr.bf16.mxu0 0
    %2660 = vmatpush1.bf16.msra.mxu0 0
    %2661 = vmatprep.subr.bf16.mxu0 0
    %2662 = vmatpush1.bf16.msra.mxu0 0
    %2663 = vmatprep.subr.bf16.mxu0 0
    %2664 = vmatpush1.bf16.msra.mxu0 0
    %2665 = vmatprep.subr.bf16.mxu0 0
    %2666 = vmatpush1.bf16.msra.mxu0 0
    %2667 = vmatprep.subr.bf16.mxu0 0
    %2668 = vmatpush1.bf16.msra.mxu0 0
    %2669 = vmatprep.subr.bf16.mxu0 0
    %2670 = vmatpush1.bf16.msra.mxu0 0
    %2671 = vmatprep.mubr.bf16.mxu0 0
    %2672 = vmatmul.mubr.bf16.gmra.mrb[0].mxu0 %v620
    %v2673 = vpop.f32.mrb[0].mxu0
    %v2674 = vadd.f32 %v2385, %v2673
    %v2675 = vpop.f32.mrb[0].mxu0
    %v2676 = vpop.f32.mrb[0].mxu0
    %v2677 = vadd.f32 %v2388, %v2676
    %v2678 = vpop.f32.mrb[0].mxu0
    %2679 = vmatprep.mubr.bf16.mxu0 0
    %2680 = vmatmul.mubr.bf16.gmra.mrb[0].mxu0 %v629
    %v2681 = vpop.f32.mrb[0].mxu0
    %v2682 = vadd.f32 %v2393, %v2681
    %v2683 = vpop.f32.mrb[0].mxu0
    %v2684 = vpop.f32.mrb[0].mxu0
    %v2685 = vadd.f32 %v2396, %v2684
    %v2686 = vpop.f32.mrb[0].mxu0
    %2687 = vmatprep.mubr.bf16.mxu0 0
    %2688 = vmatmul.mubr.bf16.gmra.mrb[0].mxu0 %v638
    %v2689 = vpop.f32.mrb[0].mxu0
    %v2690 = vadd.f32 %v2401, %v2689
    %v2691 = vpop.f32.mrb[0].mxu0
    %v2692 = vpop.f32.mrb[0].mxu0
    %v2693 = vadd.f32 %v2404, %v2692
    %v2694 = vpop.f32.mrb[0].mxu0
    %2695 = vmatprep.mubr.bf16.mxu0 0
    %2696 = vmatmul.mubr.bf16.gmra.mrb[0].mxu0 %v647
    %v2697 = vpop.f32.mrb[0].mxu0
    %v2698 = vadd.f32 %v2409, %v2697
    %v2699 = vpop.f32.mrb[0].mxu0
    %v2700 = vpop.f32.mrb[0].mxu0
    %v2701 = vadd.f32 %v2412, %v2700
    %v2702 = vpop.f32.mrb[0].mxu0
    %2703 = vmatprep.mubr.bf16.mxu0 0
    %2704 = vmatmul.mubr.bf16.gmra.mrb[0].mxu0 %v656
    %v2705 = vpop.f32.mrb[0].mxu0
    %v2706 = vadd.f32 %v2417, %v2705
    %v2707 = vpop.f32.mrb[0].mxu0
    %v2708 = vpop.f32.mrb[0].mxu0
    %v2709 = vadd.f32 %v2420, %v2708
    %v2710 = vpop.f32.mrb[0].mxu0
    %2711 = vmatprep.mubr.bf16.mxu0 0
    %2712 = vmatmul.mubr.bf16.gmra.mrb[0].mxu0 %v665
    %v2713 = vpop.f32.mrb[0].mxu0
    %v2714 = vadd.f32 %v2425, %v2713
    %v2715 = vpop.f32.mrb[0].mxu0
    %v2716 = vpop.f32.mrb[0].mxu0
    %v2717 = vadd.f32 %v2428, %v2716
    %v2718 = vpop.f32.mrb[0].mxu0
    %2719 = vmatprep.mubr.bf16.mxu0 0
    %2720 = vmatmul.mubr.bf16.gmra.mrb[0].mxu0 %v674
    %v2721 = vpop.f32.mrb[0].mxu0
    %v2722 = vadd.f32 %v2433, %v2721
    %v2723 = vpop.f32.mrb[0].mxu0
    %v2724 = vpop.f32.mrb[0].mxu0
    %v2725 = vadd.f32 %v2436, %v2724
    %v2726 = vpop.f32.mrb[0].mxu0
    %2727 = vmatprep.mubr.bf16.mxu0 0
    %2728 = vmatmul.mubr.bf16.gmra.mrb[0].mxu0 %v683
    %v2729 = vpop.f32.mrb[0].mxu0
    %v2730 = vadd.f32 %v2441, %v2729
    %v2731 = vpop.f32.mrb[0].mxu0
    %v2732 = vpop.f32.mrb[0].mxu0
    %v2733 = vadd.f32 %v2444, %v2732
    %v2734 = vpop.f32.mrb[0].mxu0
    %2735 = vmatprep.mubr.bf16.mxu0 0
    %2736 = vmatmul.mubr.bf16.gmra.mrb[0].mxu0 %v692
    %v2737 = vpop.f32.mrb[0].mxu0
    %v2738 = vadd.f32 %v2449, %v2737
    %v2739 = vpop.f32.mrb[0].mxu0
    %v2740 = vpop.f32.mrb[0].mxu0
    %v2741 = vadd.f32 %v2452, %v2740
    %v2742 = vpop.f32.mrb[0].mxu0
    %2743 = vmatprep.mubr.bf16.mxu0 0
    %2744 = vmatmul.mubr.bf16.gmra.mrb[0].mxu0 %v701
    %v2745 = vpop.f32.mrb[0].mxu0
    %v2746 = vadd.f32 %v2457, %v2745
    %v2747 = vpop.f32.mrb[0].mxu0
    %v2748 = vpop.f32.mrb[0].mxu0
    %v2749 = vadd.f32 %v2460, %v2748
    %v2750 = vpop.f32.mrb[0].mxu0
    %2751 = vmatprep.mubr.bf16.mxu0 0
    %2752 = vmatmul.mubr.bf16.gmra.mrb[0].mxu0 %v710
    %v2753 = vpop.f32.mrb[0].mxu0
    %v2754 = vadd.f32 %v2465, %v2753
    %v2755 = vpop.f32.mrb[0].mxu0
    %v2756 = vpop.f32.mrb[0].mxu0
    %v2757 = vadd.f32 %v2468, %v2756
    %v2758 = vpop.f32.mrb[0].mxu0
    %2759 = vmatprep.mubr.bf16.mxu0 0
    %2760 = vmatmul.mubr.bf16.gmra.mrb[0].mxu0 %v719
    %v2761 = vpop.f32.mrb[0].mxu0
    %v2762 = vadd.f32 %v2473, %v2761
    %v2763 = vpop.f32.mrb[0].mxu0
    %v2764 = vpop.f32.mrb[0].mxu0
    %v2765 = vadd.f32 %v2476, %v2764
    %v2766 = vpop.f32.mrb[0].mxu0
    %2767 = vmatprep.mubr.bf16.mxu0 0
    %2768 = vmatmul.mubr.bf16.gmra.mrb[0].mxu0 %v728
    %v2769 = vpop.f32.mrb[0].mxu0
    %v2770 = vadd.f32 %v2481, %v2769
    %v2771 = vpop.f32.mrb[0].mxu0
    %v2772 = vpop.f32.mrb[0].mxu0
    %v2773 = vadd.f32 %v2484, %v2772
    %v2774 = vpop.f32.mrb[0].mxu0
    %2775 = vmatprep.mubr.bf16.mxu0 0
    %2776 = vmatmul.mubr.bf16.gmra.mrb[0].mxu0 %v737
    %v2777 = vpop.f32.mrb[0].mxu0
    %v2778 = vadd.f32 %v2489, %v2777
    %v2779 = vpop.f32.mrb[0].mxu0
    %v2780 = vpop.f32.mrb[0].mxu0
    %v2781 = vadd.f32 %v2492, %v2780
    %v2782 = vpop.f32.mrb[0].mxu0
    %2783 = vmatprep.mubr.bf16.mxu0 0
    %2784 = vmatmul.mubr.bf16.gmra.mrb[0].mxu0 %v746
    %v2785 = vpop.f32.mrb[0].mxu0
    %v2786 = vadd.f32 %v2497, %v2785
    %v2787 = vpop.f32.mrb[0].mxu0
    %v2788 = vpop.f32.mrb[0].mxu0
    %v2789 = vadd.f32 %v2500, %v2788
    %v2790 = vpop.f32.mrb[0].mxu0
    %2791 = vmatprep.mubr.bf16.mxu0 0
    %2792 = vmatmul.mubr.bf16.gmra.mrb[0].mxu0 %v755
    %v2793 = vpop.f32.mrb[0].mxu0
    %v2794 = vadd.f32 %v2505, %v2793
    %v2795 = vpop.f32.mrb[0].mxu0
    %v2796 = vpop.f32.mrb[0].mxu0
    %v2797 = vadd.f32 %v2508, %v2796
    %v2798 = vpop.f32.mrb[0].mxu0
    %2799 = vmatprep.mubr.bf16.mxu0 0
    %2800 = vmatmul.mubr.bf16.gmra.mrb[0].mxu0 %v764
    %v2801 = vpop.f32.mrb[0].mxu0
    %v2802 = vadd.f32 %v2513, %v2801
    %v2803 = vpop.f32.mrb[0].mxu0
    %v2804 = vpop.f32.mrb[0].mxu0
    %v2805 = vadd.f32 %v2516, %v2804
    %v2806 = vpop.f32.mrb[0].mxu0
    %2807 = vmatprep.mubr.bf16.mxu0 0
    %2808 = vmatmul.mubr.bf16.gmra.mrb[0].mxu0 %v773
    %v2809 = vpop.f32.mrb[0].mxu0
    %v2810 = vadd.f32 %v2521, %v2809
    %v2811 = vpop.f32.mrb[0].mxu0
    %v2812 = vpop.f32.mrb[0].mxu0
    %v2813 = vadd.f32 %v2524, %v2812
    %v2814 = vpop.f32.mrb[0].mxu0
    %2815 = vmatprep.mubr.bf16.mxu0 0
    %2816 = vmatmul.mubr.bf16.gmra.mrb[0].mxu0 %v782
    %v2817 = vpop.f32.mrb[0].mxu0
    %v2818 = vadd.f32 %v2529, %v2817
    %v2819 = vpop.f32.mrb[0].mxu0
    %v2820 = vpop.f32.mrb[0].mxu0
    %v2821 = vadd.f32 %v2532, %v2820
    %v2822 = vpop.f32.mrb[0].mxu0
    %2823 = vmatprep.mubr.bf16.mxu0 0
    %2824 = vmatmul.mubr.bf16.gmra.mrb[0].mxu0 %v791
    %v2825 = vpop.f32.mrb[0].mxu0
    %v2826 = vadd.f32 %v2537, %v2825
    %v2827 = vpop.f32.mrb[0].mxu0
    %v2828 = vpop.f32.mrb[0].mxu0
    %v2829 = vadd.f32 %v2540, %v2828
    %v2830 = vpop.f32.mrb[0].mxu0
    %2831 = vmatprep.mubr.bf16.mxu0 0
    %2832 = vmatmul.mubr.bf16.gmra.mrb[0].mxu0 %v800
    %v2833 = vpop.f32.mrb[0].mxu0
    %v2834 = vadd.f32 %v2545, %v2833
    %v2835 = vpop.f32.mrb[0].mxu0
    %v2836 = vpop.f32.mrb[0].mxu0
    %v2837 = vadd.f32 %v2548, %v2836
    %v2838 = vpop.f32.mrb[0].mxu0
    %2839 = vmatprep.mubr.bf16.mxu0 0
    %2840 = vmatmul.mubr.bf16.gmra.mrb[0].mxu0 %v809
    %v2841 = vpop.f32.mrb[0].mxu0
    %v2842 = vadd.f32 %v2553, %v2841
    %v2843 = vpop.f32.mrb[0].mxu0
    %v2844 = vpop.f32.mrb[0].mxu0
    %v2845 = vadd.f32 %v2556, %v2844
    %v2846 = vpop.f32.mrb[0].mxu0
    %2847 = vmatprep.mubr.bf16.mxu0 0
    %2848 = vmatmul.mubr.bf16.gmra.mrb[0].mxu0 %v818
    %v2849 = vpop.f32.mrb[0].mxu0
    %v2850 = vadd.f32 %v2561, %v2849
    %v2851 = vpop.f32.mrb[0].mxu0
    %v2852 = vpop.f32.mrb[0].mxu0
    %v2853 = vadd.f32 %v2564, %v2852
    %v2854 = vpop.f32.mrb[0].mxu0
    %2855 = vmatprep.mubr.bf16.mxu0 0
    %2856 = vmatmul.mubr.bf16.gmra.mrb[0].mxu0 %v827
    %v2857 = vpop.f32.mrb[0].mxu0
    %v2858 = vadd.f32 %v2569, %v2857
    %v2859 = vpop.f32.mrb[0].mxu0
    %v2860 = vpop.f32.mrb[0].mxu0
    %v2861 = vadd.f32 %v2572, %v2860
    %v2862 = vpop.f32.mrb[0].mxu0
    %2863 = vmatprep.mubr.bf16.mxu0 0
    %2864 = vmatmul.mubr.bf16.gmra.mrb[0].mxu0 %v836
    %v2865 = vpop.f32.mrb[0].mxu0
    %v2866 = vadd.f32 %v2577, %v2865
    %v2867 = vpop.f32.mrb[0].mxu0
    %v2868 = vpop.f32.mrb[0].mxu0
    %v2869 = vadd.f32 %v2580, %v2868
    %v2870 = vpop.f32.mrb[0].mxu0
    %2871 = vmatprep.mubr.bf16.mxu0 0
    %2872 = vmatmul.mubr.bf16.gmra.mrb[0].mxu0 %v845
    %v2873 = vpop.f32.mrb[0].mxu0
    %v2874 = vadd.f32 %v2585, %v2873
    %v2875 = vpop.f32.mrb[0].mxu0
    %v2876 = vpop.f32.mrb[0].mxu0
    %v2877 = vadd.f32 %v2588, %v2876
    %v2878 = vpop.f32.mrb[0].mxu0
    %2879 = vmatprep.mubr.bf16.mxu0 0
    %2880 = vmatmul.mubr.bf16.gmra.mrb[0].mxu0 %v854
    %v2881 = vpop.f32.mrb[0].mxu0
    %v2882 = vadd.f32 %v2593, %v2881
    %v2883 = vpop.f32.mrb[0].mxu0
    %v2884 = vpop.f32.mrb[0].mxu0
    %v2885 = vadd.f32 %v2596, %v2884
    %v2886 = vpop.f32.mrb[0].mxu0
    %2887 = vmatprep.mubr.bf16.mxu0 0
    %2888 = vmatmul.mubr.bf16.gmra.mrb[0].mxu0 %v863
    %v2889 = vpop.f32.mrb[0].mxu0
    %v2890 = vadd.f32 %v2601, %v2889
    %v2891 = vpop.f32.mrb[0].mxu0
    %v2892 = vpop.f32.mrb[0].mxu0
    %v2893 = vadd.f32 %v2604, %v2892
    %v2894 = vpop.f32.mrb[0].mxu0
    %2895 = vmatprep.mubr.bf16.mxu0 0
    %2896 = vmatmul.mubr.bf16.gmra.mrb[0].mxu0 %v872
    %v2897 = vpop.f32.mrb[0].mxu0
    %v2898 = vadd.f32 %v2609, %v2897
    %v2899 = vpop.f32.mrb[0].mxu0
    %v2900 = vpop.f32.mrb[0].mxu0
    %v2901 = vadd.f32 %v2612, %v2900
    %v2902 = vpop.f32.mrb[0].mxu0
    %2903 = vmatprep.mubr.bf16.mxu0 0
    %2904 = vmatmul.mubr.bf16.gmra.mrb[0].mxu0 %v881
    %v2905 = vpop.f32.mrb[0].mxu0
    %v2906 = vadd.f32 %v2617, %v2905
    %v2907 = vpop.f32.mrb[0].mxu0
    %v2908 = vpop.f32.mrb[0].mxu0
    %v2909 = vadd.f32 %v2620, %v2908
    %v2910 = vpop.f32.mrb[0].mxu0
    %2911 = vmatprep.mubr.bf16.mxu0 0
    %2912 = vmatmul.mubr.bf16.gmra.mrb[0].mxu0 %v890
    %v2913 = vpop.f32.mrb[0].mxu0
    %v2914 = vadd.f32 %v2625, %v2913
    %v2915 = vpop.f32.mrb[0].mxu0
    %v2916 = vpop.f32.mrb[0].mxu0
    %v2917 = vadd.f32 %v2628, %v2916
    %v2918 = vpop.f32.mrb[0].mxu0
    %2919 = vmatprep.mubr.bf16.mxu0 0
    %2920 = vmatmul.mubr.bf16.gmra.mrb[0].mxu0 %v899
    %v2921 = vpop.f32.mrb[0].mxu0
    %v2922 = vadd.f32 %v2633, %v2921
    %v2923 = vpop.f32.mrb[0].mxu0
    %v2924 = vpop.f32.mrb[0].mxu0
    %v2925 = vadd.f32 %v2636, %v2924
    %v2926 = vpop.f32.mrb[0].mxu0
    %2927 = vdwg.mxu0
    %v2928 = vld [vmem:[%s3] sm:$0x1]
    %v2929 = vld [vmem:[%s4] sm:$0x1]
    %v2930 = vadd.f32 %v2674, %v2677
    %v2931 = vadd.f32 %v2930, %v2682
    %v2932 = vadd.f32 %v2931, %v2685
    %v2933 = vadd.f32 %v2932, %v2690
    %v2934 = vadd.f32 %v2933, %v2693
    %v2935 = vadd.f32 %v2934, %v2698
    %v2936 = vadd.f32 %v2935, %v2701
    %v2937 = vadd.f32 %v2936, %v2706
    %v2938 = vadd.f32 %v2937, %v2709
    %v2939 = vadd.f32 %v2938, %v2714
    %v2940 = vadd.f32 %v2939, %v2717
    %v2941 = vadd.f32 %v2940, %v2722
    %v2942 = vadd.f32 %v2941, %v2725
    %v2943 = vadd.f32 %v2942, %v2730
    %v2944 = vadd.f32 %v2943, %v2733
    %v2945 = vadd.f32 %v2944, %v2738
    %v2946 = vadd.f32 %v2945, %v2741
    %v2947 = vadd.f32 %v2946, %v2746
    %v2948 = vadd.f32 %v2947, %v2749
    %v2949 = vadd.f32 %v2948, %v2754
    %v2950 = vadd.f32 %v2949, %v2757
    %v2951 = vadd.f32 %v2950, %v2762
    %v2952 = vadd.f32 %v2951, %v2765
    %v2953 = vadd.f32 %v2952, %v2770
    %v2954 = vadd.f32 %v2953, %v2773
    %v2955 = vadd.f32 %v2954, %v2778
    %v2956 = vadd.f32 %v2955, %v2781
    %v2957 = vadd.f32 %v2956, %v2786
    %v2958 = vadd.f32 %v2957, %v2789
    %v2959 = vadd.f32 %v2958, %v2794
    %v2960 = vadd.f32 %v2959, %v2797
    %v2961 = vadd.f32 %v2960, %v2802
    %v2962 = vadd.f32 %v2961, %v2805
    %v2963 = vadd.f32 %v2962, %v2810
    %v2964 = vadd.f32 %v2963, %v2813
    %v2965 = vadd.f32 %v2964, %v2818
    %v2966 = vadd.f32 %v2965, %v2821
    %v2967 = vadd.f32 %v2966, %v2826
    %v2968 = vadd.f32 %v2967, %v2829
    %v2969 = vadd.f32 %v2968, %v2834
    %v2970 = vadd.f32 %v2969, %v2837
    %v2971 = vadd.f32 %v2970, %v2842
    %v2972 = vadd.f32 %v2971, %v2845
    %v2973 = vadd.f32 %v2972, %v2850
    %v2974 = vadd.f32 %v2973, %v2853
    %v2975 = vadd.f32 %v2974, %v2858
    %v2976 = vadd.f32 %v2975, %v2861
    %v2977 = vadd.f32 %v2976, %v2866
    %v2978 = vadd.f32 %v2977, %v2869
    %v2979 = vadd.f32 %v2978, %v2874
    %v2980 = vadd.f32 %v2979, %v2877
    %v2981 = vadd.f32 %v2980, %v2882
    %v2982 = vadd.f32 %v2981, %v2885
    %v2983 = vadd.f32 %v2982, %v2890
    %v2984 = vadd.f32 %v2983, %v2893
    %v2985 = vadd.f32 %v2984, %v2898
    %v2986 = vadd.f32 %v2985, %v2901
    %v2987 = vadd.f32 %v2986, %v2906
    %v2988 = vadd.f32 %v2987, %v2909
    %v2989 = vadd.f32 %v2988, %v2914
    %v2990 = vadd.f32 %v2989, %v2917
    %v2991 = vadd.f32 %v2990, %v2922
    %v2992 = vadd.f32 %v2991, %v2925
    %v2993 = vrot.slane %v2992, 4
    %v2994 = vadd.f32 %v2992, %v2993
    %v2995 = vrot.slane %v2994, 2
    %v2996 = vadd.f32 %v2994, %v2995
    %v2997 = vrot.slane %v2996, 1
    %v2998 = vadd.f32 %v2996, %v2997
    %v2999 = vmul.f32 %v2998, 0.001953125
    %v3000 = vmul.f32 %v2674, %v2674
    %v3001 = vmul.f32 %v2677, %v2677
    %v3002 = vmul.f32 %v2682, %v2682
    %v3003 = vmul.f32 %v2685, %v2685
    %v3004 = vmul.f32 %v2690, %v2690
    %v3005 = vmul.f32 %v2693, %v2693
    %v3006 = vmul.f32 %v2698, %v2698
    %v3007 = vmul.f32 %v2701, %v2701
    %v3008 = vmul.f32 %v2706, %v2706
    %v3009 = vmul.f32 %v2709, %v2709
    %v3010 = vmul.f32 %v2714, %v2714
    %v3011 = vmul.f32 %v2717, %v2717
    %v3012 = vmul.f32 %v2722, %v2722
    %v3013 = vmul.f32 %v2725, %v2725
    %v3014 = vmul.f32 %v2730, %v2730
    %v3015 = vmul.f32 %v2733, %v2733
    %v3016 = vmul.f32 %v2738, %v2738
    %v3017 = vmul.f32 %v2741, %v2741
    %v3018 = vmul.f32 %v2746, %v2746
    %v3019 = vmul.f32 %v2749, %v2749
    %v3020 = vmul.f32 %v2754, %v2754
    %v3021 = vmul.f32 %v2757, %v2757
    %v3022 = vmul.f32 %v2762, %v2762
    %v3023 = vmul.f32 %v2765, %v2765
    %v3024 = vmul.f32 %v2770, %v2770
    %v3025 = vmul.f32 %v2773, %v2773
    %v3026 = vmul.f32 %v2778, %v2778
    %v3027 = vmul.f32 %v2781, %v2781
    %v3028 = vmul.f32 %v2786, %v2786
    %v3029 = vmul.f32 %v2789, %v2789
    %v3030 = vmul.f32 %v2794, %v2794
    %v3031 = vmul.f32 %v2797, %v2797
    %v3032 = vmul.f32 %v2802, %v2802
    %v3033 = vmul.f32 %v2805, %v2805
    %v3034 = vmul.f32 %v2810, %v2810
    %v3035 = vmul.f32 %v2813, %v2813
    %v3036 = vmul.f32 %v2818, %v2818
    %v3037 = vmul.f32 %v2821, %v2821
    %v3038 = vmul.f32 %v2826, %v2826
    %v3039 = vmul.f32 %v2829, %v2829
    %v3040 = vmul.f32 %v2834, %v2834
    %v3041 = vmul.f32 %v2837, %v2837
    %v3042 = vmul.f32 %v2842, %v2842
    %v3043 = vmul.f32 %v2845, %v2845
    %v3044 = vmul.f32 %v2850, %v2850
    %v3045 = vmul.f32 %v2853, %v2853
    %v3046 = vmul.f32 %v2858, %v2858
    %v3047 = vmul.f32 %v2861, %v2861
    %v3048 = vmul.f32 %v2866, %v2866
    %v3049 = vmul.f32 %v2869, %v2869
    %v3050 = vmul.f32 %v2874, %v2874
    %v3051 = vmul.f32 %v2877, %v2877
    %v3052 = vmul.f32 %v2882, %v2882
    %v3053 = vmul.f32 %v2885, %v2885
    %v3054 = vmul.f32 %v2890, %v2890
    %v3055 = vmul.f32 %v2893, %v2893
    %v3056 = vmul.f32 %v2898, %v2898
    %v3057 = vmul.f32 %v2901, %v2901
    %v3058 = vmul.f32 %v2906, %v2906
    %v3059 = vmul.f32 %v2909, %v2909
    %v3060 = vmul.f32 %v2914, %v2914
    %v3061 = vmul.f32 %v2917, %v2917
    %v3062 = vmul.f32 %v2922, %v2922
    %v3063 = vmul.f32 %v2925, %v2925
    %v3064 = vadd.f32 %v3000, %v3001
    %v3065 = vadd.f32 %v3064, %v3002
    %v3066 = vadd.f32 %v3065, %v3003
    %v3067 = vadd.f32 %v3066, %v3004
    %v3068 = vadd.f32 %v3067, %v3005
    %v3069 = vadd.f32 %v3068, %v3006
    %v3070 = vadd.f32 %v3069, %v3007
    %v3071 = vadd.f32 %v3070, %v3008
    %v3072 = vadd.f32 %v3071, %v3009
    %v3073 = vadd.f32 %v3072, %v3010
    %v3074 = vadd.f32 %v3073, %v3011
    %v3075 = vadd.f32 %v3074, %v3012
    %v3076 = vadd.f32 %v3075, %v3013
    %v3077 = vadd.f32 %v3076, %v3014
    %v3078 = vadd.f32 %v3077, %v3015
    %v3079 = vadd.f32 %v3078, %v3016
    %v3080 = vadd.f32 %v3079, %v3017
    %v3081 = vadd.f32 %v3080, %v3018
    %v3082 = vadd.f32 %v3081, %v3019
    %v3083 = vadd.f32 %v3082, %v3020
    %v3084 = vadd.f32 %v3083, %v3021
    %v3085 = vadd.f32 %v3084, %v3022
    %v3086 = vadd.f32 %v3085, %v3023
    %v3087 = vadd.f32 %v3086, %v3024
    %v3088 = vadd.f32 %v3087, %v3025
    %v3089 = vadd.f32 %v3088, %v3026
    %v3090 = vadd.f32 %v3089, %v3027
    %v3091 = vadd.f32 %v3090, %v3028
    %v3092 = vadd.f32 %v3091, %v3029
    %v3093 = vadd.f32 %v3092, %v3030
    %v3094 = vadd.f32 %v3093, %v3031
    %v3095 = vadd.f32 %v3094, %v3032
    %v3096 = vadd.f32 %v3095, %v3033
    %v3097 = vadd.f32 %v3096, %v3034
    %v3098 = vadd.f32 %v3097, %v3035
    %v3099 = vadd.f32 %v3098, %v3036
    %v3100 = vadd.f32 %v3099, %v3037
    %v3101 = vadd.f32 %v3100, %v3038
    %v3102 = vadd.f32 %v3101, %v3039
    %v3103 = vadd.f32 %v3102, %v3040
    %v3104 = vadd.f32 %v3103, %v3041
    %v3105 = vadd.f32 %v3104, %v3042
    %v3106 = vadd.f32 %v3105, %v3043
    %v3107 = vadd.f32 %v3106, %v3044
    %v3108 = vadd.f32 %v3107, %v3045
    %v3109 = vadd.f32 %v3108, %v3046
    %v3110 = vadd.f32 %v3109, %v3047
    %v3111 = vadd.f32 %v3110, %v3048
    %v3112 = vadd.f32 %v3111, %v3049
    %v3113 = vadd.f32 %v3112, %v3050
    %v3114 = vadd.f32 %v3113, %v3051
    %v3115 = vadd.f32 %v3114, %v3052
    %v3116 = vadd.f32 %v3115, %v3053
    %v3117 = vadd.f32 %v3116, %v3054
    %v3118 = vadd.f32 %v3117, %v3055
    %v3119 = vadd.f32 %v3118, %v3056
    %v3120 = vadd.f32 %v3119, %v3057
    %v3121 = vadd.f32 %v3120, %v3058
    %v3122 = vadd.f32 %v3121, %v3059
    %v3123 = vadd.f32 %v3122, %v3060
    %v3124 = vadd.f32 %v3123, %v3061
    %v3125 = vadd.f32 %v3124, %v3062
    %v3126 = vadd.f32 %v3125, %v3063
    %v3127 = vrot.slane %v3126, 4
    %v3128 = vadd.f32 %v3126, %v3127
    %v3129 = vrot.slane %v3128, 2
    %v3130 = vadd.f32 %v3128, %v3129
    %v3131 = vrot.slane %v3130, 1
    %v3132 = vadd.f32 %v3130, %v3131
    %v3133 = vmul.f32 %v3132, 0.001953125
    %v3134 = vmul.f32 %v2999, %v2999
    %v3135 = vsub.f32 %v3133, %v3134
    %v3136 = vadd.f32 %v3135, 1e-05
    %v3137 = vrsqrt.pop %v3136
    %v3138 = vmul.f32 %v3137, %v2928
    %v3139 = vsub.f32 %v2674, %v2999
    %v3140 = vsub.f32 %v2677, %v2999
    %v3141 = vsub.f32 %v2682, %v2999
    %v3142 = vsub.f32 %v2685, %v2999
    %v3143 = vsub.f32 %v2690, %v2999
    %v3144 = vsub.f32 %v2693, %v2999
    %v3145 = vsub.f32 %v2698, %v2999
    %v3146 = vsub.f32 %v2701, %v2999
    %v3147 = vsub.f32 %v2706, %v2999
    %v3148 = vsub.f32 %v2709, %v2999
    %v3149 = vsub.f32 %v2714, %v2999
    %v3150 = vsub.f32 %v2717, %v2999
    %v3151 = vsub.f32 %v2722, %v2999
    %v3152 = vsub.f32 %v2725, %v2999
    %v3153 = vsub.f32 %v2730, %v2999
    %v3154 = vsub.f32 %v2733, %v2999
    %v3155 = vsub.f32 %v2738, %v2999
    %v3156 = vsub.f32 %v2741, %v2999
    %v3157 = vsub.f32 %v2746, %v2999
    %v3158 = vsub.f32 %v2749, %v2999
    %v3159 = vsub.f32 %v2754, %v2999
    %v3160 = vsub.f32 %v2757, %v2999
    %v3161 = vsub.f32 %v2762, %v2999
    %v3162 = vsub.f32 %v2765, %v2999
    %v3163 = vsub.f32 %v2770, %v2999
    %v3164 = vsub.f32 %v2773, %v2999
    %v3165 = vsub.f32 %v2778, %v2999
    %v3166 = vsub.f32 %v2781, %v2999
    %v3167 = vsub.f32 %v2786, %v2999
    %v3168 = vsub.f32 %v2789, %v2999
    %v3169 = vsub.f32 %v2794, %v2999
    %v3170 = vsub.f32 %v2797, %v2999
    %v3171 = vsub.f32 %v2802, %v2999
    %v3172 = vsub.f32 %v2805, %v2999
    %v3173 = vsub.f32 %v2810, %v2999
    %v3174 = vsub.f32 %v2813, %v2999
    %v3175 = vsub.f32 %v2818, %v2999
    %v3176 = vsub.f32 %v2821, %v2999
    %v3177 = vsub.f32 %v2826, %v2999
    %v3178 = vsub.f32 %v2829, %v2999
    %v3179 = vsub.f32 %v2834, %v2999
    %v3180 = vsub.f32 %v2837, %v2999
    %v3181 = vsub.f32 %v2842, %v2999
    %v3182 = vsub.f32 %v2845, %v2999
    %v3183 = vsub.f32 %v2850, %v2999
    %v3184 = vsub.f32 %v2853, %v2999
    %v3185 = vsub.f32 %v2858, %v2999
    %v3186 = vsub.f32 %v2861, %v2999
    %v3187 = vsub.f32 %v2866, %v2999
    %v3188 = vsub.f32 %v2869, %v2999
    %v3189 = vsub.f32 %v2874, %v2999
    %v3190 = vsub.f32 %v2877, %v2999
    %v3191 = vsub.f32 %v2882, %v2999
    %v3192 = vsub.f32 %v2885, %v2999
    %v3193 = vsub.f32 %v2890, %v2999
    %v3194 = vsub.f32 %v2893, %v2999
    %v3195 = vsub.f32 %v2898, %v2999
    %v3196 = vsub.f32 %v2901, %v2999
    %v3197 = vsub.f32 %v2906, %v2999
    %v3198 = vsub.f32 %v2909, %v2999
    %v3199 = vsub.f32 %v2914, %v2999
    %v3200 = vsub.f32 %v2917, %v2999
    %v3201 = vsub.f32 %v2922, %v2999
    %v3202 = vsub.f32 %v2925, %v2999
    %v3203 = vlaneseq
    %v3204 = vshrl.u32 %v3203, 7
    %v3205 = vsub.s32 0, %v3204
    %v3206 = vrot.slane %v3138, %v3205
    %v3207 = vmul.f32 %v3139, %v3206
    %v3208 = vmul.f32 %v3140, %v3206
    %v3209 = vmul.f32 %v3141, %v3206
    %v3210 = vmul.f32 %v3142, %v3206
    %v3211 = vmul.f32 %v3143, %v3206
    %v3212 = vmul.f32 %v3144, %v3206
    %v3213 = vmul.f32 %v3145, %v3206
    %v3214 = vmul.f32 %v3146, %v3206
    %v3215 = vmul.f32 %v3147, %v3206
    %v3216 = vmul.f32 %v3148, %v3206
    %v3217 = vmul.f32 %v3149, %v3206
    %v3218 = vmul.f32 %v3150, %v3206
    %v3219 = vmul.f32 %v3151, %v3206
    %v3220 = vmul.f32 %v3152, %v3206
    %v3221 = vmul.f32 %v3153, %v3206
    %v3222 = vmul.f32 %v3154, %v3206
    %v3223 = vmul.f32 %v3155, %v3206
    %v3224 = vmul.f32 %v3156, %v3206
    %v3225 = vmul.f32 %v3157, %v3206
    %v3226 = vmul.f32 %v3158, %v3206
    %v3227 = vmul.f32 %v3159, %v3206
    %v3228 = vmul.f32 %v3160, %v3206
    %v3229 = vmul.f32 %v3161, %v3206
    %v3230 = vmul.f32 %v3162, %v3206
    %v3231 = vmul.f32 %v3163, %v3206
    %v3232 = vmul.f32 %v3164, %v3206
    %v3233 = vmul.f32 %v3165, %v3206
    %v3234 = vmul.f32 %v3166, %v3206
    %v3235 = vmul.f32 %v3167, %v3206
    %v3236 = vmul.f32 %v3168, %v3206
    %v3237 = vmul.f32 %v3169, %v3206
    %v3238 = vmul.f32 %v3170, %v3206
    %v3239 = vmul.f32 %v3171, %v3206
    %v3240 = vmul.f32 %v3172, %v3206
    %v3241 = vmul.f32 %v3173, %v3206
    %v3242 = vmul.f32 %v3174, %v3206
    %v3243 = vmul.f32 %v3175, %v3206
    %v3244 = vmul.f32 %v3176, %v3206
    %v3245 = vmul.f32 %v3177, %v3206
    %v3246 = vmul.f32 %v3178, %v3206
    %v3247 = vmul.f32 %v3179, %v3206
    %v3248 = vmul.f32 %v3180, %v3206
    %v3249 = vmul.f32 %v3181, %v3206
    %v3250 = vmul.f32 %v3182, %v3206
    %v3251 = vmul.f32 %v3183, %v3206
    %v3252 = vmul.f32 %v3184, %v3206
    %v3253 = vmul.f32 %v3185, %v3206
    %v3254 = vmul.f32 %v3186, %v3206
    %v3255 = vmul.f32 %v3187, %v3206
    %v3256 = vmul.f32 %v3188, %v3206
    %v3257 = vmul.f32 %v3189, %v3206
    %v3258 = vmul.f32 %v3190, %v3206
    %v3259 = vmul.f32 %v3191, %v3206
    %v3260 = vmul.f32 %v3192, %v3206
    %v3261 = vmul.f32 %v3193, %v3206
    %v3262 = vmul.f32 %v3194, %v3206
    %v3263 = vmul.f32 %v3195, %v3206
    %v3264 = vmul.f32 %v3196, %v3206
    %v3265 = vmul.f32 %v3197, %v3206
    %v3266 = vmul.f32 %v3198, %v3206
    %v3267 = vmul.f32 %v3199, %v3206
    %v3268 = vmul.f32 %v3200, %v3206
    %v3269 = vmul.f32 %v3201, %v3206
    %v3270 = vmul.f32 %v3202, %v3206
    %v3272 = vlaneseq
    %v3273 = vshrl.u32 %v3272, 7
    %v3274 = vsub.s32 0, %v3273
    %v3275 = vrot.slane %v2929, %v3274
    %v3277 = vadd.f32 %v3207, %v3275
    %v3278 = vadd.f32 %v3208, %v3275
    %v3279 = vadd.f32 %v3209, %v3275
    %v3280 = vadd.f32 %v3210, %v3275
    %v3281 = vadd.f32 %v3211, %v3275
    %v3282 = vadd.f32 %v3212, %v3275
    %v3283 = vadd.f32 %v3213, %v3275
    %v3284 = vadd.f32 %v3214, %v3275
    %v3285 = vadd.f32 %v3215, %v3275
    %v3286 = vadd.f32 %v3216, %v3275
    %v3287 = vadd.f32 %v3217, %v3275
    %v3288 = vadd.f32 %v3218, %v3275
    %v3289 = vadd.f32 %v3219, %v3275
    %v3290 = vadd.f32 %v3220, %v3275
    %v3291 = vadd.f32 %v3221, %v3275
    %v3292 = vadd.f32 %v3222, %v3275
    %v3293 = vadd.f32 %v3223, %v3275
    %v3294 = vadd.f32 %v3224, %v3275
    %v3295 = vadd.f32 %v3225, %v3275
    %v3296 = vadd.f32 %v3226, %v3275
    %v3297 = vadd.f32 %v3227, %v3275
    %v3298 = vadd.f32 %v3228, %v3275
    %v3299 = vadd.f32 %v3229, %v3275
    %v3300 = vadd.f32 %v3230, %v3275
    %v3301 = vadd.f32 %v3231, %v3275
    %v3302 = vadd.f32 %v3232, %v3275
    %v3303 = vadd.f32 %v3233, %v3275
    %v3304 = vadd.f32 %v3234, %v3275
    %v3305 = vadd.f32 %v3235, %v3275
    %v3306 = vadd.f32 %v3236, %v3275
    %v3307 = vadd.f32 %v3237, %v3275
    %v3308 = vadd.f32 %v3238, %v3275
    %v3309 = vadd.f32 %v3239, %v3275
    %v3310 = vadd.f32 %v3240, %v3275
    %v3311 = vadd.f32 %v3241, %v3275
    %v3312 = vadd.f32 %v3242, %v3275
    %v3313 = vadd.f32 %v3243, %v3275
    %v3314 = vadd.f32 %v3244, %v3275
    %v3315 = vadd.f32 %v3245, %v3275
    %v3316 = vadd.f32 %v3246, %v3275
    %v3317 = vadd.f32 %v3247, %v3275
    %v3318 = vadd.f32 %v3248, %v3275
    %v3319 = vadd.f32 %v3249, %v3275
    %v3320 = vadd.f32 %v3250, %v3275
    %v3321 = vadd.f32 %v3251, %v3275
    %v3322 = vadd.f32 %v3252, %v3275
    %v3323 = vadd.f32 %v3253, %v3275
    %v3324 = vadd.f32 %v3254, %v3275
    %v3325 = vadd.f32 %v3255, %v3275
    %v3326 = vadd.f32 %v3256, %v3275
    %v3327 = vadd.f32 %v3257, %v3275
    %v3328 = vadd.f32 %v3258, %v3275
    %v3329 = vadd.f32 %v3259, %v3275
    %v3330 = vadd.f32 %v3260, %v3275
    %v3331 = vadd.f32 %v3261, %v3275
    %v3332 = vadd.f32 %v3262, %v3275
    %v3333 = vadd.f32 %v3263, %v3275
    %v3334 = vadd.f32 %v3264, %v3275
    %v3335 = vadd.f32 %v3265, %v3275
    %v3336 = vadd.f32 %v3266, %v3275
    %v3337 = vadd.f32 %v3267, %v3275
    %v3338 = vadd.f32 %v3268, %v3275
    %v3339 = vadd.f32 %v3269, %v3275
    %v3340 = vadd.f32 %v3270, %v3275
    %v3341 = vmax.f32 %v3277, 0.0
    %v3342 = vmax.f32 %v3278, 0.0
    %v3343 = vmax.f32 %v3279, 0.0
    %v3344 = vmax.f32 %v3280, 0.0
    %v3345 = vmax.f32 %v3281, 0.0
    %v3346 = vmax.f32 %v3282, 0.0
    %v3347 = vmax.f32 %v3283, 0.0
    %v3348 = vmax.f32 %v3284, 0.0
    %v3349 = vmax.f32 %v3285, 0.0
    %v3350 = vmax.f32 %v3286, 0.0
    %v3351 = vmax.f32 %v3287, 0.0
    %v3352 = vmax.f32 %v3288, 0.0
    %v3353 = vmax.f32 %v3289, 0.0
    %v3354 = vmax.f32 %v3290, 0.0
    %v3355 = vmax.f32 %v3291, 0.0
    %v3356 = vmax.f32 %v3292, 0.0
    %v3357 = vmax.f32 %v3293, 0.0
    %v3358 = vmax.f32 %v3294, 0.0
    %v3359 = vmax.f32 %v3295, 0.0
    %v3360 = vmax.f32 %v3296, 0.0
    %v3361 = vmax.f32 %v3297, 0.0
    %v3362 = vmax.f32 %v3298, 0.0
    %v3363 = vmax.f32 %v3299, 0.0
    %v3364 = vmax.f32 %v3300, 0.0
    %v3365 = vmax.f32 %v3301, 0.0
    %v3366 = vmax.f32 %v3302, 0.0
    %v3367 = vmax.f32 %v3303, 0.0
    %v3368 = vmax.f32 %v3304, 0.0
    %v3369 = vmax.f32 %v3305, 0.0
    %v3370 = vmax.f32 %v3306, 0.0
    %v3371 = vmax.f32 %v3307, 0.0
    %v3372 = vmax.f32 %v3308, 0.0
    %v3373 = vmax.f32 %v3309, 0.0
    %v3374 = vmax.f32 %v3310, 0.0
    %v3375 = vmax.f32 %v3311, 0.0
    %v3376 = vmax.f32 %v3312, 0.0
    %v3377 = vmax.f32 %v3313, 0.0
    %v3378 = vmax.f32 %v3314, 0.0
    %v3379 = vmax.f32 %v3315, 0.0
    %v3380 = vmax.f32 %v3316, 0.0
    %v3381 = vmax.f32 %v3317, 0.0
    %v3382 = vmax.f32 %v3318, 0.0
    %v3383 = vmax.f32 %v3319, 0.0
    %v3384 = vmax.f32 %v3320, 0.0
    %v3385 = vmax.f32 %v3321, 0.0
    %v3386 = vmax.f32 %v3322, 0.0
    %v3387 = vmax.f32 %v3323, 0.0
    %v3388 = vmax.f32 %v3324, 0.0
    %v3389 = vmax.f32 %v3325, 0.0
    %v3390 = vmax.f32 %v3326, 0.0
    %v3391 = vmax.f32 %v3327, 0.0
    %v3392 = vmax.f32 %v3328, 0.0
    %v3393 = vmax.f32 %v3329, 0.0
    %v3394 = vmax.f32 %v3330, 0.0
    %v3395 = vmax.f32 %v3331, 0.0
    %v3396 = vmax.f32 %v3332, 0.0
    %v3397 = vmax.f32 %v3333, 0.0
    %v3398 = vmax.f32 %v3334, 0.0
    %v3399 = vmax.f32 %v3335, 0.0
    %v3400 = vmax.f32 %v3336, 0.0
    %v3401 = vmax.f32 %v3337, 0.0
    %v3402 = vmax.f32 %v3338, 0.0
    %v3403 = vmax.f32 %v3339, 0.0
    %v3404 = vmax.f32 %v3340, 0.0
    %3405 = vst [vmem:[#allocation2] sm:$0xff] 0.0
    %3406 = vst [vmem:[#allocation2 + $0x8] sm:$0xff] 0.0
    %3407 = vst [vmem:[#allocation2 + $0x10] sm:$0x3] 0.0
    %3408 = vst [vmem:[#allocation2 + $0x1b0] sm:$0xff] 0.0
    %3409 = vst [vmem:[#allocation2 + $0x1b8] sm:$0xff] 0.0
    %3410 = vst [vmem:[#allocation2 + $0x1c0] sm:$0x3] 0.0
    %s3411 = scalar_lea.vmem [#allocation2], 408
    %3412 = vst [vmem:[%s3411] sm:$0xff] 0.0
    %3413 = vst [vmem:[%s3411 + $0x8] sm:$0xff] 0.0
    %3414 = vst [vmem:[%s3411 + $0x10] sm:$0x3] 0.0
    %3415 = vst [vmem:[%s3411 + $0x1b0] sm:$0xff] 0.0
    %3416 = vst [vmem:[%s3411 + $0x1b8] sm:$0xff] 0.0
    %3417 = vst [vmem:[%s3411 + $0x1c0] sm:$0x3] 0.0
    %3418 = vst [vmem:[#allocation2] sm:$0x1] 0.0
    %3419 = vst [vmem:[#allocation2 + $0x18] sm:$0x1] 0.0
    %3420 = vst [vmem:[#allocation2 + $0x30] sm:$0x1] 0.0
    %3421 = vst [vmem:[#allocation2 + $0x48] sm:$0x1] 0.0
    %3422 = vst [vmem:[#allocation2 + $0x60] sm:$0x1] 0.0
    %3423 = vst [vmem:[#allocation2 + $0x78] sm:$0x1] 0.0
    %3424 = vst [vmem:[#allocation2 + $0x90] sm:$0x1] 0.0
    %3425 = vst [vmem:[#allocation2 + $0xa8] sm:$0x1] 0.0
    %3426 = vst [vmem:[#allocation2 + $0xc0] sm:$0x1] 0.0
    %3427 = vst [vmem:[#allocation2 + $0xd8] sm:$0x1] 0.0
    %3428 = vst [vmem:[#allocation2 + $0xf0] sm:$0x1] 0.0
    %3429 = vst [vmem:[#allocation2 + $0x108] sm:$0x1] 0.0
    %3430 = vst [vmem:[#allocation2 + $0x120] sm:$0x1] 0.0
    %3431 = vst [vmem:[#allocation2 + $0x138] sm:$0x1] 0.0
    %3432 = vst [vmem:[#allocation2 + $0x150] sm:$0x1] 0.0
    %3433 = vst [vmem:[#allocation2 + $0x168] sm:$0x1] 0.0
    %3434 = vst [vmem:[#allocation2 + $0x180] sm:$0x1] 0.0
    %3435 = vst [vmem:[#allocation2 + $0x198] sm:$0x1] 0.0
    %3436 = vst [vmem:[#allocation2 + $0x1b0] sm:$0x1] 0.0
    %3437 = vst [vmem:[#allocation2 + $0x1c8] sm:$0x1] 0.0
    %3438 = vst [vmem:[#allocation2 + $0x1e0] sm:$0x1] 0.0
    %3439 = vst [vmem:[#allocation2 + $0x1f8] sm:$0x1] 0.0
    %3440 = vst [vmem:[#allocation2 + $0x210] sm:$0x1] 0.0
    %3441 = vst [vmem:[#allocation2 + $0x228] sm:$0x1] 0.0
    %3442 = vst [vmem:[#allocation2 + $0x240] sm:$0x1] 0.0
    %3443 = vst [vmem:[#allocation2 + $0x258] sm:$0x1] 0.0
    %3444 = vst [vmem:[#allocation2 + $0x270] sm:$0x1] 0.0
    %3445 = vst [vmem:[#allocation2 + $0x288] sm:$0x1] 0.0
    %3446 = vst [vmem:[#allocation2 + $0x2a0] sm:$0x1] 0.0
    %3447 = vst [vmem:[#allocation2 + $0x2b8] sm:$0x1] 0.0
    %3448 = vst [vmem:[#allocation2 + $0x2d0] sm:$0x1] 0.0
    %3449 = vst [vmem:[#allocation2 + $0x2e8] sm:$0x1] 0.0
    %3450 = vst [vmem:[#allocation2 + $0x300] sm:$0x1] 0.0
    %3451 = vst [vmem:[#allocation2 + $0x318] sm:$0x1] 0.0
    %3452 = vst [vmem:[#allocation2 + $0x330] sm:$0x1] 0.0
    %3453 = vst [vmem:[#allocation2 + $0x348] sm:$0x1] 0.0
    %3454 = vst [vmem:[#allocation2 + $0x11] sm:$0x1] 0.0
    %3455 = vst [vmem:[#allocation2 + $0x29] sm:$0x1] 0.0
    %3456 = vst [vmem:[#allocation2 + $0x41] sm:$0x1] 0.0
    %3457 = vst [vmem:[#allocation2 + $0x59] sm:$0x1] 0.0
    %3458 = vst [vmem:[#allocation2 + $0x71] sm:$0x1] 0.0
    %3459 = vst [vmem:[#allocation2 + $0x89] sm:$0x1] 0.0
    %3460 = vst [vmem:[#allocation2 + $0xa1] sm:$0x1] 0.0
    %3461 = vst [vmem:[#allocation2 + $0xb9] sm:$0x1] 0.0
    %3462 = vst [vmem:[#allocation2 + $0xd1] sm:$0x1] 0.0
    %3463 = vst [vmem:[#allocation2 + $0xe9] sm:$0x1] 0.0
    %3464 = vst [vmem:[#allocation2 + $0x101] sm:$0x1] 0.0
    %3465 = vst [vmem:[#allocation2 + $0x119] sm:$0x1] 0.0
    %3466 = vst [vmem:[#allocation2 + $0x131] sm:$0x1] 0.0
    %3467 = vst [vmem:[#allocation2 + $0x149] sm:$0x1] 0.0
    %3468 = vst [vmem:[#allocation2 + $0x161] sm:$0x1] 0.0
    %3469 = vst [vmem:[#allocation2 + $0x179] sm:$0x1] 0.0
    %3470 = vst [vmem:[#allocation2 + $0x191] sm:$0x1] 0.0
    %3471 = vst [vmem:[#allocation2 + $0x1a9] sm:$0x1] 0.0
    %3472 = vst [vmem:[#allocation2 + $0x1c1] sm:$0x1] 0.0
    %3473 = vst [vmem:[#allocation2 + $0x1d9] sm:$0x1] 0.0
    %3474 = vst [vmem:[#allocation2 + $0x1f1] sm:$0x1] 0.0
    %3475 = vst [vmem:[#allocation2 + $0x209] sm:$0x1] 0.0
    %3476 = vst [vmem:[#allocation2 + $0x221] sm:$0x1] 0.0
    %3477 = vst [vmem:[#allocation2 + $0x239] sm:$0x1] 0.0
    %3478 = vst [vmem:[#allocation2 + $0x251] sm:$0x1] 0.0
    %3479 = vst [vmem:[#allocation2 + $0x269] sm:$0x1] 0.0
    %3480 = vst [vmem:[#allocation2 + $0x281] sm:$0x1] 0.0
    %3481 = vst [vmem:[#allocation2 + $0x299] sm:$0x1] 0.0
    %3482 = vst [vmem:[#allocation2 + $0x2b1] sm:$0x1] 0.0
    %3483 = vst [vmem:[#allocation2 + $0x2c9] sm:$0x1] 0.0
    %3484 = vst [vmem:[#allocation2 + $0x2e1] sm:$0x1] 0.0
    %3485 = vst [vmem:[#allocation2 + $0x2f9] sm:$0x1] 0.0
    %3486 = vst [vmem:[#allocation2 + $0x311] sm:$0x1] 0.0
    %3487 = vst [vmem:[#allocation2 + $0x329] sm:$0x1] 0.0
    %3488 = vst [vmem:[#allocation2 + $0x341] sm:$0x1] 0.0
    %3489 = vst [vmem:[#allocation2 + $0x359] sm:$0x1] 0.0
    %s3490 = scalar_lea.vmem [#allocation2], 24
    %3491 = vst [vmem:[%s3490 + $0x1] sm:$0xff] %v3341
    %3492 = vst [vmem:[%s3490 + $0x9] sm:$0xff] %v3342
    %3493 = vst [vmem:[%s3490 + $0x19] sm:$0xff] %v3343
    %3494 = vst [vmem:[%s3490 + $0x21] sm:$0xff] %v3344
    %3495 = vst [vmem:[%s3490 + $0x31] sm:$0xff] %v3345
    %3496 = vst [vmem:[%s3490 + $0x39] sm:$0xff] %v3346
    %3497 = vst [vmem:[%s3490 + $0x49] sm:$0xff] %v3347
    %3498 = vst [vmem:[%s3490 + $0x51] sm:$0xff] %v3348
    %3499 = vst [vmem:[%s3490 + $0x61] sm:$0xff] %v3349
    %3500 = vst [vmem:[%s3490 + $0x69] sm:$0xff] %v3350
    %3501 = vst [vmem:[%s3490 + $0x79] sm:$0xff] %v3351
    %3502 = vst [vmem:[%s3490 + $0x81] sm:$0xff] %v3352
    %3503 = vst [vmem:[%s3490 + $0x91] sm:$0xff] %v3353
    %3504 = vst [vmem:[%s3490 + $0x99] sm:$0xff] %v3354
    %3505 = vst [vmem:[%s3490 + $0xa9] sm:$0xff] %v3355
    %3506 = vst [vmem:[%s3490 + $0xb1] sm:$0xff] %v3356
    %3507 = vst [vmem:[%s3490 + $0xc1] sm:$0xff] %v3357
    %3508 = vst [vmem:[%s3490 + $0xc9] sm:$0xff] %v3358
    %3509 = vst [vmem:[%s3490 + $0xd9] sm:$0xff] %v3359
    %3510 = vst [vmem:[%s3490 + $0xe1] sm:$0xff] %v3360
    %3511 = vst [vmem:[%s3490 + $0xf1] sm:$0xff] %v3361
    %3512 = vst [vmem:[%s3490 + $0xf9] sm:$0xff] %v3362
    %3513 = vst [vmem:[%s3490 + $0x109] sm:$0xff] %v3363
    %3514 = vst [vmem:[%s3490 + $0x111] sm:$0xff] %v3364
    %3515 = vst [vmem:[%s3490 + $0x121] sm:$0xff] %v3365
    %3516 = vst [vmem:[%s3490 + $0x129] sm:$0xff] %v3366
    %3517 = vst [vmem:[%s3490 + $0x139] sm:$0xff] %v3367
    %3518 = vst [vmem:[%s3490 + $0x141] sm:$0xff] %v3368
    %3519 = vst [vmem:[%s3490 + $0x151] sm:$0xff] %v3369
    %3520 = vst [vmem:[%s3490 + $0x159] sm:$0xff] %v3370
    %3521 = vst [vmem:[%s3490 + $0x169] sm:$0xff] %v3371
    %3522 = vst [vmem:[%s3490 + $0x171] sm:$0xff] %v3372
    %3523 = vst [vmem:[%s3490 + $0x1b1] sm:$0xff] %v3373
    %3524 = vst [vmem:[%s3490 + $0x1b9] sm:$0xff] %v3374
    %3525 = vst [vmem:[%s3490 + $0x1c9] sm:$0xff] %v3375
    %3526 = vst [vmem:[%s3490 + $0x1d1] sm:$0xff] %v3376
    %3527 = vst [vmem:[%s3490 + $0x1e1] sm:$0xff] %v3377
    %3528 = vst [vmem:[%s3490 + $0x1e9] sm:$0xff] %v3378
    %3529 = vst [vmem:[%s3490 + $0x1f9] sm:$0xff] %v3379
    %3530 = vst [vmem:[%s3490 + $0x201] sm:$0xff] %v3380
    %3531 = vst [vmem:[%s3490 + $0x211] sm:$0xff] %v3381
    %3532 = vst [vmem:[%s3490 + $0x219] sm:$0xff] %v3382
    %3533 = vst [vmem:[%s3490 + $0x229] sm:$0xff] %v3383
    %3534 = vst [vmem:[%s3490 + $0x231] sm:$0xff] %v3384
    %3535 = vst [vmem:[%s3490 + $0x241] sm:$0xff] %v3385
    %3536 = vst [vmem:[%s3490 + $0x249] sm:$0xff] %v3386
    %3537 = vst [vmem:[%s3490 + $0x259] sm:$0xff] %v3387
    %3538 = vst [vmem:[%s3490 + $0x261] sm:$0xff] %v3388
    %3539 = vst [vmem:[%s3490 + $0x271] sm:$0xff] %v3389
    %3540 = vst [vmem:[%s3490 + $0x279] sm:$0xff] %v3390
    %3541 = vst [vmem:[%s3490 + $0x289] sm:$0xff] %v3391
    %3542 = vst [vmem:[%s3490 + $0x291] sm:$0xff] %v3392
    %3543 = vst [vmem:[%s3490 + $0x2a1] sm:$0xff] %v3393
    %3544 = vst [vmem:[%s3490 + $0x2a9] sm:$0xff] %v3394
    %3545 = vst [vmem:[%s3490 + $0x2b9] sm:$0xff] %v3395
    %3546 = vst [vmem:[%s3490 + $0x2c1] sm:$0xff] %v3396
    %3547 = vst [vmem:[%s3490 + $0x2d1] sm:$0xff] %v3397
    %3548 = vst [vmem:[%s3490 + $0x2d9] sm:$0xff] %v3398
    %3549 = vst [vmem:[%s3490 + $0x2e9] sm:$0xff] %v3399
    %3550 = vst [vmem:[%s3490 + $0x2f1] sm:$0xff] %v3400
    %3551 = vst [vmem:[%s3490 + $0x301] sm:$0xff] %v3401
    %3552 = vst [vmem:[%s3490 + $0x309] sm:$0xff] %v3402
    %3553 = vst [vmem:[%s3490 + $0x319] sm:$0xff] %v3403
    %3554 = vst [vmem:[%s3490 + $0x321] sm:$0xff] %v3404
    %v3555 = vld [vmem:[#allocation2] sm:$0xff]
    %v3556 = vld [vmem:[#allocation2 + $0x8] sm:$0xff]
    %v3557 = vld [vmem:[#allocation2 + $0x18] sm:$0xff]
    %v3558 = vld [vmem:[#allocation2 + $0x20] sm:$0xff]
    %v3559 = vld [vmem:[#allocation2 + $0x30] sm:$0xff]
    %v3560 = vld [vmem:[#allocation2 + $0x38] sm:$0xff]
    %v3561 = vld [vmem:[#allocation2 + $0x48] sm:$0xff]
    %v3562 = vld [vmem:[#allocation2 + $0x50] sm:$0xff]
    %v3563 = vld [vmem:[#allocation2 + $0x60] sm:$0xff]
    %v3564 = vld [vmem:[#allocation2 + $0x68] sm:$0xff]
    %v3565 = vld [vmem:[#allocation2 + $0x78] sm:$0xff]
    %v3566 = vld [vmem:[#allocation2 + $0x80] sm:$0xff]
    %v3567 = vld [vmem:[#allocation2 + $0x90] sm:$0xff]
    %v3568 = vld [vmem:[#allocation2 + $0x98] sm:$0xff]
    %v3569 = vld [vmem:[#allocation2 + $0xa8] sm:$0xff]
    %v3570 = vld [vmem:[#allocation2 + $0xb0] sm:$0xff]
    %v3571 = vld [vmem:[#allocation2 + $0xc0] sm:$0xff]
    %v3572 = vld [vmem:[#allocation2 + $0xc8] sm:$0xff]
    %v3573 = vld [vmem:[#allocation2 + $0xd8] sm:$0xff]
    %v3574 = vld [vmem:[#allocation2 + $0xe0] sm:$0xff]
    %v3575 = vld [vmem:[#allocation2 + $0xf0] sm:$0xff]
    %v3576 = vld [vmem:[#allocation2 + $0xf8] sm:$0xff]
    %v3577 = vld [vmem:[#allocation2 + $0x108] sm:$0xff]
    %v3578 = vld [vmem:[#allocation2 + $0x110] sm:$0xff]
    %v3579 = vld [vmem:[#allocation2 + $0x120] sm:$0xff]
    %v3580 = vld [vmem:[#allocation2 + $0x128] sm:$0xff]
    %v3581 = vld [vmem:[#allocation2 + $0x138] sm:$0xff]
    %v3582 = vld [vmem:[#allocation2 + $0x140] sm:$0xff]
    %v3583 = vld [vmem:[#allocation2 + $0x150] sm:$0xff]
    %v3584 = vld [vmem:[#allocation2 + $0x158] sm:$0xff]
    %v3585 = vld [vmem:[#allocation2 + $0x168] sm:$0xff]
    %v3586 = vld [vmem:[#allocation2 + $0x170] sm:$0xff]
    %v3587 = vld [vmem:[#allocation2 + $0x1b0] sm:$0xff]
    %v3588 = vld [vmem:[#allocation2 + $0x1b8] sm:$0xff]
    %v3589 = vld [vmem:[#allocation2 + $0x1c8] sm:$0xff]
    %v3590 = vld [vmem:[#allocation2 + $0x1d0] sm:$0xff]
    %v3591 = vld [vmem:[#allocation2 + $0x1e0] sm:$0xff]
    %v3592 = vld [vmem:[#allocation2 + $0x1e8] sm:$0xff]
    %v3593 = vld [vmem:[#allocation2 + $0x1f8] sm:$0xff]
    %v3594 = vld [vmem:[#allocation2 + $0x200] sm:$0xff]
    %v3595 = vld [vmem:[#allocation2 + $0x210] sm:$0xff]
    %v3596 = vld [vmem:[#allocation2 + $0x218] sm:$0xff]
    %v3597 = vld [vmem:[#allocation2 + $0x228] sm:$0xff]
    %v3598 = vld [vmem:[#allocation2 + $0x230] sm:$0xff]
    %v3599 = vld [vmem:[#allocation2 + $0x240] sm:$0xff]
    %v3600 = vld [vmem:[#allocation2 + $0x248] sm:$0xff]
    %v3601 = vld [vmem:[#allocation2 + $0x258] sm:$0xff]
    %v3602 = vld [vmem:[#allocation2 + $0x260] sm:$0xff]
    %v3603 = vld [vmem:[#allocation2 + $0x270] sm:$0xff]
    %v3604 = vld [vmem:[#allocation2 + $0x278] sm:$0xff]
    %v3605 = vld [vmem:[#allocation2 + $0x288] sm:$0xff]
    %v3606 = vld [vmem:[#allocation2 + $0x290] sm:$0xff]
    %v3607 = vld [vmem:[#allocation2 + $0x2a0] sm:$0xff]
    %v3608 = vld [vmem:[#allocation2 + $0x2a8] sm:$0xff]
    %v3609 = vld [vmem:[#allocation2 + $0x2b8] sm:$0xff]
    %v3610 = vld [vmem:[#allocation2 + $0x2c0] sm:$0xff]
    %v3611 = vld [vmem:[#allocation2 + $0x2d0] sm:$0xff]
    %v3612 = vld [vmem:[#allocation2 + $0x2d8] sm:$0xff]
    %v3613 = vld [vmem:[#allocation2 + $0x2e8] sm:$0xff]
    %v3614 = vld [vmem:[#allocation2 + $0x2f0] sm:$0xff]
    %v3615 = vld [vmem:[#allocation2 + $0x300] sm:$0xff]
    %v3616 = vld [vmem:[#allocation2 + $0x308] sm:$0xff]
    %v3617 = vld [vmem:[#allocation2 + $0x318] sm:$0xff]
    %v3618 = vld [vmem:[#allocation2 + $0x320] sm:$0xff]
    %v3619 = vld [vmem:[#allocation2 + $0x1] sm:$0xff]
    %v3620 = vld [vmem:[#allocation2 + $0x9] sm:$0xff]
    %v3621 = vld [vmem:[#allocation2 + $0x19] sm:$0xff]
    %v3622 = vld [vmem:[#allocation2 + $0x21] sm:$0xff]
    %v3623 = vld [vmem:[#allocation2 + $0x31] sm:$0xff]
    %v3624 = vld [vmem:[#allocation2 + $0x39] sm:$0xff]
    %v3625 = vld [vmem:[#allocation2 + $0x49] sm:$0xff]
    %v3626 = vld [vmem:[#allocation2 + $0x51] sm:$0xff]
    %v3627 = vld [vmem:[#allocation2 + $0x61] sm:$0xff]
    %v3628 = vld [vmem:[#allocation2 + $0x69] sm:$0xff]
    %v3629 = vld [vmem:[#allocation2 + $0x79] sm:$0xff]
    %v3630 = vld [vmem:[#allocation2 + $0x81] sm:$0xff]
    %v3631 = vld [vmem:[#allocation2 + $0x91] sm:$0xff]
    %v3632 = vld [vmem:[#allocation2 + $0x99] sm:$0xff]
    %v3633 = vld [vmem:[#allocation2 + $0xa9] sm:$0xff]
    %v3634 = vld [vmem:[#allocation2 + $0xb1] sm:$0xff]
    %v3635 = vld [vmem:[#allocation2 + $0xc1] sm:$0xff]
    %v3636 = vld [vmem:[#allocation2 + $0xc9] sm:$0xff]
    %v3637 = vld [vmem:[#allocation2 + $0xd9] sm:$0xff]
    %v3638 = vld [vmem:[#allocation2 + $0xe1] sm:$0xff]
    %v3639 = vld [vmem:[#allocation2 + $0xf1] sm:$0xff]
    %v3640 = vld [vmem:[#allocation2 + $0xf9] sm:$0xff]
    %v3641 = vld [vmem:[#allocation2 + $0x109] sm:$0xff]
    %v3642 = vld [vmem:[#allocation2 + $0x111] sm:$0xff]
    %v3643 = vld [vmem:[#allocation2 + $0x121] sm:$0xff]
    %v3644 = vld [vmem:[#allocation2 + $0x129] sm:$0xff]
    %v3645 = vld [vmem:[#allocation2 + $0x139] sm:$0xff]
    %v3646 = vld [vmem:[#allocation2 + $0x141] sm:$0xff]
    %v3647 = vld [vmem:[#allocation2 + $0x151] sm:$0xff]
    %v3648 = vld [vmem:[#allocation2 + $0x159] sm:$0xff]
    %v3649 = vld [vmem:[#allocation2 + $0x169] sm:$0xff]
    %v3650 = vld [vmem:[#allocation2 + $0x171] sm:$0xff]
    %v3651 = vld [vmem:[#allocation2 + $0x1b1] sm:$0xff]
    %v3652 = vld [vmem:[#allocation2 + $0x1b9] sm:$0xff]
    %v3653 = vld [vmem:[#allocation2 + $0x1c9] sm:$0xff]
    %v3654 = vld [vmem:[#allocation2 + $0x1d1] sm:$0xff]
    %v3655 = vld [vmem:[#allocation2 + $0x1e1] sm:$0xff]
    %v3656 = vld [vmem:[#allocation2 + $0x1e9] sm:$0xff]
    %v3657 = vld [vmem:[#allocation2 + $0x1f9] sm:$0xff]
    %v3658 = vld [vmem:[#allocation2 + $0x201] sm:$0xff]
    %v3659 = vld [vmem:[#allocation2 + $0x211] sm:$0xff]
    %v3660 = vld [vmem:[#allocation2 + $0x219] sm:$0xff]
    %v3661 = vld [vmem:[#allocation2 + $0x229] sm:$0xff]
    %v3662 = vld [vmem:[#allocation2 + $0x231] sm:$0xff]
    %v3663 = vld [vmem:[#allocation2 + $0x241] sm:$0xff]
    %v3664 = vld [vmem:[#allocation2 + $0x249] sm:$0xff]
    %v3665 = vld [vmem:[#allocation2 + $0x259] sm:$0xff]
    %v3666 = vld [vmem:[#allocation2 + $0x261] sm:$0xff]
    %v3667 = vld [vmem:[#allocation2 + $0x271] sm:$0xff]
    %v3668 = vld [vmem:[#allocation2 + $0x279] sm:$0xff]
    %v3669 = vld [vmem:[#allocation2 + $0x289] sm:$0xff]
    %v3670 = vld [vmem:[#allocation2 + $0x291] sm:$0xff]
    %v3671 = vld [vmem:[#allocation2 + $0x2a1] sm:$0xff]
    %v3672 = vld [vmem:[#allocation2 + $0x2a9] sm:$0xff]
    %v3673 = vld [vmem:[#allocation2 + $0x2b9] sm:$0xff]
    %v3674 = vld [vmem:[#allocation2 + $0x2c1] sm:$0xff]
    %v3675 = vld [vmem:[#allocation2 + $0x2d1] sm:$0xff]
    %v3676 = vld [vmem:[#allocation2 + $0x2d9] sm:$0xff]
    %v3677 = vld [vmem:[#allocation2 + $0x2e9] sm:$0xff]
    %v3678 = vld [vmem:[#allocation2 + $0x2f1] sm:$0xff]
    %v3679 = vld [vmem:[#allocation2 + $0x301] sm:$0xff]
    %v3680 = vld [vmem:[#allocation2 + $0x309] sm:$0xff]
    %v3681 = vld [vmem:[#allocation2 + $0x319] sm:$0xff]
    %v3682 = vld [vmem:[#allocation2 + $0x321] sm:$0xff]
    %v3683 = vld [vmem:[#allocation2 + $0x2] sm:$0xff]
    %v3684 = vld [vmem:[#allocation2 + $0xa] sm:$0xff]
    %v3685 = vld [vmem:[#allocation2 + $0x1a] sm:$0xff]
    %v3686 = vld [vmem:[#allocation2 + $0x22] sm:$0xff]
    %v3687 = vld [vmem:[#allocation2 + $0x32] sm:$0xff]
    %v3688 = vld [vmem:[#allocation2 + $0x3a] sm:$0xff]
    %v3689 = vld [vmem:[#allocation2 + $0x4a] sm:$0xff]
    %v3690 = vld [vmem:[#allocation2 + $0x52] sm:$0xff]
    %v3691 = vld [vmem:[#allocation2 + $0x62] sm:$0xff]
    %v3692 = vld [vmem:[#allocation2 + $0x6a] sm:$0xff]
    %v3693 = vld [vmem:[#allocation2 + $0x7a] sm:$0xff]
    %v3694 = vld [vmem:[#allocation2 + $0x82] sm:$0xff]
    %v3695 = vld [vmem:[#allocation2 + $0x92] sm:$0xff]
    %v3696 = vld [vmem:[#allocation2 + $0x9a] sm:$0xff]
    %v3697 = vld [vmem:[#allocation2 + $0xaa] sm:$0xff]
    %v3698 = vld [vmem:[#allocation2 + $0xb2] sm:$0xff]
    %v3699 = vld [vmem:[#allocation2 + $0xc2] sm:$0xff]
    %v3700 = vld [vmem:[#allocation2 + $0xca] sm:$0xff]
    %v3701 = vld [vmem:[#allocation2 + $0xda] sm:$0xff]
    %v3702 = vld [vmem:[#allocation2 + $0xe2] sm:$0xff]
    %v3703 = vld [vmem:[#allocation2 + $0xf2] sm:$0xff]
    %v3704 = vld [vmem:[#allocation2 + $0xfa] sm:$0xff]
    %v3705 = vld [vmem:[#allocation2 + $0x10a] sm:$0xff]
    %v3706 = vld [vmem:[#allocation2 + $0x112] sm:$0xff]
    %v3707 = vld [vmem:[#allocation2 + $0x122] sm:$0xff]
    %v3708 = vld [vmem:[#allocation2 + $0x12a] sm:$0xff]
    %v3709 = vld [vmem:[#allocation2 + $0x13a] sm:$0xff]
    %v3710 = vld [vmem:[#allocation2 + $0x142] sm:$0xff]
    %v3711 = vld [vmem:[#allocation2 + $0x152] sm:$0xff]
    %v3712 = vld [vmem:[#allocation2 + $0x15a] sm:$0xff]
    %v3713 = vld [vmem:[#allocation2 + $0x16a] sm:$0xff]
    %v3714 = vld [vmem:[#allocation2 + $0x172] sm:$0xff]
    %v3715 = vld [vmem:[#allocation2 + $0x1b2] sm:$0xff]
    %v3716 = vld [vmem:[#allocation2 + $0x1ba] sm:$0xff]
    %v3717 = vld [vmem:[#allocation2 + $0x1ca] sm:$0xff]
    %v3718 = vld [vmem:[#allocation2 + $0x1d2] sm:$0xff]
    %v3719 = vld [vmem:[#allocation2 + $0x1e2] sm:$0xff]
    %v3720 = vld [vmem:[#allocation2 + $0x1ea] sm:$0xff]
    %v3721 = vld [vmem:[#allocation2 + $0x1fa] sm:$0xff]
    %v3722 = vld [vmem:[#allocation2 + $0x202] sm:$0xff]
    %v3723 = vld [vmem:[#allocation2 + $0x212] sm:$0xff]
    %v3724 = vld [vmem:[#allocation2 + $0x21a] sm:$0xff]
    %v3725 = vld [vmem:[#allocation2 + $0x22a] sm:$0xff]
    %v3726 = vld [vmem:[#allocation2 + $0x232] sm:$0xff]
    %v3727 = vld [vmem:[#allocation2 + $0x242] sm:$0xff]
    %v3728 = vld [vmem:[#allocation2 + $0x24a] sm:$0xff]
    %v3729 = vld [vmem:[#allocation2 + $0x25a] sm:$0xff]
    %v3730 = vld [vmem:[#allocation2 + $0x262] sm:$0xff]
    %v3731 = vld [vmem:[#allocation2 + $0x272] sm:$0xff]
    %v3732 = vld [vmem:[#allocation2 + $0x27a] sm:$0xff]
    %v3733 = vld [vmem:[#allocation2 + $0x28a] sm:$0xff]
    %v3734 = vld [vmem:[#allocation2 + $0x292] sm:$0xff]
    %v3735 = vld [vmem:[#allocation2 + $0x2a2] sm:$0xff]
    %v3736 = vld [vmem:[#allocation2 + $0x2aa] sm:$0xff]
    %v3737 = vld [vmem:[#allocation2 + $0x2ba] sm:$0xff]
    %v3738 = vld [vmem:[#allocation2 + $0x2c2] sm:$0xff]
    %v3739 = vld [vmem:[#allocation2 + $0x2d2] sm:$0xff]
    %v3740 = vld [vmem:[#allocation2 + $0x2da] sm:$0xff]
    %v3741 = vld [vmem:[#allocation2 + $0x2ea] sm:$0xff]
    %v3742 = vld [vmem:[#allocation2 + $0x2f2] sm:$0xff]
    %v3743 = vld [vmem:[#allocation2 + $0x302] sm:$0xff]
    %v3744 = vld [vmem:[#allocation2 + $0x30a] sm:$0xff]
    %v3745 = vld [vmem:[#allocation2 + $0x31a] sm:$0xff]
    %v3746 = vld [vmem:[#allocation2 + $0x322] sm:$0xff]
    %v3747 = vld [vmem:[%s3490] sm:$0xff]
    %v3748 = vld [vmem:[%s3490 + $0x8] sm:$0xff]
    %v3749 = vld [vmem:[%s3490 + $0x18] sm:$0xff]
    %v3750 = vld [vmem:[%s3490 + $0x20] sm:$0xff]
    %v3751 = vld [vmem:[%s3490 + $0x30] sm:$0xff]
    %v3752 = vld [vmem:[%s3490 + $0x38] sm:$0xff]
    %v3753 = vld [vmem:[%s3490 + $0x48] sm:$0xff]
    %v3754 = vld [vmem:[%s3490 + $0x50] sm:$0xff]
    %v3755 = vld [vmem:[%s3490 + $0x60] sm:$0xff]
    %v3756 = vld [vmem:[%s3490 + $0x68] sm:$0xff]
    %v3757 = vld [vmem:[%s3490 + $0x78] sm:$0xff]
    %v3758 = vld [vmem:[%s3490 + $0x80] sm:$0xff]
    %v3759 = vld [vmem:[%s3490 + $0x90] sm:$0xff]
    %v3760 = vld [vmem:[%s3490 + $0x98] sm:$0xff]
    %v3761 = vld [vmem:[%s3490 + $0xa8] sm:$0xff]
    %v3762 = vld [vmem:[%s3490 + $0xb0] sm:$0xff]
    %v3763 = vld [vmem:[%s3490 + $0xc0] sm:$0xff]
    %v3764 = vld [vmem:[%s3490 + $0xc8] sm:$0xff]
    %v3765 = vld [vmem:[%s3490 + $0xd8] sm:$0xff]
    %v3766 = vld [vmem:[%s3490 + $0xe0] sm:$0xff]
    %v3767 = vld [vmem:[%s3490 + $0xf0] sm:$0xff]
    %v3768 = vld [vmem:[%s3490 + $0xf8] sm:$0xff]
    %v3769 = vld [vmem:[%s3490 + $0x108] sm:$0xff]
    %v3770 = vld [vmem:[%s3490 + $0x110] sm:$0xff]
    %v3771 = vld [vmem:[%s3490 + $0x120] sm:$0xff]
    %v3772 = vld [vmem:[%s3490 + $0x128] sm:$0xff]
    %v3773 = vld [vmem:[%s3490 + $0x138] sm:$0xff]
    %v3774 = vld [vmem:[%s3490 + $0x140] sm:$0xff]
    %v3775 = vld [vmem:[%s3490 + $0x150] sm:$0xff]
    %v3776 = vld [vmem:[%s3490 + $0x158] sm:$0xff]
    %v3777 = vld [vmem:[%s3490 + $0x168] sm:$0xff]
    %v3778 = vld [vmem:[%s3490 + $0x170] sm:$0xff]
    %v3779 = vld [vmem:[%s3490 + $0x1b0] sm:$0xff]
    %v3780 = vld [vmem:[%s3490 + $0x1b8] sm:$0xff]
    %v3781 = vld [vmem:[%s3490 + $0x1c8] sm:$0xff]
    %v3782 = vld [vmem:[%s3490 + $0x1d0] sm:$0xff]
    %v3783 = vld [vmem:[%s3490 + $0x1e0] sm:$0xff]
    %v3784 = vld [vmem:[%s3490 + $0x1e8] sm:$0xff]
    %v3785 = vld [vmem:[%s3490 + $0x1f8] sm:$0xff]
    %v3786 = vld [vmem:[%s3490 + $0x200] sm:$0xff]
    %v3787 = vld [vmem:[%s3490 + $0x210] sm:$0xff]
    %v3788 = vld [vmem:[%s3490 + $0x218] sm:$0xff]
    %v3789 = vld [vmem:[%s3490 + $0x228] sm:$0xff]
    %v3790 = vld [vmem:[%s3490 + $0x230] sm:$0xff]
    %v3791 = vld [vmem:[%s3490 + $0x240] sm:$0xff]
    %v3792 = vld [vmem:[%s3490 + $0x248] sm:$0xff]
    %v3793 = vld [vmem:[%s3490 + $0x258] sm:$0xff]
    %v3794 = vld [vmem:[%s3490 + $0x260] sm:$0xff]
    %v3795 = vld [vmem:[%s3490 + $0x270] sm:$0xff]
    %v3796 = vld [vmem:[%s3490 + $0x278] sm:$0xff]
    %v3797 = vld [vmem:[%s3490 + $0x288] sm:$0xff]
    %v3798 = vld [vmem:[%s3490 + $0x290] sm:$0xff]
    %v3799 = vld [vmem:[%s3490 + $0x2a0] sm:$0xff]
    %v3800 = vld [vmem:[%s3490 + $0x2a8] sm:$0xff]
    %v3801 = vld [vmem:[%s3490 + $0x2b8] sm:$0xff]
    %v3802 = vld [vmem:[%s3490 + $0x2c0] sm:$0xff]
    %v3803 = vld [vmem:[%s3490 + $0x2d0] sm:$0xff]
    %v3804 = vld [vmem:[%s3490 + $0x2d8] sm:$0xff]
    %v3805 = vld [vmem:[%s3490 + $0x2e8] sm:$0xff]
    %v3806 = vld [vmem:[%s3490 + $0x2f0] sm:$0xff]
    %v3807 = vld [vmem:[%s3490 + $0x300] sm:$0xff]
    %v3808 = vld [vmem:[%s3490 + $0x308] sm:$0xff]
    %v3809 = vld [vmem:[%s3490 + $0x318] sm:$0xff]
    %v3810 = vld [vmem:[%s3490 + $0x320] sm:$0xff]
    %v3811 = vld [vmem:[%s3490 + $0x1] sm:$0xff]
    %v3812 = vld [vmem:[%s3490 + $0x9] sm:$0xff]
    %v3813 = vld [vmem:[%s3490 + $0x19] sm:$0xff]
    %v3814 = vld [vmem:[%s3490 + $0x21] sm:$0xff]
    %v3815 = vld [vmem:[%s3490 + $0x31] sm:$0xff]
    %v3816 = vld [vmem:[%s3490 + $0x39] sm:$0xff]
    %v3817 = vld [vmem:[%s3490 + $0x49] sm:$0xff]
    %v3818 = vld [vmem:[%s3490 + $0x51] sm:$0xff]
    %v3819 = vld [vmem:[%s3490 + $0x61] sm:$0xff]
    %v3820 = vld [vmem:[%s3490 + $0x69] sm:$0xff]
    %v3821 = vld [vmem:[%s3490 + $0x79] sm:$0xff]
    %v3822 = vld [vmem:[%s3490 + $0x81] sm:$0xff]
    %v3823 = vld [vmem:[%s3490 + $0x91] sm:$0xff]
    %v3824 = vld [vmem:[%s3490 + $0x99] sm:$0xff]
    %v3825 = vld [vmem:[%s3490 + $0xa9] sm:$0xff]
    %v3826 = vld [vmem:[%s3490 + $0xb1] sm:$0xff]
    %v3827 = vld [vmem:[%s3490 + $0xc1] sm:$0xff]
    %v3828 = vld [vmem:[%s3490 + $0xc9] sm:$0xff]
    %v3829 = vld [vmem:[%s3490 + $0xd9] sm:$0xff]
    %v3830 = vld [vmem:[%s3490 + $0xe1] sm:$0xff]
    %v3831 = vld [vmem:[%s3490 + $0xf1] sm:$0xff]
    %v3832 = vld [vmem:[%s3490 + $0xf9] sm:$0xff]
    %v3833 = vld [vmem:[%s3490 + $0x109] sm:$0xff]
    %v3834 = vld [vmem:[%s3490 + $0x111] sm:$0xff]
    %v3835 = vld [vmem:[%s3490 + $0x121] sm:$0xff]
    %v3836 = vld [vmem:[%s3490 + $0x129] sm:$0xff]
    %v3837 = vld [vmem:[%s3490 + $0x139] sm:$0xff]
    %v3838 = vld [vmem:[%s3490 + $0x141] sm:$0xff]
    %v3839 = vld [vmem:[%s3490 + $0x151] sm:$0xff]
    %v3840 = vld [vmem:[%s3490 + $0x159] sm:$0xff]
    %v3841 = vld [vmem:[%s3490 + $0x169] sm:$0xff]
    %v3842 = vld [vmem:[%s3490 + $0x171] sm:$0xff]
    %v3843 = vld [vmem:[%s3490 + $0x1b1] sm:$0xff]
    %v3844 = vld [vmem:[%s3490 + $0x1b9] sm:$0xff]
    %v3845 = vld [vmem:[%s3490 + $0x1c9] sm:$0xff]
    %v3846 = vld [vmem:[%s3490 + $0x1d1] sm:$0xff]
    %v3847 = vld [vmem:[%s3490 + $0x1e1] sm:$0xff]
    %v3848 = vld [vmem:[%s3490 + $0x1e9] sm:$0xff]
    %v3849 = vld [vmem:[%s3490 + $0x1f9] sm:$0xff]
    %v3850 = vld [vmem:[%s3490 + $0x201] sm:$0xff]
    %v3851 = vld [vmem:[%s3490 + $0x211] sm:$0xff]
    %v3852 = vld [vmem:[%s3490 + $0x219] sm:$0xff]
    %v3853 = vld [vmem:[%s3490 + $0x229] sm:$0xff]
    %v3854 = vld [vmem:[%s3490 + $0x231] sm:$0xff]
    %v3855 = vld [vmem:[%s3490 + $0x241] sm:$0xff]
    %v3856 = vld [vmem:[%s3490 + $0x249] sm:$0xff]
    %v3857 = vld [vmem:[%s3490 + $0x259] sm:$0xff]
    %v3858 = vld [vmem:[%s3490 + $0x261] sm:$0xff]
    %v3859 = vld [vmem:[%s3490 + $0x271] sm:$0xff]
    %v3860 = vld [vmem:[%s3490 + $0x279] sm:$0xff]
    %v3861 = vld [vmem:[%s3490 + $0x289] sm:$0xff]
    %v3862 = vld [vmem:[%s3490 + $0x291] sm:$0xff]
    %v3863 = vld [vmem:[%s3490 + $0x2a1] sm:$0xff]
    %v3864 = vld [vmem:[%s3490 + $0x2a9] sm:$0xff]
    %v3865 = vld [vmem:[%s3490 + $0x2b9] sm:$0xff]
    %v3866 = vld [vmem:[%s3490 + $0x2c1] sm:$0xff]
    %v3867 = vld [vmem:[%s3490 + $0x2d1] sm:$0xff]
    %v3868 = vld [vmem:[%s3490 + $0x2d9] sm:$0xff]
    %v3869 = vld [vmem:[%s3490 + $0x2e9] sm:$0xff]
    %v3870 = vld [vmem:[%s3490 + $0x2f1] sm:$0xff]
    %v3871 = vld [vmem:[%s3490 + $0x301] sm:$0xff]
    %v3872 = vld [vmem:[%s3490 + $0x309] sm:$0xff]
    %v3873 = vld [vmem:[%s3490 + $0x319] sm:$0xff]
    %v3874 = vld [vmem:[%s3490 + $0x321] sm:$0xff]
    %v3875 = vld [vmem:[%s3490 + $0x2] sm:$0xff]
    %v3876 = vld [vmem:[%s3490 + $0xa] sm:$0xff]
    %v3877 = vld [vmem:[%s3490 + $0x1a] sm:$0xff]
    %v3878 = vld [vmem:[%s3490 + $0x22] sm:$0xff]
    %v3879 = vld [vmem:[%s3490 + $0x32] sm:$0xff]
    %v3880 = vld [vmem:[%s3490 + $0x3a] sm:$0xff]
    %v3881 = vld [vmem:[%s3490 + $0x4a] sm:$0xff]
    %v3882 = vld [vmem:[%s3490 + $0x52] sm:$0xff]
    %v3883 = vld [vmem:[%s3490 + $0x62] sm:$0xff]
    %v3884 = vld [vmem:[%s3490 + $0x6a] sm:$0xff]
    %v3885 = vld [vmem:[%s3490 + $0x7a] sm:$0xff]
    %v3886 = vld [vmem:[%s3490 + $0x82] sm:$0xff]
    %v3887 = vld [vmem:[%s3490 + $0x92] sm:$0xff]
    %v3888 = vld [vmem:[%s3490 + $0x9a] sm:$0xff]
    %v3889 = vld [vmem:[%s3490 + $0xaa] sm:$0xff]
    %v3890 = vld [vmem:[%s3490 + $0xb2] sm:$0xff]
    %v3891 = vld [vmem:[%s3490 + $0xc2] sm:$0xff]
    %v3892 = vld [vmem:[%s3490 + $0xca] sm:$0xff]
    %v3893 = vld [vmem:[%s3490 + $0xda] sm:$0xff]
    %v3894 = vld [vmem:[%s3490 + $0xe2] sm:$0xff]
    %v3895 = vld [vmem:[%s3490 + $0xf2] sm:$0xff]
    %v3896 = vld [vmem:[%s3490 + $0xfa] sm:$0xff]
    %v3897 = vld [vmem:[%s3490 + $0x10a] sm:$0xff]
    %v3898 = vld [vmem:[%s3490 + $0x112] sm:$0xff]
    %v3899 = vld [vmem:[%s3490 + $0x122] sm:$0xff]
    %v3900 = vld [vmem:[%s3490 + $0x12a] sm:$0xff]
    %v3901 = vld [vmem:[%s3490 + $0x13a] sm:$0xff]
    %v3902 = vld [vmem:[%s3490 + $0x142] sm:$0xff]
    %v3903 = vld [vmem:[%s3490 + $0x152] sm:$0xff]
    %v3904 = vld [vmem:[%s3490 + $0x15a] sm:$0xff]
    %v3905 = vld [vmem:[%s3490 + $0x16a] sm:$0xff]
    %v3906 = vld [vmem:[%s3490 + $0x172] sm:$0xff]
    %v3907 = vld [vmem:[%s3490 + $0x1b2] sm:$0xff]
    %v3908 = vld [vmem:[%s3490 + $0x1ba] sm:$0xff]
    %v3909 = vld [vmem:[%s3490 + $0x1ca] sm:$0xff]
    %v3910 = vld [vmem:[%s3490 + $0x1d2] sm:$0xff]
    %v3911 = vld [vmem:[%s3490 + $0x1e2] sm:$0xff]
    %v3912 = vld [vmem:[%s3490 + $0x1ea] sm:$0xff]
    %v3913 = vld [vmem:[%s3490 + $0x1fa] sm:$0xff]
    %v3914 = vld [vmem:[%s3490 + $0x202] sm:$0xff]
    %v3915 = vld [vmem:[%s3490 + $0x212] sm:$0xff]
    %v3916 = vld [vmem:[%s3490 + $0x21a] sm:$0xff]
    %v3917 = vld [vmem:[%s3490 + $0x22a] sm:$0xff]
    %v3918 = vld [vmem:[%s3490 + $0x232] sm:$0xff]
    %v3919 = vld [vmem:[%s3490 + $0x242] sm:$0xff]
    %v3920 = vld [vmem:[%s3490 + $0x24a] sm:$0xff]
    %v3921 = vld [vmem:[%s3490 + $0x25a] sm:$0xff]
    %v3922 = vld [vmem:[%s3490 + $0x262] sm:$0xff]
    %v3923 = vld [vmem:[%s3490 + $0x272] sm:$0xff]
    %v3924 = vld [vmem:[%s3490 + $0x27a] sm:$0xff]
    %v3925 = vld [vmem:[%s3490 + $0x28a] sm:$0xff]
    %v3926 = vld [vmem:[%s3490 + $0x292] sm:$0xff]
    %v3927 = vld [vmem:[%s3490 + $0x2a2] sm:$0xff]
    %v3928 = vld [vmem:[%s3490 + $0x2aa] sm:$0xff]
    %v3929 = vld [vmem:[%s3490 + $0x2ba] sm:$0xff]
    %v3930 = vld [vmem:[%s3490 + $0x2c2] sm:$0xff]
    %v3931 = vld [vmem:[%s3490 + $0x2d2] sm:$0xff]
    %v3932 = vld [vmem:[%s3490 + $0x2da] sm:$0xff]
    %v3933 = vld [vmem:[%s3490 + $0x2ea] sm:$0xff]
    %v3934 = vld [vmem:[%s3490 + $0x2f2] sm:$0xff]
    %v3935 = vld [vmem:[%s3490 + $0x302] sm:$0xff]
    %v3936 = vld [vmem:[%s3490 + $0x30a] sm:$0xff]
    %v3937 = vld [vmem:[%s3490 + $0x31a] sm:$0xff]
    %v3938 = vld [vmem:[%s3490 + $0x322] sm:$0xff]
    %s3939 = scalar_lea.vmem [#allocation2], 48
    %v3940 = vld [vmem:[%s3939] sm:$0xff]
    %v3941 = vld [vmem:[%s3939 + $0x8] sm:$0xff]
    %v3942 = vld [vmem:[%s3939 + $0x18] sm:$0xff]
    %v3943 = vld [vmem:[%s3939 + $0x20] sm:$0xff]
    %v3944 = vld [vmem:[%s3939 + $0x30] sm:$0xff]
    %v3945 = vld [vmem:[%s3939 + $0x38] sm:$0xff]
    %v3946 = vld [vmem:[%s3939 + $0x48] sm:$0xff]
    %v3947 = vld [vmem:[%s3939 + $0x50] sm:$0xff]
    %v3948 = vld [vmem:[%s3939 + $0x60] sm:$0xff]
    %v3949 = vld [vmem:[%s3939 + $0x68] sm:$0xff]
    %v3950 = vld [vmem:[%s3939 + $0x78] sm:$0xff]
    %v3951 = vld [vmem:[%s3939 + $0x80] sm:$0xff]
    %v3952 = vld [vmem:[%s3939 + $0x90] sm:$0xff]
    %v3953 = vld [vmem:[%s3939 + $0x98] sm:$0xff]
    %v3954 = vld [vmem:[%s3939 + $0xa8] sm:$0xff]
    %v3955 = vld [vmem:[%s3939 + $0xb0] sm:$0xff]
    %v3956 = vld [vmem:[%s3939 + $0xc0] sm:$0xff]
    %v3957 = vld [vmem:[%s3939 + $0xc8] sm:$0xff]
    %v3958 = vld [vmem:[%s3939 + $0xd8] sm:$0xff]
    %v3959 = vld [vmem:[%s3939 + $0xe0] sm:$0xff]
    %v3960 = vld [vmem:[%s3939 + $0xf0] sm:$0xff]
    %v3961 = vld [vmem:[%s3939 + $0xf8] sm:$0xff]
    %v3962 = vld [vmem:[%s3939 + $0x108] sm:$0xff]
    %v3963 = vld [vmem:[%s3939 + $0x110] sm:$0xff]
    %v3964 = vld [vmem:[%s3939 + $0x120] sm:$0xff]
    %v3965 = vld [vmem:[%s3939 + $0x128] sm:$0xff]
    %v3966 = vld [vmem:[%s3939 + $0x138] sm:$0xff]
    %v3967 = vld [vmem:[%s3939 + $0x140] sm:$0xff]
    %v3968 = vld [vmem:[%s3939 + $0x150] sm:$0xff]
    %v3969 = vld [vmem:[%s3939 + $0x158] sm:$0xff]
    %v3970 = vld [vmem:[%s3939 + $0x168] sm:$0xff]
    %v3971 = vld [vmem:[%s3939 + $0x170] sm:$0xff]
    %v3972 = vld [vmem:[%s3939 + $0x1b0] sm:$0xff]
    %v3973 = vld [vmem:[%s3939 + $0x1b8] sm:$0xff]
    %v3974 = vld [vmem:[%s3939 + $0x1c8] sm:$0xff]
    %v3975 = vld [vmem:[%s3939 + $0x1d0] sm:$0xff]
    %v3976 = vld [vmem:[%s3939 + $0x1e0] sm:$0xff]
    %v3977 = vld [vmem:[%s3939 + $0x1e8] sm:$0xff]
    %v3978 = vld [vmem:[%s3939 + $0x1f8] sm:$0xff]
    %v3979 = vld [vmem:[%s3939 + $0x200] sm:$0xff]
    %v3980 = vld [vmem:[%s3939 + $0x210] sm:$0xff]
    %v3981 = vld [vmem:[%s3939 + $0x218] sm:$0xff]
    %v3982 = vld [vmem:[%s3939 + $0x228] sm:$0xff]
    %v3983 = vld [vmem:[%s3939 + $0x230] sm:$0xff]
    %v3984 = vld [vmem:[%s3939 + $0x240] sm:$0xff]
    %v3985 = vld [vmem:[%s3939 + $0x248] sm:$0xff]
    %v3986 = vld [vmem:[%s3939 + $0x258] sm:$0xff]
    %v3987 = vld [vmem:[%s3939 + $0x260] sm:$0xff]
    %v3988 = vld [vmem:[%s3939 + $0x270] sm:$0xff]
    %v3989 = vld [vmem:[%s3939 + $0x278] sm:$0xff]
    %v3990 = vld [vmem:[%s3939 + $0x288] sm:$0xff]
    %v3991 = vld [vmem:[%s3939 + $0x290] sm:$0xff]
    %v3992 = vld [vmem:[%s3939 + $0x2a0] sm:$0xff]
    %v3993 = vld [vmem:[%s3939 + $0x2a8] sm:$0xff]
    %v3994 = vld [vmem:[%s3939 + $0x2b8] sm:$0xff]
    %v3995 = vld [vmem:[%s3939 + $0x2c0] sm:$0xff]
    %v3996 = vld [vmem:[%s3939 + $0x2d0] sm:$0xff]
    %v3997 = vld [vmem:[%s3939 + $0x2d8] sm:$0xff]
    %v3998 = vld [vmem:[%s3939 + $0x2e8] sm:$0xff]
    %v3999 = vld [vmem:[%s3939 + $0x2f0] sm:$0xff]
    %v4000 = vld [vmem:[%s3939 + $0x300] sm:$0xff]
    %v4001 = vld [vmem:[%s3939 + $0x308] sm:$0xff]
    %v4002 = vld [vmem:[%s3939 + $0x318] sm:$0xff]
    %v4003 = vld [vmem:[%s3939 + $0x320] sm:$0xff]
    %v4004 = vld [vmem:[%s3939 + $0x1] sm:$0xff]
    %v4005 = vld [vmem:[%s3939 + $0x9] sm:$0xff]
    %v4006 = vld [vmem:[%s3939 + $0x19] sm:$0xff]
    %v4007 = vld [vmem:[%s3939 + $0x21] sm:$0xff]
    %v4008 = vld [vmem:[%s3939 + $0x31] sm:$0xff]
    %v4009 = vld [vmem:[%s3939 + $0x39] sm:$0xff]
    %v4010 = vld [vmem:[%s3939 + $0x49] sm:$0xff]
    %v4011 = vld [vmem:[%s3939 + $0x51] sm:$0xff]
    %v4012 = vld [vmem:[%s3939 + $0x61] sm:$0xff]
    %v4013 = vld [vmem:[%s3939 + $0x69] sm:$0xff]
    %v4014 = vld [vmem:[%s3939 + $0x79] sm:$0xff]
    %v4015 = vld [vmem:[%s3939 + $0x81] sm:$0xff]
    %v4016 = vld [vmem:[%s3939 + $0x91] sm:$0xff]
    %v4017 = vld [vmem:[%s3939 + $0x99] sm:$0xff]
    %v4018 = vld [vmem:[%s3939 + $0xa9] sm:$0xff]
    %v4019 = vld [vmem:[%s3939 + $0xb1] sm:$0xff]
    %v4020 = vld [vmem:[%s3939 + $0xc1] sm:$0xff]
    %v4021 = vld [vmem:[%s3939 + $0xc9] sm:$0xff]
    %v4022 = vld [vmem:[%s3939 + $0xd9] sm:$0xff]
    %v4023 = vld [vmem:[%s3939 + $0xe1] sm:$0xff]
    %v4024 = vld [vmem:[%s3939 + $0xf1] sm:$0xff]
    %v4025 = vld [vmem:[%s3939 + $0xf9] sm:$0xff]
    %v4026 = vld [vmem:[%s3939 + $0x109] sm:$0xff]
    %v4027 = vld [vmem:[%s3939 + $0x111] sm:$0xff]
    %v4028 = vld [vmem:[%s3939 + $0x121] sm:$0xff]
    %v4029 = vld [vmem:[%s3939 + $0x129] sm:$0xff]
    %v4030 = vld [vmem:[%s3939 + $0x139] sm:$0xff]
    %v4031 = vld [vmem:[%s3939 + $0x141] sm:$0xff]
    %v4032 = vld [vmem:[%s3939 + $0x151] sm:$0xff]
    %v4033 = vld [vmem:[%s3939 + $0x159] sm:$0xff]
    %v4034 = vld [vmem:[%s3939 + $0x169] sm:$0xff]
    %v4035 = vld [vmem:[%s3939 + $0x171] sm:$0xff]
    %v4036 = vld [vmem:[%s3939 + $0x1b1] sm:$0xff]
    %v4037 = vld [vmem:[%s3939 + $0x1b9] sm:$0xff]
    %v4038 = vld [vmem:[%s3939 + $0x1c9] sm:$0xff]
    %v4039 = vld [vmem:[%s3939 + $0x1d1] sm:$0xff]
    %v4040 = vld [vmem:[%s3939 + $0x1e1] sm:$0xff]
    %v4041 = vld [vmem:[%s3939 + $0x1e9] sm:$0xff]
    %v4042 = vld [vmem:[%s3939 + $0x1f9] sm:$0xff]
    %v4043 = vld [vmem:[%s3939 + $0x201] sm:$0xff]
    %v4044 = vld [vmem:[%s3939 + $0x211] sm:$0xff]
    %v4045 = vld [vmem:[%s3939 + $0x219] sm:$0xff]
    %v4046 = vld [vmem:[%s3939 + $0x229] sm:$0xff]
    %v4047 = vld [vmem:[%s3939 + $0x231] sm:$0xff]
    %v4048 = vld [vmem:[%s3939 + $0x241] sm:$0xff]
    %v4049 = vld [vmem:[%s3939 + $0x249] sm:$0xff]
    %v4050 = vld [vmem:[%s3939 + $0x259] sm:$0xff]
    %v4051 = vld [vmem:[%s3939 + $0x261] sm:$0xff]
    %v4052 = vld [vmem:[%s3939 + $0x271] sm:$0xff]
    %v4053 = vld [vmem:[%s3939 + $0x279] sm:$0xff]
    %v4054 = vld [vmem:[%s3939 + $0x289] sm:$0xff]
    %v4055 = vld [vmem:[%s3939 + $0x291] sm:$0xff]
    %v4056 = vld [vmem:[%s3939 + $0x2a1] sm:$0xff]
    %v4057 = vld [vmem:[%s3939 + $0x2a9] sm:$0xff]
    %v4058 = vld [vmem:[%s3939 + $0x2b9] sm:$0xff]
    %v4059 = vld [vmem:[%s3939 + $0x2c1] sm:$0xff]
    %v4060 = vld [vmem:[%s3939 + $0x2d1] sm:$0xff]
    %v4061 = vld [vmem:[%s3939 + $0x2d9] sm:$0xff]
    %v4062 = vld [vmem:[%s3939 + $0x2e9] sm:$0xff]
    %v4063 = vld [vmem:[%s3939 + $0x2f1] sm:$0xff]
    %v4064 = vld [vmem:[%s3939 + $0x301] sm:$0xff]
    %v4065 = vld [vmem:[%s3939 + $0x309] sm:$0xff]
    %v4066 = vld [vmem:[%s3939 + $0x319] sm:$0xff]
    %v4067 = vld [vmem:[%s3939 + $0x321] sm:$0xff]
    %v4068 = vld [vmem:[%s3939 + $0x2] sm:$0xff]
    %v4069 = vld [vmem:[%s3939 + $0xa] sm:$0xff]
    %v4070 = vld [vmem:[%s3939 + $0x1a] sm:$0xff]
    %v4071 = vld [vmem:[%s3939 + $0x22] sm:$0xff]
    %v4072 = vld [vmem:[%s3939 + $0x32] sm:$0xff]
    %v4073 = vld [vmem:[%s3939 + $0x3a] sm:$0xff]
    %v4074 = vld [vmem:[%s3939 + $0x4a] sm:$0xff]
    %v4075 = vld [vmem:[%s3939 + $0x52] sm:$0xff]
    %v4076 = vld [vmem:[%s3939 + $0x62] sm:$0xff]
    %v4077 = vld [vmem:[%s3939 + $0x6a] sm:$0xff]
    %v4078 = vld [vmem:[%s3939 + $0x7a] sm:$0xff]
    %v4079 = vld [vmem:[%s3939 + $0x82] sm:$0xff]
    %v4080 = vld [vmem:[%s3939 + $0x92] sm:$0xff]
    %v4081 = vld [vmem:[%s3939 + $0x9a] sm:$0xff]
    %v4082 = vld [vmem:[%s3939 + $0xaa] sm:$0xff]
    %v4083 = vld [vmem:[%s3939 + $0xb2] sm:$0xff]
    %v4084 = vld [vmem:[%s3939 + $0xc2] sm:$0xff]
    %v4085 = vld [vmem:[%s3939 + $0xca] sm:$0xff]
    %v4086 = vld [vmem:[%s3939 + $0xda] sm:$0xff]
    %v4087 = vld [vmem:[%s3939 + $0xe2] sm:$0xff]
    %v4088 = vld [vmem:[%s3939 + $0xf2] sm:$0xff]
    %v4089 = vld [vmem:[%s3939 + $0xfa] sm:$0xff]
    %v4090 = vld [vmem:[%s3939 + $0x10a] sm:$0xff]
    %v4091 = vld [vmem:[%s3939 + $0x112] sm:$0xff]
    %v4092 = vld [vmem:[%s3939 + $0x122] sm:$0xff]
    %v4093 = vld [vmem:[%s3939 + $0x12a] sm:$0xff]
    %v4094 = vld [vmem:[%s3939 + $0x13a] sm:$0xff]
    %v4095 = vld [vmem:[%s3939 + $0x142] sm:$0xff]
    %v4096 = vld [vmem:[%s3939 + $0x152] sm:$0xff]
    %v4097 = vld [vmem:[%s3939 + $0x15a] sm:$0xff]
    %v4098 = vld [vmem:[%s3939 + $0x16a] sm:$0xff]
    %v4099 = vld [vmem:[%s3939 + $0x172] sm:$0xff]
    %v4100 = vld [vmem:[%s3939 + $0x1b2] sm:$0xff]
    %v4101 = vld [vmem:[%s3939 + $0x1ba] sm:$0xff]
    %v4102 = vld [vmem:[%s3939 + $0x1ca] sm:$0xff]
    %v4103 = vld [vmem:[%s3939 + $0x1d2] sm:$0xff]
    %v4104 = vld [vmem:[%s3939 + $0x1e2] sm:$0xff]
    %v4105 = vld [vmem:[%s3939 + $0x1ea] sm:$0xff]
    %v4106 = vld [vmem:[%s3939 + $0x1fa] sm:$0xff]
    %v4107 = vld [vmem:[%s3939 + $0x202] sm:$0xff]
    %v4108 = vld [vmem:[%s3939 + $0x212] sm:$0xff]
    %v4109 = vld [vmem:[%s3939 + $0x21a] sm:$0xff]
    %v4110 = vld [vmem:[%s3939 + $0x22a] sm:$0xff]
    %v4111 = vld [vmem:[%s3939 + $0x232] sm:$0xff]
    %v4112 = vld [vmem:[%s3939 + $0x242] sm:$0xff]
    %v4113 = vld [vmem:[%s3939 + $0x24a] sm:$0xff]
    %v4114 = vld [vmem:[%s3939 + $0x25a] sm:$0xff]
    %v4115 = vld [vmem:[%s3939 + $0x262] sm:$0xff]
    %v4116 = vld [vmem:[%s3939 + $0x272] sm:$0xff]
    %v4117 = vld [vmem:[%s3939 + $0x27a] sm:$0xff]
    %v4118 = vld [vmem:[%s3939 + $0x28a] sm:$0xff]
    %v4119 = vld [vmem:[%s3939 + $0x292] sm:$0xff]
    %v4120 = vld [vmem:[%s3939 + $0x2a2] sm:$0xff]
    %v4121 = vld [vmem:[%s3939 + $0x2aa] sm:$0xff]
    %v4122 = vld [vmem:[%s3939 + $0x2ba] sm:$0xff]
    %v4123 = vld [vmem:[%s3939 + $0x2c2] sm:$0xff]
    %v4124 = vld [vmem:[%s3939 + $0x2d2] sm:$0xff]
    %v4125 = vld [vmem:[%s3939 + $0x2da] sm:$0xff]
    %v4126 = vld [vmem:[%s3939 + $0x2ea] sm:$0xff]
    %v4127 = vld [vmem:[%s3939 + $0x2f2] sm:$0xff]
    %v4128 = vld [vmem:[%s3939 + $0x302] sm:$0xff]
    %v4129 = vld [vmem:[%s3939 + $0x30a] sm:$0xff]
    %v4130 = vld [vmem:[%s3939 + $0x31a] sm:$0xff]
    %v4131 = vld [vmem:[%s3939 + $0x322] sm:$0xff]
    %v4132 = vpack.c.bf16 %v3556, %v3555
    %v4133 = vpack.c.bf16 %v3620, %v3619
    %v4134 = vpack.c.bf16 %v3684, %v3683
    %v4135 = vpack.c.bf16 %v3748, %v3747
    %v4136 = vpack.c.bf16 %v3812, %v3811
    %v4137 = vpack.c.bf16 %v3876, %v3875
    %v4138 = vpack.c.bf16 %v3941, %v3940
    %v4139 = vpack.c.bf16 %v4005, %v4004
    %v4140 = vpack.c.bf16 %v4069, %v4068
    %v4141 = vpack.c.bf16 %v3558, %v3557
    %v4142 = vpack.c.bf16 %v3622, %v3621
    %v4143 = vpack.c.bf16 %v3686, %v3685
    %v4144 = vpack.c.bf16 %v3750, %v3749
    %v4145 = vpack.c.bf16 %v3814, %v3813
    %v4146 = vpack.c.bf16 %v3878, %v3877
    %v4147 = vpack.c.bf16 %v3943, %v3942
    %v4148 = vpack.c.bf16 %v4007, %v4006
    %v4149 = vpack.c.bf16 %v4071, %v4070
    %v4150 = vpack.c.bf16 %v3560, %v3559
    %v4151 = vpack.c.bf16 %v3624, %v3623
    %v4152 = vpack.c.bf16 %v3688, %v3687
    %v4153 = vpack.c.bf16 %v3752, %v3751
    %v4154 = vpack.c.bf16 %v3816, %v3815
    %v4155 = vpack.c.bf16 %v3880, %v3879
    %v4156 = vpack.c.bf16 %v3945, %v3944
    %v4157 = vpack.c.bf16 %v4009, %v4008
    %v4158 = vpack.c.bf16 %v4073, %v4072
    %v4159 = vpack.c.bf16 %v3562, %v3561
    %v4160 = vpack.c.bf16 %v3626, %v3625
    %v4161 = vpack.c.bf16 %v3690, %v3689
    %v4162 = vpack.c.bf16 %v3754, %v3753
    %v4163 = vpack.c.bf16 %v3818, %v3817
    %v4164 = vpack.c.bf16 %v3882, %v3881
    %v4165 = vpack.c.bf16 %v3947, %v3946
    %v4166 = vpack.c.bf16 %v4011, %v4010
    %v4167 = vpack.c.bf16 %v4075, %v4074
    %v4168 = vpack.c.bf16 %v3564, %v3563
    %v4169 = vpack.c.bf16 %v3628, %v3627
    %v4170 = vpack.c.bf16 %v3692, %v3691
    %v4171 = vpack.c.bf16 %v3756, %v3755
    %v4172 = vpack.c.bf16 %v3820, %v3819
    %v4173 = vpack.c.bf16 %v3884, %v3883
    %v4174 = vpack.c.bf16 %v3949, %v3948
    %v4175 = vpack.c.bf16 %v4013, %v4012
    %v4176 = vpack.c.bf16 %v4077, %v4076
    %v4177 = vpack.c.bf16 %v3566, %v3565
    %v4178 = vpack.c.bf16 %v3630, %v3629
    %v4179 = vpack.c.bf16 %v3694, %v3693
    %v4180 = vpack.c.bf16 %v3758, %v3757
    %v4181 = vpack.c.bf16 %v3822, %v3821
    %v4182 = vpack.c.bf16 %v3886, %v3885
    %v4183 = vpack.c.bf16 %v3951, %v3950
    %v4184 = vpack.c.bf16 %v4015, %v4014
    %v4185 = vpack.c.bf16 %v4079, %v4078
    %v4186 = vpack.c.bf16 %v3568, %v3567
    %v4187 = vpack.c.bf16 %v3632, %v3631
    %v4188 = vpack.c.bf16 %v3696, %v3695
    %v4189 = vpack.c.bf16 %v3760, %v3759
    %v4190 = vpack.c.bf16 %v3824, %v3823
    %v4191 = vpack.c.bf16 %v3888, %v3887
    %v4192 = vpack.c.bf16 %v3953, %v3952
    %v4193 = vpack.c.bf16 %v4017, %v4016
    %v4194 = vpack.c.bf16 %v4081, %v4080
    %v4195 = vpack.c.bf16 %v3570, %v3569
    %v4196 = vpack.c.bf16 %v3634, %v3633
    %v4197 = vpack.c.bf16 %v3698, %v3697
    %v4198 = vpack.c.bf16 %v3762, %v3761
    %v4199 = vpack.c.bf16 %v3826, %v3825
    %v4200 = vpack.c.bf16 %v3890, %v3889
    %v4201 = vpack.c.bf16 %v3955, %v3954
    %v4202 = vpack.c.bf16 %v4019, %v4018
    %v4203 = vpack.c.bf16 %v4083, %v4082
    %v4204 = vpack.c.bf16 %v3572, %v3571
    %v4205 = vpack.c.bf16 %v3636, %v3635
    %v4206 = vpack.c.bf16 %v3700, %v3699
    %v4207 = vpack.c.bf16 %v3764, %v3763
    %v4208 = vpack.c.bf16 %v3828, %v3827
    %v4209 = vpack.c.bf16 %v3892, %v3891
    %v4210 = vpack.c.bf16 %v3957, %v3956
    %v4211 = vpack.c.bf16 %v4021, %v4020
    %v4212 = vpack.c.bf16 %v4085, %v4084
    %v4213 = vpack.c.bf16 %v3574, %v3573
    %v4214 = vpack.c.bf16 %v3638, %v3637
    %v4215 = vpack.c.bf16 %v3702, %v3701
    %v4216 = vpack.c.bf16 %v3766, %v3765
    %v4217 = vpack.c.bf16 %v3830, %v3829
    %v4218 = vpack.c.bf16 %v3894, %v3893
    %v4219 = vpack.c.bf16 %v3959, %v3958
    %v4220 = vpack.c.bf16 %v4023, %v4022
    %v4221 = vpack.c.bf16 %v4087, %v4086
    %v4222 = vpack.c.bf16 %v3576, %v3575
    %v4223 = vpack.c.bf16 %v3640, %v3639
    %v4224 = vpack.c.bf16 %v3704, %v3703
    %v4225 = vpack.c.bf16 %v3768, %v3767
    %v4226 = vpack.c.bf16 %v3832, %v3831
    %v4227 = vpack.c.bf16 %v3896, %v3895
    %v4228 = vpack.c.bf16 %v3961, %v3960
    %v4229 = vpack.c.bf16 %v4025, %v4024
    %v4230 = vpack.c.bf16 %v4089, %v4088
    %v4231 = vpack.c.bf16 %v3578, %v3577
    %v4232 = vpack.c.bf16 %v3642, %v3641
    %v4233 = vpack.c.bf16 %v3706, %v3705
    %v4234 = vpack.c.bf16 %v3770, %v3769
    %v4235 = vpack.c.bf16 %v3834, %v3833
    %v4236 = vpack.c.bf16 %v3898, %v3897
    %v4237 = vpack.c.bf16 %v3963, %v3962
    %v4238 = vpack.c.bf16 %v4027, %v4026
    %v4239 = vpack.c.bf16 %v4091, %v4090
    %v4240 = vpack.c.bf16 %v3580, %v3579
    %v4241 = vpack.c.bf16 %v3644, %v3643
    %v4242 = vpack.c.bf16 %v3708, %v3707
    %v4243 = vpack.c.bf16 %v3772, %v3771
    %v4244 = vpack.c.bf16 %v3836, %v3835
    %v4245 = vpack.c.bf16 %v3900, %v3899
    %v4246 = vpack.c.bf16 %v3965, %v3964
    %v4247 = vpack.c.bf16 %v4029, %v4028
    %v4248 = vpack.c.bf16 %v4093, %v4092
    %v4249 = vpack.c.bf16 %v3582, %v3581
    %v4250 = vpack.c.bf16 %v3646, %v3645
    %v4251 = vpack.c.bf16 %v3710, %v3709
    %v4252 = vpack.c.bf16 %v3774, %v3773
    %v4253 = vpack.c.bf16 %v3838, %v3837
    %v4254 = vpack.c.bf16 %v3902, %v3901
    %v4255 = vpack.c.bf16 %v3967, %v3966
    %v4256 = vpack.c.bf16 %v4031, %v4030
    %v4257 = vpack.c.bf16 %v4095, %v4094
    %v4258 = vpack.c.bf16 %v3584, %v3583
    %v4259 = vpack.c.bf16 %v3648, %v3647
    %v4260 = vpack.c.bf16 %v3712, %v3711
    %v4261 = vpack.c.bf16 %v3776, %v3775
    %v4262 = vpack.c.bf16 %v3840, %v3839
    %v4263 = vpack.c.bf16 %v3904, %v3903
    %v4264 = vpack.c.bf16 %v3969, %v3968
    %v4265 = vpack.c.bf16 %v4033, %v4032
    %v4266 = vpack.c.bf16 %v4097, %v4096
    %v4267 = vpack.c.bf16 %v3586, %v3585
    %v4268 = vpack.c.bf16 %v3650, %v3649
    %v4269 = vpack.c.bf16 %v3714, %v3713
    %v4270 = vpack.c.bf16 %v3778, %v3777
    %v4271 = vpack.c.bf16 %v3842, %v3841
    %v4272 = vpack.c.bf16 %v3906, %v3905
    %v4273 = vpack.c.bf16 %v3971, %v3970
    %v4274 = vpack.c.bf16 %v4035, %v4034
    %v4275 = vpack.c.bf16 %v4099, %v4098
    %v4276 = vpack.c.bf16 %v3588, %v3587
    %v4277 = vpack.c.bf16 %v3652, %v3651
    %v4278 = vpack.c.bf16 %v3716, %v3715
    %v4279 = vpack.c.bf16 %v3780, %v3779
    %v4280 = vpack.c.bf16 %v3844, %v3843
    %v4281 = vpack.c.bf16 %v3908, %v3907
    %v4282 = vpack.c.bf16 %v3973, %v3972
    %v4283 = vpack.c.bf16 %v4037, %v4036
    %v4284 = vpack.c.bf16 %v4101, %v4100
    %v4285 = vpack.c.bf16 %v3590, %v3589
    %v4286 = vpack.c.bf16 %v3654, %v3653
    %v4287 = vpack.c.bf16 %v3718, %v3717
    %v4288 = vpack.c.bf16 %v3782, %v3781
    %v4289 = vpack.c.bf16 %v3846, %v3845
    %v4290 = vpack.c.bf16 %v3910, %v3909
    %v4291 = vpack.c.bf16 %v3975, %v3974
    %v4292 = vpack.c.bf16 %v4039, %v4038
    %v4293 = vpack.c.bf16 %v4103, %v4102
    %v4294 = vpack.c.bf16 %v3592, %v3591
    %v4295 = vpack.c.bf16 %v3656, %v3655
    %v4296 = vpack.c.bf16 %v3720, %v3719
    %v4297 = vpack.c.bf16 %v3784, %v3783
    %v4298 = vpack.c.bf16 %v3848, %v3847
    %v4299 = vpack.c.bf16 %v3912, %v3911
    %v4300 = vpack.c.bf16 %v3977, %v3976
    %v4301 = vpack.c.bf16 %v4041, %v4040
    %v4302 = vpack.c.bf16 %v4105, %v4104
    %v4303 = vpack.c.bf16 %v3594, %v3593
    %v4304 = vpack.c.bf16 %v3658, %v3657
    %v4305 = vpack.c.bf16 %v3722, %v3721
    %v4306 = vpack.c.bf16 %v3786, %v3785
    %v4307 = vpack.c.bf16 %v3850, %v3849
    %v4308 = vpack.c.bf16 %v3914, %v3913
    %v4309 = vpack.c.bf16 %v3979, %v3978
    %v4310 = vpack.c.bf16 %v4043, %v4042
    %v4311 = vpack.c.bf16 %v4107, %v4106
    %v4312 = vpack.c.bf16 %v3596, %v3595
    %v4313 = vpack.c.bf16 %v3660, %v3659
    %v4314 = vpack.c.bf16 %v3724, %v3723
    %v4315 = vpack.c.bf16 %v3788, %v3787
    %v4316 = vpack.c.bf16 %v3852, %v3851
    %v4317 = vpack.c.bf16 %v3916, %v3915
    %v4318 = vpack.c.bf16 %v3981, %v3980
    %v4319 = vpack.c.bf16 %v4045, %v4044
    %v4320 = vpack.c.bf16 %v4109, %v4108
    %v4321 = vpack.c.bf16 %v3598, %v3597
    %v4322 = vpack.c.bf16 %v3662, %v3661
    %v4323 = vpack.c.bf16 %v3726, %v3725
    %v4324 = vpack.c.bf16 %v3790, %v3789
    %v4325 = vpack.c.bf16 %v3854, %v3853
    %v4326 = vpack.c.bf16 %v3918, %v3917
    %v4327 = vpack.c.bf16 %v3983, %v3982
    %v4328 = vpack.c.bf16 %v4047, %v4046
    %v4329 = vpack.c.bf16 %v4111, %v4110
    %v4330 = vpack.c.bf16 %v3600, %v3599
    %v4331 = vpack.c.bf16 %v3664, %v3663
    %v4332 = vpack.c.bf16 %v3728, %v3727
    %v4333 = vpack.c.bf16 %v3792, %v3791
    %v4334 = vpack.c.bf16 %v3856, %v3855
    %v4335 = vpack.c.bf16 %v3920, %v3919
    %v4336 = vpack.c.bf16 %v3985, %v3984
    %v4337 = vpack.c.bf16 %v4049, %v4048
    %v4338 = vpack.c.bf16 %v4113, %v4112
    %v4339 = vpack.c.bf16 %v3602, %v3601
    %v4340 = vpack.c.bf16 %v3666, %v3665
    %v4341 = vpack.c.bf16 %v3730, %v3729
    %v4342 = vpack.c.bf16 %v3794, %v3793
    %v4343 = vpack.c.bf16 %v3858, %v3857
    %v4344 = vpack.c.bf16 %v3922, %v3921
    %v4345 = vpack.c.bf16 %v3987, %v3986
    %v4346 = vpack.c.bf16 %v4051, %v4050
    %v4347 = vpack.c.bf16 %v4115, %v4114
    %v4348 = vpack.c.bf16 %v3604, %v3603
    %v4349 = vpack.c.bf16 %v3668, %v3667
    %v4350 = vpack.c.bf16 %v3732, %v3731
    %v4351 = vpack.c.bf16 %v3796, %v3795
    %v4352 = vpack.c.bf16 %v3860, %v3859
    %v4353 = vpack.c.bf16 %v3924, %v3923
    %v4354 = vpack.c.bf16 %v3989, %v3988
    %v4355 = vpack.c.bf16 %v4053, %v4052
    %v4356 = vpack.c.bf16 %v4117, %v4116
    %v4357 = vpack.c.bf16 %v3606, %v3605
    %v4358 = vpack.c.bf16 %v3670, %v3669
    %v4359 = vpack.c.bf16 %v3734, %v3733
    %v4360 = vpack.c.bf16 %v3798, %v3797
    %v4361 = vpack.c.bf16 %v3862, %v3861
    %v4362 = vpack.c.bf16 %v3926, %v3925
    %v4363 = vpack.c.bf16 %v3991, %v3990
    %v4364 = vpack.c.bf16 %v4055, %v4054
    %v4365 = vpack.c.bf16 %v4119, %v4118
    %v4366 = vpack.c.bf16 %v3608, %v3607
    %v4367 = vpack.c.bf16 %v3672, %v3671
    %v4368 = vpack.c.bf16 %v3736, %v3735
    %v4369 = vpack.c.bf16 %v3800, %v3799
    %v4370 = vpack.c.bf16 %v3864, %v3863
    %v4371 = vpack.c.bf16 %v3928, %v3927
    %v4372 = vpack.c.bf16 %v3993, %v3992
    %v4373 = vpack.c.bf16 %v4057, %v4056
    %v4374 = vpack.c.bf16 %v4121, %v4120
    %v4375 = vpack.c.bf16 %v3610, %v3609
    %v4376 = vpack.c.bf16 %v3674, %v3673
    %v4377 = vpack.c.bf16 %v3738, %v3737
    %v4378 = vpack.c.bf16 %v3802, %v3801
    %v4379 = vpack.c.bf16 %v3866, %v3865
    %v4380 = vpack.c.bf16 %v3930, %v3929
    %v4381 = vpack.c.bf16 %v3995, %v3994
    %v4382 = vpack.c.bf16 %v4059, %v4058
    %v4383 = vpack.c.bf16 %v4123, %v4122
    %v4384 = vpack.c.bf16 %v3612, %v3611
    %v4385 = vpack.c.bf16 %v3676, %v3675
    %v4386 = vpack.c.bf16 %v3740, %v3739
    %v4387 = vpack.c.bf16 %v3804, %v3803
    %v4388 = vpack.c.bf16 %v3868, %v3867
    %v4389 = vpack.c.bf16 %v3932, %v3931
    %v4390 = vpack.c.bf16 %v3997, %v3996
    %v4391 = vpack.c.bf16 %v4061, %v4060
    %v4392 = vpack.c.bf16 %v4125, %v4124
    %v4393 = vpack.c.bf16 %v3614, %v3613
    %v4394 = vpack.c.bf16 %v3678, %v3677
    %v4395 = vpack.c.bf16 %v3742, %v3741
    %v4396 = vpack.c.bf16 %v3806, %v3805
    %v4397 = vpack.c.bf16 %v3870, %v3869
    %v4398 = vpack.c.bf16 %v3934, %v3933
    %v4399 = vpack.c.bf16 %v3999, %v3998
    %v4400 = vpack.c.bf16 %v4063, %v4062
    %v4401 = vpack.c.bf16 %v4127, %v4126
    %v4402 = vpack.c.bf16 %v3616, %v3615
    %v4403 = vpack.c.bf16 %v3680, %v3679
    %v4404 = vpack.c.bf16 %v3744, %v3743
    %v4405 = vpack.c.bf16 %v3808, %v3807
    %v4406 = vpack.c.bf16 %v3872, %v3871
    %v4407 = vpack.c.bf16 %v3936, %v3935
    %v4408 = vpack.c.bf16 %v4001, %v4000
    %v4409 = vpack.c.bf16 %v4065, %v4064
    %v4410 = vpack.c.bf16 %v4129, %v4128
    %v4411 = vpack.c.bf16 %v3618, %v3617
    %v4412 = vpack.c.bf16 %v3682, %v3681
    %v4413 = vpack.c.bf16 %v3746, %v3745
    %v4414 = vpack.c.bf16 %v3810, %v3809
    %v4415 = vpack.c.bf16 %v3874, %v3873
    %v4416 = vpack.c.bf16 %v3938, %v3937
    %v4417 = vpack.c.bf16 %v4003, %v4002
    %v4418 = vpack.c.bf16 %v4067, %v4066
    %v4419 = vpack.c.bf16 %v4131, %v4130
    %v4420 = vld [vmem:[%s5] sm:$0xf]
    %v4421 = vld [vmem:[%s5 + $0x4] sm:$0xf]
    %v4422 = vld [vmem:[%s5 + $0x8] sm:$0xf]
    %v4423 = vld [vmem:[%s5 + $0xc] sm:$0xf]
    %v4424 = vld [vmem:[%s5 + $0x10] sm:$0xf]
    %v4425 = vld [vmem:[%s5 + $0x14] sm:$0xf]
    %v4426 = vld [vmem:[%s5 + $0x18] sm:$0xf]
    %v4427 = vld [vmem:[%s5 + $0x1c] sm:$0xf]
    %v4428 = vld [vmem:[%s5 + $0x20] sm:$0xf]
    %v4429 = vld [vmem:[%s5 + $0x24] sm:$0xf]
    %v4430 = vld [vmem:[%s5 + $0x28] sm:$0xf]
    %v4431 = vld [vmem:[%s5 + $0x2c] sm:$0xf]
    %v4432 = vld [vmem:[%s5 + $0x30] sm:$0xf]
    %v4433 = vld [vmem:[%s5 + $0x34] sm:$0xf]
    %v4434 = vld [vmem:[%s5 + $0x38] sm:$0xf]
    %v4435 = vld [vmem:[%s5 + $0x3c] sm:$0xf]
    %v4436 = vld [vmem:[%s5 + $0x40] sm:$0xf]
    %v4437 = vld [vmem:[%s5 + $0x44] sm:$0xf]
    %v4438 = vld [vmem:[%s5 + $0x48] sm:$0xf]
    %v4439 = vld [vmem:[%s5 + $0x4c] sm:$0xf]
    %v4440 = vld [vmem:[%s5 + $0x50] sm:$0xf]
    %v4441 = vld [vmem:[%s5 + $0x54] sm:$0xf]
    %v4442 = vld [vmem:[%s5 + $0x58] sm:$0xf]
    %v4443 = vld [vmem:[%s5 + $0x5c] sm:$0xf]
    %v4444 = vld [vmem:[%s5 + $0x60] sm:$0xf]
    %v4445 = vld [vmem:[%s5 + $0x64] sm:$0xf]
    %v4446 = vld [vmem:[%s5 + $0x68] sm:$0xf]
    %v4447 = vld [vmem:[%s5 + $0x6c] sm:$0xf]
    %v4448 = vld [vmem:[%s5 + $0x70] sm:$0xf]
    %v4449 = vld [vmem:[%s5 + $0x74] sm:$0xf]
    %v4450 = vld [vmem:[%s5 + $0x78] sm:$0xf]
    %v4451 = vld [vmem:[%s5 + $0x7c] sm:$0xf]
    %v4452 = vld [vmem:[%s5 + $0x80] sm:$0xf]
    %v4453 = vld [vmem:[%s5 + $0x84] sm:$0xf]
    %v4454 = vld [vmem:[%s5 + $0x88] sm:$0xf]
    %v4455 = vld [vmem:[%s5 + $0x8c] sm:$0xf]
    %v4456 = vld [vmem:[%s5 + $0x90] sm:$0xf]
    %v4457 = vld [vmem:[%s5 + $0x94] sm:$0xf]
    %v4458 = vld [vmem:[%s5 + $0x98] sm:$0xf]
    %v4459 = vld [vmem:[%s5 + $0x9c] sm:$0xf]
    %v4460 = vld [vmem:[%s5 + $0xa0] sm:$0xf]
    %v4461 = vld [vmem:[%s5 + $0xa4] sm:$0xf]
    %v4462 = vld [vmem:[%s5 + $0xa8] sm:$0xf]
    %v4463 = vld [vmem:[%s5 + $0xac] sm:$0xf]
    %v4464 = vld [vmem:[%s5 + $0xb0] sm:$0xf]
    %v4465 = vld [vmem:[%s5 + $0xb4] sm:$0xf]
    %v4466 = vld [vmem:[%s5 + $0xb8] sm:$0xf]
    %v4467 = vld [vmem:[%s5 + $0xbc] sm:$0xf]
    %v4468 = vld [vmem:[%s5 + $0xc0] sm:$0xf]
    %v4469 = vld [vmem:[%s5 + $0xc4] sm:$0xf]
    %v4470 = vld [vmem:[%s5 + $0xc8] sm:$0xf]
    %v4471 = vld [vmem:[%s5 + $0xcc] sm:$0xf]
    %v4472 = vld [vmem:[%s5 + $0xd0] sm:$0xf]
    %v4473 = vld [vmem:[%s5 + $0xd4] sm:$0xf]
    %v4474 = vld [vmem:[%s5 + $0xd8] sm:$0xf]
    %v4475 = vld [vmem:[%s5 + $0xdc] sm:$0xf]
    %v4476 = vld [vmem:[%s5 + $0xe0] sm:$0xf]
    %v4477 = vld [vmem:[%s5 + $0xe4] sm:$0xf]
    %v4478 = vld [vmem:[%s5 + $0xe8] sm:$0xf]
    %v4479 = vld [vmem:[%s5 + $0xec] sm:$0xf]
    %v4480 = vld [vmem:[%s5 + $0xf0] sm:$0xf]
    %v4481 = vld [vmem:[%s5 + $0xf4] sm:$0xf]
    %v4482 = vld [vmem:[%s5 + $0xf8] sm:$0xf]
    %v4483 = vld [vmem:[%s5 + $0xfc] sm:$0xf]
    %v4484 = vld [vmem:[%s5 + $0x100] sm:$0xf]
    %v4485 = vld [vmem:[%s5 + $0x104] sm:$0xf]
    %v4486 = vld [vmem:[%s5 + $0x108] sm:$0xf]
    %v4487 = vld [vmem:[%s5 + $0x10c] sm:$0xf]
    %v4488 = vld [vmem:[%s5 + $0x110] sm:$0xf]
    %v4489 = vld [vmem:[%s5 + $0x114] sm:$0xf]
    %v4490 = vld [vmem:[%s5 + $0x118] sm:$0xf]
    %v4491 = vld [vmem:[%s5 + $0x11c] sm:$0xf]
    %v4492 = vld [vmem:[%s5 + $0x120] sm:$0xf]
    %v4493 = vld [vmem:[%s5 + $0x124] sm:$0xf]
    %v4494 = vld [vmem:[%s5 + $0x128] sm:$0xf]
    %v4495 = vld [vmem:[%s5 + $0x12c] sm:$0xf]
    %v4496 = vld [vmem:[%s5 + $0x130] sm:$0xf]
    %v4497 = vld [vmem:[%s5 + $0x134] sm:$0xf]
    %v4498 = vld [vmem:[%s5 + $0x138] sm:$0xf]
    %v4499 = vld [vmem:[%s5 + $0x13c] sm:$0xf]
    %v4500 = vld [vmem:[%s5 + $0x140] sm:$0xf]
    %v4501 = vld [vmem:[%s5 + $0x144] sm:$0xf]
    %v4502 = vld [vmem:[%s5 + $0x148] sm:$0xf]
    %v4503 = vld [vmem:[%s5 + $0x14c] sm:$0xf]
    %v4504 = vld [vmem:[%s5 + $0x150] sm:$0xf]
    %v4505 = vld [vmem:[%s5 + $0x154] sm:$0xf]
    %v4506 = vld [vmem:[%s5 + $0x158] sm:$0xf]
    %v4507 = vld [vmem:[%s5 + $0x15c] sm:$0xf]
    %v4508 = vld [vmem:[%s5 + $0x160] sm:$0xf]
    %v4509 = vld [vmem:[%s5 + $0x164] sm:$0xf]
    %v4510 = vld [vmem:[%s5 + $0x168] sm:$0xf]
    %v4511 = vld [vmem:[%s5 + $0x16c] sm:$0xf]
    %v4512 = vld [vmem:[%s5 + $0x170] sm:$0xf]
    %v4513 = vld [vmem:[%s5 + $0x174] sm:$0xf]
    %v4514 = vld [vmem:[%s5 + $0x178] sm:$0xf]
    %v4515 = vld [vmem:[%s5 + $0x17c] sm:$0xf]
    %v4516 = vld [vmem:[%s5 + $0x180] sm:$0xf]
    %v4517 = vld [vmem:[%s5 + $0x184] sm:$0xf]
    %v4518 = vld [vmem:[%s5 + $0x188] sm:$0xf]
    %v4519 = vld [vmem:[%s5 + $0x18c] sm:$0xf]
    %v4520 = vld [vmem:[%s5 + $0x190] sm:$0xf]
    %v4521 = vld [vmem:[%s5 + $0x194] sm:$0xf]
    %v4522 = vld [vmem:[%s5 + $0x198] sm:$0xf]
    %v4523 = vld [vmem:[%s5 + $0x19c] sm:$0xf]
    %v4524 = vld [vmem:[%s5 + $0x1a0] sm:$0xf]
    %v4525 = vld [vmem:[%s5 + $0x1a4] sm:$0xf]
    %v4526 = vld [vmem:[%s5 + $0x1a8] sm:$0xf]
    %v4527 = vld [vmem:[%s5 + $0x1ac] sm:$0xf]
    %v4528 = vld [vmem:[%s5 + $0x1b0] sm:$0xf]
    %v4529 = vld [vmem:[%s5 + $0x1b4] sm:$0xf]
    %v4530 = vld [vmem:[%s5 + $0x1b8] sm:$0xf]
    %v4531 = vld [vmem:[%s5 + $0x1bc] sm:$0xf]
    %v4532 = vld [vmem:[%s5 + $0x1c0] sm:$0xf]
    %v4533 = vld [vmem:[%s5 + $0x1c4] sm:$0xf]
    %v4534 = vld [vmem:[%s5 + $0x1c8] sm:$0xf]
    %v4535 = vld [vmem:[%s5 + $0x1cc] sm:$0xf]
    %v4536 = vld [vmem:[%s5 + $0x1d0] sm:$0xf]
    %v4537 = vld [vmem:[%s5 + $0x1d4] sm:$0xf]
    %v4538 = vld [vmem:[%s5 + $0x1d8] sm:$0xf]
    %v4539 = vld [vmem:[%s5 + $0x1dc] sm:$0xf]
    %v4540 = vld [vmem:[%s5 + $0x1e0] sm:$0xf]
    %v4541 = vld [vmem:[%s5 + $0x1e4] sm:$0xf]
    %v4542 = vld [vmem:[%s5 + $0x1e8] sm:$0xf]
    %v4543 = vld [vmem:[%s5 + $0x1ec] sm:$0xf]
    %v4544 = vld [vmem:[%s5 + $0x1f0] sm:$0xf]
    %v4545 = vld [vmem:[%s5 + $0x1f4] sm:$0xf]
    %v4546 = vld [vmem:[%s5 + $0x1f8] sm:$0xf]
    %v4547 = vld [vmem:[%s5 + $0x1fc] sm:$0xf]
    %v4548 = vld [vmem:[%s5 + $0x200] sm:$0xf]
    %v4549 = vld [vmem:[%s5 + $0x204] sm:$0xf]
    %v4550 = vld [vmem:[%s5 + $0x208] sm:$0xf]
    %v4551 = vld [vmem:[%s5 + $0x20c] sm:$0xf]
    %v4552 = vld [vmem:[%s5 + $0x210] sm:$0xf]
    %v4553 = vld [vmem:[%s5 + $0x214] sm:$0xf]
    %v4554 = vld [vmem:[%s5 + $0x218] sm:$0xf]
    %v4555 = vld [vmem:[%s5 + $0x21c] sm:$0xf]
    %v4556 = vld [vmem:[%s5 + $0x220] sm:$0xf]
    %v4557 = vld [vmem:[%s5 + $0x224] sm:$0xf]
    %v4558 = vld [vmem:[%s5 + $0x228] sm:$0xf]
    %v4559 = vld [vmem:[%s5 + $0x22c] sm:$0xf]
    %v4560 = vld [vmem:[%s5 + $0x230] sm:$0xf]
    %v4561 = vld [vmem:[%s5 + $0x234] sm:$0xf]
    %v4562 = vld [vmem:[%s5 + $0x238] sm:$0xf]
    %v4563 = vld [vmem:[%s5 + $0x23c] sm:$0xf]
    %v4564 = vld [vmem:[%s6] sm:$0x1]
    %v4566 = vlaneseq
    %v4567 = vshrl.u32 %v4566, 7
    %v4568 = vsub.s32 0, %v4567
    %v4569 = vrot.slane %v4564, %v4568
    %v4715 = vunpack.c.l.b16 %v4420
    %v4716 = vunpack.c.l.b16 %v4421
    %v4717 = vunpack.c.l.b16 %v4422
    %v4718 = vunpack.c.l.b16 %v4423
    %v4719 = vunpack.c.l.b16 %v4424
    %v4720 = vunpack.c.l.b16 %v4425
    %v4721 = vunpack.c.l.b16 %v4426
    %v4722 = vunpack.c.l.b16 %v4427
    %v4723 = vunpack.c.l.b16 %v4428
    %v4724 = vunpack.c.l.b16 %v4429
    %v4725 = vunpack.c.l.b16 %v4430
    %v4726 = vunpack.c.l.b16 %v4431
    %v4727 = vunpack.c.l.b16 %v4432
    %v4728 = vunpack.c.l.b16 %v4433
    %v4729 = vunpack.c.l.b16 %v4434
    %v4730 = vunpack.c.l.b16 %v4435
    %v4731 = vunpack.c.l.b16 %v4436
    %v4732 = vunpack.c.l.b16 %v4437
    %v4733 = vunpack.c.l.b16 %v4438
    %v4734 = vunpack.c.l.b16 %v4439
    %v4735 = vunpack.c.l.b16 %v4440
    %v4736 = vunpack.c.l.b16 %v4441
    %v4737 = vunpack.c.l.b16 %v4442
    %v4738 = vunpack.c.l.b16 %v4443
    %v4739 = vunpack.c.l.b16 %v4444
    %v4740 = vunpack.c.l.b16 %v4445
    %v4741 = vunpack.c.l.b16 %v4446
    %v4742 = vunpack.c.l.b16 %v4447
    %v4743 = vunpack.c.l.b16 %v4448
    %v4744 = vunpack.c.l.b16 %v4449
    %v4745 = vunpack.c.l.b16 %v4450
    %v4746 = vunpack.c.l.b16 %v4451
    %v4747 = vunpack.c.l.b16 %v4452
    %v4748 = vunpack.c.l.b16 %v4453
    %v4749 = vunpack.c.l.b16 %v4454
    %v4750 = vunpack.c.l.b16 %v4455
    %v4751 = vunpack.c.l.b16 %v4456
    %v4752 = vunpack.c.l.b16 %v4457
    %v4753 = vunpack.c.l.b16 %v4458
    %v4754 = vunpack.c.l.b16 %v4459
    %v4755 = vunpack.c.l.b16 %v4460
    %v4756 = vunpack.c.l.b16 %v4461
    %v4757 = vunpack.c.l.b16 %v4462
    %v4758 = vunpack.c.l.b16 %v4463
    %v4759 = vunpack.c.l.b16 %v4464
    %v4760 = vunpack.c.l.b16 %v4465
    %v4761 = vunpack.c.l.b16 %v4466
    %v4762 = vunpack.c.l.b16 %v4467
    %v4763 = vunpack.c.l.b16 %v4468
    %v4764 = vunpack.c.l.b16 %v4469
    %v4765 = vunpack.c.l.b16 %v4470
    %v4766 = vunpack.c.l.b16 %v4471
    %v4767 = vunpack.c.l.b16 %v4472
    %v4768 = vunpack.c.l.b16 %v4473
    %v4769 = vunpack.c.l.b16 %v4474
    %v4770 = vunpack.c.l.b16 %v4475
    %v4771 = vunpack.c.l.b16 %v4476
    %v4772 = vunpack.c.l.b16 %v4477
    %v4773 = vunpack.c.l.b16 %v4478
    %v4774 = vunpack.c.l.b16 %v4479
    %v4775 = vunpack.c.l.b16 %v4480
    %v4776 = vunpack.c.l.b16 %v4481
    %v4777 = vunpack.c.l.b16 %v4482
    %v4778 = vunpack.c.l.b16 %v4483
    %v4779 = vunpack.c.l.b16 %v4484
    %v4780 = vunpack.c.l.b16 %v4485
    %v4781 = vunpack.c.l.b16 %v4486
    %v4782 = vunpack.c.l.b16 %v4487
    %v4783 = vunpack.c.l.b16 %v4488
    %v4784 = vunpack.c.l.b16 %v4489
    %v4785 = vunpack.c.l.b16 %v4490
    %v4786 = vunpack.c.l.b16 %v4491
    %v4787 = vunpack.c.l.b16 %v4492
    %v4788 = vunpack.c.l.b16 %v4493
    %v4789 = vunpack.c.l.b16 %v4494
    %v4790 = vunpack.c.l.b16 %v4495
    %v4791 = vunpack.c.l.b16 %v4496
    %v4792 = vunpack.c.l.b16 %v4497
    %v4793 = vunpack.c.l.b16 %v4498
    %v4794 = vunpack.c.l.b16 %v4499
    %v4795 = vunpack.c.l.b16 %v4500
    %v4796 = vunpack.c.l.b16 %v4501
    %v4797 = vunpack.c.l.b16 %v4502
    %v4798 = vunpack.c.l.b16 %v4503
    %v4799 = vunpack.c.l.b16 %v4504
    %v4800 = vunpack.c.l.b16 %v4505
    %v4801 = vunpack.c.l.b16 %v4506
    %v4802 = vunpack.c.l.b16 %v4507
    %v4803 = vunpack.c.l.b16 %v4508
    %v4804 = vunpack.c.l.b16 %v4509
    %v4805 = vunpack.c.l.b16 %v4510
    %v4806 = vunpack.c.l.b16 %v4511
    %v4807 = vunpack.c.l.b16 %v4512
    %v4808 = vunpack.c.l.b16 %v4513
    %v4809 = vunpack.c.l.b16 %v4514
    %v4810 = vunpack.c.l.b16 %v4515
    %v4811 = vunpack.c.l.b16 %v4516
    %v4812 = vunpack.c.l.b16 %v4517
    %v4813 = vunpack.c.l.b16 %v4518
    %v4814 = vunpack.c.l.b16 %v4519
    %v4815 = vunpack.c.l.b16 %v4520
    %v4816 = vunpack.c.l.b16 %v4521
    %v4817 = vunpack.c.l.b16 %v4522
    %v4818 = vunpack.c.l.b16 %v4523
    %v4819 = vunpack.c.l.b16 %v4524
    %v4820 = vunpack.c.l.b16 %v4525
    %v4821 = vunpack.c.l.b16 %v4526
    %v4822 = vunpack.c.l.b16 %v4527
    %v4823 = vunpack.c.l.b16 %v4528
    %v4824 = vunpack.c.l.b16 %v4529
    %v4825 = vunpack.c.l.b16 %v4530
    %v4826 = vunpack.c.l.b16 %v4531
    %v4827 = vunpack.c.l.b16 %v4532
    %v4828 = vunpack.c.l.b16 %v4533
    %v4829 = vunpack.c.l.b16 %v4534
    %v4830 = vunpack.c.l.b16 %v4535
    %v4831 = vunpack.c.l.b16 %v4536
    %v4832 = vunpack.c.l.b16 %v4537
    %v4833 = vunpack.c.l.b16 %v4538
    %v4834 = vunpack.c.l.b16 %v4539
    %v4835 = vunpack.c.l.b16 %v4540
    %v4836 = vunpack.c.l.b16 %v4541
    %v4837 = vunpack.c.l.b16 %v4542
    %v4838 = vunpack.c.l.b16 %v4543
    %v4839 = vunpack.c.l.b16 %v4544
    %v4840 = vunpack.c.l.b16 %v4545
    %v4841 = vunpack.c.l.b16 %v4546
    %v4842 = vunpack.c.l.b16 %v4547
    %v4843 = vunpack.c.l.b16 %v4548
    %v4844 = vunpack.c.l.b16 %v4549
    %v4845 = vunpack.c.l.b16 %v4550
    %v4846 = vunpack.c.l.b16 %v4551
    %v4847 = vunpack.c.l.b16 %v4552
    %v4848 = vunpack.c.l.b16 %v4553
    %v4849 = vunpack.c.l.b16 %v4554
    %v4850 = vunpack.c.l.b16 %v4555
    %v4851 = vunpack.c.l.b16 %v4556
    %v4852 = vunpack.c.l.b16 %v4557
    %v4853 = vunpack.c.l.b16 %v4558
    %v4854 = vunpack.c.l.b16 %v4559
    %v4855 = vunpack.c.l.b16 %v4560
    %v4856 = vunpack.c.l.b16 %v4561
    %v4857 = vunpack.c.l.b16 %v4562
    %v4858 = vunpack.c.l.b16 %v4563
    %v4859 = vpack.c.b16 %v4716, %v4715
    %v4860 = vpack.c.b16 %v4718, %v4717
    %v4861 = vpack.c.b16 %v4720, %v4719
    %v4862 = vpack.c.b16 %v4722, %v4721
    %v4863 = vpack.c.b16 %v4724, %v4723
    %v4864 = vpack.c.b16 %v4726, %v4725
    %v4865 = vpack.c.b16 %v4728, %v4727
    %v4866 = vpack.c.b16 %v4730, %v4729
    %v4867 = vpack.c.b16 %v4732, %v4731
    %v4868 = vpack.c.b16 %v4734, %v4733
    %v4869 = vpack.c.b16 %v4736, %v4735
    %v4870 = vpack.c.b16 %v4738, %v4737
    %v4871 = vpack.c.b16 %v4740, %v4739
    %v4872 = vpack.c.b16 %v4742, %v4741
    %v4873 = vpack.c.b16 %v4744, %v4743
    %v4874 = vpack.c.b16 %v4746, %v4745
    %v4875 = vpack.c.b16 %v4748, %v4747
    %v4876 = vpack.c.b16 %v4750, %v4749
    %v4877 = vpack.c.b16 %v4752, %v4751
    %v4878 = vpack.c.b16 %v4754, %v4753
    %v4879 = vpack.c.b16 %v4756, %v4755
    %v4880 = vpack.c.b16 %v4758, %v4757
    %v4881 = vpack.c.b16 %v4760, %v4759
    %v4882 = vpack.c.b16 %v4762, %v4761
    %v4883 = vpack.c.b16 %v4764, %v4763
    %v4884 = vpack.c.b16 %v4766, %v4765
    %v4885 = vpack.c.b16 %v4768, %v4767
    %v4886 = vpack.c.b16 %v4770, %v4769
    %v4887 = vpack.c.b16 %v4772, %v4771
    %v4888 = vpack.c.b16 %v4774, %v4773
    %v4889 = vpack.c.b16 %v4776, %v4775
    %v4890 = vpack.c.b16 %v4778, %v4777
    %v4891 = vpack.c.b16 %v4780, %v4779
    %v4892 = vpack.c.b16 %v4782, %v4781
    %v4893 = vpack.c.b16 %v4784, %v4783
    %v4894 = vpack.c.b16 %v4786, %v4785
    %v4895 = vpack.c.b16 %v4788, %v4787
    %v4896 = vpack.c.b16 %v4790, %v4789
    %v4897 = vpack.c.b16 %v4792, %v4791
    %v4898 = vpack.c.b16 %v4794, %v4793
    %v4899 = vpack.c.b16 %v4796, %v4795
    %v4900 = vpack.c.b16 %v4798, %v4797
    %v4901 = vpack.c.b16 %v4800, %v4799
    %v4902 = vpack.c.b16 %v4802, %v4801
    %v4903 = vpack.c.b16 %v4804, %v4803
    %v4904 = vpack.c.b16 %v4806, %v4805
    %v4905 = vpack.c.b16 %v4808, %v4807
    %v4906 = vpack.c.b16 %v4810, %v4809
    %v4907 = vpack.c.b16 %v4812, %v4811
    %v4908 = vpack.c.b16 %v4814, %v4813
    %v4909 = vpack.c.b16 %v4816, %v4815
    %v4910 = vpack.c.b16 %v4818, %v4817
    %v4911 = vpack.c.b16 %v4820, %v4819
    %v4912 = vpack.c.b16 %v4822, %v4821
    %v4913 = vpack.c.b16 %v4824, %v4823
    %v4914 = vpack.c.b16 %v4826, %v4825
    %v4915 = vpack.c.b16 %v4828, %v4827
    %v4916 = vpack.c.b16 %v4830, %v4829
    %v4917 = vpack.c.b16 %v4832, %v4831
    %v4918 = vpack.c.b16 %v4834, %v4833
    %v4919 = vpack.c.b16 %v4836, %v4835
    %v4920 = vpack.c.b16 %v4838, %v4837
    %v4921 = vpack.c.b16 %v4840, %v4839
    %v4922 = vpack.c.b16 %v4842, %v4841
    %v4923 = vpack.c.b16 %v4844, %v4843
    %v4924 = vpack.c.b16 %v4846, %v4845
    %v4925 = vpack.c.b16 %v4848, %v4847
    %v4926 = vpack.c.b16 %v4850, %v4849
    %v4927 = vpack.c.b16 %v4852, %v4851
    %v4928 = vpack.c.b16 %v4854, %v4853
    %v4929 = vpack.c.b16 %v4856, %v4855
    %v4930 = vpack.c.b16 %v4858, %v4857
    %5003 = vmatprep.subr.bf16.mxu0 0
    %5004 = vmatpush1.bf16.msra.mxu0 %v4859
    %5005 = vmatprep.subr.bf16.mxu0 0
    %5006 = vmatpush1.bf16.msra.mxu0 %v4860
    %5007 = vmatprep.subr.bf16.mxu0 0
    %5008 = vmatpush1.bf16.msra.mxu0 %v4861
    %5009 = vmatprep.subr.bf16.mxu0 0
    %5010 = vmatpush1.bf16.msra.mxu0 %v4862
    %5011 = vmatprep.subr.bf16.mxu0 0
    %5012 = vmatpush1.bf16.msra.mxu0 %v4863
    %5013 = vmatprep.subr.bf16.mxu0 0
    %5014 = vmatpush1.bf16.msra.mxu0 %v4864
    %5015 = vmatprep.subr.bf16.mxu0 0
    %5016 = vmatpush1.bf16.msra.mxu0 %v4865
    %5017 = vmatprep.subr.bf16.mxu0 0
    %5018 = vmatpush1.bf16.msra.mxu0 %v4866
    %5019 = vmatprep.subr.bf16.mxu0 0
    %5020 = vmatpush1.bf16.msra.mxu0 %v4867
    %5021 = vmatprep.subr.bf16.mxu0 0
    %5022 = vmatpush1.bf16.msra.mxu0 %v4868
    %5023 = vmatprep.subr.bf16.mxu0 0
    %5024 = vmatpush1.bf16.msra.mxu0 %v4869
    %5025 = vmatprep.subr.bf16.mxu0 0
    %5026 = vmatpush1.bf16.msra.mxu0 %v4870
    %5027 = vmatprep.subr.bf16.mxu0 0
    %5028 = vmatpush1.bf16.msra.mxu0 %v4871
    %5029 = vmatprep.subr.bf16.mxu0 0
    %5030 = vmatpush1.bf16.msra.mxu0 %v4872
    %5031 = vmatprep.subr.bf16.mxu0 0
    %5032 = vmatpush1.bf16.msra.mxu0 %v4873
    %5033 = vmatprep.subr.bf16.mxu0 0
    %5034 = vmatpush1.bf16.msra.mxu0 %v4874
    %5035 = vmatprep.mubr.bf16.mxu0 %v4133
    %5036 = vmatmul.mubr.bf16.gmra.mrb[0].mxu0 %v4132
    %v5037 = vpop.f32.mrb[0].mxu0
    %v5038 = vadd.f32 %v4569, %v5037
    %v5039 = vpop.f32.mrb[0].mxu0
    %v5040 = vpop.f32.mrb[0].mxu0
    %v5041 = vadd.f32 %v4569, %v5040
    %v5042 = vpop.f32.mrb[0].mxu0
    %5043 = vmatprep.mubr.bf16.mxu0 %v4142
    %5044 = vmatmul.mubr.bf16.gmra.mrb[0].mxu0 %v4141
    %v5045 = vpop.f32.mrb[0].mxu0
    %v5046 = vadd.f32 %v4569, %v5045
    %v5047 = vpop.f32.mrb[0].mxu0
    %v5048 = vpop.f32.mrb[0].mxu0
    %v5049 = vadd.f32 %v4569, %v5048
    %v5050 = vpop.f32.mrb[0].mxu0
    %5051 = vmatprep.mubr.bf16.mxu0 %v4151
    %5052 = vmatmul.mubr.bf16.gmra.mrb[0].mxu0 %v4150
    %v5053 = vpop.f32.mrb[0].mxu0
    %v5054 = vadd.f32 %v4569, %v5053
    %v5055 = vpop.f32.mrb[0].mxu0
    %v5056 = vpop.f32.mrb[0].mxu0
    %v5057 = vadd.f32 %v4569, %v5056
    %v5058 = vpop.f32.mrb[0].mxu0
    %5059 = vmatprep.mubr.bf16.mxu0 %v4160
    %5060 = vmatmul.mubr.bf16.gmra.mrb[0].mxu0 %v4159
    %v5061 = vpop.f32.mrb[0].mxu0
    %v5062 = vadd.f32 %v4569, %v5061
    %v5063 = vpop.f32.mrb[0].mxu0
    %v5064 = vpop.f32.mrb[0].mxu0
    %v5065 = vadd.f32 %v4569, %v5064
    %v5066 = vpop.f32.mrb[0].mxu0
    %5067 = vmatprep.mubr.bf16.mxu0 %v4169
    %5068 = vmatmul.mubr.bf16.gmra.mrb[0].mxu0 %v4168
    %v5069 = vpop.f32.mrb[0].mxu0
    %v5070 = vadd.f32 %v4569, %v5069
    %v5071 = vpop.f32.mrb[0].mxu0
    %v5072 = vpop.f32.mrb[0].mxu0
    %v5073 = vadd.f32 %v4569, %v5072
    %v5074 = vpop.f32.mrb[0].mxu0
    %5075 = vmatprep.mubr.bf16.mxu0 %v4178
    %5076 = vmatmul.mubr.bf16.gmra.mrb[0].mxu0 %v4177
    %v5077 = vpop.f32.mrb[0].mxu0
    %v5078 = vadd.f32 %v4569, %v5077
    %v5079 = vpop.f32.mrb[0].mxu0
    %v5080 = vpop.f32.mrb[0].mxu0
    %v5081 = vadd.f32 %v4569, %v5080
    %v5082 = vpop.f32.mrb[0].mxu0
    %5083 = vmatprep.mubr.bf16.mxu0 %v4187
    %5084 = vmatmul.mubr.bf16.gmra.mrb[0].mxu0 %v4186
    %v5085 = vpop.f32.mrb[0].mxu0
    %v5086 = vadd.f32 %v4569, %v5085
    %v5087 = vpop.f32.mrb[0].mxu0
    %v5088 = vpop.f32.mrb[0].mxu0
    %v5089 = vadd.f32 %v4569, %v5088
    %v5090 = vpop.f32.mrb[0].mxu0
    %5091 = vmatprep.mubr.bf16.mxu0 %v4196
    %5092 = vmatmul.mubr.bf16.gmra.mrb[0].mxu0 %v4195
    %v5093 = vpop.f32.mrb[0].mxu0
    %v5094 = vadd.f32 %v4569, %v5093
    %v5095 = vpop.f32.mrb[0].mxu0
    %v5096 = vpop.f32.mrb[0].mxu0
    %v5097 = vadd.f32 %v4569, %v5096
    %v5098 = vpop.f32.mrb[0].mxu0
    %5099 = vmatprep.mubr.bf16.mxu0 %v4205
    %5100 = vmatmul.mubr.bf16.gmra.mrb[0].mxu0 %v4204
    %v5101 = vpop.f32.mrb[0].mxu0
    %v5102 = vadd.f32 %v4569, %v5101
    %v5103 = vpop.f32.mrb[0].mxu0
    %v5104 = vpop.f32.mrb[0].mxu0
    %v5105 = vadd.f32 %v4569, %v5104
    %v5106 = vpop.f32.mrb[0].mxu0
    %5107 = vmatprep.mubr.bf16.mxu0 %v4214
    %5108 = vmatmul.mubr.bf16.gmra.mrb[0].mxu0 %v4213
    %v5109 = vpop.f32.mrb[0].mxu0
    %v5110 = vadd.f32 %v4569, %v5109
    %v5111 = vpop.f32.mrb[0].mxu0
    %v5112 = vpop.f32.mrb[0].mxu0
    %v5113 = vadd.f32 %v4569, %v5112
    %v5114 = vpop.f32.mrb[0].mxu0
    %5115 = vmatprep.mubr.bf16.mxu0 %v4223
    %5116 = vmatmul.mubr.bf16.gmra.mrb[0].mxu0 %v4222
    %v5117 = vpop.f32.mrb[0].mxu0
    %v5118 = vadd.f32 %v4569, %v5117
    %v5119 = vpop.f32.mrb[0].mxu0
    %v5120 = vpop.f32.mrb[0].mxu0
    %v5121 = vadd.f32 %v4569, %v5120
    %v5122 = vpop.f32.mrb[0].mxu0
    %5123 = vmatprep.mubr.bf16.mxu0 %v4232
    %5124 = vmatmul.mubr.bf16.gmra.mrb[0].mxu0 %v4231
    %v5125 = vpop.f32.mrb[0].mxu0
    %v5126 = vadd.f32 %v4569, %v5125
    %v5127 = vpop.f32.mrb[0].mxu0
    %v5128 = vpop.f32.mrb[0].mxu0
    %v5129 = vadd.f32 %v4569, %v5128
    %v5130 = vpop.f32.mrb[0].mxu0
    %5131 = vmatprep.mubr.bf16.mxu0 %v4241
    %5132 = vmatmul.mubr.bf16.gmra.mrb[0].mxu0 %v4240
    %v5133 = vpop.f32.mrb[0].mxu0
    %v5134 = vadd.f32 %v4569, %v5133
    %v5135 = vpop.f32.mrb[0].mxu0
    %v5136 = vpop.f32.mrb[0].mxu0
    %v5137 = vadd.f32 %v4569, %v5136
    %v5138 = vpop.f32.mrb[0].mxu0
    %5139 = vmatprep.mubr.bf16.mxu0 %v4250
    %5140 = vmatmul.mubr.bf16.gmra.mrb[0].mxu0 %v4249
    %v5141 = vpop.f32.mrb[0].mxu0
    %v5142 = vadd.f32 %v4569, %v5141
    %v5143 = vpop.f32.mrb[0].mxu0
    %v5144 = vpop.f32.mrb[0].mxu0
    %v5145 = vadd.f32 %v4569, %v5144
    %v5146 = vpop.f32.mrb[0].mxu0
    %5147 = vmatprep.mubr.bf16.mxu0 %v4259
    %5148 = vmatmul.mubr.bf16.gmra.mrb[0].mxu0 %v4258
    %v5149 = vpop.f32.mrb[0].mxu0
    %v5150 = vadd.f32 %v4569, %v5149
    %v5151 = vpop.f32.mrb[0].mxu0
    %v5152 = vpop.f32.mrb[0].mxu0
    %v5153 = vadd.f32 %v4569, %v5152
    %v5154 = vpop.f32.mrb[0].mxu0
    %5155 = vmatprep.mubr.bf16.mxu0 %v4268
    %5156 = vmatmul.mubr.bf16.gmra.mrb[0].mxu0 %v4267
    %v5157 = vpop.f32.mrb[0].mxu0
    %v5158 = vadd.f32 %v4569, %v5157
    %v5159 = vpop.f32.mrb[0].mxu0
    %v5160 = vpop.f32.mrb[0].mxu0
    %v5161 = vadd.f32 %v4569, %v5160
    %v5162 = vpop.f32.mrb[0].mxu0
    %5163 = vmatprep.mubr.bf16.mxu0 %v4277
    %5164 = vmatmul.mubr.bf16.gmra.mrb[0].mxu0 %v4276
    %v5165 = vpop.f32.mrb[0].mxu0
    %v5166 = vadd.f32 %v4569, %v5165
    %v5167 = vpop.f32.mrb[0].mxu0
    %v5168 = vpop.f32.mrb[0].mxu0
    %v5169 = vadd.f32 %v4569, %v5168
    %v5170 = vpop.f32.mrb[0].mxu0
    %5171 = vmatprep.mubr.bf16.mxu0 %v4286
    %5172 = vmatmul.mubr.bf16.gmra.mrb[0].mxu0 %v4285
    %v5173 = vpop.f32.mrb[0].mxu0
    %v5174 = vadd.f32 %v4569, %v5173
    %v5175 = vpop.f32.mrb[0].mxu0
    %v5176 = vpop.f32.mrb[0].mxu0
    %v5177 = vadd.f32 %v4569, %v5176
    %v5178 = vpop.f32.mrb[0].mxu0
    %5179 = vmatprep.mubr.bf16.mxu0 %v4295
    %5180 = vmatmul.mubr.bf16.gmra.mrb[0].mxu0 %v4294
    %v5181 = vpop.f32.mrb[0].mxu0
    %v5182 = vadd.f32 %v4569, %v5181
    %v5183 = vpop.f32.mrb[0].mxu0
    %v5184 = vpop.f32.mrb[0].mxu0
    %v5185 = vadd.f32 %v4569, %v5184
    %v5186 = vpop.f32.mrb[0].mxu0
    %5187 = vmatprep.mubr.bf16.mxu0 %v4304
    %5188 = vmatmul.mubr.bf16.gmra.mrb[0].mxu0 %v4303
    %v5189 = vpop.f32.mrb[0].mxu0
    %v5190 = vadd.f32 %v4569, %v5189
    %v5191 = vpop.f32.mrb[0].mxu0
    %v5192 = vpop.f32.mrb[0].mxu0
    %v5193 = vadd.f32 %v4569, %v5192
    %v5194 = vpop.f32.mrb[0].mxu0
    %5195 = vmatprep.mubr.bf16.mxu0 %v4313
    %5196 = vmatmul.mubr.bf16.gmra.mrb[0].mxu0 %v4312
    %v5197 = vpop.f32.mrb[0].mxu0
    %v5198 = vadd.f32 %v4569, %v5197
    %v5199 = vpop.f32.mrb[0].mxu0
    %v5200 = vpop.f32.mrb[0].mxu0
    %v5201 = vadd.f32 %v4569, %v5200
    %v5202 = vpop.f32.mrb[0].mxu0
    %5203 = vmatprep.mubr.bf16.mxu0 %v4322
    %5204 = vmatmul.mubr.bf16.gmra.mrb[0].mxu0 %v4321
    %v5205 = vpop.f32.mrb[0].mxu0
    %v5206 = vadd.f32 %v4569, %v5205
    %v5207 = vpop.f32.mrb[0].mxu0
    %v5208 = vpop.f32.mrb[0].mxu0
    %v5209 = vadd.f32 %v4569, %v5208
    %v5210 = vpop.f32.mrb[0].mxu0
    %5211 = vmatprep.mubr.bf16.mxu0 %v4331
    %5212 = vmatmul.mubr.bf16.gmra.mrb[0].mxu0 %v4330
    %v5213 = vpop.f32.mrb[0].mxu0
    %v5214 = vadd.f32 %v4569, %v5213
    %v5215 = vpop.f32.mrb[0].mxu0
    %v5216 = vpop.f32.mrb[0].mxu0
    %v5217 = vadd.f32 %v4569, %v5216
    %v5218 = vpop.f32.mrb[0].mxu0
    %5219 = vmatprep.mubr.bf16.mxu0 %v4340
    %5220 = vmatmul.mubr.bf16.gmra.mrb[0].mxu0 %v4339
    %v5221 = vpop.f32.mrb[0].mxu0
    %v5222 = vadd.f32 %v4569, %v5221
    %v5223 = vpop.f32.mrb[0].mxu0
    %v5224 = vpop.f32.mrb[0].mxu0
    %v5225 = vadd.f32 %v4569, %v5224
    %v5226 = vpop.f32.mrb[0].mxu0
    %5227 = vmatprep.mubr.bf16.mxu0 %v4349
    %5228 = vmatmul.mubr.bf16.gmra.mrb[0].mxu0 %v4348
    %v5229 = vpop.f32.mrb[0].mxu0
    %v5230 = vadd.f32 %v4569, %v5229
    %v5231 = vpop.f32.mrb[0].mxu0
    %v5232 = vpop.f32.mrb[0].mxu0
    %v5233 = vadd.f32 %v4569, %v5232
    %v5234 = vpop.f32.mrb[0].mxu0
    %5235 = vmatprep.mubr.bf16.mxu0 %v4358
    %5236 = vmatmul.mubr.bf16.gmra.mrb[0].mxu0 %v4357
    %v5237 = vpop.f32.mrb[0].mxu0
    %v5238 = vadd.f32 %v4569, %v5237
    %v5239 = vpop.f32.mrb[0].mxu0
    %v5240 = vpop.f32.mrb[0].mxu0
    %v5241 = vadd.f32 %v4569, %v5240
    %v5242 = vpop.f32.mrb[0].mxu0
    %5243 = vmatprep.mubr.bf16.mxu0 %v4367
    %5244 = vmatmul.mubr.bf16.gmra.mrb[0].mxu0 %v4366
    %v5245 = vpop.f32.mrb[0].mxu0
    %v5246 = vadd.f32 %v4569, %v5245
    %v5247 = vpop.f32.mrb[0].mxu0
    %v5248 = vpop.f32.mrb[0].mxu0
    %v5249 = vadd.f32 %v4569, %v5248
    %v5250 = vpop.f32.mrb[0].mxu0
    %5251 = vmatprep.mubr.bf16.mxu0 %v4376
    %5252 = vmatmul.mubr.bf16.gmra.mrb[0].mxu0 %v4375
    %v5253 = vpop.f32.mrb[0].mxu0
    %v5254 = vadd.f32 %v4569, %v5253
    %v5255 = vpop.f32.mrb[0].mxu0
    %v5256 = vpop.f32.mrb[0].mxu0
    %v5257 = vadd.f32 %v4569, %v5256
    %v5258 = vpop.f32.mrb[0].mxu0
    %5259 = vmatprep.mubr.bf16.mxu0 %v4385
    %5260 = vmatmul.mubr.bf16.gmra.mrb[0].mxu0 %v4384
    %v5261 = vpop.f32.mrb[0].mxu0
    %v5262 = vadd.f32 %v4569, %v5261
    %v5263 = vpop.f32.mrb[0].mxu0
    %v5264 = vpop.f32.mrb[0].mxu0
    %v5265 = vadd.f32 %v4569, %v5264
    %v5266 = vpop.f32.mrb[0].mxu0
    %5267 = vmatprep.mubr.bf16.mxu0 %v4394
    %5268 = vmatmul.mubr.bf16.gmra.mrb[0].mxu0 %v4393
    %v5269 = vpop.f32.mrb[0].mxu0
    %v5270 = vadd.f32 %v4569, %v5269
    %v5271 = vpop.f32.mrb[0].mxu0
    %v5272 = vpop.f32.mrb[0].mxu0
    %v5273 = vadd.f32 %v4569, %v5272
    %v5274 = vpop.f32.mrb[0].mxu0
    %5275 = vmatprep.mubr.bf16.mxu0 %v4403
    %5276 = vmatmul.mubr.bf16.gmra.mrb[0].mxu0 %v4402
    %v5277 = vpop.f32.mrb[0].mxu0
    %v5278 = vadd.f32 %v4569, %v5277
    %v5279 = vpop.f32.mrb[0].mxu0
    %v5280 = vpop.f32.mrb[0].mxu0
    %v5281 = vadd.f32 %v4569, %v5280
    %v5282 = vpop.f32.mrb[0].mxu0
    %5283 = vmatprep.mubr.bf16.mxu0 %v4412
    %5284 = vmatmul.mubr.bf16.gmra.mrb[0].mxu0 %v4411
    %v5285 = vpop.f32.mrb[0].mxu0
    %v5286 = vadd.f32 %v4569, %v5285
    %v5287 = vpop.f32.mrb[0].mxu0
    %v5288 = vpop.f32.mrb[0].mxu0
    %v5289 = vadd.f32 %v4569, %v5288
    %v5290 = vpop.f32.mrb[0].mxu0
    %5291 = vdwg.mxu0
    %5292 = vmatprep.subr.bf16.mxu0 0
    %5293 = vmatpush1.bf16.msra.mxu0 %v4875
    %5294 = vmatprep.subr.bf16.mxu0 0
    %5295 = vmatpush1.bf16.msra.mxu0 %v4876
    %5296 = vmatprep.subr.bf16.mxu0 0
    %5297 = vmatpush1.bf16.msra.mxu0 %v4877
    %5298 = vmatprep.subr.bf16.mxu0 0
    %5299 = vmatpush1.bf16.msra.mxu0 %v4878
    %5300 = vmatprep.subr.bf16.mxu0 0
    %5301 = vmatpush1.bf16.msra.mxu0 %v4879
    %5302 = vmatprep.subr.bf16.mxu0 0
    %5303 = vmatpush1.bf16.msra.mxu0 %v4880
    %5304 = vmatprep.subr.bf16.mxu0 0
    %5305 = vmatpush1.bf16.msra.mxu0 %v4881
    %5306 = vmatprep.subr.bf16.mxu0 0
    %5307 = vmatpush1.bf16.msra.mxu0 %v4882
    %5308 = vmatprep.subr.bf16.mxu0 0
    %5309 = vmatpush1.bf16.msra.mxu0 %v4883
    %5310 = vmatprep.subr.bf16.mxu0 0
    %5311 = vmatpush1.bf16.msra.mxu0 %v4884
    %5312 = vmatprep.subr.bf16.mxu0 0
    %5313 = vmatpush1.bf16.msra.mxu0 %v4885
    %5314 = vmatprep.subr.bf16.mxu0 0
    %5315 = vmatpush1.bf16.msra.mxu0 %v4886
    %5316 = vmatprep.subr.bf16.mxu0 0
    %5317 = vmatpush1.bf16.msra.mxu0 %v4887
    %5318 = vmatprep.subr.bf16.mxu0 0
    %5319 = vmatpush1.bf16.msra.mxu0 %v4888
    %5320 = vmatprep.subr.bf16.mxu0 0
    %5321 = vmatpush1.bf16.msra.mxu0 %v4889
    %5322 = vmatprep.subr.bf16.mxu0 0
    %5323 = vmatpush1.bf16.msra.mxu0 %v4890
    %5324 = vmatprep.mubr.bf16.mxu0 %v4135
    %5325 = vmatmul.mubr.bf16.gmra.mrb[0].mxu0 %v4134
    %v5326 = vpop.f32.mrb[0].mxu0
    %v5327 = vadd.f32 %v5038, %v5326
    %v5328 = vpop.f32.mrb[0].mxu0
    %v5329 = vpop.f32.mrb[0].mxu0
    %v5330 = vadd.f32 %v5041, %v5329
    %v5331 = vpop.f32.mrb[0].mxu0
    %5332 = vmatprep.mubr.bf16.mxu0 %v4144
    %5333 = vmatmul.mubr.bf16.gmra.mrb[0].mxu0 %v4143
    %v5334 = vpop.f32.mrb[0].mxu0
    %v5335 = vadd.f32 %v5046, %v5334
    %v5336 = vpop.f32.mrb[0].mxu0
    %v5337 = vpop.f32.mrb[0].mxu0
    %v5338 = vadd.f32 %v5049, %v5337
    %v5339 = vpop.f32.mrb[0].mxu0
    %5340 = vmatprep.mubr.bf16.mxu0 %v4153
    %5341 = vmatmul.mubr.bf16.gmra.mrb[0].mxu0 %v4152
    %v5342 = vpop.f32.mrb[0].mxu0
    %v5343 = vadd.f32 %v5054, %v5342
    %v5344 = vpop.f32.mrb[0].mxu0
    %v5345 = vpop.f32.mrb[0].mxu0
    %v5346 = vadd.f32 %v5057, %v5345
    %v5347 = vpop.f32.mrb[0].mxu0
    %5348 = vmatprep.mubr.bf16.mxu0 %v4162
    %5349 = vmatmul.mubr.bf16.gmra.mrb[0].mxu0 %v4161
    %v5350 = vpop.f32.mrb[0].mxu0
    %v5351 = vadd.f32 %v5062, %v5350
    %v5352 = vpop.f32.mrb[0].mxu0
    %v5353 = vpop.f32.mrb[0].mxu0
    %v5354 = vadd.f32 %v5065, %v5353
    %v5355 = vpop.f32.mrb[0].mxu0
    %5356 = vmatprep.mubr.bf16.mxu0 %v4171
    %5357 = vmatmul.mubr.bf16.gmra.mrb[0].mxu0 %v4170
    %v5358 = vpop.f32.mrb[0].mxu0
    %v5359 = vadd.f32 %v5070, %v5358
    %v5360 = vpop.f32.mrb[0].mxu0
    %v5361 = vpop.f32.mrb[0].mxu0
    %v5362 = vadd.f32 %v5073, %v5361
    %v5363 = vpop.f32.mrb[0].mxu0
    %5364 = vmatprep.mubr.bf16.mxu0 %v4180
    %5365 = vmatmul.mubr.bf16.gmra.mrb[0].mxu0 %v4179
    %v5366 = vpop.f32.mrb[0].mxu0
    %v5367 = vadd.f32 %v5078, %v5366
    %v5368 = vpop.f32.mrb[0].mxu0
    %v5369 = vpop.f32.mrb[0].mxu0
    %v5370 = vadd.f32 %v5081, %v5369
    %v5371 = vpop.f32.mrb[0].mxu0
    %5372 = vmatprep.mubr.bf16.mxu0 %v4189
    %5373 = vmatmul.mubr.bf16.gmra.mrb[0].mxu0 %v4188
    %v5374 = vpop.f32.mrb[0].mxu0
    %v5375 = vadd.f32 %v5086, %v5374
    %v5376 = vpop.f32.mrb[0].mxu0
    %v5377 = vpop.f32.mrb[0].mxu0
    %v5378 = vadd.f32 %v5089, %v5377
    %v5379 = vpop.f32.mrb[0].mxu0
    %5380 = vmatprep.mubr.bf16.mxu0 %v4198
    %5381 = vmatmul.mubr.bf16.gmra.mrb[0].mxu0 %v4197
    %v5382 = vpop.f32.mrb[0].mxu0
    %v5383 = vadd.f32 %v5094, %v5382
    %v5384 = vpop.f32.mrb[0].mxu0
    %v5385 = vpop.f32.mrb[0].mxu0
    %v5386 = vadd.f32 %v5097, %v5385
    %v5387 = vpop.f32.mrb[0].mxu0
    %5388 = vmatprep.mubr.bf16.mxu0 %v4207
    %5389 = vmatmul.mubr.bf16.gmra.mrb[0].mxu0 %v4206
    %v5390 = vpop.f32.mrb[0].mxu0
    %v5391 = vadd.f32 %v5102, %v5390
    %v5392 = vpop.f32.mrb[0].mxu0
    %v5393 = vpop.f32.mrb[0].mxu0
    %v5394 = vadd.f32 %v5105, %v5393
    %v5395 = vpop.f32.mrb[0].mxu0
    %5396 = vmatprep.mubr.bf16.mxu0 %v4216
    %5397 = vmatmul.mubr.bf16.gmra.mrb[0].mxu0 %v4215
    %v5398 = vpop.f32.mrb[0].mxu0
    %v5399 = vadd.f32 %v5110, %v5398
    %v5400 = vpop.f32.mrb[0].mxu0
    %v5401 = vpop.f32.mrb[0].mxu0
    %v5402 = vadd.f32 %v5113, %v5401
    %v5403 = vpop.f32.mrb[0].mxu0
    %5404 = vmatprep.mubr.bf16.mxu0 %v4225
    %5405 = vmatmul.mubr.bf16.gmra.mrb[0].mxu0 %v4224
    %v5406 = vpop.f32.mrb[0].mxu0
    %v5407 = vadd.f32 %v5118, %v5406
    %v5408 = vpop.f32.mrb[0].mxu0
    %v5409 = vpop.f32.mrb[0].mxu0
    %v5410 = vadd.f32 %v5121, %v5409
    %v5411 = vpop.f32.mrb[0].mxu0
    %5412 = vmatprep.mubr.bf16.mxu0 %v4234
    %5413 = vmatmul.mubr.bf16.gmra.mrb[0].mxu0 %v4233
    %v5414 = vpop.f32.mrb[0].mxu0
    %v5415 = vadd.f32 %v5126, %v5414
    %v5416 = vpop.f32.mrb[0].mxu0
    %v5417 = vpop.f32.mrb[0].mxu0
    %v5418 = vadd.f32 %v5129, %v5417
    %v5419 = vpop.f32.mrb[0].mxu0
    %5420 = vmatprep.mubr.bf16.mxu0 %v4243
    %5421 = vmatmul.mubr.bf16.gmra.mrb[0].mxu0 %v4242
    %v5422 = vpop.f32.mrb[0].mxu0
    %v5423 = vadd.f32 %v5134, %v5422
    %v5424 = vpop.f32.mrb[0].mxu0
    %v5425 = vpop.f32.mrb[0].mxu0
    %v5426 = vadd.f32 %v5137, %v5425
    %v5427 = vpop.f32.mrb[0].mxu0
    %5428 = vmatprep.mubr.bf16.mxu0 %v4252
    %5429 = vmatmul.mubr.bf16.gmra.mrb[0].mxu0 %v4251
    %v5430 = vpop.f32.mrb[0].mxu0
    %v5431 = vadd.f32 %v5142, %v5430
    %v5432 = vpop.f32.mrb[0].mxu0
    %v5433 = vpop.f32.mrb[0].mxu0
    %v5434 = vadd.f32 %v5145, %v5433
    %v5435 = vpop.f32.mrb[0].mxu0
    %5436 = vmatprep.mubr.bf16.mxu0 %v4261
    %5437 = vmatmul.mubr.bf16.gmra.mrb[0].mxu0 %v4260
    %v5438 = vpop.f32.mrb[0].mxu0
    %v5439 = vadd.f32 %v5150, %v5438
    %v5440 = vpop.f32.mrb[0].mxu0
    %v5441 = vpop.f32.mrb[0].mxu0
    %v5442 = vadd.f32 %v5153, %v5441
    %v5443 = vpop.f32.mrb[0].mxu0
    %5444 = vmatprep.mubr.bf16.mxu0 %v4270
    %5445 = vmatmul.mubr.bf16.gmra.mrb[0].mxu0 %v4269
    %v5446 = vpop.f32.mrb[0].mxu0
    %v5447 = vadd.f32 %v5158, %v5446
    %v5448 = vpop.f32.mrb[0].mxu0
    %v5449 = vpop.f32.mrb[0].mxu0
    %v5450 = vadd.f32 %v5161, %v5449
    %v5451 = vpop.f32.mrb[0].mxu0
    %5452 = vmatprep.mubr.bf16.mxu0 %v4279
    %5453 = vmatmul.mubr.bf16.gmra.mrb[0].mxu0 %v4278
    %v5454 = vpop.f32.mrb[0].mxu0
    %v5455 = vadd.f32 %v5166, %v5454
    %v5456 = vpop.f32.mrb[0].mxu0
    %v5457 = vpop.f32.mrb[0].mxu0
    %v5458 = vadd.f32 %v5169, %v5457
    %v5459 = vpop.f32.mrb[0].mxu0
    %5460 = vmatprep.mubr.bf16.mxu0 %v4288
    %5461 = vmatmul.mubr.bf16.gmra.mrb[0].mxu0 %v4287
    %v5462 = vpop.f32.mrb[0].mxu0
    %v5463 = vadd.f32 %v5174, %v5462
    %v5464 = vpop.f32.mrb[0].mxu0
    %v5465 = vpop.f32.mrb[0].mxu0
    %v5466 = vadd.f32 %v5177, %v5465
    %v5467 = vpop.f32.mrb[0].mxu0
    %5468 = vmatprep.mubr.bf16.mxu0 %v4297
    %5469 = vmatmul.mubr.bf16.gmra.mrb[0].mxu0 %v4296
    %v5470 = vpop.f32.mrb[0].mxu0
    %v5471 = vadd.f32 %v5182, %v5470
    %v5472 = vpop.f32.mrb[0].mxu0
    %v5473 = vpop.f32.mrb[0].mxu0
    %v5474 = vadd.f32 %v5185, %v5473
    %v5475 = vpop.f32.mrb[0].mxu0
    %5476 = vmatprep.mubr.bf16.mxu0 %v4306
    %5477 = vmatmul.mubr.bf16.gmra.mrb[0].mxu0 %v4305
    %v5478 = vpop.f32.mrb[0].mxu0
    %v5479 = vadd.f32 %v5190, %v5478
    %v5480 = vpop.f32.mrb[0].mxu0
    %v5481 = vpop.f32.mrb[0].mxu0
    %v5482 = vadd.f32 %v5193, %v5481
    %v5483 = vpop.f32.mrb[0].mxu0
    %5484 = vmatprep.mubr.bf16.mxu0 %v4315
    %5485 = vmatmul.mubr.bf16.gmra.mrb[0].mxu0 %v4314
    %v5486 = vpop.f32.mrb[0].mxu0
    %v5487 = vadd.f32 %v5198, %v5486
    %v5488 = vpop.f32.mrb[0].mxu0
    %v5489 = vpop.f32.mrb[0].mxu0
    %v5490 = vadd.f32 %v5201, %v5489
    %v5491 = vpop.f32.mrb[0].mxu0
    %5492 = vmatprep.mubr.bf16.mxu0 %v4324
    %5493 = vmatmul.mubr.bf16.gmra.mrb[0].mxu0 %v4323
    %v5494 = vpop.f32.mrb[0].mxu0
    %v5495 = vadd.f32 %v5206, %v5494
    %v5496 = vpop.f32.mrb[0].mxu0
    %v5497 = vpop.f32.mrb[0].mxu0
    %v5498 = vadd.f32 %v5209, %v5497
    %v5499 = vpop.f32.mrb[0].mxu0
    %5500 = vmatprep.mubr.bf16.mxu0 %v4333
    %5501 = vmatmul.mubr.bf16.gmra.mrb[0].mxu0 %v4332
    %v5502 = vpop.f32.mrb[0].mxu0
    %v5503 = vadd.f32 %v5214, %v5502
    %v5504 = vpop.f32.mrb[0].mxu0
    %v5505 = vpop.f32.mrb[0].mxu0
    %v5506 = vadd.f32 %v5217, %v5505
    %v5507 = vpop.f32.mrb[0].mxu0
    %5508 = vmatprep.mubr.bf16.mxu0 %v4342
    %5509 = vmatmul.mubr.bf16.gmra.mrb[0].mxu0 %v4341
    %v5510 = vpop.f32.mrb[0].mxu0
    %v5511 = vadd.f32 %v5222, %v5510
    %v5512 = vpop.f32.mrb[0].mxu0
    %v5513 = vpop.f32.mrb[0].mxu0
    %v5514 = vadd.f32 %v5225, %v5513
    %v5515 = vpop.f32.mrb[0].mxu0
    %5516 = vmatprep.mubr.bf16.mxu0 %v4351
    %5517 = vmatmul.mubr.bf16.gmra.mrb[0].mxu0 %v4350
    %v5518 = vpop.f32.mrb[0].mxu0
    %v5519 = vadd.f32 %v5230, %v5518
    %v5520 = vpop.f32.mrb[0].mxu0
    %v5521 = vpop.f32.mrb[0].mxu0
    %v5522 = vadd.f32 %v5233, %v5521
    %v5523 = vpop.f32.mrb[0].mxu0
    %5524 = vmatprep.mubr.bf16.mxu0 %v4360
    %5525 = vmatmul.mubr.bf16.gmra.mrb[0].mxu0 %v4359
    %v5526 = vpop.f32.mrb[0].mxu0
    %v5527 = vadd.f32 %v5238, %v5526
    %v5528 = vpop.f32.mrb[0].mxu0
    %v5529 = vpop.f32.mrb[0].mxu0
    %v5530 = vadd.f32 %v5241, %v5529
    %v5531 = vpop.f32.mrb[0].mxu0
    %5532 = vmatprep.mubr.bf16.mxu0 %v4369
    %5533 = vmatmul.mubr.bf16.gmra.mrb[0].mxu0 %v4368
    %v5534 = vpop.f32.mrb[0].mxu0
    %v5535 = vadd.f32 %v5246, %v5534
    %v5536 = vpop.f32.mrb[0].mxu0
    %v5537 = vpop.f32.mrb[0].mxu0
    %v5538 = vadd.f32 %v5249, %v5537
    %v5539 = vpop.f32.mrb[0].mxu0
    %5540 = vmatprep.mubr.bf16.mxu0 %v4378
    %5541 = vmatmul.mubr.bf16.gmra.mrb[0].mxu0 %v4377
    %v5542 = vpop.f32.mrb[0].mxu0
    %v5543 = vadd.f32 %v5254, %v5542
    %v5544 = vpop.f32.mrb[0].mxu0
    %v5545 = vpop.f32.mrb[0].mxu0
    %v5546 = vadd.f32 %v5257, %v5545
    %v5547 = vpop.f32.mrb[0].mxu0
    %5548 = vmatprep.mubr.bf16.mxu0 %v4387
    %5549 = vmatmul.mubr.bf16.gmra.mrb[0].mxu0 %v4386
    %v5550 = vpop.f32.mrb[0].mxu0
    %v5551 = vadd.f32 %v5262, %v5550
    %v5552 = vpop.f32.mrb[0].mxu0
    %v5553 = vpop.f32.mrb[0].mxu0
    %v5554 = vadd.f32 %v5265, %v5553
    %v5555 = vpop.f32.mrb[0].mxu0
    %5556 = vmatprep.mubr.bf16.mxu0 %v4396
    %5557 = vmatmul.mubr.bf16.gmra.mrb[0].mxu0 %v4395
    %v5558 = vpop.f32.mrb[0].mxu0
    %v5559 = vadd.f32 %v5270, %v5558
    %v5560 = vpop.f32.mrb[0].mxu0
    %v5561 = vpop.f32.mrb[0].mxu0
    %v5562 = vadd.f32 %v5273, %v5561
    %v5563 = vpop.f32.mrb[0].mxu0
    %5564 = vmatprep.mubr.bf16.mxu0 %v4405
    %5565 = vmatmul.mubr.bf16.gmra.mrb[0].mxu0 %v4404
    %v5566 = vpop.f32.mrb[0].mxu0
    %v5567 = vadd.f32 %v5278, %v5566
    %v5568 = vpop.f32.mrb[0].mxu0
    %v5569 = vpop.f32.mrb[0].mxu0
    %v5570 = vadd.f32 %v5281, %v5569
    %v5571 = vpop.f32.mrb[0].mxu0
    %5572 = vmatprep.mubr.bf16.mxu0 %v4414
    %5573 = vmatmul.mubr.bf16.gmra.mrb[0].mxu0 %v4413
    %v5574 = vpop.f32.mrb[0].mxu0
    %v5575 = vadd.f32 %v5286, %v5574
    %v5576 = vpop.f32.mrb[0].mxu0
    %v5577 = vpop.f32.mrb[0].mxu0
    %v5578 = vadd.f32 %v5289, %v5577
    %v5579 = vpop.f32.mrb[0].mxu0
    %5580 = vdwg.mxu0
    %5581 = vmatprep.subr.bf16.mxu0 0
    %5582 = vmatpush1.bf16.msra.mxu0 %v4891
    %5583 = vmatprep.subr.bf16.mxu0 0
    %5584 = vmatpush1.bf16.msra.mxu0 %v4892
    %5585 = vmatprep.subr.bf16.mxu0 0
    %5586 = vmatpush1.bf16.msra.mxu0 %v4893
    %5587 = vmatprep.subr.bf16.mxu0 0
    %5588 = vmatpush1.bf16.msra.mxu0 %v4894
    %5589 = vmatprep.subr.bf16.mxu0 0
    %5590 = vmatpush1.bf16.msra.mxu0 %v4895
    %5591 = vmatprep.subr.bf16.mxu0 0
    %5592 = vmatpush1.bf16.msra.mxu0 %v4896
    %5593 = vmatprep.subr.bf16.mxu0 0
    %5594 = vmatpush1.bf16.msra.mxu0 %v4897
    %5595 = vmatprep.subr.bf16.mxu0 0
    %5596 = vmatpush1.bf16.msra.mxu0 %v4898
    %5597 = vmatprep.subr.bf16.mxu0 0
    %5598 = vmatpush1.bf16.msra.mxu0 %v4899
    %5599 = vmatprep.subr.bf16.mxu0 0
    %5600 = vmatpush1.bf16.msra.mxu0 %v4900
    %5601 = vmatprep.subr.bf16.mxu0 0
    %5602 = vmatpush1.bf16.msra.mxu0 %v4901
    %5603 = vmatprep.subr.bf16.mxu0 0
    %5604 = vmatpush1.bf16.msra.mxu0 %v4902
    %5605 = vmatprep.subr.bf16.mxu0 0
    %5606 = vmatpush1.bf16.msra.mxu0 %v4903
    %5607 = vmatprep.subr.bf16.mxu0 0
    %5608 = vmatpush1.bf16.msra.mxu0 %v4904
    %5609 = vmatprep.subr.bf16.mxu0 0
    %5610 = vmatpush1.bf16.msra.mxu0 %v4905
    %5611 = vmatprep.subr.bf16.mxu0 0
    %5612 = vmatpush1.bf16.msra.mxu0 %v4906
    %5613 = vmatprep.mubr.bf16.mxu0 %v4137
    %5614 = vmatmul.mubr.bf16.gmra.mrb[0].mxu0 %v4136
    %v5615 = vpop.f32.mrb[0].mxu0
    %v5616 = vadd.f32 %v5327, %v5615
    %v5617 = vpop.f32.mrb[0].mxu0
    %v5618 = vpop.f32.mrb[0].mxu0
    %v5619 = vadd.f32 %v5330, %v5618
    %v5620 = vpop.f32.mrb[0].mxu0
    %5621 = vmatprep.mubr.bf16.mxu0 %v4146
    %5622 = vmatmul.mubr.bf16.gmra.mrb[0].mxu0 %v4145
    %v5623 = vpop.f32.mrb[0].mxu0
    %v5624 = vadd.f32 %v5335, %v5623
    %v5625 = vpop.f32.mrb[0].mxu0
    %v5626 = vpop.f32.mrb[0].mxu0
    %v5627 = vadd.f32 %v5338, %v5626
    %v5628 = vpop.f32.mrb[0].mxu0
    %5629 = vmatprep.mubr.bf16.mxu0 %v4155
    %5630 = vmatmul.mubr.bf16.gmra.mrb[0].mxu0 %v4154
    %v5631 = vpop.f32.mrb[0].mxu0
    %v5632 = vadd.f32 %v5343, %v5631
    %v5633 = vpop.f32.mrb[0].mxu0
    %v5634 = vpop.f32.mrb[0].mxu0
    %v5635 = vadd.f32 %v5346, %v5634
    %v5636 = vpop.f32.mrb[0].mxu0
    %5637 = vmatprep.mubr.bf16.mxu0 %v4164
    %5638 = vmatmul.mubr.bf16.gmra.mrb[0].mxu0 %v4163
    %v5639 = vpop.f32.mrb[0].mxu0
    %v5640 = vadd.f32 %v5351, %v5639
    %v5641 = vpop.f32.mrb[0].mxu0
    %v5642 = vpop.f32.mrb[0].mxu0
    %v5643 = vadd.f32 %v5354, %v5642
    %v5644 = vpop.f32.mrb[0].mxu0
    %5645 = vmatprep.mubr.bf16.mxu0 %v4173
    %5646 = vmatmul.mubr.bf16.gmra.mrb[0].mxu0 %v4172
    %v5647 = vpop.f32.mrb[0].mxu0
    %v5648 = vadd.f32 %v5359, %v5647
    %v5649 = vpop.f32.mrb[0].mxu0
    %v5650 = vpop.f32.mrb[0].mxu0
    %v5651 = vadd.f32 %v5362, %v5650
    %v5652 = vpop.f32.mrb[0].mxu0
    %5653 = vmatprep.mubr.bf16.mxu0 %v4182
    %5654 = vmatmul.mubr.bf16.gmra.mrb[0].mxu0 %v4181
    %v5655 = vpop.f32.mrb[0].mxu0
    %v5656 = vadd.f32 %v5367, %v5655
    %v5657 = vpop.f32.mrb[0].mxu0
    %v5658 = vpop.f32.mrb[0].mxu0
    %v5659 = vadd.f32 %v5370, %v5658
    %v5660 = vpop.f32.mrb[0].mxu0
    %5661 = vmatprep.mubr.bf16.mxu0 %v4191
    %5662 = vmatmul.mubr.bf16.gmra.mrb[0].mxu0 %v4190
    %v5663 = vpop.f32.mrb[0].mxu0
    %v5664 = vadd.f32 %v5375, %v5663
    %v5665 = vpop.f32.mrb[0].mxu0
    %v5666 = vpop.f32.mrb[0].mxu0
    %v5667 = vadd.f32 %v5378, %v5666
    %v5668 = vpop.f32.mrb[0].mxu0
    %5669 = vmatprep.mubr.bf16.mxu0 %v4200
    %5670 = vmatmul.mubr.bf16.gmra.mrb[0].mxu0 %v4199
    %v5671 = vpop.f32.mrb[0].mxu0
    %v5672 = vadd.f32 %v5383, %v5671
    %v5673 = vpop.f32.mrb[0].mxu0
    %v5674 = vpop.f32.mrb[0].mxu0
    %v5675 = vadd.f32 %v5386, %v5674
    %v5676 = vpop.f32.mrb[0].mxu0
    %5677 = vmatprep.mubr.bf16.mxu0 %v4209
    %5678 = vmatmul.mubr.bf16.gmra.mrb[0].mxu0 %v4208
    %v5679 = vpop.f32.mrb[0].mxu0
    %v5680 = vadd.f32 %v5391, %v5679
    %v5681 = vpop.f32.mrb[0].mxu0
    %v5682 = vpop.f32.mrb[0].mxu0
    %v5683 = vadd.f32 %v5394, %v5682
    %v5684 = vpop.f32.mrb[0].mxu0
    %5685 = vmatprep.mubr.bf16.mxu0 %v4218
    %5686 = vmatmul.mubr.bf16.gmra.mrb[0].mxu0 %v4217
    %v5687 = vpop.f32.mrb[0].mxu0
    %v5688 = vadd.f32 %v5399, %v5687
    %v5689 = vpop.f32.mrb[0].mxu0
    %v5690 = vpop.f32.mrb[0].mxu0
    %v5691 = vadd.f32 %v5402, %v5690
    %v5692 = vpop.f32.mrb[0].mxu0
    %5693 = vmatprep.mubr.bf16.mxu0 %v4227
    %5694 = vmatmul.mubr.bf16.gmra.mrb[0].mxu0 %v4226
    %v5695 = vpop.f32.mrb[0].mxu0
    %v5696 = vadd.f32 %v5407, %v5695
    %v5697 = vpop.f32.mrb[0].mxu0
    %v5698 = vpop.f32.mrb[0].mxu0
    %v5699 = vadd.f32 %v5410, %v5698
    %v5700 = vpop.f32.mrb[0].mxu0
    %5701 = vmatprep.mubr.bf16.mxu0 %v4236
    %5702 = vmatmul.mubr.bf16.gmra.mrb[0].mxu0 %v4235
    %v5703 = vpop.f32.mrb[0].mxu0
    %v5704 = vadd.f32 %v5415, %v5703
    %v5705 = vpop.f32.mrb[0].mxu0
    %v5706 = vpop.f32.mrb[0].mxu0
    %v5707 = vadd.f32 %v5418, %v5706
    %v5708 = vpop.f32.mrb[0].mxu0
    %5709 = vmatprep.mubr.bf16.mxu0 %v4245
    %5710 = vmatmul.mubr.bf16.gmra.mrb[0].mxu0 %v4244
    %v5711 = vpop.f32.mrb[0].mxu0
    %v5712 = vadd.f32 %v5423, %v5711
    %v5713 = vpop.f32.mrb[0].mxu0
    %v5714 = vpop.f32.mrb[0].mxu0
    %v5715 = vadd.f32 %v5426, %v5714
    %v5716 = vpop.f32.mrb[0].mxu0
    %5717 = vmatprep.mubr.bf16.mxu0 %v4254
    %5718 = vmatmul.mubr.bf16.gmra.mrb[0].mxu0 %v4253
    %v5719 = vpop.f32.mrb[0].mxu0
    %v5720 = vadd.f32 %v5431, %v5719
    %v5721 = vpop.f32.mrb[0].mxu0
    %v5722 = vpop.f32.mrb[0].mxu0
    %v5723 = vadd.f32 %v5434, %v5722
    %v5724 = vpop.f32.mrb[0].mxu0
    %5725 = vmatprep.mubr.bf16.mxu0 %v4263
    %5726 = vmatmul.mubr.bf16.gmra.mrb[0].mxu0 %v4262
    %v5727 = vpop.f32.mrb[0].mxu0
    %v5728 = vadd.f32 %v5439, %v5727
    %v5729 = vpop.f32.mrb[0].mxu0
    %v5730 = vpop.f32.mrb[0].mxu0
    %v5731 = vadd.f32 %v5442, %v5730
    %v5732 = vpop.f32.mrb[0].mxu0
    %5733 = vmatprep.mubr.bf16.mxu0 %v4272
    %5734 = vmatmul.mubr.bf16.gmra.mrb[0].mxu0 %v4271
    %v5735 = vpop.f32.mrb[0].mxu0
    %v5736 = vadd.f32 %v5447, %v5735
    %v5737 = vpop.f32.mrb[0].mxu0
    %v5738 = vpop.f32.mrb[0].mxu0
    %v5739 = vadd.f32 %v5450, %v5738
    %v5740 = vpop.f32.mrb[0].mxu0
    %5741 = vmatprep.mubr.bf16.mxu0 %v4281
    %5742 = vmatmul.mubr.bf16.gmra.mrb[0].mxu0 %v4280
    %v5743 = vpop.f32.mrb[0].mxu0
    %v5744 = vadd.f32 %v5455, %v5743
    %v5745 = vpop.f32.mrb[0].mxu0
    %v5746 = vpop.f32.mrb[0].mxu0
    %v5747 = vadd.f32 %v5458, %v5746
    %v5748 = vpop.f32.mrb[0].mxu0
    %5749 = vmatprep.mubr.bf16.mxu0 %v4290
    %5750 = vmatmul.mubr.bf16.gmra.mrb[0].mxu0 %v4289
    %v5751 = vpop.f32.mrb[0].mxu0
    %v5752 = vadd.f32 %v5463, %v5751
    %v5753 = vpop.f32.mrb[0].mxu0
    %v5754 = vpop.f32.mrb[0].mxu0
    %v5755 = vadd.f32 %v5466, %v5754
    %v5756 = vpop.f32.mrb[0].mxu0
    %5757 = vmatprep.mubr.bf16.mxu0 %v4299
    %5758 = vmatmul.mubr.bf16.gmra.mrb[0].mxu0 %v4298
    %v5759 = vpop.f32.mrb[0].mxu0
    %v5760 = vadd.f32 %v5471, %v5759
    %v5761 = vpop.f32.mrb[0].mxu0
    %v5762 = vpop.f32.mrb[0].mxu0
    %v5763 = vadd.f32 %v5474, %v5762
    %v5764 = vpop.f32.mrb[0].mxu0
    %5765 = vmatprep.mubr.bf16.mxu0 %v4308
    %5766 = vmatmul.mubr.bf16.gmra.mrb[0].mxu0 %v4307
    %v5767 = vpop.f32.mrb[0].mxu0
    %v5768 = vadd.f32 %v5479, %v5767
    %v5769 = vpop.f32.mrb[0].mxu0
    %v5770 = vpop.f32.mrb[0].mxu0
    %v5771 = vadd.f32 %v5482, %v5770
    %v5772 = vpop.f32.mrb[0].mxu0
    %5773 = vmatprep.mubr.bf16.mxu0 %v4317
    %5774 = vmatmul.mubr.bf16.gmra.mrb[0].mxu0 %v4316
    %v5775 = vpop.f32.mrb[0].mxu0
    %v5776 = vadd.f32 %v5487, %v5775
    %v5777 = vpop.f32.mrb[0].mxu0
    %v5778 = vpop.f32.mrb[0].mxu0
    %v5779 = vadd.f32 %v5490, %v5778
    %v5780 = vpop.f32.mrb[0].mxu0
    %5781 = vmatprep.mubr.bf16.mxu0 %v4326
    %5782 = vmatmul.mubr.bf16.gmra.mrb[0].mxu0 %v4325
    %v5783 = vpop.f32.mrb[0].mxu0
    %v5784 = vadd.f32 %v5495, %v5783
    %v5785 = vpop.f32.mrb[0].mxu0
    %v5786 = vpop.f32.mrb[0].mxu0
    %v5787 = vadd.f32 %v5498, %v5786
    %v5788 = vpop.f32.mrb[0].mxu0
    %5789 = vmatprep.mubr.bf16.mxu0 %v4335
    %5790 = vmatmul.mubr.bf16.gmra.mrb[0].mxu0 %v4334
    %v5791 = vpop.f32.mrb[0].mxu0
    %v5792 = vadd.f32 %v5503, %v5791
    %v5793 = vpop.f32.mrb[0].mxu0
    %v5794 = vpop.f32.mrb[0].mxu0
    %v5795 = vadd.f32 %v5506, %v5794
    %v5796 = vpop.f32.mrb[0].mxu0
    %5797 = vmatprep.mubr.bf16.mxu0 %v4344
    %5798 = vmatmul.mubr.bf16.gmra.mrb[0].mxu0 %v4343
    %v5799 = vpop.f32.mrb[0].mxu0
    %v5800 = vadd.f32 %v5511, %v5799
    %v5801 = vpop.f32.mrb[0].mxu0
    %v5802 = vpop.f32.mrb[0].mxu0
    %v5803 = vadd.f32 %v5514, %v5802
    %v5804 = vpop.f32.mrb[0].mxu0
    %5805 = vmatprep.mubr.bf16.mxu0 %v4353
    %5806 = vmatmul.mubr.bf16.gmra.mrb[0].mxu0 %v4352
    %v5807 = vpop.f32.mrb[0].mxu0
    %v5808 = vadd.f32 %v5519, %v5807
    %v5809 = vpop.f32.mrb[0].mxu0
    %v5810 = vpop.f32.mrb[0].mxu0
    %v5811 = vadd.f32 %v5522, %v5810
    %v5812 = vpop.f32.mrb[0].mxu0
    %5813 = vmatprep.mubr.bf16.mxu0 %v4362
    %5814 = vmatmul.mubr.bf16.gmra.mrb[0].mxu0 %v4361
    %v5815 = vpop.f32.mrb[0].mxu0
    %v5816 = vadd.f32 %v5527, %v5815
    %v5817 = vpop.f32.mrb[0].mxu0
    %v5818 = vpop.f32.mrb[0].mxu0
    %v5819 = vadd.f32 %v5530, %v5818
    %v5820 = vpop.f32.mrb[0].mxu0
    %5821 = vmatprep.mubr.bf16.mxu0 %v4371
    %5822 = vmatmul.mubr.bf16.gmra.mrb[0].mxu0 %v4370
    %v5823 = vpop.f32.mrb[0].mxu0
    %v5824 = vadd.f32 %v5535, %v5823
    %v5825 = vpop.f32.mrb[0].mxu0
    %v5826 = vpop.f32.mrb[0].mxu0
    %v5827 = vadd.f32 %v5538, %v5826
    %v5828 = vpop.f32.mrb[0].mxu0
    %5829 = vmatprep.mubr.bf16.mxu0 %v4380
    %5830 = vmatmul.mubr.bf16.gmra.mrb[0].mxu0 %v4379
    %v5831 = vpop.f32.mrb[0].mxu0
    %v5832 = vadd.f32 %v5543, %v5831
    %v5833 = vpop.f32.mrb[0].mxu0
    %v5834 = vpop.f32.mrb[0].mxu0
    %v5835 = vadd.f32 %v5546, %v5834
    %v5836 = vpop.f32.mrb[0].mxu0
    %5837 = vmatprep.mubr.bf16.mxu0 %v4389
    %5838 = vmatmul.mubr.bf16.gmra.mrb[0].mxu0 %v4388
    %v5839 = vpop.f32.mrb[0].mxu0
    %v5840 = vadd.f32 %v5551, %v5839
    %v5841 = vpop.f32.mrb[0].mxu0
    %v5842 = vpop.f32.mrb[0].mxu0
    %v5843 = vadd.f32 %v5554, %v5842
    %v5844 = vpop.f32.mrb[0].mxu0
    %5845 = vmatprep.mubr.bf16.mxu0 %v4398
    %5846 = vmatmul.mubr.bf16.gmra.mrb[0].mxu0 %v4397
    %v5847 = vpop.f32.mrb[0].mxu0
    %v5848 = vadd.f32 %v5559, %v5847
    %v5849 = vpop.f32.mrb[0].mxu0
    %v5850 = vpop.f32.mrb[0].mxu0
    %v5851 = vadd.f32 %v5562, %v5850
    %v5852 = vpop.f32.mrb[0].mxu0
    %5853 = vmatprep.mubr.bf16.mxu0 %v4407
    %5854 = vmatmul.mubr.bf16.gmra.mrb[0].mxu0 %v4406
    %v5855 = vpop.f32.mrb[0].mxu0
    %v5856 = vadd.f32 %v5567, %v5855
    %v5857 = vpop.f32.mrb[0].mxu0
    %v5858 = vpop.f32.mrb[0].mxu0
    %v5859 = vadd.f32 %v5570, %v5858
    %v5860 = vpop.f32.mrb[0].mxu0
    %5861 = vmatprep.mubr.bf16.mxu0 %v4416
    %5862 = vmatmul.mubr.bf16.gmra.mrb[0].mxu0 %v4415
    %v5863 = vpop.f32.mrb[0].mxu0
    %v5864 = vadd.f32 %v5575, %v5863
    %v5865 = vpop.f32.mrb[0].mxu0
    %v5866 = vpop.f32.mrb[0].mxu0
    %v5867 = vadd.f32 %v5578, %v5866
    %v5868 = vpop.f32.mrb[0].mxu0
    %5869 = vdwg.mxu0
    %5870 = vmatprep.subr.bf16.mxu0 0
    %5871 = vmatpush1.bf16.msra.mxu0 %v4907
    %5872 = vmatprep.subr.bf16.mxu0 0
    %5873 = vmatpush1.bf16.msra.mxu0 %v4908
    %5874 = vmatprep.subr.bf16.mxu0 0
    %5875 = vmatpush1.bf16.msra.mxu0 %v4909
    %5876 = vmatprep.subr.bf16.mxu0 0
    %5877 = vmatpush1.bf16.msra.mxu0 %v4910
    %5878 = vmatprep.subr.bf16.mxu0 0
    %5879 = vmatpush1.bf16.msra.mxu0 %v4911
    %5880 = vmatprep.subr.bf16.mxu0 0
    %5881 = vmatpush1.bf16.msra.mxu0 %v4912
    %5882 = vmatprep.subr.bf16.mxu0 0
    %5883 = vmatpush1.bf16.msra.mxu0 %v4913
    %5884 = vmatprep.subr.bf16.mxu0 0
    %5885 = vmatpush1.bf16.msra.mxu0 %v4914
    %5886 = vmatprep.subr.bf16.mxu0 0
    %5887 = vmatpush1.bf16.msra.mxu0 %v4915
    %5888 = vmatprep.subr.bf16.mxu0 0
    %5889 = vmatpush1.bf16.msra.mxu0 %v4916
    %5890 = vmatprep.subr.bf16.mxu0 0
    %5891 = vmatpush1.bf16.msra.mxu0 %v4917
    %5892 = vmatprep.subr.bf16.mxu0 0
    %5893 = vmatpush1.bf16.msra.mxu0 %v4918
    %5894 = vmatprep.subr.bf16.mxu0 0
    %5895 = vmatpush1.bf16.msra.mxu0 %v4919
    %5896 = vmatprep.subr.bf16.mxu0 0
    %5897 = vmatpush1.bf16.msra.mxu0 %v4920
    %5898 = vmatprep.subr.bf16.mxu0 0
    %5899 = vmatpush1.bf16.msra.mxu0 %v4921
    %5900 = vmatprep.subr.bf16.mxu0 0
    %5901 = vmatpush1.bf16.msra.mxu0 %v4922
    %5902 = vmatprep.mubr.bf16.mxu0 %v4139
    %5903 = vmatmul.mubr.bf16.gmra.mrb[0].mxu0 %v4138
    %v5904 = vpop.f32.mrb[0].mxu0
    %v5905 = vadd.f32 %v5616, %v5904
    %v5906 = vpop.f32.mrb[0].mxu0
    %v5907 = vpop.f32.mrb[0].mxu0
    %v5908 = vadd.f32 %v5619, %v5907
    %v5909 = vpop.f32.mrb[0].mxu0
    %5910 = vmatprep.mubr.bf16.mxu0 %v4148
    %5911 = vmatmul.mubr.bf16.gmra.mrb[0].mxu0 %v4147
    %v5912 = vpop.f32.mrb[0].mxu0
    %v5913 = vadd.f32 %v5624, %v5912
    %v5914 = vpop.f32.mrb[0].mxu0
    %v5915 = vpop.f32.mrb[0].mxu0
    %v5916 = vadd.f32 %v5627, %v5915
    %v5917 = vpop.f32.mrb[0].mxu0
    %5918 = vmatprep.mubr.bf16.mxu0 %v4157
    %5919 = vmatmul.mubr.bf16.gmra.mrb[0].mxu0 %v4156
    %v5920 = vpop.f32.mrb[0].mxu0
    %v5921 = vadd.f32 %v5632, %v5920
    %v5922 = vpop.f32.mrb[0].mxu0
    %v5923 = vpop.f32.mrb[0].mxu0
    %v5924 = vadd.f32 %v5635, %v5923
    %v5925 = vpop.f32.mrb[0].mxu0
    %5926 = vmatprep.mubr.bf16.mxu0 %v4166
    %5927 = vmatmul.mubr.bf16.gmra.mrb[0].mxu0 %v4165
    %v5928 = vpop.f32.mrb[0].mxu0
    %v5929 = vadd.f32 %v5640, %v5928
    %v5930 = vpop.f32.mrb[0].mxu0
    %v5931 = vpop.f32.mrb[0].mxu0
    %v5932 = vadd.f32 %v5643, %v5931
    %v5933 = vpop.f32.mrb[0].mxu0
    %5934 = vmatprep.mubr.bf16.mxu0 %v4175
    %5935 = vmatmul.mubr.bf16.gmra.mrb[0].mxu0 %v4174
    %v5936 = vpop.f32.mrb[0].mxu0
    %v5937 = vadd.f32 %v5648, %v5936
    %v5938 = vpop.f32.mrb[0].mxu0
    %v5939 = vpop.f32.mrb[0].mxu0
    %v5940 = vadd.f32 %v5651, %v5939
    %v5941 = vpop.f32.mrb[0].mxu0
    %5942 = vmatprep.mubr.bf16.mxu0 %v4184
    %5943 = vmatmul.mubr.bf16.gmra.mrb[0].mxu0 %v4183
    %v5944 = vpop.f32.mrb[0].mxu0
    %v5945 = vadd.f32 %v5656, %v5944
    %v5946 = vpop.f32.mrb[0].mxu0
    %v5947 = vpop.f32.mrb[0].mxu0
    %v5948 = vadd.f32 %v5659, %v5947
    %v5949 = vpop.f32.mrb[0].mxu0
    %5950 = vmatprep.mubr.bf16.mxu0 %v4193
    %5951 = vmatmul.mubr.bf16.gmra.mrb[0].mxu0 %v4192
    %v5952 = vpop.f32.mrb[0].mxu0
    %v5953 = vadd.f32 %v5664, %v5952
    %v5954 = vpop.f32.mrb[0].mxu0
    %v5955 = vpop.f32.mrb[0].mxu0
    %v5956 = vadd.f32 %v5667, %v5955
    %v5957 = vpop.f32.mrb[0].mxu0
    %5958 = vmatprep.mubr.bf16.mxu0 %v4202
    %5959 = vmatmul.mubr.bf16.gmra.mrb[0].mxu0 %v4201
    %v5960 = vpop.f32.mrb[0].mxu0
    %v5961 = vadd.f32 %v5672, %v5960
    %v5962 = vpop.f32.mrb[0].mxu0
    %v5963 = vpop.f32.mrb[0].mxu0
    %v5964 = vadd.f32 %v5675, %v5963
    %v5965 = vpop.f32.mrb[0].mxu0
    %5966 = vmatprep.mubr.bf16.mxu0 %v4211
    %5967 = vmatmul.mubr.bf16.gmra.mrb[0].mxu0 %v4210
    %v5968 = vpop.f32.mrb[0].mxu0
    %v5969 = vadd.f32 %v5680, %v5968
    %v5970 = vpop.f32.mrb[0].mxu0
    %v5971 = vpop.f32.mrb[0].mxu0
    %v5972 = vadd.f32 %v5683, %v5971
    %v5973 = vpop.f32.mrb[0].mxu0
    %5974 = vmatprep.mubr.bf16.mxu0 %v4220
    %5975 = vmatmul.mubr.bf16.gmra.mrb[0].mxu0 %v4219
    %v5976 = vpop.f32.mrb[0].mxu0
    %v5977 = vadd.f32 %v5688, %v5976
    %v5978 = vpop.f32.mrb[0].mxu0
    %v5979 = vpop.f32.mrb[0].mxu0
    %v5980 = vadd.f32 %v5691, %v5979
    %v5981 = vpop.f32.mrb[0].mxu0
    %5982 = vmatprep.mubr.bf16.mxu0 %v4229
    %5983 = vmatmul.mubr.bf16.gmra.mrb[0].mxu0 %v4228
    %v5984 = vpop.f32.mrb[0].mxu0
    %v5985 = vadd.f32 %v5696, %v5984
    %v5986 = vpop.f32.mrb[0].mxu0
    %v5987 = vpop.f32.mrb[0].mxu0
    %v5988 = vadd.f32 %v5699, %v5987
    %v5989 = vpop.f32.mrb[0].mxu0
    %5990 = vmatprep.mubr.bf16.mxu0 %v4238
    %5991 = vmatmul.mubr.bf16.gmra.mrb[0].mxu0 %v4237
    %v5992 = vpop.f32.mrb[0].mxu0
    %v5993 = vadd.f32 %v5704, %v5992
    %v5994 = vpop.f32.mrb[0].mxu0
    %v5995 = vpop.f32.mrb[0].mxu0
    %v5996 = vadd.f32 %v5707, %v5995
    %v5997 = vpop.f32.mrb[0].mxu0
    %5998 = vmatprep.mubr.bf16.mxu0 %v4247
    %5999 = vmatmul.mubr.bf16.gmra.mrb[0].mxu0 %v4246
    %v6000 = vpop.f32.mrb[0].mxu0
    %v6001 = vadd.f32 %v5712, %v6000
    %v6002 = vpop.f32.mrb[0].mxu0
    %v6003 = vpop.f32.mrb[0].mxu0
    %v6004 = vadd.f32 %v5715, %v6003
    %v6005 = vpop.f32.mrb[0].mxu0
    %6006 = vmatprep.mubr.bf16.mxu0 %v4256
    %6007 = vmatmul.mubr.bf16.gmra.mrb[0].mxu0 %v4255
    %v6008 = vpop.f32.mrb[0].mxu0
    %v6009 = vadd.f32 %v5720, %v6008
    %v6010 = vpop.f32.mrb[0].mxu0
    %v6011 = vpop.f32.mrb[0].mxu0
    %v6012 = vadd.f32 %v5723, %v6011
    %v6013 = vpop.f32.mrb[0].mxu0
    %6014 = vmatprep.mubr.bf16.mxu0 %v4265
    %6015 = vmatmul.mubr.bf16.gmra.mrb[0].mxu0 %v4264
    %v6016 = vpop.f32.mrb[0].mxu0
    %v6017 = vadd.f32 %v5728, %v6016
    %v6018 = vpop.f32.mrb[0].mxu0
    %v6019 = vpop.f32.mrb[0].mxu0
    %v6020 = vadd.f32 %v5731, %v6019
    %v6021 = vpop.f32.mrb[0].mxu0
    %6022 = vmatprep.mubr.bf16.mxu0 %v4274
    %6023 = vmatmul.mubr.bf16.gmra.mrb[0].mxu0 %v4273
    %v6024 = vpop.f32.mrb[0].mxu0
    %v6025 = vadd.f32 %v5736, %v6024
    %v6026 = vpop.f32.mrb[0].mxu0
    %v6027 = vpop.f32.mrb[0].mxu0
    %v6028 = vadd.f32 %v5739, %v6027
    %v6029 = vpop.f32.mrb[0].mxu0
    %6030 = vmatprep.mubr.bf16.mxu0 %v4283
    %6031 = vmatmul.mubr.bf16.gmra.mrb[0].mxu0 %v4282
    %v6032 = vpop.f32.mrb[0].mxu0
    %v6033 = vadd.f32 %v5744, %v6032
    %v6034 = vpop.f32.mrb[0].mxu0
    %v6035 = vpop.f32.mrb[0].mxu0
    %v6036 = vadd.f32 %v5747, %v6035
    %v6037 = vpop.f32.mrb[0].mxu0
    %6038 = vmatprep.mubr.bf16.mxu0 %v4292
    %6039 = vmatmul.mubr.bf16.gmra.mrb[0].mxu0 %v4291
    %v6040 = vpop.f32.mrb[0].mxu0
    %v6041 = vadd.f32 %v5752, %v6040
    %v6042 = vpop.f32.mrb[0].mxu0
    %v6043 = vpop.f32.mrb[0].mxu0
    %v6044 = vadd.f32 %v5755, %v6043
    %v6045 = vpop.f32.mrb[0].mxu0
    %6046 = vmatprep.mubr.bf16.mxu0 %v4301
    %6047 = vmatmul.mubr.bf16.gmra.mrb[0].mxu0 %v4300
    %v6048 = vpop.f32.mrb[0].mxu0
    %v6049 = vadd.f32 %v5760, %v6048
    %v6050 = vpop.f32.mrb[0].mxu0
    %v6051 = vpop.f32.mrb[0].mxu0
    %v6052 = vadd.f32 %v5763, %v6051
    %v6053 = vpop.f32.mrb[0].mxu0
    %6054 = vmatprep.mubr.bf16.mxu0 %v4310
    %6055 = vmatmul.mubr.bf16.gmra.mrb[0].mxu0 %v4309
    %v6056 = vpop.f32.mrb[0].mxu0
    %v6057 = vadd.f32 %v5768, %v6056
    %v6058 = vpop.f32.mrb[0].mxu0
    %v6059 = vpop.f32.mrb[0].mxu0
    %v6060 = vadd.f32 %v5771, %v6059
    %v6061 = vpop.f32.mrb[0].mxu0
    %6062 = vmatprep.mubr.bf16.mxu0 %v4319
    %6063 = vmatmul.mubr.bf16.gmra.mrb[0].mxu0 %v4318
    %v6064 = vpop.f32.mrb[0].mxu0
    %v6065 = vadd.f32 %v5776, %v6064
    %v6066 = vpop.f32.mrb[0].mxu0
    %v6067 = vpop.f32.mrb[0].mxu0
    %v6068 = vadd.f32 %v5779, %v6067
    %v6069 = vpop.f32.mrb[0].mxu0
    %6070 = vmatprep.mubr.bf16.mxu0 %v4328
    %6071 = vmatmul.mubr.bf16.gmra.mrb[0].mxu0 %v4327
    %v6072 = vpop.f32.mrb[0].mxu0
    %v6073 = vadd.f32 %v5784, %v6072
    %v6074 = vpop.f32.mrb[0].mxu0
    %v6075 = vpop.f32.mrb[0].mxu0
    %v6076 = vadd.f32 %v5787, %v6075
    %v6077 = vpop.f32.mrb[0].mxu0
    %6078 = vmatprep.mubr.bf16.mxu0 %v4337
    %6079 = vmatmul.mubr.bf16.gmra.mrb[0].mxu0 %v4336
    %v6080 = vpop.f32.mrb[0].mxu0
    %v6081 = vadd.f32 %v5792, %v6080
    %v6082 = vpop.f32.mrb[0].mxu0
    %v6083 = vpop.f32.mrb[0].mxu0
    %v6084 = vadd.f32 %v5795, %v6083
    %v6085 = vpop.f32.mrb[0].mxu0
    %6086 = vmatprep.mubr.bf16.mxu0 %v4346
    %6087 = vmatmul.mubr.bf16.gmra.mrb[0].mxu0 %v4345
    %v6088 = vpop.f32.mrb[0].mxu0
    %v6089 = vadd.f32 %v5800, %v6088
    %v6090 = vpop.f32.mrb[0].mxu0
    %v6091 = vpop.f32.mrb[0].mxu0
    %v6092 = vadd.f32 %v5803, %v6091
    %v6093 = vpop.f32.mrb[0].mxu0
    %6094 = vmatprep.mubr.bf16.mxu0 %v4355
    %6095 = vmatmul.mubr.bf16.gmra.mrb[0].mxu0 %v4354
    %v6096 = vpop.f32.mrb[0].mxu0
    %v6097 = vadd.f32 %v5808, %v6096
    %v6098 = vpop.f32.mrb[0].mxu0
    %v6099 = vpop.f32.mrb[0].mxu0
    %v6100 = vadd.f32 %v5811, %v6099
    %v6101 = vpop.f32.mrb[0].mxu0
    %6102 = vmatprep.mubr.bf16.mxu0 %v4364
    %6103 = vmatmul.mubr.bf16.gmra.mrb[0].mxu0 %v4363
    %v6104 = vpop.f32.mrb[0].mxu0
    %v6105 = vadd.f32 %v5816, %v6104
    %v6106 = vpop.f32.mrb[0].mxu0
    %v6107 = vpop.f32.mrb[0].mxu0
    %v6108 = vadd.f32 %v5819, %v6107
    %v6109 = vpop.f32.mrb[0].mxu0
    %6110 = vmatprep.mubr.bf16.mxu0 %v4373
    %6111 = vmatmul.mubr.bf16.gmra.mrb[0].mxu0 %v4372
    %v6112 = vpop.f32.mrb[0].mxu0
    %v6113 = vadd.f32 %v5824, %v6112
    %v6114 = vpop.f32.mrb[0].mxu0
    %v6115 = vpop.f32.mrb[0].mxu0
    %v6116 = vadd.f32 %v5827, %v6115
    %v6117 = vpop.f32.mrb[0].mxu0
    %6118 = vmatprep.mubr.bf16.mxu0 %v4382
    %6119 = vmatmul.mubr.bf16.gmra.mrb[0].mxu0 %v4381
    %v6120 = vpop.f32.mrb[0].mxu0
    %v6121 = vadd.f32 %v5832, %v6120
    %v6122 = vpop.f32.mrb[0].mxu0
    %v6123 = vpop.f32.mrb[0].mxu0
    %v6124 = vadd.f32 %v5835, %v6123
    %v6125 = vpop.f32.mrb[0].mxu0
    %6126 = vmatprep.mubr.bf16.mxu0 %v4391
    %6127 = vmatmul.mubr.bf16.gmra.mrb[0].mxu0 %v4390
    %v6128 = vpop.f32.mrb[0].mxu0
    %v6129 = vadd.f32 %v5840, %v6128
    %v6130 = vpop.f32.mrb[0].mxu0
    %v6131 = vpop.f32.mrb[0].mxu0
    %v6132 = vadd.f32 %v5843, %v6131
    %v6133 = vpop.f32.mrb[0].mxu0
    %6134 = vmatprep.mubr.bf16.mxu0 %v4400
    %6135 = vmatmul.mubr.bf16.gmra.mrb[0].mxu0 %v4399
    %v6136 = vpop.f32.mrb[0].mxu0
    %v6137 = vadd.f32 %v5848, %v6136
    %v6138 = vpop.f32.mrb[0].mxu0
    %v6139 = vpop.f32.mrb[0].mxu0
    %v6140 = vadd.f32 %v5851, %v6139
    %v6141 = vpop.f32.mrb[0].mxu0
    %6142 = vmatprep.mubr.bf16.mxu0 %v4409
    %6143 = vmatmul.mubr.bf16.gmra.mrb[0].mxu0 %v4408
    %v6144 = vpop.f32.mrb[0].mxu0
    %v6145 = vadd.f32 %v5856, %v6144
    %v6146 = vpop.f32.mrb[0].mxu0
    %v6147 = vpop.f32.mrb[0].mxu0
    %v6148 = vadd.f32 %v5859, %v6147
    %v6149 = vpop.f32.mrb[0].mxu0
    %6150 = vmatprep.mubr.bf16.mxu0 %v4418
    %6151 = vmatmul.mubr.bf16.gmra.mrb[0].mxu0 %v4417
    %v6152 = vpop.f32.mrb[0].mxu0
    %v6153 = vadd.f32 %v5864, %v6152
    %v6154 = vpop.f32.mrb[0].mxu0
    %v6155 = vpop.f32.mrb[0].mxu0
    %v6156 = vadd.f32 %v5867, %v6155
    %v6157 = vpop.f32.mrb[0].mxu0
    %6158 = vdwg.mxu0
    %6159 = vmatprep.subr.bf16.mxu0 0
    %6160 = vmatpush1.bf16.msra.mxu0 %v4923
    %6161 = vmatprep.subr.bf16.mxu0 0
    %6162 = vmatpush1.bf16.msra.mxu0 %v4924
    %6163 = vmatprep.subr.bf16.mxu0 0
    %6164 = vmatpush1.bf16.msra.mxu0 %v4925
    %6165 = vmatprep.subr.bf16.mxu0 0
    %6166 = vmatpush1.bf16.msra.mxu0 %v4926
    %6167 = vmatprep.subr.bf16.mxu0 0
    %6168 = vmatpush1.bf16.msra.mxu0 %v4927
    %6169 = vmatprep.subr.bf16.mxu0 0
    %6170 = vmatpush1.bf16.msra.mxu0 %v4928
    %6171 = vmatprep.subr.bf16.mxu0 0
    %6172 = vmatpush1.bf16.msra.mxu0 %v4929
    %6173 = vmatprep.subr.bf16.mxu0 0
    %6174 = vmatpush1.bf16.msra.mxu0 %v4930
    %6175 = vmatprep.subr.bf16.mxu0 0
    %6176 = vmatpush1.bf16.msra.mxu0 0
    %6177 = vmatprep.subr.bf16.mxu0 0
    %6178 = vmatpush1.bf16.msra.mxu0 0
    %6179 = vmatprep.subr.bf16.mxu0 0
    %6180 = vmatpush1.bf16.msra.mxu0 0
    %6181 = vmatprep.subr.bf16.mxu0 0
    %6182 = vmatpush1.bf16.msra.mxu0 0
    %6183 = vmatprep.subr.bf16.mxu0 0
    %6184 = vmatpush1.bf16.msra.mxu0 0
    %6185 = vmatprep.subr.bf16.mxu0 0
    %6186 = vmatpush1.bf16.msra.mxu0 0
    %6187 = vmatprep.subr.bf16.mxu0 0
    %6188 = vmatpush1.bf16.msra.mxu0 0
    %6189 = vmatprep.subr.bf16.mxu0 0
    %6190 = vmatpush1.bf16.msra.mxu0 0
    %6191 = vmatprep.mubr.bf16.mxu0 0
    %6192 = vmatmul.mubr.bf16.gmra.mrb[0].mxu0 %v4140
    %v6193 = vpop.f32.mrb[0].mxu0
    %v6194 = vadd.f32 %v5905, %v6193
    %v6195 = vpop.f32.mrb[0].mxu0
    %v6196 = vpop.f32.mrb[0].mxu0
    %v6197 = vadd.f32 %v5908, %v6196
    %v6198 = vpop.f32.mrb[0].mxu0
    %6199 = vmatprep.mubr.bf16.mxu0 0
    %6200 = vmatmul.mubr.bf16.gmra.mrb[0].mxu0 %v4149
    %v6201 = vpop.f32.mrb[0].mxu0
    %v6202 = vadd.f32 %v5913, %v6201
    %v6203 = vpop.f32.mrb[0].mxu0
    %v6204 = vpop.f32.mrb[0].mxu0
    %v6205 = vadd.f32 %v5916, %v6204
    %v6206 = vpop.f32.mrb[0].mxu0
    %6207 = vmatprep.mubr.bf16.mxu0 0
    %6208 = vmatmul.mubr.bf16.gmra.mrb[0].mxu0 %v4158
    %v6209 = vpop.f32.mrb[0].mxu0
    %v6210 = vadd.f32 %v5921, %v6209
    %v6211 = vpop.f32.mrb[0].mxu0
    %v6212 = vpop.f32.mrb[0].mxu0
    %v6213 = vadd.f32 %v5924, %v6212
    %v6214 = vpop.f32.mrb[0].mxu0
    %6215 = vmatprep.mubr.bf16.mxu0 0
    %6216 = vmatmul.mubr.bf16.gmra.mrb[0].mxu0 %v4167
    %v6217 = vpop.f32.mrb[0].mxu0
    %v6218 = vadd.f32 %v5929, %v6217
    %v6219 = vpop.f32.mrb[0].mxu0
    %v6220 = vpop.f32.mrb[0].mxu0
    %v6221 = vadd.f32 %v5932, %v6220
    %v6222 = vpop.f32.mrb[0].mxu0
    %6223 = vmatprep.mubr.bf16.mxu0 0
    %6224 = vmatmul.mubr.bf16.gmra.mrb[0].mxu0 %v4176
    %v6225 = vpop.f32.mrb[0].mxu0
    %v6226 = vadd.f32 %v5937, %v6225
    %v6227 = vpop.f32.mrb[0].mxu0
    %v6228 = vpop.f32.mrb[0].mxu0
    %v6229 = vadd.f32 %v5940, %v6228
    %v6230 = vpop.f32.mrb[0].mxu0
    %6231 = vmatprep.mubr.bf16.mxu0 0
    %6232 = vmatmul.mubr.bf16.gmra.mrb[0].mxu0 %v4185
    %v6233 = vpop.f32.mrb[0].mxu0
    %v6234 = vadd.f32 %v5945, %v6233
    %v6235 = vpop.f32.mrb[0].mxu0
    %v6236 = vpop.f32.mrb[0].mxu0
    %v6237 = vadd.f32 %v5948, %v6236
    %v6238 = vpop.f32.mrb[0].mxu0
    %6239 = vmatprep.mubr.bf16.mxu0 0
    %6240 = vmatmul.mubr.bf16.gmra.mrb[0].mxu0 %v4194
    %v6241 = vpop.f32.mrb[0].mxu0
    %v6242 = vadd.f32 %v5953, %v6241
    %v6243 = vpop.f32.mrb[0].mxu0
    %v6244 = vpop.f32.mrb[0].mxu0
    %v6245 = vadd.f32 %v5956, %v6244
    %v6246 = vpop.f32.mrb[0].mxu0
    %6247 = vmatprep.mubr.bf16.mxu0 0
    %6248 = vmatmul.mubr.bf16.gmra.mrb[0].mxu0 %v4203
    %v6249 = vpop.f32.mrb[0].mxu0
    %v6250 = vadd.f32 %v5961, %v6249
    %v6251 = vpop.f32.mrb[0].mxu0
    %v6252 = vpop.f32.mrb[0].mxu0
    %v6253 = vadd.f32 %v5964, %v6252
    %v6254 = vpop.f32.mrb[0].mxu0
    %6255 = vmatprep.mubr.bf16.mxu0 0
    %6256 = vmatmul.mubr.bf16.gmra.mrb[0].mxu0 %v4212
    %v6257 = vpop.f32.mrb[0].mxu0
    %v6258 = vadd.f32 %v5969, %v6257
    %v6259 = vpop.f32.mrb[0].mxu0
    %v6260 = vpop.f32.mrb[0].mxu0
    %v6261 = vadd.f32 %v5972, %v6260
    %v6262 = vpop.f32.mrb[0].mxu0
    %6263 = vmatprep.mubr.bf16.mxu0 0
    %6264 = vmatmul.mubr.bf16.gmra.mrb[0].mxu0 %v4221
    %v6265 = vpop.f32.mrb[0].mxu0
    %v6266 = vadd.f32 %v5977, %v6265
    %v6267 = vpop.f32.mrb[0].mxu0
    %v6268 = vpop.f32.mrb[0].mxu0
    %v6269 = vadd.f32 %v5980, %v6268
    %v6270 = vpop.f32.mrb[0].mxu0
    %6271 = vmatprep.mubr.bf16.mxu0 0
    %6272 = vmatmul.mubr.bf16.gmra.mrb[0].mxu0 %v4230
    %v6273 = vpop.f32.mrb[0].mxu0
    %v6274 = vadd.f32 %v5985, %v6273
    %v6275 = vpop.f32.mrb[0].mxu0
    %v6276 = vpop.f32.mrb[0].mxu0
    %v6277 = vadd.f32 %v5988, %v6276
    %v6278 = vpop.f32.mrb[0].mxu0
    %6279 = vmatprep.mubr.bf16.mxu0 0
    %6280 = vmatmul.mubr.bf16.gmra.mrb[0].mxu0 %v4239
    %v6281 = vpop.f32.mrb[0].mxu0
    %v6282 = vadd.f32 %v5993, %v6281
    %v6283 = vpop.f32.mrb[0].mxu0
    %v6284 = vpop.f32.mrb[0].mxu0
    %v6285 = vadd.f32 %v5996, %v6284
    %v6286 = vpop.f32.mrb[0].mxu0
    %6287 = vmatprep.mubr.bf16.mxu0 0
    %6288 = vmatmul.mubr.bf16.gmra.mrb[0].mxu0 %v4248
    %v6289 = vpop.f32.mrb[0].mxu0
    %v6290 = vadd.f32 %v6001, %v6289
    %v6291 = vpop.f32.mrb[0].mxu0
    %v6292 = vpop.f32.mrb[0].mxu0
    %v6293 = vadd.f32 %v6004, %v6292
    %v6294 = vpop.f32.mrb[0].mxu0
    %6295 = vmatprep.mubr.bf16.mxu0 0
    %6296 = vmatmul.mubr.bf16.gmra.mrb[0].mxu0 %v4257
    %v6297 = vpop.f32.mrb[0].mxu0
    %v6298 = vadd.f32 %v6009, %v6297
    %v6299 = vpop.f32.mrb[0].mxu0
    %v6300 = vpop.f32.mrb[0].mxu0
    %v6301 = vadd.f32 %v6012, %v6300
    %v6302 = vpop.f32.mrb[0].mxu0
    %6303 = vmatprep.mubr.bf16.mxu0 0
    %6304 = vmatmul.mubr.bf16.gmra.mrb[0].mxu0 %v4266
    %v6305 = vpop.f32.mrb[0].mxu0
    %v6306 = vadd.f32 %v6017, %v6305
    %v6307 = vpop.f32.mrb[0].mxu0
    %v6308 = vpop.f32.mrb[0].mxu0
    %v6309 = vadd.f32 %v6020, %v6308
    %v6310 = vpop.f32.mrb[0].mxu0
    %6311 = vmatprep.mubr.bf16.mxu0 0
    %6312 = vmatmul.mubr.bf16.gmra.mrb[0].mxu0 %v4275
    %v6313 = vpop.f32.mrb[0].mxu0
    %v6314 = vadd.f32 %v6025, %v6313
    %v6315 = vpop.f32.mrb[0].mxu0
    %v6316 = vpop.f32.mrb[0].mxu0
    %v6317 = vadd.f32 %v6028, %v6316
    %v6318 = vpop.f32.mrb[0].mxu0
    %6319 = vmatprep.mubr.bf16.mxu0 0
    %6320 = vmatmul.mubr.bf16.gmra.mrb[0].mxu0 %v4284
    %v6321 = vpop.f32.mrb[0].mxu0
    %v6322 = vadd.f32 %v6033, %v6321
    %v6323 = vpop.f32.mrb[0].mxu0
    %v6324 = vpop.f32.mrb[0].mxu0
    %v6325 = vadd.f32 %v6036, %v6324
    %v6326 = vpop.f32.mrb[0].mxu0
    %6327 = vmatprep.mubr.bf16.mxu0 0
    %6328 = vmatmul.mubr.bf16.gmra.mrb[0].mxu0 %v4293
    %v6329 = vpop.f32.mrb[0].mxu0
    %v6330 = vadd.f32 %v6041, %v6329
    %v6331 = vpop.f32.mrb[0].mxu0
    %v6332 = vpop.f32.mrb[0].mxu0
    %v6333 = vadd.f32 %v6044, %v6332
    %v6334 = vpop.f32.mrb[0].mxu0
    %6335 = vmatprep.mubr.bf16.mxu0 0
    %6336 = vmatmul.mubr.bf16.gmra.mrb[0].mxu0 %v4302
    %v6337 = vpop.f32.mrb[0].mxu0
    %v6338 = vadd.f32 %v6049, %v6337
    %v6339 = vpop.f32.mrb[0].mxu0
    %v6340 = vpop.f32.mrb[0].mxu0
    %v6341 = vadd.f32 %v6052, %v6340
    %v6342 = vpop.f32.mrb[0].mxu0
    %6343 = vmatprep.mubr.bf16.mxu0 0
    %6344 = vmatmul.mubr.bf16.gmra.mrb[0].mxu0 %v4311
    %v6345 = vpop.f32.mrb[0].mxu0
    %v6346 = vadd.f32 %v6057, %v6345
    %v6347 = vpop.f32.mrb[0].mxu0
    %v6348 = vpop.f32.mrb[0].mxu0
    %v6349 = vadd.f32 %v6060, %v6348
    %v6350 = vpop.f32.mrb[0].mxu0
    %6351 = vmatprep.mubr.bf16.mxu0 0
    %6352 = vmatmul.mubr.bf16.gmra.mrb[0].mxu0 %v4320
    %v6353 = vpop.f32.mrb[0].mxu0
    %v6354 = vadd.f32 %v6065, %v6353
    %v6355 = vpop.f32.mrb[0].mxu0
    %v6356 = vpop.f32.mrb[0].mxu0
    %v6357 = vadd.f32 %v6068, %v6356
    %v6358 = vpop.f32.mrb[0].mxu0
    %6359 = vmatprep.mubr.bf16.mxu0 0
    %6360 = vmatmul.mubr.bf16.gmra.mrb[0].mxu0 %v4329
    %v6361 = vpop.f32.mrb[0].mxu0
    %v6362 = vadd.f32 %v6073, %v6361
    %v6363 = vpop.f32.mrb[0].mxu0
    %v6364 = vpop.f32.mrb[0].mxu0
    %v6365 = vadd.f32 %v6076, %v6364
    %v6366 = vpop.f32.mrb[0].mxu0
    %6367 = vmatprep.mubr.bf16.mxu0 0
    %6368 = vmatmul.mubr.bf16.gmra.mrb[0].mxu0 %v4338
    %v6369 = vpop.f32.mrb[0].mxu0
    %v6370 = vadd.f32 %v6081, %v6369
    %v6371 = vpop.f32.mrb[0].mxu0
    %v6372 = vpop.f32.mrb[0].mxu0
    %v6373 = vadd.f32 %v6084, %v6372
    %v6374 = vpop.f32.mrb[0].mxu0
    %6375 = vmatprep.mubr.bf16.mxu0 0
    %6376 = vmatmul.mubr.bf16.gmra.mrb[0].mxu0 %v4347
    %v6377 = vpop.f32.mrb[0].mxu0
    %v6378 = vadd.f32 %v6089, %v6377
    %v6379 = vpop.f32.mrb[0].mxu0
    %v6380 = vpop.f32.mrb[0].mxu0
    %v6381 = vadd.f32 %v6092, %v6380
    %v6382 = vpop.f32.mrb[0].mxu0
    %6383 = vmatprep.mubr.bf16.mxu0 0
    %6384 = vmatmul.mubr.bf16.gmra.mrb[0].mxu0 %v4356
    %v6385 = vpop.f32.mrb[0].mxu0
    %v6386 = vadd.f32 %v6097, %v6385
    %v6387 = vpop.f32.mrb[0].mxu0
    %v6388 = vpop.f32.mrb[0].mxu0
    %v6389 = vadd.f32 %v6100, %v6388
    %v6390 = vpop.f32.mrb[0].mxu0
    %6391 = vmatprep.mubr.bf16.mxu0 0
    %6392 = vmatmul.mubr.bf16.gmra.mrb[0].mxu0 %v4365
    %v6393 = vpop.f32.mrb[0].mxu0
    %v6394 = vadd.f32 %v6105, %v6393
    %v6395 = vpop.f32.mrb[0].mxu0
    %v6396 = vpop.f32.mrb[0].mxu0
    %v6397 = vadd.f32 %v6108, %v6396
    %v6398 = vpop.f32.mrb[0].mxu0
    %6399 = vmatprep.mubr.bf16.mxu0 0
    %6400 = vmatmul.mubr.bf16.gmra.mrb[0].mxu0 %v4374
    %v6401 = vpop.f32.mrb[0].mxu0
    %v6402 = vadd.f32 %v6113, %v6401
    %v6403 = vpop.f32.mrb[0].mxu0
    %v6404 = vpop.f32.mrb[0].mxu0
    %v6405 = vadd.f32 %v6116, %v6404
    %v6406 = vpop.f32.mrb[0].mxu0
    %6407 = vmatprep.mubr.bf16.mxu0 0
    %6408 = vmatmul.mubr.bf16.gmra.mrb[0].mxu0 %v4383
    %v6409 = vpop.f32.mrb[0].mxu0
    %v6410 = vadd.f32 %v6121, %v6409
    %v6411 = vpop.f32.mrb[0].mxu0
    %v6412 = vpop.f32.mrb[0].mxu0
    %v6413 = vadd.f32 %v6124, %v6412
    %v6414 = vpop.f32.mrb[0].mxu0
    %6415 = vmatprep.mubr.bf16.mxu0 0
    %6416 = vmatmul.mubr.bf16.gmra.mrb[0].mxu0 %v4392
    %v6417 = vpop.f32.mrb[0].mxu0
    %v6418 = vadd.f32 %v6129, %v6417
    %v6419 = vpop.f32.mrb[0].mxu0
    %v6420 = vpop.f32.mrb[0].mxu0
    %v6421 = vadd.f32 %v6132, %v6420
    %v6422 = vpop.f32.mrb[0].mxu0
    %6423 = vmatprep.mubr.bf16.mxu0 0
    %6424 = vmatmul.mubr.bf16.gmra.mrb[0].mxu0 %v4401
    %v6425 = vpop.f32.mrb[0].mxu0
    %v6426 = vadd.f32 %v6137, %v6425
    %v6427 = vpop.f32.mrb[0].mxu0
    %v6428 = vpop.f32.mrb[0].mxu0
    %v6429 = vadd.f32 %v6140, %v6428
    %v6430 = vpop.f32.mrb[0].mxu0
    %6431 = vmatprep.mubr.bf16.mxu0 0
    %6432 = vmatmul.mubr.bf16.gmra.mrb[0].mxu0 %v4410
    %v6433 = vpop.f32.mrb[0].mxu0
    %v6434 = vadd.f32 %v6145, %v6433
    %v6435 = vpop.f32.mrb[0].mxu0
    %v6436 = vpop.f32.mrb[0].mxu0
    %v6437 = vadd.f32 %v6148, %v6436
    %v6438 = vpop.f32.mrb[0].mxu0
    %6439 = vmatprep.mubr.bf16.mxu0 0
    %6440 = vmatmul.mubr.bf16.gmra.mrb[0].mxu0 %v4419
    %v6441 = vpop.f32.mrb[0].mxu0
    %v6442 = vadd.f32 %v6153, %v6441
    %v6443 = vpop.f32.mrb[0].mxu0
    %v6444 = vpop.f32.mrb[0].mxu0
    %v6445 = vadd.f32 %v6156, %v6444
    %v6446 = vpop.f32.mrb[0].mxu0
    %6447 = vdwg.mxu0
    %v6448 = vld [vmem:[%s7] sm:$0x1]
    %v6449 = vld [vmem:[%s8] sm:$0x1]
    %v6450 = vadd.f32 %v6194, %v6197
    %v6451 = vadd.f32 %v6450, %v6202
    %v6452 = vadd.f32 %v6451, %v6205
    %v6453 = vadd.f32 %v6452, %v6210
    %v6454 = vadd.f32 %v6453, %v6213
    %v6455 = vadd.f32 %v6454, %v6218
    %v6456 = vadd.f32 %v6455, %v6221
    %v6457 = vadd.f32 %v6456, %v6226
    %v6458 = vadd.f32 %v6457, %v6229
    %v6459 = vadd.f32 %v6458, %v6234
    %v6460 = vadd.f32 %v6459, %v6237
    %v6461 = vadd.f32 %v6460, %v6242
    %v6462 = vadd.f32 %v6461, %v6245
    %v6463 = vadd.f32 %v6462, %v6250
    %v6464 = vadd.f32 %v6463, %v6253
    %v6465 = vadd.f32 %v6464, %v6258
    %v6466 = vadd.f32 %v6465, %v6261
    %v6467 = vadd.f32 %v6466, %v6266
    %v6468 = vadd.f32 %v6467, %v6269
    %v6469 = vadd.f32 %v6468, %v6274
    %v6470 = vadd.f32 %v6469, %v6277
    %v6471 = vadd.f32 %v6470, %v6282
    %v6472 = vadd.f32 %v6471, %v6285
    %v6473 = vadd.f32 %v6472, %v6290
    %v6474 = vadd.f32 %v6473, %v6293
    %v6475 = vadd.f32 %v6474, %v6298
    %v6476 = vadd.f32 %v6475, %v6301
    %v6477 = vadd.f32 %v6476, %v6306
    %v6478 = vadd.f32 %v6477, %v6309
    %v6479 = vadd.f32 %v6478, %v6314
    %v6480 = vadd.f32 %v6479, %v6317
    %v6481 = vadd.f32 %v6480, %v6322
    %v6482 = vadd.f32 %v6481, %v6325
    %v6483 = vadd.f32 %v6482, %v6330
    %v6484 = vadd.f32 %v6483, %v6333
    %v6485 = vadd.f32 %v6484, %v6338
    %v6486 = vadd.f32 %v6485, %v6341
    %v6487 = vadd.f32 %v6486, %v6346
    %v6488 = vadd.f32 %v6487, %v6349
    %v6489 = vadd.f32 %v6488, %v6354
    %v6490 = vadd.f32 %v6489, %v6357
    %v6491 = vadd.f32 %v6490, %v6362
    %v6492 = vadd.f32 %v6491, %v6365
    %v6493 = vadd.f32 %v6492, %v6370
    %v6494 = vadd.f32 %v6493, %v6373
    %v6495 = vadd.f32 %v6494, %v6378
    %v6496 = vadd.f32 %v6495, %v6381
    %v6497 = vadd.f32 %v6496, %v6386
    %v6498 = vadd.f32 %v6497, %v6389
    %v6499 = vadd.f32 %v6498, %v6394
    %v6500 = vadd.f32 %v6499, %v6397
    %v6501 = vadd.f32 %v6500, %v6402
    %v6502 = vadd.f32 %v6501, %v6405
    %v6503 = vadd.f32 %v6502, %v6410
    %v6504 = vadd.f32 %v6503, %v6413
    %v6505 = vadd.f32 %v6504, %v6418
    %v6506 = vadd.f32 %v6505, %v6421
    %v6507 = vadd.f32 %v6506, %v6426
    %v6508 = vadd.f32 %v6507, %v6429
    %v6509 = vadd.f32 %v6508, %v6434
    %v6510 = vadd.f32 %v6509, %v6437
    %v6511 = vadd.f32 %v6510, %v6442
    %v6512 = vadd.f32 %v6511, %v6445
    %v6513 = vrot.slane %v6512, 4
    %v6514 = vadd.f32 %v6512, %v6513
    %v6515 = vrot.slane %v6514, 2
    %v6516 = vadd.f32 %v6514, %v6515
    %v6517 = vrot.slane %v6516, 1
    %v6518 = vadd.f32 %v6516, %v6517
    %v6519 = vmul.f32 %v6518, 0.001953125
    %v6520 = vmul.f32 %v6194, %v6194
    %v6521 = vmul.f32 %v6197, %v6197
    %v6522 = vmul.f32 %v6202, %v6202
    %v6523 = vmul.f32 %v6205, %v6205
    %v6524 = vmul.f32 %v6210, %v6210
    %v6525 = vmul.f32 %v6213, %v6213
    %v6526 = vmul.f32 %v6218, %v6218
    %v6527 = vmul.f32 %v6221, %v6221
    %v6528 = vmul.f32 %v6226, %v6226
    %v6529 = vmul.f32 %v6229, %v6229
    %v6530 = vmul.f32 %v6234, %v6234
    %v6531 = vmul.f32 %v6237, %v6237
    %v6532 = vmul.f32 %v6242, %v6242
    %v6533 = vmul.f32 %v6245, %v6245
    %v6534 = vmul.f32 %v6250, %v6250
    %v6535 = vmul.f32 %v6253, %v6253
    %v6536 = vmul.f32 %v6258, %v6258
    %v6537 = vmul.f32 %v6261, %v6261
    %v6538 = vmul.f32 %v6266, %v6266
    %v6539 = vmul.f32 %v6269, %v6269
    %v6540 = vmul.f32 %v6274, %v6274
    %v6541 = vmul.f32 %v6277, %v6277
    %v6542 = vmul.f32 %v6282, %v6282
    %v6543 = vmul.f32 %v6285, %v6285
    %v6544 = vmul.f32 %v6290, %v6290
    %v6545 = vmul.f32 %v6293, %v6293
    %v6546 = vmul.f32 %v6298, %v6298
    %v6547 = vmul.f32 %v6301, %v6301
    %v6548 = vmul.f32 %v6306, %v6306
    %v6549 = vmul.f32 %v6309, %v6309
    %v6550 = vmul.f32 %v6314, %v6314
    %v6551 = vmul.f32 %v6317, %v6317
    %v6552 = vmul.f32 %v6322, %v6322
    %v6553 = vmul.f32 %v6325, %v6325
    %v6554 = vmul.f32 %v6330, %v6330
    %v6555 = vmul.f32 %v6333, %v6333
    %v6556 = vmul.f32 %v6338, %v6338
    %v6557 = vmul.f32 %v6341, %v6341
    %v6558 = vmul.f32 %v6346, %v6346
    %v6559 = vmul.f32 %v6349, %v6349
    %v6560 = vmul.f32 %v6354, %v6354
    %v6561 = vmul.f32 %v6357, %v6357
    %v6562 = vmul.f32 %v6362, %v6362
    %v6563 = vmul.f32 %v6365, %v6365
    %v6564 = vmul.f32 %v6370, %v6370
    %v6565 = vmul.f32 %v6373, %v6373
    %v6566 = vmul.f32 %v6378, %v6378
    %v6567 = vmul.f32 %v6381, %v6381
    %v6568 = vmul.f32 %v6386, %v6386
    %v6569 = vmul.f32 %v6389, %v6389
    %v6570 = vmul.f32 %v6394, %v6394
    %v6571 = vmul.f32 %v6397, %v6397
    %v6572 = vmul.f32 %v6402, %v6402
    %v6573 = vmul.f32 %v6405, %v6405
    %v6574 = vmul.f32 %v6410, %v6410
    %v6575 = vmul.f32 %v6413, %v6413
    %v6576 = vmul.f32 %v6418, %v6418
    %v6577 = vmul.f32 %v6421, %v6421
    %v6578 = vmul.f32 %v6426, %v6426
    %v6579 = vmul.f32 %v6429, %v6429
    %v6580 = vmul.f32 %v6434, %v6434
    %v6581 = vmul.f32 %v6437, %v6437
    %v6582 = vmul.f32 %v6442, %v6442
    %v6583 = vmul.f32 %v6445, %v6445
    %v6584 = vadd.f32 %v6520, %v6521
    %v6585 = vadd.f32 %v6584, %v6522
    %v6586 = vadd.f32 %v6585, %v6523
    %v6587 = vadd.f32 %v6586, %v6524
    %v6588 = vadd.f32 %v6587, %v6525
    %v6589 = vadd.f32 %v6588, %v6526
    %v6590 = vadd.f32 %v6589, %v6527
    %v6591 = vadd.f32 %v6590, %v6528
    %v6592 = vadd.f32 %v6591, %v6529
    %v6593 = vadd.f32 %v6592, %v6530
    %v6594 = vadd.f32 %v6593, %v6531
    %v6595 = vadd.f32 %v6594, %v6532
    %v6596 = vadd.f32 %v6595, %v6533
    %v6597 = vadd.f32 %v6596, %v6534
    %v6598 = vadd.f32 %v6597, %v6535
    %v6599 = vadd.f32 %v6598, %v6536
    %v6600 = vadd.f32 %v6599, %v6537
    %v6601 = vadd.f32 %v6600, %v6538
    %v6602 = vadd.f32 %v6601, %v6539
    %v6603 = vadd.f32 %v6602, %v6540
    %v6604 = vadd.f32 %v6603, %v6541
    %v6605 = vadd.f32 %v6604, %v6542
    %v6606 = vadd.f32 %v6605, %v6543
    %v6607 = vadd.f32 %v6606, %v6544
    %v6608 = vadd.f32 %v6607, %v6545
    %v6609 = vadd.f32 %v6608, %v6546
    %v6610 = vadd.f32 %v6609, %v6547
    %v6611 = vadd.f32 %v6610, %v6548
    %v6612 = vadd.f32 %v6611, %v6549
    %v6613 = vadd.f32 %v6612, %v6550
    %v6614 = vadd.f32 %v6613, %v6551
    %v6615 = vadd.f32 %v6614, %v6552
    %v6616 = vadd.f32 %v6615, %v6553
    %v6617 = vadd.f32 %v6616, %v6554
    %v6618 = vadd.f32 %v6617, %v6555
    %v6619 = vadd.f32 %v6618, %v6556
    %v6620 = vadd.f32 %v6619, %v6557
    %v6621 = vadd.f32 %v6620, %v6558
    %v6622 = vadd.f32 %v6621, %v6559
    %v6623 = vadd.f32 %v6622, %v6560
    %v6624 = vadd.f32 %v6623, %v6561
    %v6625 = vadd.f32 %v6624, %v6562
    %v6626 = vadd.f32 %v6625, %v6563
    %v6627 = vadd.f32 %v6626, %v6564
    %v6628 = vadd.f32 %v6627, %v6565
    %v6629 = vadd.f32 %v6628, %v6566
    %v6630 = vadd.f32 %v6629, %v6567
    %v6631 = vadd.f32 %v6630, %v6568
    %v6632 = vadd.f32 %v6631, %v6569
    %v6633 = vadd.f32 %v6632, %v6570
    %v6634 = vadd.f32 %v6633, %v6571
    %v6635 = vadd.f32 %v6634, %v6572
    %v6636 = vadd.f32 %v6635, %v6573
    %v6637 = vadd.f32 %v6636, %v6574
    %v6638 = vadd.f32 %v6637, %v6575
    %v6639 = vadd.f32 %v6638, %v6576
    %v6640 = vadd.f32 %v6639, %v6577
    %v6641 = vadd.f32 %v6640, %v6578
    %v6642 = vadd.f32 %v6641, %v6579
    %v6643 = vadd.f32 %v6642, %v6580
    %v6644 = vadd.f32 %v6643, %v6581
    %v6645 = vadd.f32 %v6644, %v6582
    %v6646 = vadd.f32 %v6645, %v6583
    %v6647 = vrot.slane %v6646, 4
    %v6648 = vadd.f32 %v6646, %v6647
    %v6649 = vrot.slane %v6648, 2
    %v6650 = vadd.f32 %v6648, %v6649
    %v6651 = vrot.slane %v6650, 1
    %v6652 = vadd.f32 %v6650, %v6651
    %v6653 = vmul.f32 %v6652, 0.001953125
    %v6654 = vmul.f32 %v6519, %v6519
    %v6655 = vsub.f32 %v6653, %v6654
    %v6656 = vadd.f32 %v6655, 1e-05
    %v6657 = vrsqrt.pop %v6656
    %v6658 = vmul.f32 %v6657, %v6448
    %v6659 = vsub.f32 %v6194, %v6519
    %v6660 = vsub.f32 %v6197, %v6519
    %v6661 = vsub.f32 %v6202, %v6519
    %v6662 = vsub.f32 %v6205, %v6519
    %v6663 = vsub.f32 %v6210, %v6519
    %v6664 = vsub.f32 %v6213, %v6519
    %v6665 = vsub.f32 %v6218, %v6519
    %v6666 = vsub.f32 %v6221, %v6519
    %v6667 = vsub.f32 %v6226, %v6519
    %v6668 = vsub.f32 %v6229, %v6519
    %v6669 = vsub.f32 %v6234, %v6519
    %v6670 = vsub.f32 %v6237, %v6519
    %v6671 = vsub.f32 %v6242, %v6519
    %v6672 = vsub.f32 %v6245, %v6519
    %v6673 = vsub.f32 %v6250, %v6519
    %v6674 = vsub.f32 %v6253, %v6519
    %v6675 = vsub.f32 %v6258, %v6519
    %v6676 = vsub.f32 %v6261, %v6519
    %v6677 = vsub.f32 %v6266, %v6519
    %v6678 = vsub.f32 %v6269, %v6519
    %v6679 = vsub.f32 %v6274, %v6519
    %v6680 = vsub.f32 %v6277, %v6519
    %v6681 = vsub.f32 %v6282, %v6519
    %v6682 = vsub.f32 %v6285, %v6519
    %v6683 = vsub.f32 %v6290, %v6519
    %v6684 = vsub.f32 %v6293, %v6519
    %v6685 = vsub.f32 %v6298, %v6519
    %v6686 = vsub.f32 %v6301, %v6519
    %v6687 = vsub.f32 %v6306, %v6519
    %v6688 = vsub.f32 %v6309, %v6519
    %v6689 = vsub.f32 %v6314, %v6519
    %v6690 = vsub.f32 %v6317, %v6519
    %v6691 = vsub.f32 %v6322, %v6519
    %v6692 = vsub.f32 %v6325, %v6519
    %v6693 = vsub.f32 %v6330, %v6519
    %v6694 = vsub.f32 %v6333, %v6519
    %v6695 = vsub.f32 %v6338, %v6519
    %v6696 = vsub.f32 %v6341, %v6519
    %v6697 = vsub.f32 %v6346, %v6519
    %v6698 = vsub.f32 %v6349, %v6519
    %v6699 = vsub.f32 %v6354, %v6519
    %v6700 = vsub.f32 %v6357, %v6519
    %v6701 = vsub.f32 %v6362, %v6519
    %v6702 = vsub.f32 %v6365, %v6519
    %v6703 = vsub.f32 %v6370, %v6519
    %v6704 = vsub.f32 %v6373, %v6519
    %v6705 = vsub.f32 %v6378, %v6519
    %v6706 = vsub.f32 %v6381, %v6519
    %v6707 = vsub.f32 %v6386, %v6519
    %v6708 = vsub.f32 %v6389, %v6519
    %v6709 = vsub.f32 %v6394, %v6519
    %v6710 = vsub.f32 %v6397, %v6519
    %v6711 = vsub.f32 %v6402, %v6519
    %v6712 = vsub.f32 %v6405, %v6519
    %v6713 = vsub.f32 %v6410, %v6519
    %v6714 = vsub.f32 %v6413, %v6519
    %v6715 = vsub.f32 %v6418, %v6519
    %v6716 = vsub.f32 %v6421, %v6519
    %v6717 = vsub.f32 %v6426, %v6519
    %v6718 = vsub.f32 %v6429, %v6519
    %v6719 = vsub.f32 %v6434, %v6519
    %v6720 = vsub.f32 %v6437, %v6519
    %v6721 = vsub.f32 %v6442, %v6519
    %v6722 = vsub.f32 %v6445, %v6519
    %v6723 = vlaneseq
    %v6724 = vshrl.u32 %v6723, 7
    %v6725 = vsub.s32 0, %v6724
    %v6726 = vrot.slane %v6658, %v6725
    %v6727 = vmul.f32 %v6659, %v6726
    %v6728 = vmul.f32 %v6660, %v6726
    %v6729 = vmul.f32 %v6661, %v6726
    %v6730 = vmul.f32 %v6662, %v6726
    %v6731 = vmul.f32 %v6663, %v6726
    %v6732 = vmul.f32 %v6664, %v6726
    %v6733 = vmul.f32 %v6665, %v6726
    %v6734 = vmul.f32 %v6666, %v6726
    %v6735 = vmul.f32 %v6667, %v6726
    %v6736 = vmul.f32 %v6668, %v6726
    %v6737 = vmul.f32 %v6669, %v6726
    %v6738 = vmul.f32 %v6670, %v6726
    %v6739 = vmul.f32 %v6671, %v6726
    %v6740 = vmul.f32 %v6672, %v6726
    %v6741 = vmul.f32 %v6673, %v6726
    %v6742 = vmul.f32 %v6674, %v6726
    %v6743 = vmul.f32 %v6675, %v6726
    %v6744 = vmul.f32 %v6676, %v6726
    %v6745 = vmul.f32 %v6677, %v6726
    %v6746 = vmul.f32 %v6678, %v6726
    %v6747 = vmul.f32 %v6679, %v6726
    %v6748 = vmul.f32 %v6680, %v6726
    %v6749 = vmul.f32 %v6681, %v6726
    %v6750 = vmul.f32 %v6682, %v6726
    %v6751 = vmul.f32 %v6683, %v6726
    %v6752 = vmul.f32 %v6684, %v6726
    %v6753 = vmul.f32 %v6685, %v6726
    %v6754 = vmul.f32 %v6686, %v6726
    %v6755 = vmul.f32 %v6687, %v6726
    %v6756 = vmul.f32 %v6688, %v6726
    %v6757 = vmul.f32 %v6689, %v6726
    %v6758 = vmul.f32 %v6690, %v6726
    %v6759 = vmul.f32 %v6691, %v6726
    %v6760 = vmul.f32 %v6692, %v6726
    %v6761 = vmul.f32 %v6693, %v6726
    %v6762 = vmul.f32 %v6694, %v6726
    %v6763 = vmul.f32 %v6695, %v6726
    %v6764 = vmul.f32 %v6696, %v6726
    %v6765 = vmul.f32 %v6697, %v6726
    %v6766 = vmul.f32 %v6698, %v6726
    %v6767 = vmul.f32 %v6699, %v6726
    %v6768 = vmul.f32 %v6700, %v6726
    %v6769 = vmul.f32 %v6701, %v6726
    %v6770 = vmul.f32 %v6702, %v6726
    %v6771 = vmul.f32 %v6703, %v6726
    %v6772 = vmul.f32 %v6704, %v6726
    %v6773 = vmul.f32 %v6705, %v6726
    %v6774 = vmul.f32 %v6706, %v6726
    %v6775 = vmul.f32 %v6707, %v6726
    %v6776 = vmul.f32 %v6708, %v6726
    %v6777 = vmul.f32 %v6709, %v6726
    %v6778 = vmul.f32 %v6710, %v6726
    %v6779 = vmul.f32 %v6711, %v6726
    %v6780 = vmul.f32 %v6712, %v6726
    %v6781 = vmul.f32 %v6713, %v6726
    %v6782 = vmul.f32 %v6714, %v6726
    %v6783 = vmul.f32 %v6715, %v6726
    %v6784 = vmul.f32 %v6716, %v6726
    %v6785 = vmul.f32 %v6717, %v6726
    %v6786 = vmul.f32 %v6718, %v6726
    %v6787 = vmul.f32 %v6719, %v6726
    %v6788 = vmul.f32 %v6720, %v6726
    %v6789 = vmul.f32 %v6721, %v6726
    %v6790 = vmul.f32 %v6722, %v6726
    %v6792 = vlaneseq
    %v6793 = vshrl.u32 %v6792, 7
    %v6794 = vsub.s32 0, %v6793
    %v6795 = vrot.slane %v6449, %v6794
    %v6797 = vadd.f32 %v6727, %v6795
    %v6798 = vadd.f32 %v6728, %v6795
    %v6799 = vadd.f32 %v6729, %v6795
    %v6800 = vadd.f32 %v6730, %v6795
    %v6801 = vadd.f32 %v6731, %v6795
    %v6802 = vadd.f32 %v6732, %v6795
    %v6803 = vadd.f32 %v6733, %v6795
    %v6804 = vadd.f32 %v6734, %v6795
    %v6805 = vadd.f32 %v6735, %v6795
    %v6806 = vadd.f32 %v6736, %v6795
    %v6807 = vadd.f32 %v6737, %v6795
    %v6808 = vadd.f32 %v6738, %v6795
    %v6809 = vadd.f32 %v6739, %v6795
    %v6810 = vadd.f32 %v6740, %v6795
    %v6811 = vadd.f32 %v6741, %v6795
    %v6812 = vadd.f32 %v6742, %v6795
    %v6813 = vadd.f32 %v6743, %v6795
    %v6814 = vadd.f32 %v6744, %v6795
    %v6815 = vadd.f32 %v6745, %v6795
    %v6816 = vadd.f32 %v6746, %v6795
    %v6817 = vadd.f32 %v6747, %v6795
    %v6818 = vadd.f32 %v6748, %v6795
    %v6819 = vadd.f32 %v6749, %v6795
    %v6820 = vadd.f32 %v6750, %v6795
    %v6821 = vadd.f32 %v6751, %v6795
    %v6822 = vadd.f32 %v6752, %v6795
    %v6823 = vadd.f32 %v6753, %v6795
    %v6824 = vadd.f32 %v6754, %v6795
    %v6825 = vadd.f32 %v6755, %v6795
    %v6826 = vadd.f32 %v6756, %v6795
    %v6827 = vadd.f32 %v6757, %v6795
    %v6828 = vadd.f32 %v6758, %v6795
    %v6829 = vadd.f32 %v6759, %v6795
    %v6830 = vadd.f32 %v6760, %v6795
    %v6831 = vadd.f32 %v6761, %v6795
    %v6832 = vadd.f32 %v6762, %v6795
    %v6833 = vadd.f32 %v6763, %v6795
    %v6834 = vadd.f32 %v6764, %v6795
    %v6835 = vadd.f32 %v6765, %v6795
    %v6836 = vadd.f32 %v6766, %v6795
    %v6837 = vadd.f32 %v6767, %v6795
    %v6838 = vadd.f32 %v6768, %v6795
    %v6839 = vadd.f32 %v6769, %v6795
    %v6840 = vadd.f32 %v6770, %v6795
    %v6841 = vadd.f32 %v6771, %v6795
    %v6842 = vadd.f32 %v6772, %v6795
    %v6843 = vadd.f32 %v6773, %v6795
    %v6844 = vadd.f32 %v6774, %v6795
    %v6845 = vadd.f32 %v6775, %v6795
    %v6846 = vadd.f32 %v6776, %v6795
    %v6847 = vadd.f32 %v6777, %v6795
    %v6848 = vadd.f32 %v6778, %v6795
    %v6849 = vadd.f32 %v6779, %v6795
    %v6850 = vadd.f32 %v6780, %v6795
    %v6851 = vadd.f32 %v6781, %v6795
    %v6852 = vadd.f32 %v6782, %v6795
    %v6853 = vadd.f32 %v6783, %v6795
    %v6854 = vadd.f32 %v6784, %v6795
    %v6855 = vadd.f32 %v6785, %v6795
    %v6856 = vadd.f32 %v6786, %v6795
    %v6857 = vadd.f32 %v6787, %v6795
    %v6858 = vadd.f32 %v6788, %v6795
    %v6859 = vadd.f32 %v6789, %v6795
    %v6860 = vadd.f32 %v6790, %v6795
    %v6861 = vmax.f32 %v6797, 0.0
    %v6862 = vmax.f32 %v6798, 0.0
    %v6863 = vmax.f32 %v6799, 0.0
    %v6864 = vmax.f32 %v6800, 0.0
    %v6865 = vmax.f32 %v6801, 0.0
    %v6866 = vmax.f32 %v6802, 0.0
    %v6867 = vmax.f32 %v6803, 0.0
    %v6868 = vmax.f32 %v6804, 0.0
    %v6869 = vmax.f32 %v6805, 0.0
    %v6870 = vmax.f32 %v6806, 0.0
    %v6871 = vmax.f32 %v6807, 0.0
    %v6872 = vmax.f32 %v6808, 0.0
    %v6873 = vmax.f32 %v6809, 0.0
    %v6874 = vmax.f32 %v6810, 0.0
    %v6875 = vmax.f32 %v6811, 0.0
    %v6876 = vmax.f32 %v6812, 0.0
    %v6877 = vmax.f32 %v6813, 0.0
    %v6878 = vmax.f32 %v6814, 0.0
    %v6879 = vmax.f32 %v6815, 0.0
    %v6880 = vmax.f32 %v6816, 0.0
    %v6881 = vmax.f32 %v6817, 0.0
    %v6882 = vmax.f32 %v6818, 0.0
    %v6883 = vmax.f32 %v6819, 0.0
    %v6884 = vmax.f32 %v6820, 0.0
    %v6885 = vmax.f32 %v6821, 0.0
    %v6886 = vmax.f32 %v6822, 0.0
    %v6887 = vmax.f32 %v6823, 0.0
    %v6888 = vmax.f32 %v6824, 0.0
    %v6889 = vmax.f32 %v6825, 0.0
    %v6890 = vmax.f32 %v6826, 0.0
    %v6891 = vmax.f32 %v6827, 0.0
    %v6892 = vmax.f32 %v6828, 0.0
    %v6893 = vmax.f32 %v6829, 0.0
    %v6894 = vmax.f32 %v6830, 0.0
    %v6895 = vmax.f32 %v6831, 0.0
    %v6896 = vmax.f32 %v6832, 0.0
    %v6897 = vmax.f32 %v6833, 0.0
    %v6898 = vmax.f32 %v6834, 0.0
    %v6899 = vmax.f32 %v6835, 0.0
    %v6900 = vmax.f32 %v6836, 0.0
    %v6901 = vmax.f32 %v6837, 0.0
    %v6902 = vmax.f32 %v6838, 0.0
    %v6903 = vmax.f32 %v6839, 0.0
    %v6904 = vmax.f32 %v6840, 0.0
    %v6905 = vmax.f32 %v6841, 0.0
    %v6906 = vmax.f32 %v6842, 0.0
    %v6907 = vmax.f32 %v6843, 0.0
    %v6908 = vmax.f32 %v6844, 0.0
    %v6909 = vmax.f32 %v6845, 0.0
    %v6910 = vmax.f32 %v6846, 0.0
    %v6911 = vmax.f32 %v6847, 0.0
    %v6912 = vmax.f32 %v6848, 0.0
    %v6913 = vmax.f32 %v6849, 0.0
    %v6914 = vmax.f32 %v6850, 0.0
    %v6915 = vmax.f32 %v6851, 0.0
    %v6916 = vmax.f32 %v6852, 0.0
    %v6917 = vmax.f32 %v6853, 0.0
    %v6918 = vmax.f32 %v6854, 0.0
    %v6919 = vmax.f32 %v6855, 0.0
    %v6920 = vmax.f32 %v6856, 0.0
    %v6921 = vmax.f32 %v6857, 0.0
    %v6922 = vmax.f32 %v6858, 0.0
    %v6923 = vmax.f32 %v6859, 0.0
    %v6924 = vmax.f32 %v6860, 0.0
    %6925 = vst [vmem:[#allocation3] sm:$0xff] %v6861
    %6926 = vst [vmem:[#allocation3 + $0x8] sm:$0xff] %v6862
    %6927 = vst [vmem:[#allocation3 + $0x10] sm:$0xff] %v6863
    %6928 = vst [vmem:[#allocation3 + $0x18] sm:$0xff] %v6864
    %6929 = vst [vmem:[#allocation3 + $0x20] sm:$0xff] %v6865
    %6930 = vst [vmem:[#allocation3 + $0x28] sm:$0xff] %v6866
    %6931 = vst [vmem:[#allocation3 + $0x30] sm:$0xff] %v6867
    %6932 = vst [vmem:[#allocation3 + $0x38] sm:$0xff] %v6868
    %6933 = vst [vmem:[#allocation3 + $0x40] sm:$0xff] %v6869
    %6934 = vst [vmem:[#allocation3 + $0x48] sm:$0xff] %v6870
    %6935 = vst [vmem:[#allocation3 + $0x50] sm:$0xff] %v6871
    %6936 = vst [vmem:[#allocation3 + $0x58] sm:$0xff] %v6872
    %6937 = vst [vmem:[#allocation3 + $0x60] sm:$0xff] %v6873
    %6938 = vst [vmem:[#allocation3 + $0x68] sm:$0xff] %v6874
    %6939 = vst [vmem:[#allocation3 + $0x70] sm:$0xff] %v6875
    %6940 = vst [vmem:[#allocation3 + $0x78] sm:$0xff] %v6876
    %6941 = vst [vmem:[#allocation3 + $0x80] sm:$0xff] %v6877
    %6942 = vst [vmem:[#allocation3 + $0x88] sm:$0xff] %v6878
    %6943 = vst [vmem:[#allocation3 + $0x90] sm:$0xff] %v6879
    %6944 = vst [vmem:[#allocation3 + $0x98] sm:$0xff] %v6880
    %6945 = vst [vmem:[#allocation3 + $0xa0] sm:$0xff] %v6881
    %6946 = vst [vmem:[#allocation3 + $0xa8] sm:$0xff] %v6882
    %6947 = vst [vmem:[#allocation3 + $0xb0] sm:$0xff] %v6883
    %6948 = vst [vmem:[#allocation3 + $0xb8] sm:$0xff] %v6884
    %6949 = vst [vmem:[#allocation3 + $0xc0] sm:$0xff] %v6885
    %6950 = vst [vmem:[#allocation3 + $0xc8] sm:$0xff] %v6886
    %6951 = vst [vmem:[#allocation3 + $0xd0] sm:$0xff] %v6887
    %6952 = vst [vmem:[#allocation3 + $0xd8] sm:$0xff] %v6888
    %6953 = vst [vmem:[#allocation3 + $0xe0] sm:$0xff] %v6889
    %6954 = vst [vmem:[#allocation3 + $0xe8] sm:$0xff] %v6890
    %6955 = vst [vmem:[#allocation3 + $0xf0] sm:$0xff] %v6891
    %6956 = vst [vmem:[#allocation3 + $0xf8] sm:$0xff] %v6892
    %6957 = vst [vmem:[#allocation3 + $0x100] sm:$0xff] %v6893
    %6958 = vst [vmem:[#allocation3 + $0x108] sm:$0xff] %v6894
    %6959 = vst [vmem:[#allocation3 + $0x110] sm:$0xff] %v6895
    %6960 = vst [vmem:[#allocation3 + $0x118] sm:$0xff] %v6896
    %6961 = vst [vmem:[#allocation3 + $0x120] sm:$0xff] %v6897
    %6962 = vst [vmem:[#allocation3 + $0x128] sm:$0xff] %v6898
    %6963 = vst [vmem:[#allocation3 + $0x130] sm:$0xff] %v6899
    %6964 = vst [vmem:[#allocation3 + $0x138] sm:$0xff] %v6900
    %6965 = vst [vmem:[#allocation3 + $0x140] sm:$0xff] %v6901
    %6966 = vst [vmem:[#allocation3 + $0x148] sm:$0xff] %v6902
    %6967 = vst [vmem:[#allocation3 + $0x150] sm:$0xff] %v6903
    %6968 = vst [vmem:[#allocation3 + $0x158] sm:$0xff] %v6904
    %6969 = vst [vmem:[#allocation3 + $0x160] sm:$0xff] %v6905
    %6970 = vst [vmem:[#allocation3 + $0x168] sm:$0xff] %v6906
    %6971 = vst [vmem:[#allocation3 + $0x170] sm:$0xff] %v6907
    %6972 = vst [vmem:[#allocation3 + $0x178] sm:$0xff] %v6908
    %6973 = vst [vmem:[#allocation3 + $0x180] sm:$0xff] %v6909
    %6974 = vst [vmem:[#allocation3 + $0x188] sm:$0xff] %v6910
    %6975 = vst [vmem:[#allocation3 + $0x190] sm:$0xff] %v6911
    %6976 = vst [vmem:[#allocation3 + $0x198] sm:$0xff] %v6912
    %6977 = vst [vmem:[#allocation3 + $0x1a0] sm:$0xff] %v6913
    %6978 = vst [vmem:[#allocation3 + $0x1a8] sm:$0xff] %v6914
    %6979 = vst [vmem:[#allocation3 + $0x1b0] sm:$0xff] %v6915
    %6980 = vst [vmem:[#allocation3 + $0x1b8] sm:$0xff] %v6916
    %6981 = vst [vmem:[#allocation3 + $0x1c0] sm:$0xff] %v6917
    %6982 = vst [vmem:[#allocation3 + $0x1c8] sm:$0xff] %v6918
    %6983 = vst [vmem:[#allocation3 + $0x1d0] sm:$0xff] %v6919
    %6984 = vst [vmem:[#allocation3 + $0x1d8] sm:$0xff] %v6920
    %6985 = vst [vmem:[#allocation3 + $0x1e0] sm:$0xff] %v6921
    %6986 = vst [vmem:[#allocation3 + $0x1e8] sm:$0xff] %v6922
    %6987 = vst [vmem:[#allocation3 + $0x1f0] sm:$0xff] %v6923
    %6988 = vst [vmem:[#allocation3 + $0x1f8] sm:$0xff] %v6924
    // Predicated region
    $region38: #{tpu_custom_call.1} parent=1 // pred_check
      _
    $region39: #{tpu_custom_call.1} parent=1 // pred_check_branch
      %6990 = sbr.rel (0) target = $region41
    $region40: #{tpu_custom_call.1} parent=1 // pred_region
      %s6992 = ssub.s32 8192, 8192
      %6993 = vsyncadd [#allocation4], %s6992
      %s6994 = sshll.u32 [#allocation3], 4
      %s6995 = int_to_ptr.vmem [resolvable:$true] %s6994
      %7000 = dma.vmem_to_hbm [thread:$0]  %s6995, 8192, %s9, [#allocation4], 128, 128, 8
    $region41: #{tpu_custom_call.1} parent=1 // pred_fallthru
      _
    // Predicated region
    $region42: #{tpu_custom_call.1} parent=1 // pred_check
      _
    $region43: #{tpu_custom_call.1} parent=1 // pred_check_branch
      %7002 = sbr.rel (0) target = $region45
    $region44: #{tpu_custom_call.1} parent=1 // pred_region
      %7003 = dma.done [#allocation4], 8192
    $region45: #{tpu_custom_call.1} parent=1 // pred_fallthru
      _
    %7004 = vsyncpa [#allocation4], 1

</llo_original>
